<compile_context>
chip_gen: v5e
topology: v5e:2x2
jax: 0.10.0
libtpu: 0.0.40
codegen_flags: <defaults>
</compile_context>

<pallas_src>
import functools

import jax
import jax.numpy as jnp
from jax import lax
from jax.experimental import pallas as pl
from jax.experimental.pallas import tpu as pltpu


# ----------------------------------------------------------------------------
# Small helpers
# ----------------------------------------------------------------------------
def _const_spec(shape):
    """Full-array block revisited every grid step (weights stay VMEM-resident)."""
    zeros = (0,) * len(shape)
    return pl.BlockSpec(shape, lambda i: zeros)


def _batch_tile(B, max_tile):
    """Largest legal batch tile: == B, or a multiple of 8 dividing B."""
    if B <= max_tile:
        return B
    t = (max_tile // 8) * 8
    while t >= 8:
        if B % t == 0:
            return t
        t -= 8
    return B


def _vmem_limit_bytes():
    """Per-generation scoped-VMEM budget (defaults are only 16/32 MiB)."""
    try:
        cap = pltpu.get_tpu_info().vmem_capacity_bytes
        return int(min(cap * 3 // 4, 96 * 1024 * 1024))
    except Exception:
        return 48 * 1024 * 1024


# ----------------------------------------------------------------------------
# Kernel A: fused pixel-encoder conv stack (flat padded-geometry layout)
# ----------------------------------------------------------------------------
def _conv_stack_kernel(p_ref, w1_ref, b1_ref, w2_ref, b2_ref, w3_ref, b3_ref,
                       w4_ref, b4_ref, out_ref, bufA, bufB, bufC, *, W1, M1, slack):
    """4x (3x3 conv + ReLU) for one batch tile.

    Activations live in flat (row-major over b, oh, ow) 2D buffers of width F; because
    every layer keeps the H1 x W1 storage geometry (valid region shrinks toward the
    top-left), tap (i, j) of a stride-1 3x3 conv is the contiguous slice starting at
    flat offset i*W1 + j.  Each layer is therefore 9 big-M accumulated MXU matmuls.
    """
    F = w1_ref.shape[1]
    cdt = bufA.dtype

    # Keep the (never-consumed-for-valid-outputs) slack tail finite.
    if slack > 0:
        z = jnp.zeros((slack, F), cdt)
        bufA[pl.ds(M1, slack), :] = z
        bufB[pl.ds(M1, slack), :] = z
        bufC[pl.ds(M1, slack), :] = z

    # ---- layer 1 (stride 2): glue im2col -> one (M1, 9*Cin) @ (9*Cin, F) matmul ----
    h1 = jnp.dot(p_ref[...], w1_ref[...], preferred_element_type=jnp.float32)
    h1 = jnp.maximum(h1 + b1_ref[...], 0.0)          # bias hoisted: added once per tile
    bufA[pl.ds(0, M1), :] = h1.astype(cdt)

    # ---- layers 2..4 (stride 1): 9 shifted big-M matmuls over the flat layout -------
    def conv3x3(src, w_ref, b_ref):
        acc = jnp.zeros((M1, F), jnp.float32)
        for i in range(3):                            # unrolled tap loop
            for j in range(3):
                acc = acc + jnp.dot(src[pl.ds(i * W1 + j, M1), :], w_ref[i * 3 + j],
                                    preferred_element_type=jnp.float32)
        return jnp.maximum(acc + b_ref[...], 0.0)

    bufB[pl.ds(0, M1), :] = conv3x3(bufA, w2_ref, b2_ref).astype(cdt)
    bufC[pl.ds(0, M1), :] = conv3x3(bufB, w3_ref, b3_ref).astype(cdt)
    out_ref[...] = conv3x3(bufC, w4_ref, b4_ref).astype(out_ref.dtype)
    # TODO(synk): concatenate the 9 taps along K (K=9*F=288) once minor-dim value concat
    # is confirmed on all target Mosaic versions; N=F=32 lane fill remains the MXU limit.


def encoder_convs(obs_nhwc, params):
    """obs_nhwc: (B, H, W, C) f32 in [0, 255]. Returns (B, H4*W4*F) in compute dtype."""
    B, H, W, C = obs_nhwc.shape
    F = params["conv_w1"].shape[1]
    cdt = params["conv_w1"].dtype
    H1, W1 = (H - 3) // 2 + 1, (W - 3) // 2 + 1
    H4, W4 = H1 - 6, W1 - 6

    # Layer-1 im2col in glue (single XLA pass; patch dim = 9*C), ordered (b, oh, ow)
    # row-major and (tap_i, tap_j, c) feature-major to match the packed weights.
    taps = [obs_nhwc[:, i:i + 2 * H1 - 1:2, j:j + 2 * W1 - 1:2, :]
            for i in range(3) for j in range(3)]
    patches = jnp.concatenate(taps, axis=-1).reshape(B * H1 * W1, 9 * C).astype(cdt)

    bt = _batch_tile(B, 8)                 # tune upward at DRQ scale / bigger VMEM
    Mblk = bt * H1 * W1
    Mbuf = ((Mblk + 2 * W1 + 2 + 7) // 8) * 8
    slack = Mbuf - Mblk

    weight_args = (params["conv_w1"], params["conv_b1"], params["conv_w2"], params["conv_b2"],
                   params["conv_w3"], params["conv_b3"], params["conv_w4"], params["conv_b4"])

    conv_flat = pl.pallas_call(
        functools.partial(_conv_stack_kernel, W1=W1, M1=Mblk, slack=slack),
        out_shape=jax.ShapeDtypeStruct((B * H1 * W1, F), cdt),
        grid=(B // bt,),
        in_specs=[pl.BlockSpec((Mblk, 9 * C), lambda i: (i, 0))]
                 + [_const_spec(a.shape) for a in weight_args],
        out_specs=pl.BlockSpec((Mblk, F), lambda i: (i, 0)),
        scratch_shapes=[pltpu.VMEM((Mbuf, F), cdt),
                        pltpu.VMEM((Mbuf, F), cdt),
                        pltpu.VMEM((Mbuf, F), cdt)],
        compiler_params=pltpu.CompilerParams(
            dimension_semantics=("parallel",),
            vmem_limit_bytes=_vmem_limit_bytes()),
    )(patches, *weight_args)

    # Extract the valid (H4, W4) region and flatten HWC for the dense tail
    # (one small bf16 XLA copy between the two pallas_calls).
    valid = conv_flat.reshape(B, H1, W1, F)[:, :H4, :W4, :].reshape(B, H4 * W4 * F)
    return valid


# ----------------------------------------------------------------------------
# Kernel B: fused dense tail (enc FC -> LayerNorm+tanh -> trunk -> Gaussian head)
# ----------------------------------------------------------------------------
def _tail_kernel(*refs, hidden_depth, action_dim, log_std_min, log_std_max):
    mu_ref, std_ref = refs[-2], refs[-1]
    it = iter(refs[:-2])
    x_ref, fcw, fcb, g, be = next(it), next(it), next(it), next(it), next(it)
    hidden = [(next(it), next(it)) for _ in range(hidden_depth)]
    hw, hb = next(it), next(it)

    # encoder FC (bf16 operands at production dtype, f32 accumulation)
    h = jnp.dot(x_ref[...], fcw[...], preferred_element_type=jnp.float32) + fcb[...]
    # LayerNorm (biased var, eps=1e-5) + tanh, all f32
    m = jnp.mean(h, axis=-1, keepdims=True)
    v = jnp.mean((h - m) ** 2, axis=-1, keepdims=True)
    h = jnp.tanh((h - m) * lax.rsqrt(v + 1e-5) * g[...] + be[...])
    # trunk hidden layers: Linear + ReLU (f32; tiny weights)
    for (w, b) in hidden:
        h = jnp.maximum(jnp.dot(h, w[...], preferred_element_type=jnp.float32) + b[...], 0.0)
    # merged Gaussian head: one (hidden, 2A) matmul, static lane split
    y = jnp.dot(h, hw[...], preferred_element_type=jnp.float32) + hb[...]
    A = action_dim
    mu = y[:, :A]
    ls = jnp.tanh(y[:, A:])
    ls = log_std_min + 0.5 * (log_std_max - log_std_min) * (ls + 1.0)
    mu_ref[...] = mu.astype(mu_ref.dtype)
    std_ref[...] = jnp.exp(ls).astype(std_ref.dtype)


def actor_dense_tail(flat, params, *, log_std_bounds):
    B, Dflat = flat.shape
    A = params["head_w"].shape[1] // 2
    depth = len(params["trunk_hidden"])
    inputs = [flat, params["enc_fc_w"], params["enc_fc_b"],
              params["ln_gamma"], params["ln_beta"]]
    for (w, b) in params["trunk_hidden"]:
        inputs += [w, b]
    inputs += [params["head_w"], params["head_b"]]

    bt = _batch_tile(B, 128)
    lo, hi = log_std_bounds
    in_specs = [pl.BlockSpec((bt, Dflat), lambda i: (i, 0))]
    in_specs += [_const_spec(a.shape) for a in inputs[1:]]

    return pl.pallas_call(
        functools.partial(_tail_kernel, hidden_depth=depth, action_dim=A,
                          log_std_min=float(lo), log_std_max=float(hi)),
        out_shape=(jax.ShapeDtypeStruct((B, A), jnp.float32),
                   jax.ShapeDtypeStruct((B, A), jnp.float32)),
        grid=(B // bt,),
        in_specs=in_specs,
        out_specs=(pl.BlockSpec((bt, A), lambda i: (i, 0)),
                   pl.BlockSpec((bt, A), lambda i: (i, 0))),
        compiler_params=pltpu.CompilerParams(
            dimension_semantics=("parallel",),
            vmem_limit_bytes=_vmem_limit_bytes()),
    )(*inputs)


# ----------------------------------------------------------------------------
# Full Actor forward: exactly two pallas_calls
# ----------------------------------------------------------------------------
def actor_forward(params, obs, *, log_std_bounds):
    """obs: (B, C, H, W) in [0, 255]. Returns (mu, std) of the SquashedNormal."""
    x = jnp.transpose(obs.astype(jnp.float32), (0, 2, 3, 1))   # NCHW -> NHWC once
    flat = encoder_convs(x, params)                            # (B, H4*W4*F)
    return actor_dense_tail(flat, params, log_std_bounds=log_std_bounds)


# ----------------------------------------------------------------------------
# Parameters: synthetic PyTorch-layout params + one-time host-side re-layout
# ----------------------------------------------------------------------------
def init_params(key, *, obs_shape, num_filters, feature_dim, hidden_dim,
                hidden_depth, action_dim):
    """Synthetic parameters in PyTorch layout (as the nn.Module would hold)."""
    C, H, W = obs_shape

    def nk():
        nonlocal key
        key, sub = jax.random.split(key)
        return sub

    convs = []
    ic = C
    oh, ow = H, W
    for stride in (2, 1, 1, 1):
        w = jax.random.normal(nk(), (num_filters, ic, 3, 3), jnp.float32) * 0.05
        b = jax.random.normal(nk(), (num_filters,), jnp.float32) * 0.01
        convs.append((w, b))
        ic = num_filters
        oh = (oh - 3) // stride + 1
        ow = (ow - 3) // stride + 1

    flat_dim = num_filters * oh * ow
    enc_fc_w = jax.random.normal(nk(), (feature_dim, flat_dim), jnp.float32) * 0.02
    enc_fc_b = jax.random.normal(nk(), (feature_dim,), jnp.float32) * 0.01
    ln_gamma = 1.0 + 0.1 * jax.random.normal(nk(), (feature_dim,), jnp.float32)
    ln_beta = 0.01 * jax.random.normal(nk(), (feature_dim,), jnp.float32)

    trunk_hidden = []
    in_dim = feature_dim
    for _ in range(hidden_depth):
        w = jax.random.normal(nk(), (hidden_dim, in_dim), jnp.float32) * 0.1
        b = jax.random.normal(nk(), (hidden_dim,), jnp.float32) * 0.01
        trunk_hidden.append((w, b))
        in_dim = hidden_dim

    head_w = jax.random.normal(nk(), (2 * action_dim, in_dim), jnp.float32) * 0.1
    head_b = jax.random.normal(nk(), (2 * action_dim,), jnp.float32) * 0.01

    params = {"convs": convs,
              "enc_fc_w": enc_fc_w, "enc_fc_b": enc_fc_b,
              "ln_gamma": ln_gamma, "ln_beta": ln_beta,
              "trunk_hidden": trunk_hidden,
              "head_w": head_w, "head_b": head_b}
    return params, (oh, ow)


def prepare_params(pt, *, conv_out_hw, compute_dtype=jnp.bfloat16):
    """One-time host-side re-layout of PyTorch params into kernel layouts."""
    H4, W4 = conv_out_hw
    (w1, b1), (w2, b2), (w3, b3), (w4, b4) = pt["convs"]
    C = w1.shape[1]
    F = w1.shape[0]

    def pack(w):  # (OC, Cin, 3, 3) -> (9, Cin, OC), tap-major (i, j), channel-minor
        return jnp.transpose(w, (2, 3, 1, 0)).reshape(9, w.shape[1], w.shape[0])

    params = {
        # layer 1: flat (9*Cin, F) to match the glue im2col; obs/255 folded in
        "conv_w1": (pack(w1) / 255.0).reshape(9 * C, F).astype(compute_dtype),
        "conv_b1": b1.reshape(1, F).astype(jnp.float32),
        "conv_w2": pack(w2).astype(compute_dtype), "conv_b2": b2.reshape(1, F).astype(jnp.float32),
        "conv_w3": pack(w3).astype(compute_dtype), "conv_b3": b3.reshape(1, F).astype(jnp.float32),
        "conv_w4": pack(w4).astype(compute_dtype), "conv_b4": b4.reshape(1, F).astype(jnp.float32),
    }

    # fc weight rows: NCHW-flatten (PyTorch) -> NHWC-flatten order used by the kernels.
    hh, ww, cc = jnp.meshgrid(jnp.arange(H4), jnp.arange(W4), jnp.arange(F), indexing="ij")
    perm = (cc * (H4 * W4) + hh * W4 + ww).reshape(-1)
    params["enc_fc_w"] = pt["enc_fc_w"].T[perm].astype(compute_dtype)   # (H4*W4*F, feat)
    params["enc_fc_b"] = pt["enc_fc_b"].reshape(1, -1).astype(jnp.float32)
    params["ln_gamma"] = pt["ln_gamma"].reshape(1, -1).astype(jnp.float32)
    params["ln_beta"] = pt["ln_beta"].reshape(1, -1).astype(jnp.float32)

    params["trunk_hidden"] = [(w.T.astype(jnp.float32), b.reshape(1, -1).astype(jnp.float32))
                              for (w, b) in pt["trunk_hidden"]]
    params["head_w"] = pt["head_w"].T.astype(jnp.float32)               # (in_dim, 2A)
    params["head_b"] = pt["head_b"].reshape(1, -1).astype(jnp.float32)
    return params


# ----------------------------------------------------------------------------
# Pure-JAX reference (mirrors the PyTorch module) for a numerical check
# ----------------------------------------------------------------------------
def actor_reference(pt, obs, *, log_std_bounds):
    x = obs.astype(jnp.float32) / 255.0
    for (w, b), s in zip(pt["convs"], (2, 1, 1, 1)):
        x = lax.conv_general_dilated(x, w, window_strides=(s, s), padding="VALID",
                                     dimension_numbers=("NCHW", "OIHW", "NCHW"))
        x = jnp.maximum(x + b[None, :, None, None], 0.0)
    flat = x.reshape(x.shape[0], -1)
    h = flat @ pt["enc_fc_w"].T + pt["enc_fc_b"]
    m = jnp.mean(h, -1, keepdims=True)
    v = jnp.mean((h - m) ** 2, -1, keepdims=True)
    h = jnp.tanh((h - m) / jnp.sqrt(v + 1e-5) * pt["ln_gamma"] + pt["ln_beta"])
    for (w, b) in pt["trunk_hidden"]:
        h = jnp.maximum(h @ w.T + b, 0.0)
    y = h @ pt["head_w"].T + pt["head_b"]
    A = y.shape[-1] // 2
    mu, log_std = y[:, :A], y[:, A:]
    lo, hi = log_std_bounds
    log_std = lo + 0.5 * (hi - lo) * (jnp.tanh(log_std) + 1.0)
    return mu, jnp.exp(log_std)


# ----------------------------------------------------------------------------
if __name__ == "__main__":
    B, C, H, W = 2, 3, 21, 21          # 21 -> 10 -> 8 -> 6 -> 4 spatially
    NUM_FILTERS = 32
    FEATURE_DIM = 32
    HIDDEN_DIM = 32
    HIDDEN_DEPTH = 2
    ACTION_DIM = 4
    LOG_STD_BOUNDS = (-10.0, 2.0)

    key = jax.random.PRNGKey(0)
    kp, ko = jax.random.split(key)
    pt_params, conv_out_hw = init_params(
        kp, obs_shape=(C, H, W), num_filters=NUM_FILTERS, feature_dim=FEATURE_DIM,
        hidden_dim=HIDDEN_DIM, hidden_depth=HIDDEN_DEPTH, action_dim=ACTION_DIM)
    obs = jax.random.uniform(ko, (B, C, H, W), jnp.float32, minval=0.0, maxval=255.0)

    fwd = jax.jit(functools.partial(actor_forward, log_std_bounds=LOG_STD_BOUNDS))
    mu_ref, std_ref = actor_reference(pt_params, obs, log_std_bounds=LOG_STD_BOUNDS)

    # 1) f32 compute path: tight check against the PyTorch-equivalent reference.
    params_f32 = prepare_params(pt_params, conv_out_hw=conv_out_hw,
                                compute_dtype=jnp.float32)
    mu32, std32 = fwd(params_f32, obs)
    jax.block_until_ready((mu32, std32))
    assert mu32.shape == (B, ACTION_DIM) and std32.shape == (B, ACTION_DIM)
    assert float(jnp.max(jnp.abs(mu32 - mu_ref))) < 1e-3
    assert float(jnp.max(jnp.abs(std32 - std_ref))) < 1e-3

    # 2) bf16 matmul-operand path (production config per the perf review): accumulation
    #    and elementwise tail stay f32, so only a loosened tolerance is needed.
    params_bf16 = prepare_params(pt_params, conv_out_hw=conv_out_hw,
                                 compute_dtype=jnp.bfloat16)
    mu_bf, std_bf = fwd(params_bf16, obs)
    jax.block_until_ready((mu_bf, std_bf))
    assert mu_bf.shape == (B, ACTION_DIM) and std_bf.shape == (B, ACTION_DIM)
    assert bool(jnp.all(jnp.isfinite(mu_bf))) and bool(jnp.all(std_bf > 0))
    mu_scale = 1.0 + float(jnp.max(jnp.abs(mu_ref)))
    assert float(jnp.max(jnp.abs(mu_bf - mu_ref))) < 0.08 * mu_scale
    assert float(jnp.max(jnp.abs(jnp.log(std_bf) - jnp.log(std_ref)))) < 0.15

    # TODO(synk): SquashedNormal (TransformedDistribution) is returned as its (mu, std)
    # parameters; the distribution object itself is not a kernel op.
    print("KERNEL_OK")
</pallas_src>

<mosaic_0001>
module attributes {stable_mosaic.version = 11 : i64} {
  func.func @_conv_stack_kernel(%arg0: i32, %arg1: memref<200x27xf32, #tpu.memory_space<vmem>>, %arg2: memref<27x32xf32, #tpu.memory_space<vmem>>, %arg3: memref<1x32xf32, #tpu.memory_space<vmem>>, %arg4: memref<9x32x32xf32, #tpu.memory_space<vmem>>, %arg5: memref<1x32xf32, #tpu.memory_space<vmem>>, %arg6: memref<9x32x32xf32, #tpu.memory_space<vmem>>, %arg7: memref<1x32xf32, #tpu.memory_space<vmem>>, %arg8: memref<9x32x32xf32, #tpu.memory_space<vmem>>, %arg9: memref<1x32xf32, #tpu.memory_space<vmem>>, %arg10: memref<200x32xf32, #tpu.memory_space<vmem>>, %arg11: memref<224x32xf32, #tpu.memory_space<vmem>>, %arg12: memref<224x32xf32, #tpu.memory_space<vmem>>, %arg13: memref<224x32xf32, #tpu.memory_space<vmem>>) attributes {dimension_semantics = [#tpu.dimension_semantics<parallel>], iteration_bounds = array<i64: 1>, scalar_prefetch = 0 : i64, scratch_operands = 3 : i64, tpu.core_type = #tpu.core_type<tc>, window_params = [{transform_indices = @transform_0, window_bounds = array<i64: 200, 27>}, {pipeline_mode = #tpu.pipeline_mode<synchronous>, transform_indices = @transform_1, window_bounds = array<i64: 27, 32>}, {pipeline_mode = #tpu.pipeline_mode<synchronous>, transform_indices = @transform_2, window_bounds = array<i64: 1, 32>}, {pipeline_mode = #tpu.pipeline_mode<synchronous>, transform_indices = @transform_3, window_bounds = array<i64: 9, 32, 32>}, {pipeline_mode = #tpu.pipeline_mode<synchronous>, transform_indices = @transform_4, window_bounds = array<i64: 1, 32>}, {pipeline_mode = #tpu.pipeline_mode<synchronous>, transform_indices = @transform_5, window_bounds = array<i64: 9, 32, 32>}, {pipeline_mode = #tpu.pipeline_mode<synchronous>, transform_indices = @transform_6, window_bounds = array<i64: 1, 32>}, {pipeline_mode = #tpu.pipeline_mode<synchronous>, transform_indices = @transform_7, window_bounds = array<i64: 9, 32, 32>}, {pipeline_mode = #tpu.pipeline_mode<synchronous>, transform_indices = @transform_8, window_bounds = array<i64: 1, 32>}, {transform_indices = @transform_9, window_bounds = array<i64: 200, 32>}]} {
    %cst = arith.constant 0.000000e+00 : f32
    %0 = vector.broadcast %cst : f32 to vector<24x32xf32>
    %c200 = arith.constant 200 : index
    %c0 = arith.constant 0 : index
    %1 = vector.load %arg11[%c200, %c0] : memref<224x32xf32, #tpu.memory_space<vmem>>, vector<24x32xf32>
    tpu.vector_store %arg11[%c200, %c0], %0 {strides = array<i32>} : memref<224x32xf32, #tpu.memory_space<vmem>>, vector<24x32xf32>,
    %c200_0 = arith.constant 200 : index
    %c0_1 = arith.constant 0 : index
    %2 = vector.load %arg12[%c200_0, %c0_1] : memref<224x32xf32, #tpu.memory_space<vmem>>, vector<24x32xf32>
    tpu.vector_store %arg12[%c200_0, %c0_1], %0 {strides = array<i32>} : memref<224x32xf32, #tpu.memory_space<vmem>>, vector<24x32xf32>,
    %c200_2 = arith.constant 200 : index
    %c0_3 = arith.constant 0 : index
    %3 = vector.load %arg13[%c200_2, %c0_3] : memref<224x32xf32, #tpu.memory_space<vmem>>, vector<24x32xf32>
    tpu.vector_store %arg13[%c200_2, %c0_3], %0 {strides = array<i32>} : memref<224x32xf32, #tpu.memory_space<vmem>>, vector<24x32xf32>,
    %c0_4 = arith.constant 0 : index
    %c0_5 = arith.constant 0 : index
    %4 = vector.load %arg1[%c0_4, %c0_5] : memref<200x27xf32, #tpu.memory_space<vmem>>, vector<200x27xf32>
    %c0_6 = arith.constant 0 : index
    %c0_7 = arith.constant 0 : index
    %5 = vector.load %arg2[%c0_6, %c0_7] : memref<27x32xf32, #tpu.memory_space<vmem>>, vector<27x32xf32>
    %cst_8 = arith.constant dense<0.000000e+00> : vector<200x32xf32>
    %6 = tpu.matmul %4, %5, %cst_8 {dimension_numbers = #tpu.dot_dimension_numbers<[1], [0], [0], [1], [0, 0, 1, 1], [], []>} : vector<200x27xf32>, vector<27x32xf32>, vector<200x32xf32> -> vector<200x32xf32>
    %c0_9 = arith.constant 0 : index
    %c0_10 = arith.constant 0 : index
    %7 = vector.load %arg3[%c0_9, %c0_10] : memref<1x32xf32, #tpu.memory_space<vmem>>, vector<1x32xf32>
    %8 = vector.broadcast %7 : vector<1x32xf32> to vector<200x32xf32>
    %9 = arith.addf %6, %8 : vector<200x32xf32>
    %cst_11 = arith.constant 0.000000e+00 : f32
    %10 = vector.broadcast %cst_11 : f32 to vector<200x32xf32>
    %11 = arith.maximumf %9, %10 : vector<200x32xf32>
    %c0_12 = arith.constant 0 : index
    %c0_13 = arith.constant 0 : index
    %12 = vector.load %arg11[%c0_12, %c0_13] : memref<224x32xf32, #tpu.memory_space<vmem>>, vector<200x32xf32>
    tpu.vector_store %arg11[%c0_12, %c0_13], %11 {strides = array<i32>} : memref<224x32xf32, #tpu.memory_space<vmem>>, vector<200x32xf32>,
    %cst_14 = arith.constant 0.000000e+00 : f32
    %13 = vector.broadcast %cst_14 : f32 to vector<200x32xf32>
    %c0_15 = arith.constant 0 : index
    %c0_16 = arith.constant 0 : index
    %14 = vector.load %arg11[%c0_15, %c0_16] : memref<224x32xf32, #tpu.memory_space<vmem>>, vector<200x32xf32>
    %c0_17 = arith.constant 0 : index
    %c0_18 = arith.constant 0 : index
    %c0_19 = arith.constant 0 : index
    %15 = vector.load %arg4[%c0_17, %c0_18, %c0_19] : memref<9x32x32xf32, #tpu.memory_space<vmem>>, vector<1x32x32xf32>
    %16 = vector.shape_cast %15 : vector<1x32x32xf32> to vector<32x32xf32>
    %cst_20 = arith.constant dense<0.000000e+00> : vector<200x32xf32>
    %17 = tpu.matmul %14, %16, %cst_20 {dimension_numbers = #tpu.dot_dimension_numbers<[1], [0], [0], [1], [0, 0, 1, 1], [], []>} : vector<200x32xf32>, vector<32x32xf32>, vector<200x32xf32> -> vector<200x32xf32>
    %18 = arith.addf %13, %17 : vector<200x32xf32>
    %c1 = arith.constant 1 : index
    %c0_21 = arith.constant 0 : index
    %19 = vector.load %arg11[%c1, %c0_21] : memref<224x32xf32, #tpu.memory_space<vmem>>, vector<200x32xf32>
    %c1_22 = arith.constant 1 : index
    %c0_23 = arith.constant 0 : index
    %c0_24 = arith.constant 0 : index
    %20 = vector.load %arg4[%c1_22, %c0_23, %c0_24] : memref<9x32x32xf32, #tpu.memory_space<vmem>>, vector<1x32x32xf32>
    %21 = vector.shape_cast %20 : vector<1x32x32xf32> to vector<32x32xf32>
    %cst_25 = arith.constant dense<0.000000e+00> : vector<200x32xf32>
    %22 = tpu.matmul %19, %21, %cst_25 {dimension_numbers = #tpu.dot_dimension_numbers<[1], [0], [0], [1], [0, 0, 1, 1], [], []>} : vector<200x32xf32>, vector<32x32xf32>, vector<200x32xf32> -> vector<200x32xf32>
    %23 = arith.addf %18, %22 : vector<200x32xf32>
    %c2 = arith.constant 2 : index
    %c0_26 = arith.constant 0 : index
    %24 = vector.load %arg11[%c2, %c0_26] : memref<224x32xf32, #tpu.memory_space<vmem>>, vector<200x32xf32>
    %c2_27 = arith.constant 2 : index
    %c0_28 = arith.constant 0 : index
    %c0_29 = arith.constant 0 : index
    %25 = vector.load %arg4[%c2_27, %c0_28, %c0_29] : memref<9x32x32xf32, #tpu.memory_space<vmem>>, vector<1x32x32xf32>
    %26 = vector.shape_cast %25 : vector<1x32x32xf32> to vector<32x32xf32>
    %cst_30 = arith.constant dense<0.000000e+00> : vector<200x32xf32>
    %27 = tpu.matmul %24, %26, %cst_30 {dimension_numbers = #tpu.dot_dimension_numbers<[1], [0], [0], [1], [0, 0, 1, 1], [], []>} : vector<200x32xf32>, vector<32x32xf32>, vector<200x32xf32> -> vector<200x32xf32>
    %28 = arith.addf %23, %27 : vector<200x32xf32>
    %c10 = arith.constant 10 : index
    %c0_31 = arith.constant 0 : index
    %29 = vector.load %arg11[%c10, %c0_31] : memref<224x32xf32, #tpu.memory_space<vmem>>, vector<200x32xf32>
    %c3 = arith.constant 3 : index
    %c0_32 = arith.constant 0 : index
    %c0_33 = arith.constant 0 : index
    %30 = vector.load %arg4[%c3, %c0_32, %c0_33] : memref<9x32x32xf32, #tpu.memory_space<vmem>>, vector<1x32x32xf32>
    %31 = vector.shape_cast %30 : vector<1x32x32xf32> to vector<32x32xf32>
    %cst_34 = arith.constant dense<0.000000e+00> : vector<200x32xf32>
    %32 = tpu.matmul %29, %31, %cst_34 {dimension_numbers = #tpu.dot_dimension_numbers<[1], [0], [0], [1], [0, 0, 1, 1], [], []>} : vector<200x32xf32>, vector<32x32xf32>, vector<200x32xf32> -> vector<200x32xf32>
    %33 = arith.addf %28, %32 : vector<200x32xf32>
    %c11 = arith.constant 11 : index
    %c0_35 = arith.constant 0 : index
    %34 = vector.load %arg11[%c11, %c0_35] : memref<224x32xf32, #tpu.memory_space<vmem>>, vector<200x32xf32>
    %c4 = arith.constant 4 : index
    %c0_36 = arith.constant 0 : index
    %c0_37 = arith.constant 0 : index
    %35 = vector.load %arg4[%c4, %c0_36, %c0_37] : memref<9x32x32xf32, #tpu.memory_space<vmem>>, vector<1x32x32xf32>
    %36 = vector.shape_cast %35 : vector<1x32x32xf32> to vector<32x32xf32>
    %cst_38 = arith.constant dense<0.000000e+00> : vector<200x32xf32>
    %37 = tpu.matmul %34, %36, %cst_38 {dimension_numbers = #tpu.dot_dimension_numbers<[1], [0], [0], [1], [0, 0, 1, 1], [], []>} : vector<200x32xf32>, vector<32x32xf32>, vector<200x32xf32> -> vector<200x32xf32>
    %38 = arith.addf %33, %37 : vector<200x32xf32>
    %c12 = arith.constant 12 : index
    %c0_39 = arith.constant 0 : index
    %39 = vector.load %arg11[%c12, %c0_39] : memref<224x32xf32, #tpu.memory_space<vmem>>, vector<200x32xf32>
    %c5 = arith.constant 5 : index
    %c0_40 = arith.constant 0 : index
    %c0_41 = arith.constant 0 : index
    %40 = vector.load %arg4[%c5, %c0_40, %c0_41] : memref<9x32x32xf32, #tpu.memory_space<vmem>>, vector<1x32x32xf32>
    %41 = vector.shape_cast %40 : vector<1x32x32xf32> to vector<32x32xf32>
    %cst_42 = arith.constant dense<0.000000e+00> : vector<200x32xf32>
    %42 = tpu.matmul %39, %41, %cst_42 {dimension_numbers = #tpu.dot_dimension_numbers<[1], [0], [0], [1], [0, 0, 1, 1], [], []>} : vector<200x32xf32>, vector<32x32xf32>, vector<200x32xf32> -> vector<200x32xf32>
    %43 = arith.addf %38, %42 : vector<200x32xf32>
    %c20 = arith.constant 20 : index
    %c0_43 = arith.constant 0 : index
    %44 = vector.load %arg11[%c20, %c0_43] : memref<224x32xf32, #tpu.memory_space<vmem>>, vector<200x32xf32>
    %c6 = arith.constant 6 : index
    %c0_44 = arith.constant 0 : index
    %c0_45 = arith.constant 0 : index
    %45 = vector.load %arg4[%c6, %c0_44, %c0_45] : memref<9x32x32xf32, #tpu.memory_space<vmem>>, vector<1x32x32xf32>
    %46 = vector.shape_cast %45 : vector<1x32x32xf32> to vector<32x32xf32>
    %cst_46 = arith.constant dense<0.000000e+00> : vector<200x32xf32>
    %47 = tpu.matmul %44, %46, %cst_46 {dimension_numbers = #tpu.dot_dimension_numbers<[1], [0], [0], [1], [0, 0, 1, 1], [], []>} : vector<200x32xf32>, vector<32x32xf32>, vector<200x32xf32> -> vector<200x32xf32>
    %48 = arith.addf %43, %47 : vector<200x32xf32>
    %c21 = arith.constant 21 : index
    %c0_47 = arith.constant 0 : index
    %49 = vector.load %arg11[%c21, %c0_47] : memref<224x32xf32, #tpu.memory_space<vmem>>, vector<200x32xf32>
    %c7 = arith.constant 7 : index
    %c0_48 = arith.constant 0 : index
    %c0_49 = arith.constant 0 : index
    %50 = vector.load %arg4[%c7, %c0_48, %c0_49] : memref<9x32x32xf32, #tpu.memory_space<vmem>>, vector<1x32x32xf32>
    %51 = vector.shape_cast %50 : vector<1x32x32xf32> to vector<32x32xf32>
    %cst_50 = arith.constant dense<0.000000e+00> : vector<200x32xf32>
    %52 = tpu.matmul %49, %51, %cst_50 {dimension_numbers = #tpu.dot_dimension_numbers<[1], [0], [0], [1], [0, 0, 1, 1], [], []>} : vector<200x32xf32>, vector<32x32xf32>, vector<200x32xf32> -> vector<200x32xf32>
    %53 = arith.addf %48, %52 : vector<200x32xf32>
    %c22 = arith.constant 22 : index
    %c0_51 = arith.constant 0 : index
    %54 = vector.load %arg11[%c22, %c0_51] : memref<224x32xf32, #tpu.memory_space<vmem>>, vector<200x32xf32>
    %c8 = arith.constant 8 : index
    %c0_52 = arith.constant 0 : index
    %c0_53 = arith.constant 0 : index
    %55 = vector.load %arg4[%c8, %c0_52, %c0_53] : memref<9x32x32xf32, #tpu.memory_space<vmem>>, vector<1x32x32xf32>
    %56 = vector.shape_cast %55 : vector<1x32x32xf32> to vector<32x32xf32>
    %cst_54 = arith.constant dense<0.000000e+00> : vector<200x32xf32>
    %57 = tpu.matmul %54, %56, %cst_54 {dimension_numbers = #tpu.dot_dimension_numbers<[1], [0], [0], [1], [0, 0, 1, 1], [], []>} : vector<200x32xf32>, vector<32x32xf32>, vector<200x32xf32> -> vector<200x32xf32>
    %58 = arith.addf %53, %57 : vector<200x32xf32>
    %c0_55 = arith.constant 0 : index
    %c0_56 = arith.constant 0 : index
    %59 = vector.load %arg5[%c0_55, %c0_56] : memref<1x32xf32, #tpu.memory_space<vmem>>, vector<1x32xf32>
    %60 = vector.broadcast %59 : vector<1x32xf32> to vector<200x32xf32>
    %61 = arith.addf %58, %60 : vector<200x32xf32>
    %cst_57 = arith.constant 0.000000e+00 : f32
    %62 = vector.broadcast %cst_57 : f32 to vector<200x32xf32>
    %63 = arith.maximumf %61, %62 : vector<200x32xf32>
    %c0_58 = arith.constant 0 : index
    %c0_59 = arith.constant 0 : index
    %64 = vector.load %arg12[%c0_58, %c0_59] : memref<224x32xf32, #tpu.memory_space<vmem>>, vector<200x32xf32>
    tpu.vector_store %arg12[%c0_58, %c0_59], %63 {strides = array<i32>} : memref<224x32xf32, #tpu.memory_space<vmem>>, vector<200x32xf32>,
    %cst_60 = arith.constant 0.000000e+00 : f32
    %65 = vector.broadcast %cst_60 : f32 to vector<200x32xf32>
    %c0_61 = arith.constant 0 : index
    %c0_62 = arith.constant 0 : index
    %66 = vector.load %arg12[%c0_61, %c0_62] : memref<224x32xf32, #tpu.memory_space<vmem>>, vector<200x32xf32>
    %c0_63 = arith.constant 0 : index
    %c0_64 = arith.constant 0 : index
    %c0_65 = arith.constant 0 : index
    %67 = vector.load %arg6[%c0_63, %c0_64, %c0_65] : memref<9x32x32xf32, #tpu.memory_space<vmem>>, vector<1x32x32xf32>
    %68 = vector.shape_cast %67 : vector<1x32x32xf32> to vector<32x32xf32>
    %cst_66 = arith.constant dense<0.000000e+00> : vector<200x32xf32>
    %69 = tpu.matmul %66, %68, %cst_66 {dimension_numbers = #tpu.dot_dimension_numbers<[1], [0], [0], [1], [0, 0, 1, 1], [], []>} : vector<200x32xf32>, vector<32x32xf32>, vector<200x32xf32> -> vector<200x32xf32>
    %70 = arith.addf %65, %69 : vector<200x32xf32>
    %c1_67 = arith.constant 1 : index
    %c0_68 = arith.constant 0 : index
    %71 = vector.load %arg12[%c1_67, %c0_68] : memref<224x32xf32, #tpu.memory_space<vmem>>, vector<200x32xf32>
    %c1_69 = arith.constant 1 : index
    %c0_70 = arith.constant 0 : index
    %c0_71 = arith.constant 0 : index
    %72 = vector.load %arg6[%c1_69, %c0_70, %c0_71] : memref<9x32x32xf32, #tpu.memory_space<vmem>>, vector<1x32x32xf32>
    %73 = vector.shape_cast %72 : vector<1x32x32xf32> to vector<32x32xf32>
    %cst_72 = arith.constant dense<0.000000e+00> : vector<200x32xf32>
    %74 = tpu.matmul %71, %73, %cst_72 {dimension_numbers = #tpu.dot_dimension_numbers<[1], [0], [0], [1], [0, 0, 1, 1], [], []>} : vector<200x32xf32>, vector<32x32xf32>, vector<200x32xf32> -> vector<200x32xf32>
    %75 = arith.addf %70, %74 : vector<200x32xf32>
    %c2_73 = arith.constant 2 : index
    %c0_74 = arith.constant 0 : index
    %76 = vector.load %arg12[%c2_73, %c0_74] : memref<224x32xf32, #tpu.memory_space<vmem>>, vector<200x32xf32>
    %c2_75 = arith.constant 2 : index
    %c0_76 = arith.constant 0 : index
    %c0_77 = arith.constant 0 : index
    %77 = vector.load %arg6[%c2_75, %c0_76, %c0_77] : memref<9x32x32xf32, #tpu.memory_space<vmem>>, vector<1x32x32xf32>
    %78 = vector.shape_cast %77 : vector<1x32x32xf32> to vector<32x32xf32>
    %cst_78 = arith.constant dense<0.000000e+00> : vector<200x32xf32>
    %79 = tpu.matmul %76, %78, %cst_78 {dimension_numbers = #tpu.dot_dimension_numbers<[1], [0], [0], [1], [0, 0, 1, 1], [], []>} : vector<200x32xf32>, vector<32x32xf32>, vector<200x32xf32> -> vector<200x32xf32>
    %80 = arith.addf %75, %79 : vector<200x32xf32>
    %c10_79 = arith.constant 10 : index
    %c0_80 = arith.constant 0 : index
    %81 = vector.load %arg12[%c10_79, %c0_80] : memref<224x32xf32, #tpu.memory_space<vmem>>, vector<200x32xf32>
    %c3_81 = arith.constant 3 : index
    %c0_82 = arith.constant 0 : index
    %c0_83 = arith.constant 0 : index
    %82 = vector.load %arg6[%c3_81, %c0_82, %c0_83] : memref<9x32x32xf32, #tpu.memory_space<vmem>>, vector<1x32x32xf32>
    %83 = vector.shape_cast %82 : vector<1x32x32xf32> to vector<32x32xf32>
    %cst_84 = arith.constant dense<0.000000e+00> : vector<200x32xf32>
    %84 = tpu.matmul %81, %83, %cst_84 {dimension_numbers = #tpu.dot_dimension_numbers<[1], [0], [0], [1], [0, 0, 1, 1], [], []>} : vector<200x32xf32>, vector<32x32xf32>, vector<200x32xf32> -> vector<200x32xf32>
    %85 = arith.addf %80, %84 : vector<200x32xf32>
    %c11_85 = arith.constant 11 : index
    %c0_86 = arith.constant 0 : index
    %86 = vector.load %arg12[%c11_85, %c0_86] : memref<224x32xf32, #tpu.memory_space<vmem>>, vector<200x32xf32>
    %c4_87 = arith.constant 4 : index
    %c0_88 = arith.constant 0 : index
    %c0_89 = arith.constant 0 : index
    %87 = vector.load %arg6[%c4_87, %c0_88, %c0_89] : memref<9x32x32xf32, #tpu.memory_space<vmem>>, vector<1x32x32xf32>
    %88 = vector.shape_cast %87 : vector<1x32x32xf32> to vector<32x32xf32>
    %cst_90 = arith.constant dense<0.000000e+00> : vector<200x32xf32>
    %89 = tpu.matmul %86, %88, %cst_90 {dimension_numbers = #tpu.dot_dimension_numbers<[1], [0], [0], [1], [0, 0, 1, 1], [], []>} : vector<200x32xf32>, vector<32x32xf32>, vector<200x32xf32> -> vector<200x32xf32>
    %90 = arith.addf %85, %89 : vector<200x32xf32>
    %c12_91 = arith.constant 12 : index
    %c0_92 = arith.constant 0 : index
    %91 = vector.load %arg12[%c12_91, %c0_92] : memref<224x32xf32, #tpu.memory_space<vmem>>, vector<200x32xf32>
    %c5_93 = arith.constant 5 : index
    %c0_94 = arith.constant 0 : index
    %c0_95 = arith.constant 0 : index
    %92 = vector.load %arg6[%c5_93, %c0_94, %c0_95] : memref<9x32x32xf32, #tpu.memory_space<vmem>>, vector<1x32x32xf32>
    %93 = vector.shape_cast %92 : vector<1x32x32xf32> to vector<32x32xf32>
    %cst_96 = arith.constant dense<0.000000e+00> : vector<200x32xf32>
    %94 = tpu.matmul %91, %93, %cst_96 {dimension_numbers = #tpu.dot_dimension_numbers<[1], [0], [0], [1], [0, 0, 1, 1], [], []>} : vector<200x32xf32>, vector<32x32xf32>, vector<200x32xf32> -> vector<200x32xf32>
    %95 = arith.addf %90, %94 : vector<200x32xf32>
    %c20_97 = arith.constant 20 : index
    %c0_98 = arith.constant 0 : index
    %96 = vector.load %arg12[%c20_97, %c0_98] : memref<224x32xf32, #tpu.memory_space<vmem>>, vector<200x32xf32>
    %c6_99 = arith.constant 6 : index
    %c0_100 = arith.constant 0 : index
    %c0_101 = arith.constant 0 : index
    %97 = vector.load %arg6[%c6_99, %c0_100, %c0_101] : memref<9x32x32xf32, #tpu.memory_space<vmem>>, vector<1x32x32xf32>
    %98 = vector.shape_cast %97 : vector<1x32x32xf32> to vector<32x32xf32>
    %cst_102 = arith.constant dense<0.000000e+00> : vector<200x32xf32>
    %99 = tpu.matmul %96, %98, %cst_102 {dimension_numbers = #tpu.dot_dimension_numbers<[1], [0], [0], [1], [0, 0, 1, 1], [], []>} : vector<200x32xf32>, vector<32x32xf32>, vector<200x32xf32> -> vector<200x32xf32>
    %100 = arith.addf %95, %99 : vector<200x32xf32>
    %c21_103 = arith.constant 21 : index
    %c0_104 = arith.constant 0 : index
    %101 = vector.load %arg12[%c21_103, %c0_104] : memref<224x32xf32, #tpu.memory_space<vmem>>, vector<200x32xf32>
    %c7_105 = arith.constant 7 : index
    %c0_106 = arith.constant 0 : index
    %c0_107 = arith.constant 0 : index
    %102 = vector.load %arg6[%c7_105, %c0_106, %c0_107] : memref<9x32x32xf32, #tpu.memory_space<vmem>>, vector<1x32x32xf32>
    %103 = vector.shape_cast %102 : vector<1x32x32xf32> to vector<32x32xf32>
    %cst_108 = arith.constant dense<0.000000e+00> : vector<200x32xf32>
    %104 = tpu.matmul %101, %103, %cst_108 {dimension_numbers = #tpu.dot_dimension_numbers<[1], [0], [0], [1], [0, 0, 1, 1], [], []>} : vector<200x32xf32>, vector<32x32xf32>, vector<200x32xf32> -> vector<200x32xf32>
    %105 = arith.addf %100, %104 : vector<200x32xf32>
    %c22_109 = arith.constant 22 : index
    %c0_110 = arith.constant 0 : index
    %106 = vector.load %arg12[%c22_109, %c0_110] : memref<224x32xf32, #tpu.memory_space<vmem>>, vector<200x32xf32>
    %c8_111 = arith.constant 8 : index
    %c0_112 = arith.constant 0 : index
    %c0_113 = arith.constant 0 : index
    %107 = vector.load %arg6[%c8_111, %c0_112, %c0_113] : memref<9x32x32xf32, #tpu.memory_space<vmem>>, vector<1x32x32xf32>
    %108 = vector.shape_cast %107 : vector<1x32x32xf32> to vector<32x32xf32>
    %cst_114 = arith.constant dense<0.000000e+00> : vector<200x32xf32>
    %109 = tpu.matmul %106, %108, %cst_114 {dimension_numbers = #tpu.dot_dimension_numbers<[1], [0], [0], [1], [0, 0, 1, 1], [], []>} : vector<200x32xf32>, vector<32x32xf32>, vector<200x32xf32> -> vector<200x32xf32>
    %110 = arith.addf %105, %109 : vector<200x32xf32>
    %c0_115 = arith.constant 0 : index
    %c0_116 = arith.constant 0 : index
    %111 = vector.load %arg7[%c0_115, %c0_116] : memref<1x32xf32, #tpu.memory_space<vmem>>, vector<1x32xf32>
    %112 = vector.broadcast %111 : vector<1x32xf32> to vector<200x32xf32>
    %113 = arith.addf %110, %112 : vector<200x32xf32>
    %cst_117 = arith.constant 0.000000e+00 : f32
    %114 = vector.broadcast %cst_117 : f32 to vector<200x32xf32>
    %115 = arith.maximumf %113, %114 : vector<200x32xf32>
    %c0_118 = arith.constant 0 : index
    %c0_119 = arith.constant 0 : index
    %116 = vector.load %arg13[%c0_118, %c0_119] : memref<224x32xf32, #tpu.memory_space<vmem>>, vector<200x32xf32>
    tpu.vector_store %arg13[%c0_118, %c0_119], %115 {strides = array<i32>} : memref<224x32xf32, #tpu.memory_space<vmem>>, vector<200x32xf32>,
    %cst_120 = arith.constant 0.000000e+00 : f32
    %117 = vector.broadcast %cst_120 : f32 to vector<200x32xf32>
    %c0_121 = arith.constant 0 : index
    %c0_122 = arith.constant 0 : index
    %118 = vector.load %arg13[%c0_121, %c0_122] : memref<224x32xf32, #tpu.memory_space<vmem>>, vector<200x32xf32>
    %c0_123 = arith.constant 0 : index
    %c0_124 = arith.constant 0 : index
    %c0_125 = arith.constant 0 : index
    %119 = vector.load %arg8[%c0_123, %c0_124, %c0_125] : memref<9x32x32xf32, #tpu.memory_space<vmem>>, vector<1x32x32xf32>
    %120 = vector.shape_cast %119 : vector<1x32x32xf32> to vector<32x32xf32>
    %cst_126 = arith.constant dense<0.000000e+00> : vector<200x32xf32>
    %121 = tpu.matmul %118, %120, %cst_126 {dimension_numbers = #tpu.dot_dimension_numbers<[1], [0], [0], [1], [0, 0, 1, 1], [], []>} : vector<200x32xf32>, vector<32x32xf32>, vector<200x32xf32> -> vector<200x32xf32>
    %122 = arith.addf %117, %121 : vector<200x32xf32>
    %c1_127 = arith.constant 1 : index
    %c0_128 = arith.constant 0 : index
    %123 = vector.load %arg13[%c1_127, %c0_128] : memref<224x32xf32, #tpu.memory_space<vmem>>, vector<200x32xf32>
    %c1_129 = arith.constant 1 : index
    %c0_130 = arith.constant 0 : index
    %c0_131 = arith.constant 0 : index
    %124 = vector.load %arg8[%c1_129, %c0_130, %c0_131] : memref<9x32x32xf32, #tpu.memory_space<vmem>>, vector<1x32x32xf32>
    %125 = vector.shape_cast %124 : vector<1x32x32xf32> to vector<32x32xf32>
    %cst_132 = arith.constant dense<0.000000e+00> : vector<200x32xf32>
    %126 = tpu.matmul %123, %125, %cst_132 {dimension_numbers = #tpu.dot_dimension_numbers<[1], [0], [0], [1], [0, 0, 1, 1], [], []>} : vector<200x32xf32>, vector<32x32xf32>, vector<200x32xf32> -> vector<200x32xf32>
    %127 = arith.addf %122, %126 : vector<200x32xf32>
    %c2_133 = arith.constant 2 : index
    %c0_134 = arith.constant 0 : index
    %128 = vector.load %arg13[%c2_133, %c0_134] : memref<224x32xf32, #tpu.memory_space<vmem>>, vector<200x32xf32>
    %c2_135 = arith.constant 2 : index
    %c0_136 = arith.constant 0 : index
    %c0_137 = arith.constant 0 : index
    %129 = vector.load %arg8[%c2_135, %c0_136, %c0_137] : memref<9x32x32xf32, #tpu.memory_space<vmem>>, vector<1x32x32xf32>
    %130 = vector.shape_cast %129 : vector<1x32x32xf32> to vector<32x32xf32>
    %cst_138 = arith.constant dense<0.000000e+00> : vector<200x32xf32>
    %131 = tpu.matmul %128, %130, %cst_138 {dimension_numbers = #tpu.dot_dimension_numbers<[1], [0], [0], [1], [0, 0, 1, 1], [], []>} : vector<200x32xf32>, vector<32x32xf32>, vector<200x32xf32> -> vector<200x32xf32>
    %132 = arith.addf %127, %131 : vector<200x32xf32>
    %c10_139 = arith.constant 10 : index
    %c0_140 = arith.constant 0 : index
    %133 = vector.load %arg13[%c10_139, %c0_140] : memref<224x32xf32, #tpu.memory_space<vmem>>, vector<200x32xf32>
    %c3_141 = arith.constant 3 : index
    %c0_142 = arith.constant 0 : index
    %c0_143 = arith.constant 0 : index
    %134 = vector.load %arg8[%c3_141, %c0_142, %c0_143] : memref<9x32x32xf32, #tpu.memory_space<vmem>>, vector<1x32x32xf32>
    %135 = vector.shape_cast %134 : vector<1x32x32xf32> to vector<32x32xf32>
    %cst_144 = arith.constant dense<0.000000e+00> : vector<200x32xf32>
    %136 = tpu.matmul %133, %135, %cst_144 {dimension_numbers = #tpu.dot_dimension_numbers<[1], [0], [0], [1], [0, 0, 1, 1], [], []>} : vector<200x32xf32>, vector<32x32xf32>, vector<200x32xf32> -> vector<200x32xf32>
    %137 = arith.addf %132, %136 : vector<200x32xf32>
    %c11_145 = arith.constant 11 : index
    %c0_146 = arith.constant 0 : index
    %138 = vector.load %arg13[%c11_145, %c0_146] : memref<224x32xf32, #tpu.memory_space<vmem>>, vector<200x32xf32>
    %c4_147 = arith.constant 4 : index
    %c0_148 = arith.constant 0 : index
    %c0_149 = arith.constant 0 : index
    %139 = vector.load %arg8[%c4_147, %c0_148, %c0_149] : memref<9x32x32xf32, #tpu.memory_space<vmem>>, vector<1x32x32xf32>
    %140 = vector.shape_cast %139 : vector<1x32x32xf32> to vector<32x32xf32>
    %cst_150 = arith.constant dense<0.000000e+00> : vector<200x32xf32>
    %141 = tpu.matmul %138, %140, %cst_150 {dimension_numbers = #tpu.dot_dimension_numbers<[1], [0], [0], [1], [0, 0, 1, 1], [], []>} : vector<200x32xf32>, vector<32x32xf32>, vector<200x32xf32> -> vector<200x32xf32>
    %142 = arith.addf %137, %141 : vector<200x32xf32>
    %c12_151 = arith.constant 12 : index
    %c0_152 = arith.constant 0 : index
    %143 = vector.load %arg13[%c12_151, %c0_152] : memref<224x32xf32, #tpu.memory_space<vmem>>, vector<200x32xf32>
    %c5_153 = arith.constant 5 : index
    %c0_154 = arith.constant 0 : index
    %c0_155 = arith.constant 0 : index
    %144 = vector.load %arg8[%c5_153, %c0_154, %c0_155] : memref<9x32x32xf32, #tpu.memory_space<vmem>>, vector<1x32x32xf32>
    %145 = vector.shape_cast %144 : vector<1x32x32xf32> to vector<32x32xf32>
    %cst_156 = arith.constant dense<0.000000e+00> : vector<200x32xf32>
    %146 = tpu.matmul %143, %145, %cst_156 {dimension_numbers = #tpu.dot_dimension_numbers<[1], [0], [0], [1], [0, 0, 1, 1], [], []>} : vector<200x32xf32>, vector<32x32xf32>, vector<200x32xf32> -> vector<200x32xf32>
    %147 = arith.addf %142, %146 : vector<200x32xf32>
    %c20_157 = arith.constant 20 : index
    %c0_158 = arith.constant 0 : index
    %148 = vector.load %arg13[%c20_157, %c0_158] : memref<224x32xf32, #tpu.memory_space<vmem>>, vector<200x32xf32>
    %c6_159 = arith.constant 6 : index
    %c0_160 = arith.constant 0 : index
    %c0_161 = arith.constant 0 : index
    %149 = vector.load %arg8[%c6_159, %c0_160, %c0_161] : memref<9x32x32xf32, #tpu.memory_space<vmem>>, vector<1x32x32xf32>
    %150 = vector.shape_cast %149 : vector<1x32x32xf32> to vector<32x32xf32>
    %cst_162 = arith.constant dense<0.000000e+00> : vector<200x32xf32>
    %151 = tpu.matmul %148, %150, %cst_162 {dimension_numbers = #tpu.dot_dimension_numbers<[1], [0], [0], [1], [0, 0, 1, 1], [], []>} : vector<200x32xf32>, vector<32x32xf32>, vector<200x32xf32> -> vector<200x32xf32>
    %152 = arith.addf %147, %151 : vector<200x32xf32>
    %c21_163 = arith.constant 21 : index
    %c0_164 = arith.constant 0 : index
    %153 = vector.load %arg13[%c21_163, %c0_164] : memref<224x32xf32, #tpu.memory_space<vmem>>, vector<200x32xf32>
    %c7_165 = arith.constant 7 : index
    %c0_166 = arith.constant 0 : index
    %c0_167 = arith.constant 0 : index
    %154 = vector.load %arg8[%c7_165, %c0_166, %c0_167] : memref<9x32x32xf32, #tpu.memory_space<vmem>>, vector<1x32x32xf32>
    %155 = vector.shape_cast %154 : vector<1x32x32xf32> to vector<32x32xf32>
    %cst_168 = arith.constant dense<0.000000e+00> : vector<200x32xf32>
    %156 = tpu.matmul %153, %155, %cst_168 {dimension_numbers = #tpu.dot_dimension_numbers<[1], [0], [0], [1], [0, 0, 1, 1], [], []>} : vector<200x32xf32>, vector<32x32xf32>, vector<200x32xf32> -> vector<200x32xf32>
    %157 = arith.addf %152, %156 : vector<200x32xf32>
    %c22_169 = arith.constant 22 : index
    %c0_170 = arith.constant 0 : index
    %158 = vector.load %arg13[%c22_169, %c0_170] : memref<224x32xf32, #tpu.memory_space<vmem>>, vector<200x32xf32>
    %c8_171 = arith.constant 8 : index
    %c0_172 = arith.constant 0 : index
    %c0_173 = arith.constant 0 : index
    %159 = vector.load %arg8[%c8_171, %c0_172, %c0_173] : memref<9x32x32xf32, #tpu.memory_space<vmem>>, vector<1x32x32xf32>
    %160 = vector.shape_cast %159 : vector<1x32x32xf32> to vector<32x32xf32>
    %cst_174 = arith.constant dense<0.000000e+00> : vector<200x32xf32>
    %161 = tpu.matmul %158, %160, %cst_174 {dimension_numbers = #tpu.dot_dimension_numbers<[1], [0], [0], [1], [0, 0, 1, 1], [], []>} : vector<200x32xf32>, vector<32x32xf32>, vector<200x32xf32> -> vector<200x32xf32>
    %162 = arith.addf %157, %161 : vector<200x32xf32>
    %c0_175 = arith.constant 0 : index
    %c0_176 = arith.constant 0 : index
    %163 = vector.load %arg9[%c0_175, %c0_176] : memref<1x32xf32, #tpu.memory_space<vmem>>, vector<1x32xf32>
    %164 = vector.broadcast %163 : vector<1x32xf32> to vector<200x32xf32>
    %165 = arith.addf %162, %164 : vector<200x32xf32>
    %cst_177 = arith.constant 0.000000e+00 : f32
    %166 = vector.broadcast %cst_177 : f32 to vector<200x32xf32>
    %167 = arith.maximumf %165, %166 : vector<200x32xf32>
    %c0_178 = arith.constant 0 : index
    %c0_179 = arith.constant 0 : index
    %168 = vector.load %arg10[%c0_178, %c0_179] : memref<200x32xf32, #tpu.memory_space<vmem>>, vector<200x32xf32>
    tpu.vector_store %arg10[%c0_178, %c0_179], %167 {strides = array<i32>} : memref<200x32xf32, #tpu.memory_space<vmem>>, vector<200x32xf32>,
    return
  }
  func.func @transform_0(%arg0: i32) -> (i32, i32) {
    %c0_i32 = arith.constant 0 : i32
    %c0_i32_0 = arith.constant 0 : i32
    return %arg0, %c0_i32 : i32, i32
  }
  func.func @transform_1(%arg0: i32) -> (i32, i32) {
    %c0_i32 = arith.constant 0 : i32
    %c0_i32_0 = arith.constant 0 : i32
    %c0_i32_1 = arith.constant 0 : i32
    return %c0_i32, %c0_i32_0 : i32, i32
  }
  func.func @transform_2(%arg0: i32) -> (i32, i32) {
    %c0_i32 = arith.constant 0 : i32
    %c0_i32_0 = arith.constant 0 : i32
    %c0_i32_1 = arith.constant 0 : i32
    return %c0_i32, %c0_i32_0 : i32, i32
  }
  func.func @transform_3(%arg0: i32) -> (i32, i32, i32) {
    %c0_i32 = arith.constant 0 : i32
    %c0_i32_0 = arith.constant 0 : i32
    %c0_i32_1 = arith.constant 0 : i32
    %c0_i32_2 = arith.constant 0 : i32
    return %c0_i32, %c0_i32_0, %c0_i32_1 : i32, i32, i32
  }
  func.func @transform_4(%arg0: i32) -> (i32, i32) {
    %c0_i32 = arith.constant 0 : i32
    %c0_i32_0 = arith.constant 0 : i32
    %c0_i32_1 = arith.constant 0 : i32
    return %c0_i32, %c0_i32_0 : i32, i32
  }
  func.func @transform_5(%arg0: i32) -> (i32, i32, i32) {
    %c0_i32 = arith.constant 0 : i32
    %c0_i32_0 = arith.constant 0 : i32
    %c0_i32_1 = arith.constant 0 : i32
    %c0_i32_2 = arith.constant 0 : i32
    return %c0_i32, %c0_i32_0, %c0_i32_1 : i32, i32, i32
  }
  func.func @transform_6(%arg0: i32) -> (i32, i32) {
    %c0_i32 = arith.constant 0 : i32
    %c0_i32_0 = arith.constant 0 : i32
    %c0_i32_1 = arith.constant 0 : i32
    return %c0_i32, %c0_i32_0 : i32, i32
  }
  func.func @transform_7(%arg0: i32) -> (i32, i32, i32) {
    %c0_i32 = arith.constant 0 : i32
    %c0_i32_0 = arith.constant 0 : i32
    %c0_i32_1 = arith.constant 0 : i32
    %c0_i32_2 = arith.constant 0 : i32
    return %c0_i32, %c0_i32_0, %c0_i32_1 : i32, i32, i32
  }
  func.func @transform_8(%arg0: i32) -> (i32, i32) {
    %c0_i32 = arith.constant 0 : i32
    %c0_i32_0 = arith.constant 0 : i32
    %c0_i32_1 = arith.constant 0 : i32
    return %c0_i32, %c0_i32_0 : i32, i32
  }
  func.func @transform_9(%arg0: i32) -> (i32, i32) {
    %c0_i32 = arith.constant 0 : i32
    %c0_i32_0 = arith.constant 0 : i32
    return %arg0, %c0_i32 : i32, i32
  }
}

module attributes {stable_mosaic.version = 11 : i64} {
  func.func @_tail_kernel(%arg0: i32, %arg1: memref<2x512xf32, #tpu.memory_space<vmem>>, %arg2: memref<512x32xf32, #tpu.memory_space<vmem>>, %arg3: memref<1x32xf32, #tpu.memory_space<vmem>>, %arg4: memref<1x32xf32, #tpu.memory_space<vmem>>, %arg5: memref<1x32xf32, #tpu.memory_space<vmem>>, %arg6: memref<32x32xf32, #tpu.memory_space<vmem>>, %arg7: memref<1x32xf32, #tpu.memory_space<vmem>>, %arg8: memref<32x32xf32, #tpu.memory_space<vmem>>, %arg9: memref<1x32xf32, #tpu.memory_space<vmem>>, %arg10: memref<32x8xf32, #tpu.memory_space<vmem>>, %arg11: memref<1x8xf32, #tpu.memory_space<vmem>>, %arg12: memref<2x4xf32, #tpu.memory_space<vmem>>, %arg13: memref<2x4xf32, #tpu.memory_space<vmem>>) attributes {dimension_semantics = [#tpu.dimension_semantics<parallel>], iteration_bounds = array<i64: 1>, scalar_prefetch = 0 : i64, scratch_operands = 0 : i64, tpu.core_type = #tpu.core_type<tc>, window_params = [{transform_indices = @transform_0, window_bounds = array<i64: 2, 512>}, {pipeline_mode = #tpu.pipeline_mode<synchronous>, transform_indices = @transform_1, window_bounds = array<i64: 512, 32>}, {pipeline_mode = #tpu.pipeline_mode<synchronous>, transform_indices = @transform_2, window_bounds = array<i64: 1, 32>}, {pipeline_mode = #tpu.pipeline_mode<synchronous>, transform_indices = @transform_3, window_bounds = array<i64: 1, 32>}, {pipeline_mode = #tpu.pipeline_mode<synchronous>, transform_indices = @transform_4, window_bounds = array<i64: 1, 32>}, {pipeline_mode = #tpu.pipeline_mode<synchronous>, transform_indices = @transform_5, window_bounds = array<i64: 32, 32>}, {pipeline_mode = #tpu.pipeline_mode<synchronous>, transform_indices = @transform_6, window_bounds = array<i64: 1, 32>}, {pipeline_mode = #tpu.pipeline_mode<synchronous>, transform_indices = @transform_7, window_bounds = array<i64: 32, 32>}, {pipeline_mode = #tpu.pipeline_mode<synchronous>, transform_indices = @transform_8, window_bounds = array<i64: 1, 32>}, {pipeline_mode = #tpu.pipeline_mode<synchronous>, transform_indices = @transform_9, window_bounds = array<i64: 32, 8>}, {pipeline_mode = #tpu.pipeline_mode<synchronous>, transform_indices = @transform_10, window_bounds = array<i64: 1, 8>}, {transform_indices = @transform_11, window_bounds = array<i64: 2, 4>}, {transform_indices = @transform_12, window_bounds = array<i64: 2, 4>}]} {
    %c0 = arith.constant 0 : index
    %c0_0 = arith.constant 0 : index
    %0 = vector.load %arg1[%c0, %c0_0] : memref<2x512xf32, #tpu.memory_space<vmem>>, vector<2x512xf32>
    %c0_1 = arith.constant 0 : index
    %c0_2 = arith.constant 0 : index
    %1 = vector.load %arg2[%c0_1, %c0_2] : memref<512x32xf32, #tpu.memory_space<vmem>>, vector<512x32xf32>
    %cst = arith.constant dense<0.000000e+00> : vector<2x32xf32>
    %2 = tpu.matmul %0, %1, %cst {dimension_numbers = #tpu.dot_dimension_numbers<[1], [0], [0], [1], [0, 0, 1, 1], [], []>} : vector<2x512xf32>, vector<512x32xf32>, vector<2x32xf32> -> vector<2x32xf32>
    %c0_3 = arith.constant 0 : index
    %c0_4 = arith.constant 0 : index
    %3 = vector.load %arg3[%c0_3, %c0_4] : memref<1x32xf32, #tpu.memory_space<vmem>>, vector<1x32xf32>
    %4 = vector.broadcast %3 : vector<1x32xf32> to vector<2x32xf32>
    %5 = arith.addf %2, %4 : vector<2x32xf32>
    %cst_5 = arith.constant dense<0.000000e+00> : vector<2xf32>
    %6 = vector.multi_reduction <add>, %5, %cst_5 [1] : vector<2x32xf32> to vector<2xf32>
    %7 = vector.shape_cast %6 : vector<2xf32> to vector<2x1xf32>
    %cst_6 = arith.constant 3.200000e+01 : f32
    %8 = vector.broadcast %cst_6 : f32 to vector<2x1xf32>
    %9 = arith.divf %7, %8 : vector<2x1xf32>
    %10 = vector.broadcast %9 : vector<2x1xf32> to vector<2x32xf32>
    %11 = arith.subf %5, %10 : vector<2x32xf32>
    %12 = arith.mulf %11, %11 : vector<2x32xf32>
    %cst_7 = arith.constant dense<0.000000e+00> : vector<2xf32>
    %13 = vector.multi_reduction <add>, %12, %cst_7 [1] : vector<2x32xf32> to vector<2xf32>
    %14 = vector.shape_cast %13 : vector<2xf32> to vector<2x1xf32>
    %cst_8 = arith.constant 3.200000e+01 : f32
    %15 = vector.broadcast %cst_8 : f32 to vector<2x1xf32>
    %16 = arith.divf %14, %15 : vector<2x1xf32>
    %17 = vector.broadcast %9 : vector<2x1xf32> to vector<2x32xf32>
    %18 = arith.subf %5, %17 : vector<2x32xf32>
    %cst_9 = arith.constant 9.99999974E-6 : f32
    %19 = vector.broadcast %cst_9 : f32 to vector<2x1xf32>
    %20 = arith.addf %16, %19 : vector<2x1xf32>
    %21 = math.rsqrt %20 : vector<2x1xf32>
    %22 = vector.broadcast %21 : vector<2x1xf32> to vector<2x32xf32>
    %23 = arith.mulf %18, %22 : vector<2x32xf32>
    %c0_10 = arith.constant 0 : index
    %c0_11 = arith.constant 0 : index
    %24 = vector.load %arg4[%c0_10, %c0_11] : memref<1x32xf32, #tpu.memory_space<vmem>>, vector<1x32xf32>
    %25 = vector.broadcast %24 : vector<1x32xf32> to vector<2x32xf32>
    %26 = arith.mulf %23, %25 : vector<2x32xf32>
    %c0_12 = arith.constant 0 : index
    %c0_13 = arith.constant 0 : index
    %27 = vector.load %arg5[%c0_12, %c0_13] : memref<1x32xf32, #tpu.memory_space<vmem>>, vector<1x32xf32>
    %28 = vector.broadcast %27 : vector<1x32xf32> to vector<2x32xf32>
    %29 = arith.addf %26, %28 : vector<2x32xf32>
    %30 = math.tanh %29 : vector<2x32xf32>
    %c0_14 = arith.constant 0 : index
    %c0_15 = arith.constant 0 : index
    %31 = vector.load %arg6[%c0_14, %c0_15] : memref<32x32xf32, #tpu.memory_space<vmem>>, vector<32x32xf32>
    %cst_16 = arith.constant dense<0.000000e+00> : vector<2x32xf32>
    %32 = tpu.matmul %30, %31, %cst_16 {dimension_numbers = #tpu.dot_dimension_numbers<[1], [0], [0], [1], [0, 0, 1, 1], [], []>} : vector<2x32xf32>, vector<32x32xf32>, vector<2x32xf32> -> vector<2x32xf32>
    %c0_17 = arith.constant 0 : index
    %c0_18 = arith.constant 0 : index
    %33 = vector.load %arg7[%c0_17, %c0_18] : memref<1x32xf32, #tpu.memory_space<vmem>>, vector<1x32xf32>
    %34 = vector.broadcast %33 : vector<1x32xf32> to vector<2x32xf32>
    %35 = arith.addf %32, %34 : vector<2x32xf32>
    %cst_19 = arith.constant 0.000000e+00 : f32
    %36 = vector.broadcast %cst_19 : f32 to vector<2x32xf32>
    %37 = arith.maximumf %35, %36 : vector<2x32xf32>
    %c0_20 = arith.constant 0 : index
    %c0_21 = arith.constant 0 : index
    %38 = vector.load %arg8[%c0_20, %c0_21] : memref<32x32xf32, #tpu.memory_space<vmem>>, vector<32x32xf32>
    %cst_22 = arith.constant dense<0.000000e+00> : vector<2x32xf32>
    %39 = tpu.matmul %37, %38, %cst_22 {dimension_numbers = #tpu.dot_dimension_numbers<[1], [0], [0], [1], [0, 0, 1, 1], [], []>} : vector<2x32xf32>, vector<32x32xf32>, vector<2x32xf32> -> vector<2x32xf32>
    %c0_23 = arith.constant 0 : index
    %c0_24 = arith.constant 0 : index
    %40 = vector.load %arg9[%c0_23, %c0_24] : memref<1x32xf32, #tpu.memory_space<vmem>>, vector<1x32xf32>
    %41 = vector.broadcast %40 : vector<1x32xf32> to vector<2x32xf32>
    %42 = arith.addf %39, %41 : vector<2x32xf32>
    %cst_25 = arith.constant 0.000000e+00 : f32
    %43 = vector.broadcast %cst_25 : f32 to vector<2x32xf32>
    %44 = arith.maximumf %42, %43 : vector<2x32xf32>
    %c0_26 = arith.constant 0 : index
    %c0_27 = arith.constant 0 : index
    %45 = vector.load %arg10[%c0_26, %c0_27] : memref<32x8xf32, #tpu.memory_space<vmem>>, vector<32x8xf32>
    %cst_28 = arith.constant dense<0.000000e+00> : vector<2x8xf32>
    %46 = tpu.matmul %44, %45, %cst_28 {dimension_numbers = #tpu.dot_dimension_numbers<[1], [0], [0], [1], [0, 0, 1, 1], [], []>} : vector<2x32xf32>, vector<32x8xf32>, vector<2x8xf32> -> vector<2x8xf32>
    %c0_29 = arith.constant 0 : index
    %c0_30 = arith.constant 0 : index
    %47 = vector.load %arg11[%c0_29, %c0_30] : memref<1x8xf32, #tpu.memory_space<vmem>>, vector<1x8xf32>
    %48 = vector.broadcast %47 : vector<1x8xf32> to vector<2x8xf32>
    %49 = arith.addf %46, %48 : vector<2x8xf32>
    %50 = vector.extract_strided_slice %49 {offsets = [0, 0], sizes = [2, 4], strides = [1, 1]} : vector<2x8xf32> to vector<2x4xf32>
    %51 = vector.extract_strided_slice %49 {offsets = [0, 4], sizes = [2, 4], strides = [1, 1]} : vector<2x8xf32> to vector<2x4xf32>
    %52 = math.tanh %51 : vector<2x4xf32>
    %cst_31 = arith.constant 1.000000e+00 : f32
    %53 = vector.broadcast %cst_31 : f32 to vector<2x4xf32>
    %54 = arith.addf %52, %53 : vector<2x4xf32>
    %cst_32 = arith.constant 6.000000e+00 : f32
    %55 = vector.broadcast %cst_32 : f32 to vector<2x4xf32>
    %56 = arith.mulf %55, %54 : vector<2x4xf32>
    %cst_33 = arith.constant -1.000000e+01 : f32
    %57 = vector.broadcast %cst_33 : f32 to vector<2x4xf32>
    %58 = arith.addf %57, %56 : vector<2x4xf32>
    %c0_34 = arith.constant 0 : index
    %c0_35 = arith.constant 0 : index
    %59 = vector.load %arg12[%c0_34, %c0_35] : memref<2x4xf32, #tpu.memory_space<vmem>>, vector<2x4xf32>
    tpu.vector_store %arg12[%c0_34, %c0_35], %50 {strides = array<i32>} : memref<2x4xf32, #tpu.memory_space<vmem>>, vector<2x4xf32>,
    %60 = math.exp %58 : vector<2x4xf32>
    %c0_36 = arith.constant 0 : index
    %c0_37 = arith.constant 0 : index
    %61 = vector.load %arg13[%c0_36, %c0_37] : memref<2x4xf32, #tpu.memory_space<vmem>>, vector<2x4xf32>
    tpu.vector_store %arg13[%c0_36, %c0_37], %60 {strides = array<i32>} : memref<2x4xf32, #tpu.memory_space<vmem>>, vector<2x4xf32>,
    return
  }
  func.func @transform_0(%arg0: i32) -> (i32, i32) {
    %c0_i32 = arith.constant 0 : i32
    %c0_i32_0 = arith.constant 0 : i32
    return %arg0, %c0_i32 : i32, i32
  }
  func.func @transform_1(%arg0: i32) -> (i32, i32) {
    %c0_i32 = arith.constant 0 : i32
    %c0_i32_0 = arith.constant 0 : i32
    %c0_i32_1 = arith.constant 0 : i32
    return %c0_i32, %c0_i32_0 : i32, i32
  }
  func.func @transform_2(%arg0: i32) -> (i32, i32) {
    %c0_i32 = arith.constant 0 : i32
    %c0_i32_0 = arith.constant 0 : i32
    %c0_i32_1 = arith.constant 0 : i32
    return %c0_i32, %c0_i32_0 : i32, i32
  }
  func.func @transform_3(%arg0: i32) -> (i32, i32) {
    %c0_i32 = arith.constant 0 : i32
    %c0_i32_0 = arith.constant 0 : i32
    %c0_i32_1 = arith.constant 0 : i32
    return %c0_i32, %c0_i32_0 : i32, i32
  }
  func.func @transform_4(%arg0: i32) -> (i32, i32) {
    %c0_i32 = arith.constant 0 : i32
    %c0_i32_0 = arith.constant 0 : i32
    %c0_i32_1 = arith.constant 0 : i32
    return %c0_i32, %c0_i32_0 : i32, i32
  }
  func.func @transform_5(%arg0: i32) -> (i32, i32) {
    %c0_i32 = arith.constant 0 : i32
    %c0_i32_0 = arith.constant 0 : i32
    %c0_i32_1 = arith.constant 0 : i32
    return %c0_i32, %c0_i32_0 : i32, i32
  }
  func.func @transform_6(%arg0: i32) -> (i32, i32) {
    %c0_i32 = arith.constant 0 : i32
    %c0_i32_0 = arith.constant 0 : i32
    %c0_i32_1 = arith.constant 0 : i32
    return %c0_i32, %c0_i32_0 : i32, i32
  }
  func.func @transform_7(%arg0: i32) -> (i32, i32) {
    %c0_i32 = arith.constant 0 : i32
    %c0_i32_0 = arith.constant 0 : i32
    %c0_i32_1 = arith.constant 0 : i32
    return %c0_i32, %c0_i32_0 : i32, i32
  }
  func.func @transform_8(%arg0: i32) -> (i32, i32) {
    %c0_i32 = arith.constant 0 : i32
    %c0_i32_0 = arith.constant 0 : i32
    %c0_i32_1 = arith.constant 0 : i32
    return %c0_i32, %c0_i32_0 : i32, i32
  }
  func.func @transform_9(%arg0: i32) -> (i32, i32) {
    %c0_i32 = arith.constant 0 : i32
    %c0_i32_0 = arith.constant 0 : i32
    %c0_i32_1 = arith.constant 0 : i32
    return %c0_i32, %c0_i32_0 : i32, i32
  }
  func.func @transform_10(%arg0: i32) -> (i32, i32) {
    %c0_i32 = arith.constant 0 : i32
    %c0_i32_0 = arith.constant 0 : i32
    %c0_i32_1 = arith.constant 0 : i32
    return %c0_i32, %c0_i32_0 : i32, i32
  }
  func.func @transform_11(%arg0: i32) -> (i32, i32) {
    %c0_i32 = arith.constant 0 : i32
    %c0_i32_0 = arith.constant 0 : i32
    return %arg0, %c0_i32 : i32, i32
  }
  func.func @transform_12(%arg0: i32) -> (i32, i32) {
    %c0_i32 = arith.constant 0 : i32
    %c0_i32_0 = arith.constant 0 : i32
    return %arg0, %c0_i32 : i32, i32
  }
}

</mosaic_0001>

<llo_original>
// kernel: actor_forward.3
$region0: #{actor_forward.3}
  #allocation0 [shape = 'u32[]', space=smem, size = 0x4, offset = 0x4, fixed_abs, tag = 'smem constant byte address 0x4 - core index']
  #allocation1 [shape = 'u32[72,128]{1,0:T(1,128)}', space=vmem, size = 0x9000, scoped, tag = 'internal scratch']
  %s0 = inlined_call_operand.vmem [shape: f32[2,512], index: 0, kind: input, shape index: {}]
  %s1 = inlined_call_operand.vmem [shape: f32[512,32], index: 1, kind: input, shape index: {}]
  %s2 = inlined_call_operand.vmem [shape: f32[1,32], index: 2, kind: input, shape index: {}]
  %s3 = inlined_call_operand.vmem [shape: f32[1,32], index: 3, kind: input, shape index: {}]
  %s4 = inlined_call_operand.vmem [shape: f32[1,32], index: 4, kind: input, shape index: {}]
  %s5 = inlined_call_operand.vmem [shape: f32[32,32], index: 5, kind: input, shape index: {}]
  %s6 = inlined_call_operand.vmem [shape: f32[1,32], index: 6, kind: input, shape index: {}]
  %s7 = inlined_call_operand.vmem [shape: f32[32,32], index: 7, kind: input, shape index: {}]
  %s8 = inlined_call_operand.vmem [shape: f32[1,32], index: 8, kind: input, shape index: {}]
  %s9 = inlined_call_operand.vmem [shape: f32[32,8], index: 9, kind: input, shape index: {}]
  %s10 = inlined_call_operand.vmem [shape: f32[1,8], index: 10, kind: input, shape index: {}]
  %s11 = inlined_call_operand.hbm [shape: f32[2,4], index: 11, kind: output, shape index: {0}]
  %s12 = inlined_call_operand.hbm [shape: f32[2,4], index: 12, kind: output, shape index: {1}]
  %13 = xla_tuple %s11, %s12
  %s14 = sld [smem:[#allocation0]]
  $region62: #{actor_forward.3} parent=0
    _
  %s16 = ssub.s32 1, %s14
  %s17 = scalar_select 0, %s16, %s14
  $region1: #{actor_forward.3} parent=0
    #allocation2 [shape = 'u8[1024]{0}', space=vmem, size = 0x400, scoped, tag = 'output window, operand 0, single buffered']
    #allocation3 [shape = 's32[1]{0}', space=sflag, size = 0x4, scoped, tag = 'scoped memory for actor_forward.3']
    #allocation4 [shape = 'u8[1024]{0}', space=vmem, size = 0x400, scoped, tag = 'output window, operand 1, single buffered']
    #allocation5 [shape = 's32[1]{0}', space=sflag, size = 0x4, scoped, tag = 'scoped memory for actor_forward.3']
    %18 = vsyncpa [#allocation3], 0
    %19 = vsyncpa [#allocation5], 0
    // Predicated region
    $region2: #{actor_forward.3} parent=1 // pred_check
      _
    $region3: #{actor_forward.3} parent=1 // pred_check_branch
      %21 = sbr.rel (0) target = $region5
    $region4: #{actor_forward.3} parent=1 // pred_region
      _
    $region5: #{actor_forward.3} parent=1 // pred_fallthru
      _
    // Predicated region
    $region6: #{actor_forward.3} parent=1 // pred_check
      _
    $region7: #{actor_forward.3} parent=1 // pred_check_branch
      %23 = sbr.rel (0) target = $region9
    $region8: #{actor_forward.3} parent=1 // pred_region
      _
    $region9: #{actor_forward.3} parent=1 // pred_fallthru
      _
    // Predicated region
    $region10: #{actor_forward.3} parent=1 // pred_check
      _
    $region11: #{actor_forward.3} parent=1 // pred_check_branch
      %25 = sbr.rel (0) target = $region13
    $region12: #{actor_forward.3} parent=1 // pred_region
      _
    $region13: #{actor_forward.3} parent=1 // pred_fallthru
      _
    // Predicated region
    $region14: #{actor_forward.3} parent=1 // pred_check
      _
    $region15: #{actor_forward.3} parent=1 // pred_check_branch
      %27 = sbr.rel (0) target = $region17
    $region16: #{actor_forward.3} parent=1 // pred_region
      _
    $region17: #{actor_forward.3} parent=1 // pred_fallthru
      _
    // Predicated region
    $region18: #{actor_forward.3} parent=1 // pred_check
      _
    $region19: #{actor_forward.3} parent=1 // pred_check_branch
      %29 = sbr.rel (0) target = $region21
    $region20: #{actor_forward.3} parent=1 // pred_region
      _
    $region21: #{actor_forward.3} parent=1 // pred_fallthru
      _
    // Predicated region
    $region22: #{actor_forward.3} parent=1 // pred_check
      _
    $region23: #{actor_forward.3} parent=1 // pred_check_branch
      %31 = sbr.rel (0) target = $region25
    $region24: #{actor_forward.3} parent=1 // pred_region
      _
    $region25: #{actor_forward.3} parent=1 // pred_fallthru
      _
    // Predicated region
    $region26: #{actor_forward.3} parent=1 // pred_check
      _
    $region27: #{actor_forward.3} parent=1 // pred_check_branch
      %33 = sbr.rel (0) target = $region29
    $region28: #{actor_forward.3} parent=1 // pred_region
      _
    $region29: #{actor_forward.3} parent=1 // pred_fallthru
      _
    // Predicated region
    $region30: #{actor_forward.3} parent=1 // pred_check
      _
    $region31: #{actor_forward.3} parent=1 // pred_check_branch
      %35 = sbr.rel (0) target = $region33
    $region32: #{actor_forward.3} parent=1 // pred_region
      _
    $region33: #{actor_forward.3} parent=1 // pred_fallthru
      _
    // Predicated region
    $region34: #{actor_forward.3} parent=1 // pred_check
      _
    $region35: #{actor_forward.3} parent=1 // pred_check_branch
      %37 = sbr.rel (0) target = $region37
    $region36: #{actor_forward.3} parent=1 // pred_region
      _
    $region37: #{actor_forward.3} parent=1 // pred_fallthru
      _
    // Predicated region
    $region38: #{actor_forward.3} parent=1 // pred_check
      _
    $region39: #{actor_forward.3} parent=1 // pred_check_branch
      %39 = sbr.rel (0) target = $region41
    $region40: #{actor_forward.3} parent=1 // pred_region
      _
    $region41: #{actor_forward.3} parent=1 // pred_fallthru
      _
    // Predicated region
    $region42: #{actor_forward.3} parent=1 // pred_check
      _
    $region43: #{actor_forward.3} parent=1 // pred_check_branch
      %41 = sbr.rel (0) target = $region45
    $region44: #{actor_forward.3} parent=1 // pred_region
      _
    $region45: #{actor_forward.3} parent=1 // pred_fallthru
      _
    %v42 = vld [vmem:[%s0] sm:$0xff]
    %v43 = vld [vmem:[%s1] sm:$0xff]
    %v44 = vld [vmem:[%s1 + $0x8] sm:$0xff]
    %v45 = vld [vmem:[%s1 + $0x10] sm:$0xff]
    %v46 = vld [vmem:[%s1 + $0x18] sm:$0xff]
    %v47 = vld [vmem:[%s1 + $0x20] sm:$0xff]
    %v48 = vld [vmem:[%s1 + $0x28] sm:$0xff]
    %v49 = vld [vmem:[%s1 + $0x30] sm:$0xff]
    %v50 = vld [vmem:[%s1 + $0x38] sm:$0xff]
    %v51 = vld [vmem:[%s1 + $0x40] sm:$0xff]
    %v52 = vld [vmem:[%s1 + $0x48] sm:$0xff]
    %v53 = vld [vmem:[%s1 + $0x50] sm:$0xff]
    %v54 = vld [vmem:[%s1 + $0x58] sm:$0xff]
    %v55 = vld [vmem:[%s1 + $0x60] sm:$0xff]
    %v56 = vld [vmem:[%s1 + $0x68] sm:$0xff]
    %v57 = vld [vmem:[%s1 + $0x70] sm:$0xff]
    %v58 = vld [vmem:[%s1 + $0x78] sm:$0xff]
    %v59 = vld [vmem:[%s1 + $0x80] sm:$0xff]
    %v60 = vld [vmem:[%s1 + $0x88] sm:$0xff]
    %v61 = vld [vmem:[%s1 + $0x90] sm:$0xff]
    %v62 = vld [vmem:[%s1 + $0x98] sm:$0xff]
    %v63 = vld [vmem:[%s1 + $0xa0] sm:$0xff]
    %v64 = vld [vmem:[%s1 + $0xa8] sm:$0xff]
    %v65 = vld [vmem:[%s1 + $0xb0] sm:$0xff]
    %v66 = vld [vmem:[%s1 + $0xb8] sm:$0xff]
    %v67 = vld [vmem:[%s1 + $0xc0] sm:$0xff]
    %v68 = vld [vmem:[%s1 + $0xc8] sm:$0xff]
    %v69 = vld [vmem:[%s1 + $0xd0] sm:$0xff]
    %v70 = vld [vmem:[%s1 + $0xd8] sm:$0xff]
    %v71 = vld [vmem:[%s1 + $0xe0] sm:$0xff]
    %v72 = vld [vmem:[%s1 + $0xe8] sm:$0xff]
    %v73 = vld [vmem:[%s1 + $0xf0] sm:$0xff]
    %v74 = vld [vmem:[%s1 + $0xf8] sm:$0xff]
    %v75 = vld [vmem:[%s1 + $0x100] sm:$0xff]
    %v76 = vld [vmem:[%s1 + $0x108] sm:$0xff]
    %v77 = vld [vmem:[%s1 + $0x110] sm:$0xff]
    %v78 = vld [vmem:[%s1 + $0x118] sm:$0xff]
    %v79 = vld [vmem:[%s1 + $0x120] sm:$0xff]
    %v80 = vld [vmem:[%s1 + $0x128] sm:$0xff]
    %v81 = vld [vmem:[%s1 + $0x130] sm:$0xff]
    %v82 = vld [vmem:[%s1 + $0x138] sm:$0xff]
    %v83 = vld [vmem:[%s1 + $0x140] sm:$0xff]
    %v84 = vld [vmem:[%s1 + $0x148] sm:$0xff]
    %v85 = vld [vmem:[%s1 + $0x150] sm:$0xff]
    %v86 = vld [vmem:[%s1 + $0x158] sm:$0xff]
    %v87 = vld [vmem:[%s1 + $0x160] sm:$0xff]
    %v88 = vld [vmem:[%s1 + $0x168] sm:$0xff]
    %v89 = vld [vmem:[%s1 + $0x170] sm:$0xff]
    %v90 = vld [vmem:[%s1 + $0x178] sm:$0xff]
    %v91 = vld [vmem:[%s1 + $0x180] sm:$0xff]
    %v92 = vld [vmem:[%s1 + $0x188] sm:$0xff]
    %v93 = vld [vmem:[%s1 + $0x190] sm:$0xff]
    %v94 = vld [vmem:[%s1 + $0x198] sm:$0xff]
    %v95 = vld [vmem:[%s1 + $0x1a0] sm:$0xff]
    %v96 = vld [vmem:[%s1 + $0x1a8] sm:$0xff]
    %v97 = vld [vmem:[%s1 + $0x1b0] sm:$0xff]
    %v98 = vld [vmem:[%s1 + $0x1b8] sm:$0xff]
    %v99 = vld [vmem:[%s1 + $0x1c0] sm:$0xff]
    %v100 = vld [vmem:[%s1 + $0x1c8] sm:$0xff]
    %v101 = vld [vmem:[%s1 + $0x1d0] sm:$0xff]
    %v102 = vld [vmem:[%s1 + $0x1d8] sm:$0xff]
    %v103 = vld [vmem:[%s1 + $0x1e0] sm:$0xff]
    %v104 = vld [vmem:[%s1 + $0x1e8] sm:$0xff]
    %v105 = vld [vmem:[%s1 + $0x1f0] sm:$0xff]
    %v106 = vld [vmem:[%s1 + $0x1f8] sm:$0xff]
    %v107 = vld [vmem:[%s2] sm:$0x1]
    %v109 = vperm.slane %v107, 0
    %112 = vst [vmem:[#allocation1] ss:$4 sm:$0xff] %v42
    %v113 = vld.sshfl [vmem:[#allocation1] sm:$0xff pattern:$0x73625140]
    %v114 = vld.sshfl [vmem:[#allocation1 + $0x8] sm:$0xff pattern:$0x73625140]
    %v115 = vld.sshfl [vmem:[#allocation1 + $0x10] sm:$0xff pattern:$0x73625140]
    %v116 = vld.sshfl [vmem:[#allocation1 + $0x18] sm:$0xff pattern:$0x73625140]
    %121 = vmatpush.msra.mxu0 %v58
    %122 = vmatpush.msra.mxu0 %v57
    %123 = vmatpush.msra.mxu0 %v56
    %124 = vmatpush.msra.mxu0 %v55
    %125 = vmatpush.msra.mxu0 %v54
    %126 = vmatpush.msra.mxu0 %v53
    %127 = vmatpush.msra.mxu0 %v52
    %128 = vmatpush.msra.mxu0 %v51
    %129 = vmatpush.msra.mxu0 %v50
    %130 = vmatpush.msra.mxu0 %v49
    %131 = vmatpush.msra.mxu0 %v48
    %132 = vmatpush.msra.mxu0 %v47
    %133 = vmatpush.msra.mxu0 %v46
    %134 = vmatpush.msra.mxu0 %v45
    %135 = vmatpush.msra.mxu0 %v44
    %136 = vmatpush.msra.mxu0 %v43
    %137 = vmatmul.f32.gmra.mxu0 %v113
    %v138 = vpop.f32.mrf.mxu0
    %v139 = vadd.f32 %v109, %v138
    %140 = vdwg.mxu0
    %141 = vmatpush.msra.mxu0 %v74
    %142 = vmatpush.msra.mxu0 %v73
    %143 = vmatpush.msra.mxu0 %v72
    %144 = vmatpush.msra.mxu0 %v71
    %145 = vmatpush.msra.mxu0 %v70
    %146 = vmatpush.msra.mxu0 %v69
    %147 = vmatpush.msra.mxu0 %v68
    %148 = vmatpush.msra.mxu0 %v67
    %149 = vmatpush.msra.mxu0 %v66
    %150 = vmatpush.msra.mxu0 %v65
    %151 = vmatpush.msra.mxu0 %v64
    %152 = vmatpush.msra.mxu0 %v63
    %153 = vmatpush.msra.mxu0 %v62
    %154 = vmatpush.msra.mxu0 %v61
    %155 = vmatpush.msra.mxu0 %v60
    %156 = vmatpush.msra.mxu0 %v59
    %157 = vmatmul.f32.gmra.mxu0 %v114
    %v158 = vpop.f32.mrf.mxu0
    %v159 = vadd.f32 %v139, %v158
    %160 = vdwg.mxu0
    %161 = vmatpush.msra.mxu0 %v90
    %162 = vmatpush.msra.mxu0 %v89
    %163 = vmatpush.msra.mxu0 %v88
    %164 = vmatpush.msra.mxu0 %v87
    %165 = vmatpush.msra.mxu0 %v86
    %166 = vmatpush.msra.mxu0 %v85
    %167 = vmatpush.msra.mxu0 %v84
    %168 = vmatpush.msra.mxu0 %v83
    %169 = vmatpush.msra.mxu0 %v82
    %170 = vmatpush.msra.mxu0 %v81
    %171 = vmatpush.msra.mxu0 %v80
    %172 = vmatpush.msra.mxu0 %v79
    %173 = vmatpush.msra.mxu0 %v78
    %174 = vmatpush.msra.mxu0 %v77
    %175 = vmatpush.msra.mxu0 %v76
    %176 = vmatpush.msra.mxu0 %v75
    %177 = vmatmul.f32.gmra.mxu0 %v115
    %v178 = vpop.f32.mrf.mxu0
    %v179 = vadd.f32 %v159, %v178
    %180 = vdwg.mxu0
    %181 = vmatpush.msra.mxu0 %v106
    %182 = vmatpush.msra.mxu0 %v105
    %183 = vmatpush.msra.mxu0 %v104
    %184 = vmatpush.msra.mxu0 %v103
    %185 = vmatpush.msra.mxu0 %v102
    %186 = vmatpush.msra.mxu0 %v101
    %187 = vmatpush.msra.mxu0 %v100
    %188 = vmatpush.msra.mxu0 %v99
    %189 = vmatpush.msra.mxu0 %v98
    %190 = vmatpush.msra.mxu0 %v97
    %191 = vmatpush.msra.mxu0 %v96
    %192 = vmatpush.msra.mxu0 %v95
    %193 = vmatpush.msra.mxu0 %v94
    %194 = vmatpush.msra.mxu0 %v93
    %195 = vmatpush.msra.mxu0 %v92
    %196 = vmatpush.msra.mxu0 %v91
    %197 = vmatmul.f32.gmra.mxu0 %v116
    %v198 = vpop.f32.mrf.mxu0
    %v199 = vadd.f32 %v179, %v198
    %200 = vdwg.mxu0
    %vm201 = vcmask 254976
    %v202 = vsel %vm201, %v199, 0.0
    %203 = vadd.xlane.f32.xlu0 %v202
    %v204 = vpop.xlane.xlu0 %203
    %v205 = vrcp.pop 32.0
    %v206 = vmul.f32 32.0, %v205
    %v207 = vsub.f32 1.0, %v206
    %v208 = vmul.f32 %v205, %v207
    %v209 = vadd.f32 %v205, %v208
    %vm210 = vweird.f32 %v205
    %v211 = vsel %vm210, %v205, %v209
    %v212 = vmul.f32 %v204, %v211
    %v213 = vsub.f32 %v199, %v212
    %v214 = vmul.f32 %v213, %v213
    %v215 = vsel %vm201, %v214, 0.0
    %216 = vadd.xlane.f32.xlu0 %v215
    %v217 = vpop.xlane.xlu0 %216
    %v218 = vmul.f32 %v217, %v211
    %v219 = vadd.f32 %v218, 1e-05
    %v220 = vrsqrt.pop %v219
    %v221 = vmul.f32 %v220, %v219
    %v222 = vmul.f32 %v221, %v220
    %v223 = vmul.f32 0.5, %v222
    %v224 = vsub.f32 1.5, %v223
    %v225 = vmul.f32 %v220, %v224
    %vm226 = vweird.f32 %v219
    %vm227 = vweird.f32 %v220
    %vm228 = vmor %vm226, %vm227
    %v229 = vsel %vm228, %v220, %v225
    %v230 = vmul.f32 %v213, %v229
    %v231 = vld [vmem:[%s3] sm:$0x1]
    %v233 = vperm.slane %v231, 0
    %v235 = vmul.f32 %v230, %v233
    %v236 = vld [vmem:[%s4] sm:$0x1]
    %v238 = vperm.slane %v236, 0
    %v240 = vadd.f32 %v235, %v238
    %v241 = vtanh.pop %v240
    %v242 = vld [vmem:[%s5] sm:$0xff]
    %v243 = vld [vmem:[%s5 + $0x8] sm:$0xff]
    %v244 = vld [vmem:[%s5 + $0x10] sm:$0xff]
    %v245 = vld [vmem:[%s5 + $0x18] sm:$0xff]
    %v246 = vld [vmem:[%s6] sm:$0x1]
    %v248 = vperm.slane %v246, 0
    %vm250 = vcmask 261120
    %v252 = vsel %vm250, %v241, 0
    %254 = vmatpush.msra.mxu0 0.0
    %255 = vmatpush.msra.mxu0 0.0
    %256 = vmatpush.msra.mxu0 0.0
    %257 = vmatpush.msra.mxu0 0.0
    %258 = vmatpush.msra.mxu0 0.0
    %259 = vmatpush.msra.mxu0 0.0
    %260 = vmatpush.msra.mxu0 0.0
    %261 = vmatpush.msra.mxu0 0.0
    %262 = vmatpush.msra.mxu0 0.0
    %263 = vmatpush.msra.mxu0 0.0
    %264 = vmatpush.msra.mxu0 0.0
    %265 = vmatpush.msra.mxu0 0.0
    %266 = vmatpush.msra.mxu0 %v245
    %267 = vmatpush.msra.mxu0 %v244
    %268 = vmatpush.msra.mxu0 %v243
    %269 = vmatpush.msra.mxu0 %v242
    %270 = vmatmul.f32.gmra.mxu0 %v252
    %v271 = vpop.f32.mrf.mxu0
    %v272 = vadd.f32 %v248, %v271
    %273 = vdwg.mxu0
    %v274 = vmax.f32 %v272, 0.0
    %v275 = vld [vmem:[%s7] sm:$0xff]
    %v276 = vld [vmem:[%s7 + $0x8] sm:$0xff]
    %v277 = vld [vmem:[%s7 + $0x10] sm:$0xff]
    %v278 = vld [vmem:[%s7 + $0x18] sm:$0xff]
    %v279 = vld [vmem:[%s8] sm:$0x1]
    %v281 = vperm.slane %v279, 0
    %v284 = vsel %vm250, %v274, 0
    %286 = vmatpush.msra.mxu0 0.0
    %287 = vmatpush.msra.mxu0 0.0
    %288 = vmatpush.msra.mxu0 0.0
    %289 = vmatpush.msra.mxu0 0.0
    %290 = vmatpush.msra.mxu0 0.0
    %291 = vmatpush.msra.mxu0 0.0
    %292 = vmatpush.msra.mxu0 0.0
    %293 = vmatpush.msra.mxu0 0.0
    %294 = vmatpush.msra.mxu0 0.0
    %295 = vmatpush.msra.mxu0 0.0
    %296 = vmatpush.msra.mxu0 0.0
    %297 = vmatpush.msra.mxu0 0.0
    %298 = vmatpush.msra.mxu0 %v278
    %299 = vmatpush.msra.mxu0 %v277
    %300 = vmatpush.msra.mxu0 %v276
    %301 = vmatpush.msra.mxu0 %v275
    %302 = vmatmul.f32.gmra.mxu0 %v284
    %v303 = vpop.f32.mrf.mxu0
    %v304 = vadd.f32 %v281, %v303
    %305 = vdwg.mxu0
    %v306 = vmax.f32 %v304, 0.0
    %v307 = vld [vmem:[%s9] sm:$0xff]
    %v308 = vld [vmem:[%s9 + $0x8] sm:$0xff]
    %v309 = vld [vmem:[%s9 + $0x10] sm:$0xff]
    %v310 = vld [vmem:[%s9 + $0x18] sm:$0xff]
    %v311 = vld [vmem:[%s10] sm:$0x1]
    %v313 = vperm.slane %v311, 0
    %v316 = vsel %vm250, %v306, 0
    %318 = vmatpush.msra.mxu0 0.0
    %319 = vmatpush.msra.mxu0 0.0
    %320 = vmatpush.msra.mxu0 0.0
    %321 = vmatpush.msra.mxu0 0.0
    %322 = vmatpush.msra.mxu0 0.0
    %323 = vmatpush.msra.mxu0 0.0
    %324 = vmatpush.msra.mxu0 0.0
    %325 = vmatpush.msra.mxu0 0.0
    %326 = vmatpush.msra.mxu0 0.0
    %327 = vmatpush.msra.mxu0 0.0
    %328 = vmatpush.msra.mxu0 0.0
    %329 = vmatpush.msra.mxu0 0.0
    %330 = vmatpush.msra.mxu0 %v310
    %331 = vmatpush.msra.mxu0 %v309
    %332 = vmatpush.msra.mxu0 %v308
    %333 = vmatpush.msra.mxu0 %v307
    %334 = vmatmul.f32.gmra.mxu0 %v316
    %v335 = vpop.f32.mrf.mxu0
    %v336 = vadd.f32 %v313, %v335
    %337 = vdwg.mxu0
    %v338 = vtanh.pop %v336
    %v339 = vadd.f32 %v338, 1.0
    %v340 = vmul.f32 %v339, 6.0
    %v341 = vadd.f32 %v340, -10.0
    %vm342 = vcmask 25600
    %343 = vst.msk [vmem:[#allocation2] sm:$0x3] %vm342, %v336
    %v344 = vmul.f32 %v341, 1.442695
    %v345 = vpow.pop %v344
    %347 = vrot.lane.b32.xlu0 %v345, 124
    %v348 = vpop.permute.xlu0 %347
    %350 = vst.msk [vmem:[#allocation4] sm:$0x3] %vm342, %v348
    // Predicated region
    $region46: #{actor_forward.3} parent=1 // pred_check
      _
    $region47: #{actor_forward.3} parent=1 // pred_check_branch
      %352 = sbr.rel (0) target = $region49
    $region48: #{actor_forward.3} parent=1 // pred_region
      %354 = vsyncadd [#allocation3], 0
      %s356 = sshll.u32 [#allocation2], 4
      %s357 = int_to_ptr.vmem [resolvable:$true] %s356
      %s358 = sshll.u32 %s11, 4
      %s359 = int_to_ptr.hbm [resolvable:$true] %s358
      %361 = dma.vmem_to_hbm [thread:$0]  %s357, 32, %s359, [#allocation3]
    $region49: #{actor_forward.3} parent=1 // pred_fallthru
      _
    // Predicated region
    $region50: #{actor_forward.3} parent=1 // pred_check
      _
    $region51: #{actor_forward.3} parent=1 // pred_check_branch
      %363 = sbr.rel (0) target = $region53
    $region52: #{actor_forward.3} parent=1 // pred_region
      %365 = vsyncadd [#allocation5], 0
      %s367 = sshll.u32 [#allocation4], 4
      %s368 = int_to_ptr.vmem [resolvable:$true] %s367
      %s369 = sshll.u32 %s12, 4
      %s370 = int_to_ptr.hbm [resolvable:$true] %s369
      %372 = dma.vmem_to_hbm [thread:$0]  %s368, 32, %s370, [#allocation5]
    $region53: #{actor_forward.3} parent=1 // pred_fallthru
      _
    // Predicated region
    $region54: #{actor_forward.3} parent=1 // pred_check
      _
    $region55: #{actor_forward.3} parent=1 // pred_check_branch
      %374 = sbr.rel (0) target = $region57
    $region56: #{actor_forward.3} parent=1 // pred_region
      %376 = dma.done [#allocation3], 32
    $region57: #{actor_forward.3} parent=1 // pred_fallthru
      _
    // Predicated region
    $region58: #{actor_forward.3} parent=1 // pred_check
      _
    $region59: #{actor_forward.3} parent=1 // pred_check_branch
      %378 = sbr.rel (0) target = $region61
    $region60: #{actor_forward.3} parent=1 // pred_region
      %380 = dma.done [#allocation5], 32
    $region61: #{actor_forward.3} parent=1 // pred_fallthru
      _
    %381 = vsyncpa [#allocation3], 1
    %382 = vsyncpa [#allocation5], 1

// kernel: actor_forward.2
$region0: #{actor_forward.2}
  #allocation0 [shape = 'u32[]', space=smem, size = 0x4, offset = 0x4, fixed_abs, tag = 'smem constant byte address 0x4 - core index']
  #allocation1 [shape = 'u32[72,128]{1,0:T(1,128)}', space=vmem, size = 0x9000, scoped, tag = 'internal scratch']
  #allocation2 [shape = 'f32[224,32]{1,0:T(8,128)}', space=vmem, size = 0x1c000, scoped, tag = 'scratch operand']
  #allocation3 [shape = 'f32[224,32]{1,0:T(8,128)}', space=vmem, size = 0x1c000, scoped, tag = 'scratch operand']
  #allocation4 [shape = 'f32[224,32]{1,0:T(8,128)}', space=vmem, size = 0x1c000, scoped, tag = 'scratch operand']
  %s0 = inlined_call_operand.vmem [shape: f32[200,27], index: 0, kind: input, shape index: {}]
  %s1 = inlined_call_operand.vmem [shape: f32[27,32], index: 1, kind: input, shape index: {}]
  %s2 = inlined_call_operand.vmem [shape: f32[1,32], index: 2, kind: input, shape index: {}]
  %s3 = inlined_call_operand.vmem [shape: f32[9,32,32], index: 3, kind: input, shape index: {}]
  %s4 = inlined_call_operand.vmem [shape: f32[1,32], index: 4, kind: input, shape index: {}]
  %s5 = inlined_call_operand.vmem [shape: f32[9,32,32], index: 5, kind: input, shape index: {}]
  %s6 = inlined_call_operand.vmem [shape: f32[1,32], index: 6, kind: input, shape index: {}]
  %s7 = inlined_call_operand.vmem [shape: f32[9,32,32], index: 7, kind: input, shape index: {}]
  %s8 = inlined_call_operand.vmem [shape: f32[1,32], index: 8, kind: input, shape index: {}]
  %s9 = inlined_call_operand.vmem [shape: f32[200,32], index: 9, kind: output, shape index: {}]
  %s10 = sld [smem:[#allocation0]]
  $region46: #{actor_forward.2} parent=0
    _
  %s12 = ssub.s32 1, %s10
  %s13 = scalar_select 0, %s12, %s10
  // Predicated region
  $region2: #{actor_forward.2} parent=0 // pred_check
    _
  $region3: #{actor_forward.2} parent=0 // pred_check_branch
    %15 = sbr.rel (0) target = $region5
  $region4: #{actor_forward.2} parent=0 // pred_region
    _
  $region5: #{actor_forward.2} parent=0 // pred_fallthru
    _
  // Predicated region
  $region6: #{actor_forward.2} parent=0 // pred_check
    _
  $region7: #{actor_forward.2} parent=0 // pred_check_branch
    %17 = sbr.rel (0) target = $region9
  $region8: #{actor_forward.2} parent=0 // pred_region
    _
  $region9: #{actor_forward.2} parent=0 // pred_fallthru
    _
  // Predicated region
  $region10: #{actor_forward.2} parent=0 // pred_check
    _
  $region11: #{actor_forward.2} parent=0 // pred_check_branch
    %19 = sbr.rel (0) target = $region13
  $region12: #{actor_forward.2} parent=0 // pred_region
    _
  $region13: #{actor_forward.2} parent=0 // pred_fallthru
    _
  // Predicated region
  $region14: #{actor_forward.2} parent=0 // pred_check
    _
  $region15: #{actor_forward.2} parent=0 // pred_check_branch
    %21 = sbr.rel (0) target = $region17
  $region16: #{actor_forward.2} parent=0 // pred_region
    _
  $region17: #{actor_forward.2} parent=0 // pred_fallthru
    _
  // Predicated region
  $region18: #{actor_forward.2} parent=0 // pred_check
    _
  $region19: #{actor_forward.2} parent=0 // pred_check_branch
    %23 = sbr.rel (0) target = $region21
  $region20: #{actor_forward.2} parent=0 // pred_region
    _
  $region21: #{actor_forward.2} parent=0 // pred_fallthru
    _
  // Predicated region
  $region22: #{actor_forward.2} parent=0 // pred_check
    _
  $region23: #{actor_forward.2} parent=0 // pred_check_branch
    %25 = sbr.rel (0) target = $region25
  $region24: #{actor_forward.2} parent=0 // pred_region
    _
  $region25: #{actor_forward.2} parent=0 // pred_fallthru
    _
  // Predicated region
  $region26: #{actor_forward.2} parent=0 // pred_check
    _
  $region27: #{actor_forward.2} parent=0 // pred_check_branch
    %27 = sbr.rel (0) target = $region29
  $region28: #{actor_forward.2} parent=0 // pred_region
    _
  $region29: #{actor_forward.2} parent=0 // pred_fallthru
    _
  // Predicated region
  $region30: #{actor_forward.2} parent=0 // pred_check
    _
  $region31: #{actor_forward.2} parent=0 // pred_check_branch
    %29 = sbr.rel (0) target = $region33
  $region32: #{actor_forward.2} parent=0 // pred_region
    _
  $region33: #{actor_forward.2} parent=0 // pred_fallthru
    _
  // Predicated region
  $region34: #{actor_forward.2} parent=0 // pred_check
    _
  $region35: #{actor_forward.2} parent=0 // pred_check_branch
    %31 = sbr.rel (0) target = $region37
  $region36: #{actor_forward.2} parent=0 // pred_region
    _
  $region37: #{actor_forward.2} parent=0 // pred_fallthru
    _
  %vm32 = vcmask 261120
  %33 = vst.msk [vmem:[#allocation2 + $0xc8] sm:$0xff] %vm32, 0.0
  %34 = vst.msk [vmem:[#allocation2 + $0xd0] sm:$0xff] %vm32, 0.0
  %35 = vst.msk [vmem:[#allocation2 + $0xd8] sm:$0xff] %vm32, 0.0
  %36 = vst.msk [vmem:[#allocation3 + $0xc8] sm:$0xff] %vm32, 0.0
  %37 = vst.msk [vmem:[#allocation3 + $0xd0] sm:$0xff] %vm32, 0.0
  %38 = vst.msk [vmem:[#allocation3 + $0xd8] sm:$0xff] %vm32, 0.0
  %39 = vst.msk [vmem:[#allocation4 + $0xc8] sm:$0xff] %vm32, 0.0
  %40 = vst.msk [vmem:[#allocation4 + $0xd0] sm:$0xff] %vm32, 0.0
  %41 = vst.msk [vmem:[#allocation4 + $0xd8] sm:$0xff] %vm32, 0.0
  %v42 = vld [vmem:[%s0] sm:$0xff]
  %v43 = vld [vmem:[%s0 + $0x8] sm:$0xff]
  %v44 = vld [vmem:[%s0 + $0x10] sm:$0xff]
  %v45 = vld [vmem:[%s0 + $0x18] sm:$0xff]
  %v46 = vld [vmem:[%s0 + $0x20] sm:$0xff]
  %v47 = vld [vmem:[%s0 + $0x28] sm:$0xff]
  %v48 = vld [vmem:[%s0 + $0x30] sm:$0xff]
  %v49 = vld [vmem:[%s0 + $0x38] sm:$0xff]
  %v50 = vld [vmem:[%s0 + $0x40] sm:$0xff]
  %v51 = vld [vmem:[%s0 + $0x48] sm:$0xff]
  %v52 = vld [vmem:[%s0 + $0x50] sm:$0xff]
  %v53 = vld [vmem:[%s0 + $0x58] sm:$0xff]
  %v54 = vld [vmem:[%s0 + $0x60] sm:$0xff]
  %v55 = vld [vmem:[%s0 + $0x68] sm:$0xff]
  %v56 = vld [vmem:[%s0 + $0x70] sm:$0xff]
  %v57 = vld [vmem:[%s0 + $0x78] sm:$0xff]
  %v58 = vld [vmem:[%s0 + $0x80] sm:$0xff]
  %v59 = vld [vmem:[%s0 + $0x88] sm:$0xff]
  %v60 = vld [vmem:[%s0 + $0x90] sm:$0xff]
  %v61 = vld [vmem:[%s0 + $0x98] sm:$0xff]
  %v62 = vld [vmem:[%s0 + $0xa0] sm:$0xff]
  %v63 = vld [vmem:[%s0 + $0xa8] sm:$0xff]
  %v64 = vld [vmem:[%s0 + $0xb0] sm:$0xff]
  %v65 = vld [vmem:[%s0 + $0xb8] sm:$0xff]
  %v66 = vld [vmem:[%s0 + $0xc0] sm:$0xff]
  %v67 = vld [vmem:[%s1] sm:$0xff]
  %v68 = vld [vmem:[%s1 + $0x8] sm:$0xff]
  %v69 = vld [vmem:[%s1 + $0x10] sm:$0xff]
  %v70 = vld [vmem:[%s1 + $0x18] sm:$0x7]
  %v71 = vld [vmem:[%s2] sm:$0x1]
  %v73 = vperm.slane %v71, 0
  %vm75 = vcmask 220160
  %v77 = vsel %vm75, %v42, 0
  %v80 = vsel %vm75, %v43, 0
  %v83 = vsel %vm75, %v44, 0
  %v86 = vsel %vm75, %v45, 0
  %v89 = vsel %vm75, %v46, 0
  %v92 = vsel %vm75, %v47, 0
  %v95 = vsel %vm75, %v48, 0
  %v98 = vsel %vm75, %v49, 0
  %v101 = vsel %vm75, %v50, 0
  %v104 = vsel %vm75, %v51, 0
  %v107 = vsel %vm75, %v52, 0
  %v110 = vsel %vm75, %v53, 0
  %v113 = vsel %vm75, %v54, 0
  %v116 = vsel %vm75, %v55, 0
  %v119 = vsel %vm75, %v56, 0
  %v122 = vsel %vm75, %v57, 0
  %v125 = vsel %vm75, %v58, 0
  %v128 = vsel %vm75, %v59, 0
  %v131 = vsel %vm75, %v60, 0
  %v134 = vsel %vm75, %v61, 0
  %v137 = vsel %vm75, %v62, 0
  %v140 = vsel %vm75, %v63, 0
  %v143 = vsel %vm75, %v64, 0
  %v146 = vsel %vm75, %v65, 0
  %v149 = vsel %vm75, %v66, 0
  %vm151 = vcmask 1042432
  %v153 = vsel %vm151, %v70, 0
  %155 = vmatpush.msra.mxu0 0.0
  %156 = vmatpush.msra.mxu0 0.0
  %157 = vmatpush.msra.mxu0 0.0
  %158 = vmatpush.msra.mxu0 0.0
  %159 = vmatpush.msra.mxu0 0.0
  %160 = vmatpush.msra.mxu0 0.0
  %161 = vmatpush.msra.mxu0 0.0
  %162 = vmatpush.msra.mxu0 0.0
  %163 = vmatpush.msra.mxu0 0.0
  %164 = vmatpush.msra.mxu0 0.0
  %165 = vmatpush.msra.mxu0 0.0
  %166 = vmatpush.msra.mxu0 0.0
  %167 = vmatpush.msra.mxu0 %v153
  %168 = vmatpush.msra.mxu0 %v69
  %169 = vmatpush.msra.mxu0 %v68
  %170 = vmatpush.msra.mxu0 %v67
  %171 = vmatmul.f32.gmra.mxu0 %v77
  %v172 = vpop.f32.mrf.mxu0
  %v173 = vadd.f32 %v73, %v172
  %174 = vmatmul.f32.gmra.mxu0 %v80
  %v175 = vpop.f32.mrf.mxu0
  %v176 = vadd.f32 %v73, %v175
  %177 = vmatmul.f32.gmra.mxu0 %v83
  %v178 = vpop.f32.mrf.mxu0
  %v179 = vadd.f32 %v73, %v178
  %180 = vmatmul.f32.gmra.mxu0 %v86
  %v181 = vpop.f32.mrf.mxu0
  %v182 = vadd.f32 %v73, %v181
  %183 = vmatmul.f32.gmra.mxu0 %v89
  %v184 = vpop.f32.mrf.mxu0
  %v185 = vadd.f32 %v73, %v184
  %186 = vmatmul.f32.gmra.mxu0 %v92
  %v187 = vpop.f32.mrf.mxu0
  %v188 = vadd.f32 %v73, %v187
  %189 = vmatmul.f32.gmra.mxu0 %v95
  %v190 = vpop.f32.mrf.mxu0
  %v191 = vadd.f32 %v73, %v190
  %192 = vmatmul.f32.gmra.mxu0 %v98
  %v193 = vpop.f32.mrf.mxu0
  %v194 = vadd.f32 %v73, %v193
  %195 = vmatmul.f32.gmra.mxu0 %v101
  %v196 = vpop.f32.mrf.mxu0
  %v197 = vadd.f32 %v73, %v196
  %198 = vmatmul.f32.gmra.mxu0 %v104
  %v199 = vpop.f32.mrf.mxu0
  %v200 = vadd.f32 %v73, %v199
  %201 = vmatmul.f32.gmra.mxu0 %v107
  %v202 = vpop.f32.mrf.mxu0
  %v203 = vadd.f32 %v73, %v202
  %204 = vmatmul.f32.gmra.mxu0 %v110
  %v205 = vpop.f32.mrf.mxu0
  %v206 = vadd.f32 %v73, %v205
  %207 = vmatmul.f32.gmra.mxu0 %v113
  %v208 = vpop.f32.mrf.mxu0
  %v209 = vadd.f32 %v73, %v208
  %210 = vmatmul.f32.gmra.mxu0 %v116
  %v211 = vpop.f32.mrf.mxu0
  %v212 = vadd.f32 %v73, %v211
  %213 = vmatmul.f32.gmra.mxu0 %v119
  %v214 = vpop.f32.mrf.mxu0
  %v215 = vadd.f32 %v73, %v214
  %216 = vmatmul.f32.gmra.mxu0 %v122
  %v217 = vpop.f32.mrf.mxu0
  %v218 = vadd.f32 %v73, %v217
  %219 = vmatmul.f32.gmra.mxu0 %v125
  %v220 = vpop.f32.mrf.mxu0
  %v221 = vadd.f32 %v73, %v220
  %222 = vmatmul.f32.gmra.mxu0 %v128
  %v223 = vpop.f32.mrf.mxu0
  %v224 = vadd.f32 %v73, %v223
  %225 = vmatmul.f32.gmra.mxu0 %v131
  %v226 = vpop.f32.mrf.mxu0
  %v227 = vadd.f32 %v73, %v226
  %228 = vmatmul.f32.gmra.mxu0 %v134
  %v229 = vpop.f32.mrf.mxu0
  %v230 = vadd.f32 %v73, %v229
  %231 = vmatmul.f32.gmra.mxu0 %v137
  %v232 = vpop.f32.mrf.mxu0
  %v233 = vadd.f32 %v73, %v232
  %234 = vmatmul.f32.gmra.mxu0 %v140
  %v235 = vpop.f32.mrf.mxu0
  %v236 = vadd.f32 %v73, %v235
  %237 = vmatmul.f32.gmra.mxu0 %v143
  %v238 = vpop.f32.mrf.mxu0
  %v239 = vadd.f32 %v73, %v238
  %240 = vmatmul.f32.gmra.mxu0 %v146
  %v241 = vpop.f32.mrf.mxu0
  %v242 = vadd.f32 %v73, %v241
  %243 = vmatmul.f32.gmra.mxu0 %v149
  %v244 = vpop.f32.mrf.mxu0
  %v245 = vadd.f32 %v73, %v244
  %246 = vdwg.mxu0
  %v247 = vmax.f32 %v173, 0.0
  %v248 = vmax.f32 %v176, 0.0
  %v249 = vmax.f32 %v179, 0.0
  %v250 = vmax.f32 %v182, 0.0
  %v251 = vmax.f32 %v185, 0.0
  %v252 = vmax.f32 %v188, 0.0
  %v253 = vmax.f32 %v191, 0.0
  %v254 = vmax.f32 %v194, 0.0
  %v255 = vmax.f32 %v197, 0.0
  %v256 = vmax.f32 %v200, 0.0
  %v257 = vmax.f32 %v203, 0.0
  %v258 = vmax.f32 %v206, 0.0
  %v259 = vmax.f32 %v209, 0.0
  %v260 = vmax.f32 %v212, 0.0
  %v261 = vmax.f32 %v215, 0.0
  %v262 = vmax.f32 %v218, 0.0
  %v263 = vmax.f32 %v221, 0.0
  %v264 = vmax.f32 %v224, 0.0
  %v265 = vmax.f32 %v227, 0.0
  %v266 = vmax.f32 %v230, 0.0
  %v267 = vmax.f32 %v233, 0.0
  %v268 = vmax.f32 %v236, 0.0
  %v269 = vmax.f32 %v239, 0.0
  %v270 = vmax.f32 %v242, 0.0
  %v271 = vmax.f32 %v245, 0.0
  %272 = vst.msk [vmem:[#allocation2] sm:$0xff] %vm32, %v247
  %273 = vst.msk [vmem:[#allocation2 + $0x8] sm:$0xff] %vm32, %v248
  %274 = vst.msk [vmem:[#allocation2 + $0x10] sm:$0xff] %vm32, %v249
  %275 = vst.msk [vmem:[#allocation2 + $0x18] sm:$0xff] %vm32, %v250
  %276 = vst.msk [vmem:[#allocation2 + $0x20] sm:$0xff] %vm32, %v251
  %277 = vst.msk [vmem:[#allocation2 + $0x28] sm:$0xff] %vm32, %v252
  %278 = vst.msk [vmem:[#allocation2 + $0x30] sm:$0xff] %vm32, %v253
  %279 = vst.msk [vmem:[#allocation2 + $0x38] sm:$0xff] %vm32, %v254
  %280 = vst.msk [vmem:[#allocation2 + $0x40] sm:$0xff] %vm32, %v255
  %281 = vst.msk [vmem:[#allocation2 + $0x48] sm:$0xff] %vm32, %v256
  %282 = vst.msk [vmem:[#allocation2 + $0x50] sm:$0xff] %vm32, %v257
  %283 = vst.msk [vmem:[#allocation2 + $0x58] sm:$0xff] %vm32, %v258
  %284 = vst.msk [vmem:[#allocation2 + $0x60] sm:$0xff] %vm32, %v259
  %285 = vst.msk [vmem:[#allocation2 + $0x68] sm:$0xff] %vm32, %v260
  %286 = vst.msk [vmem:[#allocation2 + $0x70] sm:$0xff] %vm32, %v261
  %287 = vst.msk [vmem:[#allocation2 + $0x78] sm:$0xff] %vm32, %v262
  %288 = vst.msk [vmem:[#allocation2 + $0x80] sm:$0xff] %vm32, %v263
  %289 = vst.msk [vmem:[#allocation2 + $0x88] sm:$0xff] %vm32, %v264
  %290 = vst.msk [vmem:[#allocation2 + $0x90] sm:$0xff] %vm32, %v265
  %291 = vst.msk [vmem:[#allocation2 + $0x98] sm:$0xff] %vm32, %v266
  %292 = vst.msk [vmem:[#allocation2 + $0xa0] sm:$0xff] %vm32, %v267
  %293 = vst.msk [vmem:[#allocation2 + $0xa8] sm:$0xff] %vm32, %v268
  %294 = vst.msk [vmem:[#allocation2 + $0xb0] sm:$0xff] %vm32, %v269
  %295 = vst.msk [vmem:[#allocation2 + $0xb8] sm:$0xff] %vm32, %v270
  %296 = vst.msk [vmem:[#allocation2 + $0xc0] sm:$0xff] %vm32, %v271
  %v297 = vld [vmem:[#allocation2] sm:$0xff]
  %v298 = vld [vmem:[#allocation2 + $0x8] sm:$0xff]
  %v299 = vld [vmem:[#allocation2 + $0x10] sm:$0xff]
  %v300 = vld [vmem:[#allocation2 + $0x18] sm:$0xff]
  %v301 = vld [vmem:[#allocation2 + $0x20] sm:$0xff]
  %v302 = vld [vmem:[#allocation2 + $0x28] sm:$0xff]
  %v303 = vld [vmem:[#allocation2 + $0x30] sm:$0xff]
  %v304 = vld [vmem:[#allocation2 + $0x38] sm:$0xff]
  %v305 = vld [vmem:[#allocation2 + $0x40] sm:$0xff]
  %v306 = vld [vmem:[#allocation2 + $0x48] sm:$0xff]
  %v307 = vld [vmem:[#allocation2 + $0x50] sm:$0xff]
  %v308 = vld [vmem:[#allocation2 + $0x58] sm:$0xff]
  %v309 = vld [vmem:[#allocation2 + $0x60] sm:$0xff]
  %v310 = vld [vmem:[#allocation2 + $0x68] sm:$0xff]
  %v311 = vld [vmem:[#allocation2 + $0x70] sm:$0xff]
  %v312 = vld [vmem:[#allocation2 + $0x78] sm:$0xff]
  %v313 = vld [vmem:[#allocation2 + $0x80] sm:$0xff]
  %v314 = vld [vmem:[#allocation2 + $0x88] sm:$0xff]
  %v315 = vld [vmem:[#allocation2 + $0x90] sm:$0xff]
  %v316 = vld [vmem:[#allocation2 + $0x98] sm:$0xff]
  %v317 = vld [vmem:[#allocation2 + $0xa0] sm:$0xff]
  %v318 = vld [vmem:[#allocation2 + $0xa8] sm:$0xff]
  %v319 = vld [vmem:[#allocation2 + $0xb0] sm:$0xff]
  %v320 = vld [vmem:[#allocation2 + $0xb8] sm:$0xff]
  %v321 = vld [vmem:[#allocation2 + $0xc0] sm:$0xff]
  %v322 = vld [vmem:[%s3] sm:$0xff]
  %v323 = vld [vmem:[%s3 + $0x8] sm:$0xff]
  %v324 = vld [vmem:[%s3 + $0x10] sm:$0xff]
  %v325 = vld [vmem:[%s3 + $0x18] sm:$0xff]
  %v326 = vld [vmem:[#allocation2 + $0x1] sm:$0xff]
  %v327 = vld [vmem:[#allocation2 + $0x9] sm:$0xff]
  %v328 = vld [vmem:[#allocation2 + $0x11] sm:$0xff]
  %v329 = vld [vmem:[#allocation2 + $0x19] sm:$0xff]
  %v330 = vld [vmem:[#allocation2 + $0x21] sm:$0xff]
  %v331 = vld [vmem:[#allocation2 + $0x29] sm:$0xff]
  %v332 = vld [vmem:[#allocation2 + $0x31] sm:$0xff]
  %v333 = vld [vmem:[#allocation2 + $0x39] sm:$0xff]
  %v334 = vld [vmem:[#allocation2 + $0x41] sm:$0xff]
  %v335 = vld [vmem:[#allocation2 + $0x49] sm:$0xff]
  %v336 = vld [vmem:[#allocation2 + $0x51] sm:$0xff]
  %v337 = vld [vmem:[#allocation2 + $0x59] sm:$0xff]
  %v338 = vld [vmem:[#allocation2 + $0x61] sm:$0xff]
  %v339 = vld [vmem:[#allocation2 + $0x69] sm:$0xff]
  %v340 = vld [vmem:[#allocation2 + $0x71] sm:$0xff]
  %v341 = vld [vmem:[#allocation2 + $0x79] sm:$0xff]
  %v342 = vld [vmem:[#allocation2 + $0x81] sm:$0xff]
  %v343 = vld [vmem:[#allocation2 + $0x89] sm:$0xff]
  %v344 = vld [vmem:[#allocation2 + $0x91] sm:$0xff]
  %v345 = vld [vmem:[#allocation2 + $0x99] sm:$0xff]
  %v346 = vld [vmem:[#allocation2 + $0xa1] sm:$0xff]
  %v347 = vld [vmem:[#allocation2 + $0xa9] sm:$0xff]
  %v348 = vld [vmem:[#allocation2 + $0xb1] sm:$0xff]
  %v349 = vld [vmem:[#allocation2 + $0xb9] sm:$0xff]
  %v350 = vld [vmem:[#allocation2 + $0xc1] sm:$0xff]
  %s351 = scalar_lea.vmem %s3, 32
  %v352 = vld [vmem:[%s351] sm:$0xff]
  %v353 = vld [vmem:[%s351 + $0x8] sm:$0xff]
  %v354 = vld [vmem:[%s351 + $0x10] sm:$0xff]
  %v355 = vld [vmem:[%s351 + $0x18] sm:$0xff]
  %v357 = vsel %vm32, %v326, 0
  %v360 = vsel %vm32, %v327, 0
  %v363 = vsel %vm32, %v328, 0
  %v366 = vsel %vm32, %v329, 0
  %v369 = vsel %vm32, %v330, 0
  %v372 = vsel %vm32, %v331, 0
  %v375 = vsel %vm32, %v332, 0
  %v378 = vsel %vm32, %v333, 0
  %v381 = vsel %vm32, %v334, 0
  %v384 = vsel %vm32, %v335, 0
  %v387 = vsel %vm32, %v336, 0
  %v390 = vsel %vm32, %v337, 0
  %v393 = vsel %vm32, %v338, 0
  %v396 = vsel %vm32, %v339, 0
  %v399 = vsel %vm32, %v340, 0
  %v402 = vsel %vm32, %v341, 0
  %v405 = vsel %vm32, %v342, 0
  %v408 = vsel %vm32, %v343, 0
  %v411 = vsel %vm32, %v344, 0
  %v414 = vsel %vm32, %v345, 0
  %v417 = vsel %vm32, %v346, 0
  %v420 = vsel %vm32, %v347, 0
  %v423 = vsel %vm32, %v348, 0
  %v426 = vsel %vm32, %v349, 0
  %v429 = vsel %vm32, %v350, 0
  %431 = vmatpush.msra.mxu0 0.0
  %432 = vmatpush.msra.mxu0 0.0
  %433 = vmatpush.msra.mxu0 0.0
  %434 = vmatpush.msra.mxu0 0.0
  %435 = vmatpush.msra.mxu0 0.0
  %436 = vmatpush.msra.mxu0 0.0
  %437 = vmatpush.msra.mxu0 0.0
  %438 = vmatpush.msra.mxu0 0.0
  %439 = vmatpush.msra.mxu0 0.0
  %440 = vmatpush.msra.mxu0 0.0
  %441 = vmatpush.msra.mxu0 0.0
  %442 = vmatpush.msra.mxu0 0.0
  %443 = vmatpush.msra.mxu0 %v355
  %444 = vmatpush.msra.mxu0 %v354
  %445 = vmatpush.msra.mxu0 %v353
  %446 = vmatpush.msra.mxu0 %v352
  %447 = vmatmul.f32.gmra.mxu0 %v357
  %v448 = vpop.f32.mrf.mxu0
  %v449 = vadd.f32 0.0, %v448
  %450 = vmatmul.f32.gmra.mxu0 %v360
  %v451 = vpop.f32.mrf.mxu0
  %v452 = vadd.f32 0.0, %v451
  %453 = vmatmul.f32.gmra.mxu0 %v363
  %v454 = vpop.f32.mrf.mxu0
  %v455 = vadd.f32 0.0, %v454
  %456 = vmatmul.f32.gmra.mxu0 %v366
  %v457 = vpop.f32.mrf.mxu0
  %v458 = vadd.f32 0.0, %v457
  %459 = vmatmul.f32.gmra.mxu0 %v369
  %v460 = vpop.f32.mrf.mxu0
  %v461 = vadd.f32 0.0, %v460
  %462 = vmatmul.f32.gmra.mxu0 %v372
  %v463 = vpop.f32.mrf.mxu0
  %v464 = vadd.f32 0.0, %v463
  %465 = vmatmul.f32.gmra.mxu0 %v375
  %v466 = vpop.f32.mrf.mxu0
  %v467 = vadd.f32 0.0, %v466
  %468 = vmatmul.f32.gmra.mxu0 %v378
  %v469 = vpop.f32.mrf.mxu0
  %v470 = vadd.f32 0.0, %v469
  %471 = vmatmul.f32.gmra.mxu0 %v381
  %v472 = vpop.f32.mrf.mxu0
  %v473 = vadd.f32 0.0, %v472
  %474 = vmatmul.f32.gmra.mxu0 %v384
  %v475 = vpop.f32.mrf.mxu0
  %v476 = vadd.f32 0.0, %v475
  %477 = vmatmul.f32.gmra.mxu0 %v387
  %v478 = vpop.f32.mrf.mxu0
  %v479 = vadd.f32 0.0, %v478
  %480 = vmatmul.f32.gmra.mxu0 %v390
  %v481 = vpop.f32.mrf.mxu0
  %v482 = vadd.f32 0.0, %v481
  %483 = vmatmul.f32.gmra.mxu0 %v393
  %v484 = vpop.f32.mrf.mxu0
  %v485 = vadd.f32 0.0, %v484
  %486 = vmatmul.f32.gmra.mxu0 %v396
  %v487 = vpop.f32.mrf.mxu0
  %v488 = vadd.f32 0.0, %v487
  %489 = vmatmul.f32.gmra.mxu0 %v399
  %v490 = vpop.f32.mrf.mxu0
  %v491 = vadd.f32 0.0, %v490
  %492 = vmatmul.f32.gmra.mxu0 %v402
  %v493 = vpop.f32.mrf.mxu0
  %v494 = vadd.f32 0.0, %v493
  %495 = vmatmul.f32.gmra.mxu0 %v405
  %v496 = vpop.f32.mrf.mxu0
  %v497 = vadd.f32 0.0, %v496
  %498 = vmatmul.f32.gmra.mxu0 %v408
  %v499 = vpop.f32.mrf.mxu0
  %v500 = vadd.f32 0.0, %v499
  %501 = vmatmul.f32.gmra.mxu0 %v411
  %v502 = vpop.f32.mrf.mxu0
  %v503 = vadd.f32 0.0, %v502
  %504 = vmatmul.f32.gmra.mxu0 %v414
  %v505 = vpop.f32.mrf.mxu0
  %v506 = vadd.f32 0.0, %v505
  %507 = vmatmul.f32.gmra.mxu0 %v417
  %v508 = vpop.f32.mrf.mxu0
  %v509 = vadd.f32 0.0, %v508
  %510 = vmatmul.f32.gmra.mxu0 %v420
  %v511 = vpop.f32.mrf.mxu0
  %v512 = vadd.f32 0.0, %v511
  %513 = vmatmul.f32.gmra.mxu0 %v423
  %v514 = vpop.f32.mrf.mxu0
  %v515 = vadd.f32 0.0, %v514
  %516 = vmatmul.f32.gmra.mxu0 %v426
  %v517 = vpop.f32.mrf.mxu0
  %v518 = vadd.f32 0.0, %v517
  %519 = vmatmul.f32.gmra.mxu0 %v429
  %v520 = vpop.f32.mrf.mxu0
  %v521 = vadd.f32 0.0, %v520
  %522 = vdwg.mxu0
  %v524 = vsel %vm32, %v297, 0
  %v527 = vsel %vm32, %v298, 0
  %v530 = vsel %vm32, %v299, 0
  %v533 = vsel %vm32, %v300, 0
  %v536 = vsel %vm32, %v301, 0
  %v539 = vsel %vm32, %v302, 0
  %v542 = vsel %vm32, %v303, 0
  %v545 = vsel %vm32, %v304, 0
  %v548 = vsel %vm32, %v305, 0
  %v551 = vsel %vm32, %v306, 0
  %v554 = vsel %vm32, %v307, 0
  %v557 = vsel %vm32, %v308, 0
  %v560 = vsel %vm32, %v309, 0
  %v563 = vsel %vm32, %v310, 0
  %v566 = vsel %vm32, %v311, 0
  %v569 = vsel %vm32, %v312, 0
  %v572 = vsel %vm32, %v313, 0
  %v575 = vsel %vm32, %v314, 0
  %v578 = vsel %vm32, %v315, 0
  %v581 = vsel %vm32, %v316, 0
  %v584 = vsel %vm32, %v317, 0
  %v587 = vsel %vm32, %v318, 0
  %v590 = vsel %vm32, %v319, 0
  %v593 = vsel %vm32, %v320, 0
  %v596 = vsel %vm32, %v321, 0
  %598 = vmatpush.msra.mxu0 0.0
  %599 = vmatpush.msra.mxu0 0.0
  %600 = vmatpush.msra.mxu0 0.0
  %601 = vmatpush.msra.mxu0 0.0
  %602 = vmatpush.msra.mxu0 0.0
  %603 = vmatpush.msra.mxu0 0.0
  %604 = vmatpush.msra.mxu0 0.0
  %605 = vmatpush.msra.mxu0 0.0
  %606 = vmatpush.msra.mxu0 0.0
  %607 = vmatpush.msra.mxu0 0.0
  %608 = vmatpush.msra.mxu0 0.0
  %609 = vmatpush.msra.mxu0 0.0
  %610 = vmatpush.msra.mxu0 %v325
  %611 = vmatpush.msra.mxu0 %v324
  %612 = vmatpush.msra.mxu0 %v323
  %613 = vmatpush.msra.mxu0 %v322
  %614 = vmatmul.f32.gmra.mxu0 %v524
  %v615 = vpop.f32.mrf.mxu0
  %v616 = vadd.f32 %v449, %v615
  %617 = vmatmul.f32.gmra.mxu0 %v527
  %v618 = vpop.f32.mrf.mxu0
  %v619 = vadd.f32 %v452, %v618
  %620 = vmatmul.f32.gmra.mxu0 %v530
  %v621 = vpop.f32.mrf.mxu0
  %v622 = vadd.f32 %v455, %v621
  %623 = vmatmul.f32.gmra.mxu0 %v533
  %v624 = vpop.f32.mrf.mxu0
  %v625 = vadd.f32 %v458, %v624
  %626 = vmatmul.f32.gmra.mxu0 %v536
  %v627 = vpop.f32.mrf.mxu0
  %v628 = vadd.f32 %v461, %v627
  %629 = vmatmul.f32.gmra.mxu0 %v539
  %v630 = vpop.f32.mrf.mxu0
  %v631 = vadd.f32 %v464, %v630
  %632 = vmatmul.f32.gmra.mxu0 %v542
  %v633 = vpop.f32.mrf.mxu0
  %v634 = vadd.f32 %v467, %v633
  %635 = vmatmul.f32.gmra.mxu0 %v545
  %v636 = vpop.f32.mrf.mxu0
  %v637 = vadd.f32 %v470, %v636
  %638 = vmatmul.f32.gmra.mxu0 %v548
  %v639 = vpop.f32.mrf.mxu0
  %v640 = vadd.f32 %v473, %v639
  %641 = vmatmul.f32.gmra.mxu0 %v551
  %v642 = vpop.f32.mrf.mxu0
  %v643 = vadd.f32 %v476, %v642
  %644 = vmatmul.f32.gmra.mxu0 %v554
  %v645 = vpop.f32.mrf.mxu0
  %v646 = vadd.f32 %v479, %v645
  %647 = vmatmul.f32.gmra.mxu0 %v557
  %v648 = vpop.f32.mrf.mxu0
  %v649 = vadd.f32 %v482, %v648
  %650 = vmatmul.f32.gmra.mxu0 %v560
  %v651 = vpop.f32.mrf.mxu0
  %v652 = vadd.f32 %v485, %v651
  %653 = vmatmul.f32.gmra.mxu0 %v563
  %v654 = vpop.f32.mrf.mxu0
  %v655 = vadd.f32 %v488, %v654
  %656 = vmatmul.f32.gmra.mxu0 %v566
  %v657 = vpop.f32.mrf.mxu0
  %v658 = vadd.f32 %v491, %v657
  %659 = vmatmul.f32.gmra.mxu0 %v569
  %v660 = vpop.f32.mrf.mxu0
  %v661 = vadd.f32 %v494, %v660
  %662 = vmatmul.f32.gmra.mxu0 %v572
  %v663 = vpop.f32.mrf.mxu0
  %v664 = vadd.f32 %v497, %v663
  %665 = vmatmul.f32.gmra.mxu0 %v575
  %v666 = vpop.f32.mrf.mxu0
  %v667 = vadd.f32 %v500, %v666
  %668 = vmatmul.f32.gmra.mxu0 %v578
  %v669 = vpop.f32.mrf.mxu0
  %v670 = vadd.f32 %v503, %v669
  %671 = vmatmul.f32.gmra.mxu0 %v581
  %v672 = vpop.f32.mrf.mxu0
  %v673 = vadd.f32 %v506, %v672
  %674 = vmatmul.f32.gmra.mxu0 %v584
  %v675 = vpop.f32.mrf.mxu0
  %v676 = vadd.f32 %v509, %v675
  %677 = vmatmul.f32.gmra.mxu0 %v587
  %v678 = vpop.f32.mrf.mxu0
  %v679 = vadd.f32 %v512, %v678
  %680 = vmatmul.f32.gmra.mxu0 %v590
  %v681 = vpop.f32.mrf.mxu0
  %v682 = vadd.f32 %v515, %v681
  %683 = vmatmul.f32.gmra.mxu0 %v593
  %v684 = vpop.f32.mrf.mxu0
  %v685 = vadd.f32 %v518, %v684
  %686 = vmatmul.f32.gmra.mxu0 %v596
  %v687 = vpop.f32.mrf.mxu0
  %v688 = vadd.f32 %v521, %v687
  %689 = vdwg.mxu0
  %v690 = vld [vmem:[#allocation2 + $0x2] sm:$0xff]
  %v691 = vld [vmem:[#allocation2 + $0xa] sm:$0xff]
  %v692 = vld [vmem:[#allocation2 + $0x12] sm:$0xff]
  %v693 = vld [vmem:[#allocation2 + $0x1a] sm:$0xff]
  %v694 = vld [vmem:[#allocation2 + $0x22] sm:$0xff]
  %v695 = vld [vmem:[#allocation2 + $0x2a] sm:$0xff]
  %v696 = vld [vmem:[#allocation2 + $0x32] sm:$0xff]
  %v697 = vld [vmem:[#allocation2 + $0x3a] sm:$0xff]
  %v698 = vld [vmem:[#allocation2 + $0x42] sm:$0xff]
  %v699 = vld [vmem:[#allocation2 + $0x4a] sm:$0xff]
  %v700 = vld [vmem:[#allocation2 + $0x52] sm:$0xff]
  %v701 = vld [vmem:[#allocation2 + $0x5a] sm:$0xff]
  %v702 = vld [vmem:[#allocation2 + $0x62] sm:$0xff]
  %v703 = vld [vmem:[#allocation2 + $0x6a] sm:$0xff]
  %v704 = vld [vmem:[#allocation2 + $0x72] sm:$0xff]
  %v705 = vld [vmem:[#allocation2 + $0x7a] sm:$0xff]
  %v706 = vld [vmem:[#allocation2 + $0x82] sm:$0xff]
  %v707 = vld [vmem:[#allocation2 + $0x8a] sm:$0xff]
  %v708 = vld [vmem:[#allocation2 + $0x92] sm:$0xff]
  %v709 = vld [vmem:[#allocation2 + $0x9a] sm:$0xff]
  %v710 = vld [vmem:[#allocation2 + $0xa2] sm:$0xff]
  %v711 = vld [vmem:[#allocation2 + $0xaa] sm:$0xff]
  %v712 = vld [vmem:[#allocation2 + $0xb2] sm:$0xff]
  %v713 = vld [vmem:[#allocation2 + $0xba] sm:$0xff]
  %v714 = vld [vmem:[#allocation2 + $0xc2] sm:$0xff]
  %s715 = scalar_lea.vmem %s3, 64
  %v716 = vld [vmem:[%s715] sm:$0xff]
  %v717 = vld [vmem:[%s715 + $0x8] sm:$0xff]
  %v718 = vld [vmem:[%s715 + $0x10] sm:$0xff]
  %v719 = vld [vmem:[%s715 + $0x18] sm:$0xff]
  %v721 = vsel %vm32, %v690, 0
  %v724 = vsel %vm32, %v691, 0
  %v727 = vsel %vm32, %v692, 0
  %v730 = vsel %vm32, %v693, 0
  %v733 = vsel %vm32, %v694, 0
  %v736 = vsel %vm32, %v695, 0
  %v739 = vsel %vm32, %v696, 0
  %v742 = vsel %vm32, %v697, 0
  %v745 = vsel %vm32, %v698, 0
  %v748 = vsel %vm32, %v699, 0
  %v751 = vsel %vm32, %v700, 0
  %v754 = vsel %vm32, %v701, 0
  %v757 = vsel %vm32, %v702, 0
  %v760 = vsel %vm32, %v703, 0
  %v763 = vsel %vm32, %v704, 0
  %v766 = vsel %vm32, %v705, 0
  %v769 = vsel %vm32, %v706, 0
  %v772 = vsel %vm32, %v707, 0
  %v775 = vsel %vm32, %v708, 0
  %v778 = vsel %vm32, %v709, 0
  %v781 = vsel %vm32, %v710, 0
  %v784 = vsel %vm32, %v711, 0
  %v787 = vsel %vm32, %v712, 0
  %v790 = vsel %vm32, %v713, 0
  %v793 = vsel %vm32, %v714, 0
  %795 = vmatpush.msra.mxu0 0.0
  %796 = vmatpush.msra.mxu0 0.0
  %797 = vmatpush.msra.mxu0 0.0
  %798 = vmatpush.msra.mxu0 0.0
  %799 = vmatpush.msra.mxu0 0.0
  %800 = vmatpush.msra.mxu0 0.0
  %801 = vmatpush.msra.mxu0 0.0
  %802 = vmatpush.msra.mxu0 0.0
  %803 = vmatpush.msra.mxu0 0.0
  %804 = vmatpush.msra.mxu0 0.0
  %805 = vmatpush.msra.mxu0 0.0
  %806 = vmatpush.msra.mxu0 0.0
  %807 = vmatpush.msra.mxu0 %v719
  %808 = vmatpush.msra.mxu0 %v718
  %809 = vmatpush.msra.mxu0 %v717
  %810 = vmatpush.msra.mxu0 %v716
  %811 = vmatmul.f32.gmra.mxu0 %v721
  %v812 = vpop.f32.mrf.mxu0
  %v813 = vadd.f32 0.0, %v812
  %814 = vmatmul.f32.gmra.mxu0 %v724
  %v815 = vpop.f32.mrf.mxu0
  %v816 = vadd.f32 0.0, %v815
  %817 = vmatmul.f32.gmra.mxu0 %v727
  %v818 = vpop.f32.mrf.mxu0
  %v819 = vadd.f32 0.0, %v818
  %820 = vmatmul.f32.gmra.mxu0 %v730
  %v821 = vpop.f32.mrf.mxu0
  %v822 = vadd.f32 0.0, %v821
  %823 = vmatmul.f32.gmra.mxu0 %v733
  %v824 = vpop.f32.mrf.mxu0
  %v825 = vadd.f32 0.0, %v824
  %826 = vmatmul.f32.gmra.mxu0 %v736
  %v827 = vpop.f32.mrf.mxu0
  %v828 = vadd.f32 0.0, %v827
  %829 = vmatmul.f32.gmra.mxu0 %v739
  %v830 = vpop.f32.mrf.mxu0
  %v831 = vadd.f32 0.0, %v830
  %832 = vmatmul.f32.gmra.mxu0 %v742
  %v833 = vpop.f32.mrf.mxu0
  %v834 = vadd.f32 0.0, %v833
  %835 = vmatmul.f32.gmra.mxu0 %v745
  %v836 = vpop.f32.mrf.mxu0
  %v837 = vadd.f32 0.0, %v836
  %838 = vmatmul.f32.gmra.mxu0 %v748
  %v839 = vpop.f32.mrf.mxu0
  %v840 = vadd.f32 0.0, %v839
  %841 = vmatmul.f32.gmra.mxu0 %v751
  %v842 = vpop.f32.mrf.mxu0
  %v843 = vadd.f32 0.0, %v842
  %844 = vmatmul.f32.gmra.mxu0 %v754
  %v845 = vpop.f32.mrf.mxu0
  %v846 = vadd.f32 0.0, %v845
  %847 = vmatmul.f32.gmra.mxu0 %v757
  %v848 = vpop.f32.mrf.mxu0
  %v849 = vadd.f32 0.0, %v848
  %850 = vmatmul.f32.gmra.mxu0 %v760
  %v851 = vpop.f32.mrf.mxu0
  %v852 = vadd.f32 0.0, %v851
  %853 = vmatmul.f32.gmra.mxu0 %v763
  %v854 = vpop.f32.mrf.mxu0
  %v855 = vadd.f32 0.0, %v854
  %856 = vmatmul.f32.gmra.mxu0 %v766
  %v857 = vpop.f32.mrf.mxu0
  %v858 = vadd.f32 0.0, %v857
  %859 = vmatmul.f32.gmra.mxu0 %v769
  %v860 = vpop.f32.mrf.mxu0
  %v861 = vadd.f32 0.0, %v860
  %862 = vmatmul.f32.gmra.mxu0 %v772
  %v863 = vpop.f32.mrf.mxu0
  %v864 = vadd.f32 0.0, %v863
  %865 = vmatmul.f32.gmra.mxu0 %v775
  %v866 = vpop.f32.mrf.mxu0
  %v867 = vadd.f32 0.0, %v866
  %868 = vmatmul.f32.gmra.mxu0 %v778
  %v869 = vpop.f32.mrf.mxu0
  %v870 = vadd.f32 0.0, %v869
  %871 = vmatmul.f32.gmra.mxu0 %v781
  %v872 = vpop.f32.mrf.mxu0
  %v873 = vadd.f32 0.0, %v872
  %874 = vmatmul.f32.gmra.mxu0 %v784
  %v875 = vpop.f32.mrf.mxu0
  %v876 = vadd.f32 0.0, %v875
  %877 = vmatmul.f32.gmra.mxu0 %v787
  %v878 = vpop.f32.mrf.mxu0
  %v879 = vadd.f32 0.0, %v878
  %880 = vmatmul.f32.gmra.mxu0 %v790
  %v881 = vpop.f32.mrf.mxu0
  %v882 = vadd.f32 0.0, %v881
  %883 = vmatmul.f32.gmra.mxu0 %v793
  %v884 = vpop.f32.mrf.mxu0
  %v885 = vadd.f32 0.0, %v884
  %886 = vdwg.mxu0
  %v887 = vadd.f32 %v616, %v813
  %v888 = vadd.f32 %v619, %v816
  %v889 = vadd.f32 %v622, %v819
  %v890 = vadd.f32 %v625, %v822
  %v891 = vadd.f32 %v628, %v825
  %v892 = vadd.f32 %v631, %v828
  %v893 = vadd.f32 %v634, %v831
  %v894 = vadd.f32 %v637, %v834
  %v895 = vadd.f32 %v640, %v837
  %v896 = vadd.f32 %v643, %v840
  %v897 = vadd.f32 %v646, %v843
  %v898 = vadd.f32 %v649, %v846
  %v899 = vadd.f32 %v652, %v849
  %v900 = vadd.f32 %v655, %v852
  %v901 = vadd.f32 %v658, %v855
  %v902 = vadd.f32 %v661, %v858
  %v903 = vadd.f32 %v664, %v861
  %v904 = vadd.f32 %v667, %v864
  %v905 = vadd.f32 %v670, %v867
  %v906 = vadd.f32 %v673, %v870
  %v907 = vadd.f32 %v676, %v873
  %v908 = vadd.f32 %v679, %v876
  %v909 = vadd.f32 %v682, %v879
  %v910 = vadd.f32 %v685, %v882
  %v911 = vadd.f32 %v688, %v885
  %v912 = vld [vmem:[#allocation2 + $0xa] sm:$0xff]
  %v913 = vld [vmem:[#allocation2 + $0x12] sm:$0xff]
  %v914 = vld [vmem:[#allocation2 + $0x1a] sm:$0xff]
  %v915 = vld [vmem:[#allocation2 + $0x22] sm:$0xff]
  %v916 = vld [vmem:[#allocation2 + $0x2a] sm:$0xff]
  %v917 = vld [vmem:[#allocation2 + $0x32] sm:$0xff]
  %v918 = vld [vmem:[#allocation2 + $0x3a] sm:$0xff]
  %v919 = vld [vmem:[#allocation2 + $0x42] sm:$0xff]
  %v920 = vld [vmem:[#allocation2 + $0x4a] sm:$0xff]
  %v921 = vld [vmem:[#allocation2 + $0x52] sm:$0xff]
  %v922 = vld [vmem:[#allocation2 + $0x5a] sm:$0xff]
  %v923 = vld [vmem:[#allocation2 + $0x62] sm:$0xff]
  %v924 = vld [vmem:[#allocation2 + $0x6a] sm:$0xff]
  %v925 = vld [vmem:[#allocation2 + $0x72] sm:$0xff]
  %v926 = vld [vmem:[#allocation2 + $0x7a] sm:$0xff]
  %v927 = vld [vmem:[#allocation2 + $0x82] sm:$0xff]
  %v928 = vld [vmem:[#allocation2 + $0x8a] sm:$0xff]
  %v929 = vld [vmem:[#allocation2 + $0x92] sm:$0xff]
  %v930 = vld [vmem:[#allocation2 + $0x9a] sm:$0xff]
  %v931 = vld [vmem:[#allocation2 + $0xa2] sm:$0xff]
  %v932 = vld [vmem:[#allocation2 + $0xaa] sm:$0xff]
  %v933 = vld [vmem:[#allocation2 + $0xb2] sm:$0xff]
  %v934 = vld [vmem:[#allocation2 + $0xba] sm:$0xff]
  %v935 = vld [vmem:[#allocation2 + $0xc2] sm:$0xff]
  %v936 = vld [vmem:[#allocation2 + $0xca] sm:$0xff]
  %s937 = scalar_lea.vmem %s3, 96
  %v938 = vld [vmem:[%s937] sm:$0xff]
  %v939 = vld [vmem:[%s937 + $0x8] sm:$0xff]
  %v940 = vld [vmem:[%s937 + $0x10] sm:$0xff]
  %v941 = vld [vmem:[%s937 + $0x18] sm:$0xff]
  %v943 = vsel %vm32, %v912, 0
  %v946 = vsel %vm32, %v913, 0
  %v949 = vsel %vm32, %v914, 0
  %v952 = vsel %vm32, %v915, 0
  %v955 = vsel %vm32, %v916, 0
  %v958 = vsel %vm32, %v917, 0
  %v961 = vsel %vm32, %v918, 0
  %v964 = vsel %vm32, %v919, 0
  %v967 = vsel %vm32, %v920, 0
  %v970 = vsel %vm32, %v921, 0
  %v973 = vsel %vm32, %v922, 0
  %v976 = vsel %vm32, %v923, 0
  %v979 = vsel %vm32, %v924, 0
  %v982 = vsel %vm32, %v925, 0
  %v985 = vsel %vm32, %v926, 0
  %v988 = vsel %vm32, %v927, 0
  %v991 = vsel %vm32, %v928, 0
  %v994 = vsel %vm32, %v929, 0
  %v997 = vsel %vm32, %v930, 0
  %v1000 = vsel %vm32, %v931, 0
  %v1003 = vsel %vm32, %v932, 0
  %v1006 = vsel %vm32, %v933, 0
  %v1009 = vsel %vm32, %v934, 0
  %v1012 = vsel %vm32, %v935, 0
  %v1015 = vsel %vm32, %v936, 0
  %1017 = vmatpush.msra.mxu0 0.0
  %1018 = vmatpush.msra.mxu0 0.0
  %1019 = vmatpush.msra.mxu0 0.0
  %1020 = vmatpush.msra.mxu0 0.0
  %1021 = vmatpush.msra.mxu0 0.0
  %1022 = vmatpush.msra.mxu0 0.0
  %1023 = vmatpush.msra.mxu0 0.0
  %1024 = vmatpush.msra.mxu0 0.0
  %1025 = vmatpush.msra.mxu0 0.0
  %1026 = vmatpush.msra.mxu0 0.0
  %1027 = vmatpush.msra.mxu0 0.0
  %1028 = vmatpush.msra.mxu0 0.0
  %1029 = vmatpush.msra.mxu0 %v941
  %1030 = vmatpush.msra.mxu0 %v940
  %1031 = vmatpush.msra.mxu0 %v939
  %1032 = vmatpush.msra.mxu0 %v938
  %1033 = vmatmul.f32.gmra.mxu0 %v943
  %v1034 = vpop.f32.mrf.mxu0
  %v1035 = vadd.f32 0.0, %v1034
  %1036 = vmatmul.f32.gmra.mxu0 %v946
  %v1037 = vpop.f32.mrf.mxu0
  %v1038 = vadd.f32 0.0, %v1037
  %1039 = vmatmul.f32.gmra.mxu0 %v949
  %v1040 = vpop.f32.mrf.mxu0
  %v1041 = vadd.f32 0.0, %v1040
  %1042 = vmatmul.f32.gmra.mxu0 %v952
  %v1043 = vpop.f32.mrf.mxu0
  %v1044 = vadd.f32 0.0, %v1043
  %1045 = vmatmul.f32.gmra.mxu0 %v955
  %v1046 = vpop.f32.mrf.mxu0
  %v1047 = vadd.f32 0.0, %v1046
  %1048 = vmatmul.f32.gmra.mxu0 %v958
  %v1049 = vpop.f32.mrf.mxu0
  %v1050 = vadd.f32 0.0, %v1049
  %1051 = vmatmul.f32.gmra.mxu0 %v961
  %v1052 = vpop.f32.mrf.mxu0
  %v1053 = vadd.f32 0.0, %v1052
  %1054 = vmatmul.f32.gmra.mxu0 %v964
  %v1055 = vpop.f32.mrf.mxu0
  %v1056 = vadd.f32 0.0, %v1055
  %1057 = vmatmul.f32.gmra.mxu0 %v967
  %v1058 = vpop.f32.mrf.mxu0
  %v1059 = vadd.f32 0.0, %v1058
  %1060 = vmatmul.f32.gmra.mxu0 %v970
  %v1061 = vpop.f32.mrf.mxu0
  %v1062 = vadd.f32 0.0, %v1061
  %1063 = vmatmul.f32.gmra.mxu0 %v973
  %v1064 = vpop.f32.mrf.mxu0
  %v1065 = vadd.f32 0.0, %v1064
  %1066 = vmatmul.f32.gmra.mxu0 %v976
  %v1067 = vpop.f32.mrf.mxu0
  %v1068 = vadd.f32 0.0, %v1067
  %1069 = vmatmul.f32.gmra.mxu0 %v979
  %v1070 = vpop.f32.mrf.mxu0
  %v1071 = vadd.f32 0.0, %v1070
  %1072 = vmatmul.f32.gmra.mxu0 %v982
  %v1073 = vpop.f32.mrf.mxu0
  %v1074 = vadd.f32 0.0, %v1073
  %1075 = vmatmul.f32.gmra.mxu0 %v985
  %v1076 = vpop.f32.mrf.mxu0
  %v1077 = vadd.f32 0.0, %v1076
  %1078 = vmatmul.f32.gmra.mxu0 %v988
  %v1079 = vpop.f32.mrf.mxu0
  %v1080 = vadd.f32 0.0, %v1079
  %1081 = vmatmul.f32.gmra.mxu0 %v991
  %v1082 = vpop.f32.mrf.mxu0
  %v1083 = vadd.f32 0.0, %v1082
  %1084 = vmatmul.f32.gmra.mxu0 %v994
  %v1085 = vpop.f32.mrf.mxu0
  %v1086 = vadd.f32 0.0, %v1085
  %1087 = vmatmul.f32.gmra.mxu0 %v997
  %v1088 = vpop.f32.mrf.mxu0
  %v1089 = vadd.f32 0.0, %v1088
  %1090 = vmatmul.f32.gmra.mxu0 %v1000
  %v1091 = vpop.f32.mrf.mxu0
  %v1092 = vadd.f32 0.0, %v1091
  %1093 = vmatmul.f32.gmra.mxu0 %v1003
  %v1094 = vpop.f32.mrf.mxu0
  %v1095 = vadd.f32 0.0, %v1094
  %1096 = vmatmul.f32.gmra.mxu0 %v1006
  %v1097 = vpop.f32.mrf.mxu0
  %v1098 = vadd.f32 0.0, %v1097
  %1099 = vmatmul.f32.gmra.mxu0 %v1009
  %v1100 = vpop.f32.mrf.mxu0
  %v1101 = vadd.f32 0.0, %v1100
  %1102 = vmatmul.f32.gmra.mxu0 %v1012
  %v1103 = vpop.f32.mrf.mxu0
  %v1104 = vadd.f32 0.0, %v1103
  %1105 = vmatmul.f32.gmra.mxu0 %v1015
  %v1106 = vpop.f32.mrf.mxu0
  %v1107 = vadd.f32 0.0, %v1106
  %1108 = vdwg.mxu0
  %v1109 = vadd.f32 %v887, %v1035
  %v1110 = vadd.f32 %v888, %v1038
  %v1111 = vadd.f32 %v889, %v1041
  %v1112 = vadd.f32 %v890, %v1044
  %v1113 = vadd.f32 %v891, %v1047
  %v1114 = vadd.f32 %v892, %v1050
  %v1115 = vadd.f32 %v893, %v1053
  %v1116 = vadd.f32 %v894, %v1056
  %v1117 = vadd.f32 %v895, %v1059
  %v1118 = vadd.f32 %v896, %v1062
  %v1119 = vadd.f32 %v897, %v1065
  %v1120 = vadd.f32 %v898, %v1068
  %v1121 = vadd.f32 %v899, %v1071
  %v1122 = vadd.f32 %v900, %v1074
  %v1123 = vadd.f32 %v901, %v1077
  %v1124 = vadd.f32 %v902, %v1080
  %v1125 = vadd.f32 %v903, %v1083
  %v1126 = vadd.f32 %v904, %v1086
  %v1127 = vadd.f32 %v905, %v1089
  %v1128 = vadd.f32 %v906, %v1092
  %v1129 = vadd.f32 %v907, %v1095
  %v1130 = vadd.f32 %v908, %v1098
  %v1131 = vadd.f32 %v909, %v1101
  %v1132 = vadd.f32 %v910, %v1104
  %v1133 = vadd.f32 %v911, %v1107
  %v1134 = vld [vmem:[#allocation2 + $0xb] sm:$0xff]
  %v1135 = vld [vmem:[#allocation2 + $0x13] sm:$0xff]
  %v1136 = vld [vmem:[#allocation2 + $0x1b] sm:$0xff]
  %v1137 = vld [vmem:[#allocation2 + $0x23] sm:$0xff]
  %v1138 = vld [vmem:[#allocation2 + $0x2b] sm:$0xff]
  %v1139 = vld [vmem:[#allocation2 + $0x33] sm:$0xff]
  %v1140 = vld [vmem:[#allocation2 + $0x3b] sm:$0xff]
  %v1141 = vld [vmem:[#allocation2 + $0x43] sm:$0xff]
  %v1142 = vld [vmem:[#allocation2 + $0x4b] sm:$0xff]
  %v1143 = vld [vmem:[#allocation2 + $0x53] sm:$0xff]
  %v1144 = vld [vmem:[#allocation2 + $0x5b] sm:$0xff]
  %v1145 = vld [vmem:[#allocation2 + $0x63] sm:$0xff]
  %v1146 = vld [vmem:[#allocation2 + $0x6b] sm:$0xff]
  %v1147 = vld [vmem:[#allocation2 + $0x73] sm:$0xff]
  %v1148 = vld [vmem:[#allocation2 + $0x7b] sm:$0xff]
  %v1149 = vld [vmem:[#allocation2 + $0x83] sm:$0xff]
  %v1150 = vld [vmem:[#allocation2 + $0x8b] sm:$0xff]
  %v1151 = vld [vmem:[#allocation2 + $0x93] sm:$0xff]
  %v1152 = vld [vmem:[#allocation2 + $0x9b] sm:$0xff]
  %v1153 = vld [vmem:[#allocation2 + $0xa3] sm:$0xff]
  %v1154 = vld [vmem:[#allocation2 + $0xab] sm:$0xff]
  %v1155 = vld [vmem:[#allocation2 + $0xb3] sm:$0xff]
  %v1156 = vld [vmem:[#allocation2 + $0xbb] sm:$0xff]
  %v1157 = vld [vmem:[#allocation2 + $0xc3] sm:$0xff]
  %v1158 = vld [vmem:[#allocation2 + $0xcb] sm:$0xff]
  %s1159 = scalar_lea.vmem %s3, 128
  %v1160 = vld [vmem:[%s1159] sm:$0xff]
  %v1161 = vld [vmem:[%s1159 + $0x8] sm:$0xff]
  %v1162 = vld [vmem:[%s1159 + $0x10] sm:$0xff]
  %v1163 = vld [vmem:[%s1159 + $0x18] sm:$0xff]
  %v1165 = vsel %vm32, %v1134, 0
  %v1168 = vsel %vm32, %v1135, 0
  %v1171 = vsel %vm32, %v1136, 0
  %v1174 = vsel %vm32, %v1137, 0
  %v1177 = vsel %vm32, %v1138, 0
  %v1180 = vsel %vm32, %v1139, 0
  %v1183 = vsel %vm32, %v1140, 0
  %v1186 = vsel %vm32, %v1141, 0
  %v1189 = vsel %vm32, %v1142, 0
  %v1192 = vsel %vm32, %v1143, 0
  %v1195 = vsel %vm32, %v1144, 0
  %v1198 = vsel %vm32, %v1145, 0
  %v1201 = vsel %vm32, %v1146, 0
  %v1204 = vsel %vm32, %v1147, 0
  %v1207 = vsel %vm32, %v1148, 0
  %v1210 = vsel %vm32, %v1149, 0
  %v1213 = vsel %vm32, %v1150, 0
  %v1216 = vsel %vm32, %v1151, 0
  %v1219 = vsel %vm32, %v1152, 0
  %v1222 = vsel %vm32, %v1153, 0
  %v1225 = vsel %vm32, %v1154, 0
  %v1228 = vsel %vm32, %v1155, 0
  %v1231 = vsel %vm32, %v1156, 0
  %v1234 = vsel %vm32, %v1157, 0
  %v1237 = vsel %vm32, %v1158, 0
  %1239 = vmatpush.msra.mxu0 0.0
  %1240 = vmatpush.msra.mxu0 0.0
  %1241 = vmatpush.msra.mxu0 0.0
  %1242 = vmatpush.msra.mxu0 0.0
  %1243 = vmatpush.msra.mxu0 0.0
  %1244 = vmatpush.msra.mxu0 0.0
  %1245 = vmatpush.msra.mxu0 0.0
  %1246 = vmatpush.msra.mxu0 0.0
  %1247 = vmatpush.msra.mxu0 0.0
  %1248 = vmatpush.msra.mxu0 0.0
  %1249 = vmatpush.msra.mxu0 0.0
  %1250 = vmatpush.msra.mxu0 0.0
  %1251 = vmatpush.msra.mxu0 %v1163
  %1252 = vmatpush.msra.mxu0 %v1162
  %1253 = vmatpush.msra.mxu0 %v1161
  %1254 = vmatpush.msra.mxu0 %v1160
  %1255 = vmatmul.f32.gmra.mxu0 %v1165
  %v1256 = vpop.f32.mrf.mxu0
  %v1257 = vadd.f32 0.0, %v1256
  %1258 = vmatmul.f32.gmra.mxu0 %v1168
  %v1259 = vpop.f32.mrf.mxu0
  %v1260 = vadd.f32 0.0, %v1259
  %1261 = vmatmul.f32.gmra.mxu0 %v1171
  %v1262 = vpop.f32.mrf.mxu0
  %v1263 = vadd.f32 0.0, %v1262
  %1264 = vmatmul.f32.gmra.mxu0 %v1174
  %v1265 = vpop.f32.mrf.mxu0
  %v1266 = vadd.f32 0.0, %v1265
  %1267 = vmatmul.f32.gmra.mxu0 %v1177
  %v1268 = vpop.f32.mrf.mxu0
  %v1269 = vadd.f32 0.0, %v1268
  %1270 = vmatmul.f32.gmra.mxu0 %v1180
  %v1271 = vpop.f32.mrf.mxu0
  %v1272 = vadd.f32 0.0, %v1271
  %1273 = vmatmul.f32.gmra.mxu0 %v1183
  %v1274 = vpop.f32.mrf.mxu0
  %v1275 = vadd.f32 0.0, %v1274
  %1276 = vmatmul.f32.gmra.mxu0 %v1186
  %v1277 = vpop.f32.mrf.mxu0
  %v1278 = vadd.f32 0.0, %v1277
  %1279 = vmatmul.f32.gmra.mxu0 %v1189
  %v1280 = vpop.f32.mrf.mxu0
  %v1281 = vadd.f32 0.0, %v1280
  %1282 = vmatmul.f32.gmra.mxu0 %v1192
  %v1283 = vpop.f32.mrf.mxu0
  %v1284 = vadd.f32 0.0, %v1283
  %1285 = vmatmul.f32.gmra.mxu0 %v1195
  %v1286 = vpop.f32.mrf.mxu0
  %v1287 = vadd.f32 0.0, %v1286
  %1288 = vmatmul.f32.gmra.mxu0 %v1198
  %v1289 = vpop.f32.mrf.mxu0
  %v1290 = vadd.f32 0.0, %v1289
  %1291 = vmatmul.f32.gmra.mxu0 %v1201
  %v1292 = vpop.f32.mrf.mxu0
  %v1293 = vadd.f32 0.0, %v1292
  %1294 = vmatmul.f32.gmra.mxu0 %v1204
  %v1295 = vpop.f32.mrf.mxu0
  %v1296 = vadd.f32 0.0, %v1295
  %1297 = vmatmul.f32.gmra.mxu0 %v1207
  %v1298 = vpop.f32.mrf.mxu0
  %v1299 = vadd.f32 0.0, %v1298
  %1300 = vmatmul.f32.gmra.mxu0 %v1210
  %v1301 = vpop.f32.mrf.mxu0
  %v1302 = vadd.f32 0.0, %v1301
  %1303 = vmatmul.f32.gmra.mxu0 %v1213
  %v1304 = vpop.f32.mrf.mxu0
  %v1305 = vadd.f32 0.0, %v1304
  %1306 = vmatmul.f32.gmra.mxu0 %v1216
  %v1307 = vpop.f32.mrf.mxu0
  %v1308 = vadd.f32 0.0, %v1307
  %1309 = vmatmul.f32.gmra.mxu0 %v1219
  %v1310 = vpop.f32.mrf.mxu0
  %v1311 = vadd.f32 0.0, %v1310
  %1312 = vmatmul.f32.gmra.mxu0 %v1222
  %v1313 = vpop.f32.mrf.mxu0
  %v1314 = vadd.f32 0.0, %v1313
  %1315 = vmatmul.f32.gmra.mxu0 %v1225
  %v1316 = vpop.f32.mrf.mxu0
  %v1317 = vadd.f32 0.0, %v1316
  %1318 = vmatmul.f32.gmra.mxu0 %v1228
  %v1319 = vpop.f32.mrf.mxu0
  %v1320 = vadd.f32 0.0, %v1319
  %1321 = vmatmul.f32.gmra.mxu0 %v1231
  %v1322 = vpop.f32.mrf.mxu0
  %v1323 = vadd.f32 0.0, %v1322
  %1324 = vmatmul.f32.gmra.mxu0 %v1234
  %v1325 = vpop.f32.mrf.mxu0
  %v1326 = vadd.f32 0.0, %v1325
  %1327 = vmatmul.f32.gmra.mxu0 %v1237
  %v1328 = vpop.f32.mrf.mxu0
  %v1329 = vadd.f32 0.0, %v1328
  %1330 = vdwg.mxu0
  %v1331 = vadd.f32 %v1109, %v1257
  %v1332 = vadd.f32 %v1110, %v1260
  %v1333 = vadd.f32 %v1111, %v1263
  %v1334 = vadd.f32 %v1112, %v1266
  %v1335 = vadd.f32 %v1113, %v1269
  %v1336 = vadd.f32 %v1114, %v1272
  %v1337 = vadd.f32 %v1115, %v1275
  %v1338 = vadd.f32 %v1116, %v1278
  %v1339 = vadd.f32 %v1117, %v1281
  %v1340 = vadd.f32 %v1118, %v1284
  %v1341 = vadd.f32 %v1119, %v1287
  %v1342 = vadd.f32 %v1120, %v1290
  %v1343 = vadd.f32 %v1121, %v1293
  %v1344 = vadd.f32 %v1122, %v1296
  %v1345 = vadd.f32 %v1123, %v1299
  %v1346 = vadd.f32 %v1124, %v1302
  %v1347 = vadd.f32 %v1125, %v1305
  %v1348 = vadd.f32 %v1126, %v1308
  %v1349 = vadd.f32 %v1127, %v1311
  %v1350 = vadd.f32 %v1128, %v1314
  %v1351 = vadd.f32 %v1129, %v1317
  %v1352 = vadd.f32 %v1130, %v1320
  %v1353 = vadd.f32 %v1131, %v1323
  %v1354 = vadd.f32 %v1132, %v1326
  %v1355 = vadd.f32 %v1133, %v1329
  %v1356 = vld [vmem:[#allocation2 + $0xc] sm:$0xff]
  %v1357 = vld [vmem:[#allocation2 + $0x14] sm:$0xff]
  %v1358 = vld [vmem:[#allocation2 + $0x1c] sm:$0xff]
  %v1359 = vld [vmem:[#allocation2 + $0x24] sm:$0xff]
  %v1360 = vld [vmem:[#allocation2 + $0x2c] sm:$0xff]
  %v1361 = vld [vmem:[#allocation2 + $0x34] sm:$0xff]
  %v1362 = vld [vmem:[#allocation2 + $0x3c] sm:$0xff]
  %v1363 = vld [vmem:[#allocation2 + $0x44] sm:$0xff]
  %v1364 = vld [vmem:[#allocation2 + $0x4c] sm:$0xff]
  %v1365 = vld [vmem:[#allocation2 + $0x54] sm:$0xff]
  %v1366 = vld [vmem:[#allocation2 + $0x5c] sm:$0xff]
  %v1367 = vld [vmem:[#allocation2 + $0x64] sm:$0xff]
  %v1368 = vld [vmem:[#allocation2 + $0x6c] sm:$0xff]
  %v1369 = vld [vmem:[#allocation2 + $0x74] sm:$0xff]
  %v1370 = vld [vmem:[#allocation2 + $0x7c] sm:$0xff]
  %v1371 = vld [vmem:[#allocation2 + $0x84] sm:$0xff]
  %v1372 = vld [vmem:[#allocation2 + $0x8c] sm:$0xff]
  %v1373 = vld [vmem:[#allocation2 + $0x94] sm:$0xff]
  %v1374 = vld [vmem:[#allocation2 + $0x9c] sm:$0xff]
  %v1375 = vld [vmem:[#allocation2 + $0xa4] sm:$0xff]
  %v1376 = vld [vmem:[#allocation2 + $0xac] sm:$0xff]
  %v1377 = vld [vmem:[#allocation2 + $0xb4] sm:$0xff]
  %v1378 = vld [vmem:[#allocation2 + $0xbc] sm:$0xff]
  %v1379 = vld [vmem:[#allocation2 + $0xc4] sm:$0xff]
  %v1380 = vld [vmem:[#allocation2 + $0xcc] sm:$0xff]
  %s1381 = scalar_lea.vmem %s3, 160
  %v1382 = vld [vmem:[%s1381] sm:$0xff]
  %v1383 = vld [vmem:[%s1381 + $0x8] sm:$0xff]
  %v1384 = vld [vmem:[%s1381 + $0x10] sm:$0xff]
  %v1385 = vld [vmem:[%s1381 + $0x18] sm:$0xff]
  %v1387 = vsel %vm32, %v1356, 0
  %v1390 = vsel %vm32, %v1357, 0
  %v1393 = vsel %vm32, %v1358, 0
  %v1396 = vsel %vm32, %v1359, 0
  %v1399 = vsel %vm32, %v1360, 0
  %v1402 = vsel %vm32, %v1361, 0
  %v1405 = vsel %vm32, %v1362, 0
  %v1408 = vsel %vm32, %v1363, 0
  %v1411 = vsel %vm32, %v1364, 0
  %v1414 = vsel %vm32, %v1365, 0
  %v1417 = vsel %vm32, %v1366, 0
  %v1420 = vsel %vm32, %v1367, 0
  %v1423 = vsel %vm32, %v1368, 0
  %v1426 = vsel %vm32, %v1369, 0
  %v1429 = vsel %vm32, %v1370, 0
  %v1432 = vsel %vm32, %v1371, 0
  %v1435 = vsel %vm32, %v1372, 0
  %v1438 = vsel %vm32, %v1373, 0
  %v1441 = vsel %vm32, %v1374, 0
  %v1444 = vsel %vm32, %v1375, 0
  %v1447 = vsel %vm32, %v1376, 0
  %v1450 = vsel %vm32, %v1377, 0
  %v1453 = vsel %vm32, %v1378, 0
  %v1456 = vsel %vm32, %v1379, 0
  %v1459 = vsel %vm32, %v1380, 0
  %1461 = vmatpush.msra.mxu0 0.0
  %1462 = vmatpush.msra.mxu0 0.0
  %1463 = vmatpush.msra.mxu0 0.0
  %1464 = vmatpush.msra.mxu0 0.0
  %1465 = vmatpush.msra.mxu0 0.0
  %1466 = vmatpush.msra.mxu0 0.0
  %1467 = vmatpush.msra.mxu0 0.0
  %1468 = vmatpush.msra.mxu0 0.0
  %1469 = vmatpush.msra.mxu0 0.0
  %1470 = vmatpush.msra.mxu0 0.0
  %1471 = vmatpush.msra.mxu0 0.0
  %1472 = vmatpush.msra.mxu0 0.0
  %1473 = vmatpush.msra.mxu0 %v1385
  %1474 = vmatpush.msra.mxu0 %v1384
  %1475 = vmatpush.msra.mxu0 %v1383
  %1476 = vmatpush.msra.mxu0 %v1382
  %1477 = vmatmul.f32.gmra.mxu0 %v1387
  %v1478 = vpop.f32.mrf.mxu0
  %v1479 = vadd.f32 0.0, %v1478
  %1480 = vmatmul.f32.gmra.mxu0 %v1390
  %v1481 = vpop.f32.mrf.mxu0
  %v1482 = vadd.f32 0.0, %v1481
  %1483 = vmatmul.f32.gmra.mxu0 %v1393
  %v1484 = vpop.f32.mrf.mxu0
  %v1485 = vadd.f32 0.0, %v1484
  %1486 = vmatmul.f32.gmra.mxu0 %v1396
  %v1487 = vpop.f32.mrf.mxu0
  %v1488 = vadd.f32 0.0, %v1487
  %1489 = vmatmul.f32.gmra.mxu0 %v1399
  %v1490 = vpop.f32.mrf.mxu0
  %v1491 = vadd.f32 0.0, %v1490
  %1492 = vmatmul.f32.gmra.mxu0 %v1402
  %v1493 = vpop.f32.mrf.mxu0
  %v1494 = vadd.f32 0.0, %v1493
  %1495 = vmatmul.f32.gmra.mxu0 %v1405
  %v1496 = vpop.f32.mrf.mxu0
  %v1497 = vadd.f32 0.0, %v1496
  %1498 = vmatmul.f32.gmra.mxu0 %v1408
  %v1499 = vpop.f32.mrf.mxu0
  %v1500 = vadd.f32 0.0, %v1499
  %1501 = vmatmul.f32.gmra.mxu0 %v1411
  %v1502 = vpop.f32.mrf.mxu0
  %v1503 = vadd.f32 0.0, %v1502
  %1504 = vmatmul.f32.gmra.mxu0 %v1414
  %v1505 = vpop.f32.mrf.mxu0
  %v1506 = vadd.f32 0.0, %v1505
  %1507 = vmatmul.f32.gmra.mxu0 %v1417
  %v1508 = vpop.f32.mrf.mxu0
  %v1509 = vadd.f32 0.0, %v1508
  %1510 = vmatmul.f32.gmra.mxu0 %v1420
  %v1511 = vpop.f32.mrf.mxu0
  %v1512 = vadd.f32 0.0, %v1511
  %1513 = vmatmul.f32.gmra.mxu0 %v1423
  %v1514 = vpop.f32.mrf.mxu0
  %v1515 = vadd.f32 0.0, %v1514
  %1516 = vmatmul.f32.gmra.mxu0 %v1426
  %v1517 = vpop.f32.mrf.mxu0
  %v1518 = vadd.f32 0.0, %v1517
  %1519 = vmatmul.f32.gmra.mxu0 %v1429
  %v1520 = vpop.f32.mrf.mxu0
  %v1521 = vadd.f32 0.0, %v1520
  %1522 = vmatmul.f32.gmra.mxu0 %v1432
  %v1523 = vpop.f32.mrf.mxu0
  %v1524 = vadd.f32 0.0, %v1523
  %1525 = vmatmul.f32.gmra.mxu0 %v1435
  %v1526 = vpop.f32.mrf.mxu0
  %v1527 = vadd.f32 0.0, %v1526
  %1528 = vmatmul.f32.gmra.mxu0 %v1438
  %v1529 = vpop.f32.mrf.mxu0
  %v1530 = vadd.f32 0.0, %v1529
  %1531 = vmatmul.f32.gmra.mxu0 %v1441
  %v1532 = vpop.f32.mrf.mxu0
  %v1533 = vadd.f32 0.0, %v1532
  %1534 = vmatmul.f32.gmra.mxu0 %v1444
  %v1535 = vpop.f32.mrf.mxu0
  %v1536 = vadd.f32 0.0, %v1535
  %1537 = vmatmul.f32.gmra.mxu0 %v1447
  %v1538 = vpop.f32.mrf.mxu0
  %v1539 = vadd.f32 0.0, %v1538
  %1540 = vmatmul.f32.gmra.mxu0 %v1450
  %v1541 = vpop.f32.mrf.mxu0
  %v1542 = vadd.f32 0.0, %v1541
  %1543 = vmatmul.f32.gmra.mxu0 %v1453
  %v1544 = vpop.f32.mrf.mxu0
  %v1545 = vadd.f32 0.0, %v1544
  %1546 = vmatmul.f32.gmra.mxu0 %v1456
  %v1547 = vpop.f32.mrf.mxu0
  %v1548 = vadd.f32 0.0, %v1547
  %1549 = vmatmul.f32.gmra.mxu0 %v1459
  %v1550 = vpop.f32.mrf.mxu0
  %v1551 = vadd.f32 0.0, %v1550
  %1552 = vdwg.mxu0
  %v1553 = vadd.f32 %v1331, %v1479
  %v1554 = vadd.f32 %v1332, %v1482
  %v1555 = vadd.f32 %v1333, %v1485
  %v1556 = vadd.f32 %v1334, %v1488
  %v1557 = vadd.f32 %v1335, %v1491
  %v1558 = vadd.f32 %v1336, %v1494
  %v1559 = vadd.f32 %v1337, %v1497
  %v1560 = vadd.f32 %v1338, %v1500
  %v1561 = vadd.f32 %v1339, %v1503
  %v1562 = vadd.f32 %v1340, %v1506
  %v1563 = vadd.f32 %v1341, %v1509
  %v1564 = vadd.f32 %v1342, %v1512
  %v1565 = vadd.f32 %v1343, %v1515
  %v1566 = vadd.f32 %v1344, %v1518
  %v1567 = vadd.f32 %v1345, %v1521
  %v1568 = vadd.f32 %v1346, %v1524
  %v1569 = vadd.f32 %v1347, %v1527
  %v1570 = vadd.f32 %v1348, %v1530
  %v1571 = vadd.f32 %v1349, %v1533
  %v1572 = vadd.f32 %v1350, %v1536
  %v1573 = vadd.f32 %v1351, %v1539
  %v1574 = vadd.f32 %v1352, %v1542
  %v1575 = vadd.f32 %v1353, %v1545
  %v1576 = vadd.f32 %v1354, %v1548
  %v1577 = vadd.f32 %v1355, %v1551
  %v1578 = vld [vmem:[#allocation2 + $0x14] sm:$0xff]
  %v1579 = vld [vmem:[#allocation2 + $0x1c] sm:$0xff]
  %v1580 = vld [vmem:[#allocation2 + $0x24] sm:$0xff]
  %v1581 = vld [vmem:[#allocation2 + $0x2c] sm:$0xff]
  %v1582 = vld [vmem:[#allocation2 + $0x34] sm:$0xff]
  %v1583 = vld [vmem:[#allocation2 + $0x3c] sm:$0xff]
  %v1584 = vld [vmem:[#allocation2 + $0x44] sm:$0xff]
  %v1585 = vld [vmem:[#allocation2 + $0x4c] sm:$0xff]
  %v1586 = vld [vmem:[#allocation2 + $0x54] sm:$0xff]
  %v1587 = vld [vmem:[#allocation2 + $0x5c] sm:$0xff]
  %v1588 = vld [vmem:[#allocation2 + $0x64] sm:$0xff]
  %v1589 = vld [vmem:[#allocation2 + $0x6c] sm:$0xff]
  %v1590 = vld [vmem:[#allocation2 + $0x74] sm:$0xff]
  %v1591 = vld [vmem:[#allocation2 + $0x7c] sm:$0xff]
  %v1592 = vld [vmem:[#allocation2 + $0x84] sm:$0xff]
  %v1593 = vld [vmem:[#allocation2 + $0x8c] sm:$0xff]
  %v1594 = vld [vmem:[#allocation2 + $0x94] sm:$0xff]
  %v1595 = vld [vmem:[#allocation2 + $0x9c] sm:$0xff]
  %v1596 = vld [vmem:[#allocation2 + $0xa4] sm:$0xff]
  %v1597 = vld [vmem:[#allocation2 + $0xac] sm:$0xff]
  %v1598 = vld [vmem:[#allocation2 + $0xb4] sm:$0xff]
  %v1599 = vld [vmem:[#allocation2 + $0xbc] sm:$0xff]
  %v1600 = vld [vmem:[#allocation2 + $0xc4] sm:$0xff]
  %v1601 = vld [vmem:[#allocation2 + $0xcc] sm:$0xff]
  %v1602 = vld [vmem:[#allocation2 + $0xd4] sm:$0xff]
  %s1603 = scalar_lea.vmem %s3, 192
  %v1604 = vld [vmem:[%s1603] sm:$0xff]
  %v1605 = vld [vmem:[%s1603 + $0x8] sm:$0xff]
  %v1606 = vld [vmem:[%s1603 + $0x10] sm:$0xff]
  %v1607 = vld [vmem:[%s1603 + $0x18] sm:$0xff]
  %v1609 = vsel %vm32, %v1578, 0
  %v1612 = vsel %vm32, %v1579, 0
  %v1615 = vsel %vm32, %v1580, 0
  %v1618 = vsel %vm32, %v1581, 0
  %v1621 = vsel %vm32, %v1582, 0
  %v1624 = vsel %vm32, %v1583, 0
  %v1627 = vsel %vm32, %v1584, 0
  %v1630 = vsel %vm32, %v1585, 0
  %v1633 = vsel %vm32, %v1586, 0
  %v1636 = vsel %vm32, %v1587, 0
  %v1639 = vsel %vm32, %v1588, 0
  %v1642 = vsel %vm32, %v1589, 0
  %v1645 = vsel %vm32, %v1590, 0
  %v1648 = vsel %vm32, %v1591, 0
  %v1651 = vsel %vm32, %v1592, 0
  %v1654 = vsel %vm32, %v1593, 0
  %v1657 = vsel %vm32, %v1594, 0
  %v1660 = vsel %vm32, %v1595, 0
  %v1663 = vsel %vm32, %v1596, 0
  %v1666 = vsel %vm32, %v1597, 0
  %v1669 = vsel %vm32, %v1598, 0
  %v1672 = vsel %vm32, %v1599, 0
  %v1675 = vsel %vm32, %v1600, 0
  %v1678 = vsel %vm32, %v1601, 0
  %v1681 = vsel %vm32, %v1602, 0
  %1683 = vmatpush.msra.mxu0 0.0
  %1684 = vmatpush.msra.mxu0 0.0
  %1685 = vmatpush.msra.mxu0 0.0
  %1686 = vmatpush.msra.mxu0 0.0
  %1687 = vmatpush.msra.mxu0 0.0
  %1688 = vmatpush.msra.mxu0 0.0
  %1689 = vmatpush.msra.mxu0 0.0
  %1690 = vmatpush.msra.mxu0 0.0
  %1691 = vmatpush.msra.mxu0 0.0
  %1692 = vmatpush.msra.mxu0 0.0
  %1693 = vmatpush.msra.mxu0 0.0
  %1694 = vmatpush.msra.mxu0 0.0
  %1695 = vmatpush.msra.mxu0 %v1607
  %1696 = vmatpush.msra.mxu0 %v1606
  %1697 = vmatpush.msra.mxu0 %v1605
  %1698 = vmatpush.msra.mxu0 %v1604
  %1699 = vmatmul.f32.gmra.mxu0 %v1609
  %v1700 = vpop.f32.mrf.mxu0
  %v1701 = vadd.f32 0.0, %v1700
  %1702 = vmatmul.f32.gmra.mxu0 %v1612
  %v1703 = vpop.f32.mrf.mxu0
  %v1704 = vadd.f32 0.0, %v1703
  %1705 = vmatmul.f32.gmra.mxu0 %v1615
  %v1706 = vpop.f32.mrf.mxu0
  %v1707 = vadd.f32 0.0, %v1706
  %1708 = vmatmul.f32.gmra.mxu0 %v1618
  %v1709 = vpop.f32.mrf.mxu0
  %v1710 = vadd.f32 0.0, %v1709
  %1711 = vmatmul.f32.gmra.mxu0 %v1621
  %v1712 = vpop.f32.mrf.mxu0
  %v1713 = vadd.f32 0.0, %v1712
  %1714 = vmatmul.f32.gmra.mxu0 %v1624
  %v1715 = vpop.f32.mrf.mxu0
  %v1716 = vadd.f32 0.0, %v1715
  %1717 = vmatmul.f32.gmra.mxu0 %v1627
  %v1718 = vpop.f32.mrf.mxu0
  %v1719 = vadd.f32 0.0, %v1718
  %1720 = vmatmul.f32.gmra.mxu0 %v1630
  %v1721 = vpop.f32.mrf.mxu0
  %v1722 = vadd.f32 0.0, %v1721
  %1723 = vmatmul.f32.gmra.mxu0 %v1633
  %v1724 = vpop.f32.mrf.mxu0
  %v1725 = vadd.f32 0.0, %v1724
  %1726 = vmatmul.f32.gmra.mxu0 %v1636
  %v1727 = vpop.f32.mrf.mxu0
  %v1728 = vadd.f32 0.0, %v1727
  %1729 = vmatmul.f32.gmra.mxu0 %v1639
  %v1730 = vpop.f32.mrf.mxu0
  %v1731 = vadd.f32 0.0, %v1730
  %1732 = vmatmul.f32.gmra.mxu0 %v1642
  %v1733 = vpop.f32.mrf.mxu0
  %v1734 = vadd.f32 0.0, %v1733
  %1735 = vmatmul.f32.gmra.mxu0 %v1645
  %v1736 = vpop.f32.mrf.mxu0
  %v1737 = vadd.f32 0.0, %v1736
  %1738 = vmatmul.f32.gmra.mxu0 %v1648
  %v1739 = vpop.f32.mrf.mxu0
  %v1740 = vadd.f32 0.0, %v1739
  %1741 = vmatmul.f32.gmra.mxu0 %v1651
  %v1742 = vpop.f32.mrf.mxu0
  %v1743 = vadd.f32 0.0, %v1742
  %1744 = vmatmul.f32.gmra.mxu0 %v1654
  %v1745 = vpop.f32.mrf.mxu0
  %v1746 = vadd.f32 0.0, %v1745
  %1747 = vmatmul.f32.gmra.mxu0 %v1657
  %v1748 = vpop.f32.mrf.mxu0
  %v1749 = vadd.f32 0.0, %v1748
  %1750 = vmatmul.f32.gmra.mxu0 %v1660
  %v1751 = vpop.f32.mrf.mxu0
  %v1752 = vadd.f32 0.0, %v1751
  %1753 = vmatmul.f32.gmra.mxu0 %v1663
  %v1754 = vpop.f32.mrf.mxu0
  %v1755 = vadd.f32 0.0, %v1754
  %1756 = vmatmul.f32.gmra.mxu0 %v1666
  %v1757 = vpop.f32.mrf.mxu0
  %v1758 = vadd.f32 0.0, %v1757
  %1759 = vmatmul.f32.gmra.mxu0 %v1669
  %v1760 = vpop.f32.mrf.mxu0
  %v1761 = vadd.f32 0.0, %v1760
  %1762 = vmatmul.f32.gmra.mxu0 %v1672
  %v1763 = vpop.f32.mrf.mxu0
  %v1764 = vadd.f32 0.0, %v1763
  %1765 = vmatmul.f32.gmra.mxu0 %v1675
  %v1766 = vpop.f32.mrf.mxu0
  %v1767 = vadd.f32 0.0, %v1766
  %1768 = vmatmul.f32.gmra.mxu0 %v1678
  %v1769 = vpop.f32.mrf.mxu0
  %v1770 = vadd.f32 0.0, %v1769
  %1771 = vmatmul.f32.gmra.mxu0 %v1681
  %v1772 = vpop.f32.mrf.mxu0
  %v1773 = vadd.f32 0.0, %v1772
  %1774 = vdwg.mxu0
  %v1775 = vadd.f32 %v1553, %v1701
  %v1776 = vadd.f32 %v1554, %v1704
  %v1777 = vadd.f32 %v1555, %v1707
  %v1778 = vadd.f32 %v1556, %v1710
  %v1779 = vadd.f32 %v1557, %v1713
  %v1780 = vadd.f32 %v1558, %v1716
  %v1781 = vadd.f32 %v1559, %v1719
  %v1782 = vadd.f32 %v1560, %v1722
  %v1783 = vadd.f32 %v1561, %v1725
  %v1784 = vadd.f32 %v1562, %v1728
  %v1785 = vadd.f32 %v1563, %v1731
  %v1786 = vadd.f32 %v1564, %v1734
  %v1787 = vadd.f32 %v1565, %v1737
  %v1788 = vadd.f32 %v1566, %v1740
  %v1789 = vadd.f32 %v1567, %v1743
  %v1790 = vadd.f32 %v1568, %v1746
  %v1791 = vadd.f32 %v1569, %v1749
  %v1792 = vadd.f32 %v1570, %v1752
  %v1793 = vadd.f32 %v1571, %v1755
  %v1794 = vadd.f32 %v1572, %v1758
  %v1795 = vadd.f32 %v1573, %v1761
  %v1796 = vadd.f32 %v1574, %v1764
  %v1797 = vadd.f32 %v1575, %v1767
  %v1798 = vadd.f32 %v1576, %v1770
  %v1799 = vadd.f32 %v1577, %v1773
  %v1800 = vld [vmem:[#allocation2 + $0x15] sm:$0xff]
  %v1801 = vld [vmem:[#allocation2 + $0x1d] sm:$0xff]
  %v1802 = vld [vmem:[#allocation2 + $0x25] sm:$0xff]
  %v1803 = vld [vmem:[#allocation2 + $0x2d] sm:$0xff]
  %v1804 = vld [vmem:[#allocation2 + $0x35] sm:$0xff]
  %v1805 = vld [vmem:[#allocation2 + $0x3d] sm:$0xff]
  %v1806 = vld [vmem:[#allocation2 + $0x45] sm:$0xff]
  %v1807 = vld [vmem:[#allocation2 + $0x4d] sm:$0xff]
  %v1808 = vld [vmem:[#allocation2 + $0x55] sm:$0xff]
  %v1809 = vld [vmem:[#allocation2 + $0x5d] sm:$0xff]
  %v1810 = vld [vmem:[#allocation2 + $0x65] sm:$0xff]
  %v1811 = vld [vmem:[#allocation2 + $0x6d] sm:$0xff]
  %v1812 = vld [vmem:[#allocation2 + $0x75] sm:$0xff]
  %v1813 = vld [vmem:[#allocation2 + $0x7d] sm:$0xff]
  %v1814 = vld [vmem:[#allocation2 + $0x85] sm:$0xff]
  %v1815 = vld [vmem:[#allocation2 + $0x8d] sm:$0xff]
  %v1816 = vld [vmem:[#allocation2 + $0x95] sm:$0xff]
  %v1817 = vld [vmem:[#allocation2 + $0x9d] sm:$0xff]
  %v1818 = vld [vmem:[#allocation2 + $0xa5] sm:$0xff]
  %v1819 = vld [vmem:[#allocation2 + $0xad] sm:$0xff]
  %v1820 = vld [vmem:[#allocation2 + $0xb5] sm:$0xff]
  %v1821 = vld [vmem:[#allocation2 + $0xbd] sm:$0xff]
  %v1822 = vld [vmem:[#allocation2 + $0xc5] sm:$0xff]
  %v1823 = vld [vmem:[#allocation2 + $0xcd] sm:$0xff]
  %v1824 = vld [vmem:[#allocation2 + $0xd5] sm:$0xff]
  %s1825 = scalar_lea.vmem %s3, 224
  %v1826 = vld [vmem:[%s1825] sm:$0xff]
  %v1827 = vld [vmem:[%s1825 + $0x8] sm:$0xff]
  %v1828 = vld [vmem:[%s1825 + $0x10] sm:$0xff]
  %v1829 = vld [vmem:[%s1825 + $0x18] sm:$0xff]
  %v1831 = vsel %vm32, %v1800, 0
  %v1834 = vsel %vm32, %v1801, 0
  %v1837 = vsel %vm32, %v1802, 0
  %v1840 = vsel %vm32, %v1803, 0
  %v1843 = vsel %vm32, %v1804, 0
  %v1846 = vsel %vm32, %v1805, 0
  %v1849 = vsel %vm32, %v1806, 0
  %v1852 = vsel %vm32, %v1807, 0
  %v1855 = vsel %vm32, %v1808, 0
  %v1858 = vsel %vm32, %v1809, 0
  %v1861 = vsel %vm32, %v1810, 0
  %v1864 = vsel %vm32, %v1811, 0
  %v1867 = vsel %vm32, %v1812, 0
  %v1870 = vsel %vm32, %v1813, 0
  %v1873 = vsel %vm32, %v1814, 0
  %v1876 = vsel %vm32, %v1815, 0
  %v1879 = vsel %vm32, %v1816, 0
  %v1882 = vsel %vm32, %v1817, 0
  %v1885 = vsel %vm32, %v1818, 0
  %v1888 = vsel %vm32, %v1819, 0
  %v1891 = vsel %vm32, %v1820, 0
  %v1894 = vsel %vm32, %v1821, 0
  %v1897 = vsel %vm32, %v1822, 0
  %v1900 = vsel %vm32, %v1823, 0
  %v1903 = vsel %vm32, %v1824, 0
  %1905 = vmatpush.msra.mxu0 0.0
  %1906 = vmatpush.msra.mxu0 0.0
  %1907 = vmatpush.msra.mxu0 0.0
  %1908 = vmatpush.msra.mxu0 0.0
  %1909 = vmatpush.msra.mxu0 0.0
  %1910 = vmatpush.msra.mxu0 0.0
  %1911 = vmatpush.msra.mxu0 0.0
  %1912 = vmatpush.msra.mxu0 0.0
  %1913 = vmatpush.msra.mxu0 0.0
  %1914 = vmatpush.msra.mxu0 0.0
  %1915 = vmatpush.msra.mxu0 0.0
  %1916 = vmatpush.msra.mxu0 0.0
  %1917 = vmatpush.msra.mxu0 %v1829
  %1918 = vmatpush.msra.mxu0 %v1828
  %1919 = vmatpush.msra.mxu0 %v1827
  %1920 = vmatpush.msra.mxu0 %v1826
  %1921 = vmatmul.f32.gmra.mxu0 %v1831
  %v1922 = vpop.f32.mrf.mxu0
  %v1923 = vadd.f32 0.0, %v1922
  %1924 = vmatmul.f32.gmra.mxu0 %v1834
  %v1925 = vpop.f32.mrf.mxu0
  %v1926 = vadd.f32 0.0, %v1925
  %1927 = vmatmul.f32.gmra.mxu0 %v1837
  %v1928 = vpop.f32.mrf.mxu0
  %v1929 = vadd.f32 0.0, %v1928
  %1930 = vmatmul.f32.gmra.mxu0 %v1840
  %v1931 = vpop.f32.mrf.mxu0
  %v1932 = vadd.f32 0.0, %v1931
  %1933 = vmatmul.f32.gmra.mxu0 %v1843
  %v1934 = vpop.f32.mrf.mxu0
  %v1935 = vadd.f32 0.0, %v1934
  %1936 = vmatmul.f32.gmra.mxu0 %v1846
  %v1937 = vpop.f32.mrf.mxu0
  %v1938 = vadd.f32 0.0, %v1937
  %1939 = vmatmul.f32.gmra.mxu0 %v1849
  %v1940 = vpop.f32.mrf.mxu0
  %v1941 = vadd.f32 0.0, %v1940
  %1942 = vmatmul.f32.gmra.mxu0 %v1852
  %v1943 = vpop.f32.mrf.mxu0
  %v1944 = vadd.f32 0.0, %v1943
  %1945 = vmatmul.f32.gmra.mxu0 %v1855
  %v1946 = vpop.f32.mrf.mxu0
  %v1947 = vadd.f32 0.0, %v1946
  %1948 = vmatmul.f32.gmra.mxu0 %v1858
  %v1949 = vpop.f32.mrf.mxu0
  %v1950 = vadd.f32 0.0, %v1949
  %1951 = vmatmul.f32.gmra.mxu0 %v1861
  %v1952 = vpop.f32.mrf.mxu0
  %v1953 = vadd.f32 0.0, %v1952
  %1954 = vmatmul.f32.gmra.mxu0 %v1864
  %v1955 = vpop.f32.mrf.mxu0
  %v1956 = vadd.f32 0.0, %v1955
  %1957 = vmatmul.f32.gmra.mxu0 %v1867
  %v1958 = vpop.f32.mrf.mxu0
  %v1959 = vadd.f32 0.0, %v1958
  %1960 = vmatmul.f32.gmra.mxu0 %v1870
  %v1961 = vpop.f32.mrf.mxu0
  %v1962 = vadd.f32 0.0, %v1961
  %1963 = vmatmul.f32.gmra.mxu0 %v1873
  %v1964 = vpop.f32.mrf.mxu0
  %v1965 = vadd.f32 0.0, %v1964
  %1966 = vmatmul.f32.gmra.mxu0 %v1876
  %v1967 = vpop.f32.mrf.mxu0
  %v1968 = vadd.f32 0.0, %v1967
  %1969 = vmatmul.f32.gmra.mxu0 %v1879
  %v1970 = vpop.f32.mrf.mxu0
  %v1971 = vadd.f32 0.0, %v1970
  %1972 = vmatmul.f32.gmra.mxu0 %v1882
  %v1973 = vpop.f32.mrf.mxu0
  %v1974 = vadd.f32 0.0, %v1973
  %1975 = vmatmul.f32.gmra.mxu0 %v1885
  %v1976 = vpop.f32.mrf.mxu0
  %v1977 = vadd.f32 0.0, %v1976
  %1978 = vmatmul.f32.gmra.mxu0 %v1888
  %v1979 = vpop.f32.mrf.mxu0
  %v1980 = vadd.f32 0.0, %v1979
  %1981 = vmatmul.f32.gmra.mxu0 %v1891
  %v1982 = vpop.f32.mrf.mxu0
  %v1983 = vadd.f32 0.0, %v1982
  %1984 = vmatmul.f32.gmra.mxu0 %v1894
  %v1985 = vpop.f32.mrf.mxu0
  %v1986 = vadd.f32 0.0, %v1985
  %1987 = vmatmul.f32.gmra.mxu0 %v1897
  %v1988 = vpop.f32.mrf.mxu0
  %v1989 = vadd.f32 0.0, %v1988
  %1990 = vmatmul.f32.gmra.mxu0 %v1900
  %v1991 = vpop.f32.mrf.mxu0
  %v1992 = vadd.f32 0.0, %v1991
  %1993 = vmatmul.f32.gmra.mxu0 %v1903
  %v1994 = vpop.f32.mrf.mxu0
  %v1995 = vadd.f32 0.0, %v1994
  %1996 = vdwg.mxu0
  %v1997 = vadd.f32 %v1775, %v1923
  %v1998 = vadd.f32 %v1776, %v1926
  %v1999 = vadd.f32 %v1777, %v1929
  %v2000 = vadd.f32 %v1778, %v1932
  %v2001 = vadd.f32 %v1779, %v1935
  %v2002 = vadd.f32 %v1780, %v1938
  %v2003 = vadd.f32 %v1781, %v1941
  %v2004 = vadd.f32 %v1782, %v1944
  %v2005 = vadd.f32 %v1783, %v1947
  %v2006 = vadd.f32 %v1784, %v1950
  %v2007 = vadd.f32 %v1785, %v1953
  %v2008 = vadd.f32 %v1786, %v1956
  %v2009 = vadd.f32 %v1787, %v1959
  %v2010 = vadd.f32 %v1788, %v1962
  %v2011 = vadd.f32 %v1789, %v1965
  %v2012 = vadd.f32 %v1790, %v1968
  %v2013 = vadd.f32 %v1791, %v1971
  %v2014 = vadd.f32 %v1792, %v1974
  %v2015 = vadd.f32 %v1793, %v1977
  %v2016 = vadd.f32 %v1794, %v1980
  %v2017 = vadd.f32 %v1795, %v1983
  %v2018 = vadd.f32 %v1796, %v1986
  %v2019 = vadd.f32 %v1797, %v1989
  %v2020 = vadd.f32 %v1798, %v1992
  %v2021 = vadd.f32 %v1799, %v1995
  %v2022 = vld [vmem:[#allocation2 + $0x16] sm:$0xff]
  %v2023 = vld [vmem:[#allocation2 + $0x1e] sm:$0xff]
  %v2024 = vld [vmem:[#allocation2 + $0x26] sm:$0xff]
  %v2025 = vld [vmem:[#allocation2 + $0x2e] sm:$0xff]
  %v2026 = vld [vmem:[#allocation2 + $0x36] sm:$0xff]
  %v2027 = vld [vmem:[#allocation2 + $0x3e] sm:$0xff]
  %v2028 = vld [vmem:[#allocation2 + $0x46] sm:$0xff]
  %v2029 = vld [vmem:[#allocation2 + $0x4e] sm:$0xff]
  %v2030 = vld [vmem:[#allocation2 + $0x56] sm:$0xff]
  %v2031 = vld [vmem:[#allocation2 + $0x5e] sm:$0xff]
  %v2032 = vld [vmem:[#allocation2 + $0x66] sm:$0xff]
  %v2033 = vld [vmem:[#allocation2 + $0x6e] sm:$0xff]
  %v2034 = vld [vmem:[#allocation2 + $0x76] sm:$0xff]
  %v2035 = vld [vmem:[#allocation2 + $0x7e] sm:$0xff]
  %v2036 = vld [vmem:[#allocation2 + $0x86] sm:$0xff]
  %v2037 = vld [vmem:[#allocation2 + $0x8e] sm:$0xff]
  %v2038 = vld [vmem:[#allocation2 + $0x96] sm:$0xff]
  %v2039 = vld [vmem:[#allocation2 + $0x9e] sm:$0xff]
  %v2040 = vld [vmem:[#allocation2 + $0xa6] sm:$0xff]
  %v2041 = vld [vmem:[#allocation2 + $0xae] sm:$0xff]
  %v2042 = vld [vmem:[#allocation2 + $0xb6] sm:$0xff]
  %v2043 = vld [vmem:[#allocation2 + $0xbe] sm:$0xff]
  %v2044 = vld [vmem:[#allocation2 + $0xc6] sm:$0xff]
  %v2045 = vld [vmem:[#allocation2 + $0xce] sm:$0xff]
  %v2046 = vld [vmem:[#allocation2 + $0xd6] sm:$0xff]
  %s2047 = scalar_lea.vmem %s3, 256
  %v2048 = vld [vmem:[%s2047] sm:$0xff]
  %v2049 = vld [vmem:[%s2047 + $0x8] sm:$0xff]
  %v2050 = vld [vmem:[%s2047 + $0x10] sm:$0xff]
  %v2051 = vld [vmem:[%s2047 + $0x18] sm:$0xff]
  %v2053 = vsel %vm32, %v2022, 0
  %v2056 = vsel %vm32, %v2023, 0
  %v2059 = vsel %vm32, %v2024, 0
  %v2062 = vsel %vm32, %v2025, 0
  %v2065 = vsel %vm32, %v2026, 0
  %v2068 = vsel %vm32, %v2027, 0
  %v2071 = vsel %vm32, %v2028, 0
  %v2074 = vsel %vm32, %v2029, 0
  %v2077 = vsel %vm32, %v2030, 0
  %v2080 = vsel %vm32, %v2031, 0
  %v2083 = vsel %vm32, %v2032, 0
  %v2086 = vsel %vm32, %v2033, 0
  %v2089 = vsel %vm32, %v2034, 0
  %v2092 = vsel %vm32, %v2035, 0
  %v2095 = vsel %vm32, %v2036, 0
  %v2098 = vsel %vm32, %v2037, 0
  %v2101 = vsel %vm32, %v2038, 0
  %v2104 = vsel %vm32, %v2039, 0
  %v2107 = vsel %vm32, %v2040, 0
  %v2110 = vsel %vm32, %v2041, 0
  %v2113 = vsel %vm32, %v2042, 0
  %v2116 = vsel %vm32, %v2043, 0
  %v2119 = vsel %vm32, %v2044, 0
  %v2122 = vsel %vm32, %v2045, 0
  %v2125 = vsel %vm32, %v2046, 0
  %2127 = vmatpush.msra.mxu0 0.0
  %2128 = vmatpush.msra.mxu0 0.0
  %2129 = vmatpush.msra.mxu0 0.0
  %2130 = vmatpush.msra.mxu0 0.0
  %2131 = vmatpush.msra.mxu0 0.0
  %2132 = vmatpush.msra.mxu0 0.0
  %2133 = vmatpush.msra.mxu0 0.0
  %2134 = vmatpush.msra.mxu0 0.0
  %2135 = vmatpush.msra.mxu0 0.0
  %2136 = vmatpush.msra.mxu0 0.0
  %2137 = vmatpush.msra.mxu0 0.0
  %2138 = vmatpush.msra.mxu0 0.0
  %2139 = vmatpush.msra.mxu0 %v2051
  %2140 = vmatpush.msra.mxu0 %v2050
  %2141 = vmatpush.msra.mxu0 %v2049
  %2142 = vmatpush.msra.mxu0 %v2048
  %2143 = vmatmul.f32.gmra.mxu0 %v2053
  %v2144 = vpop.f32.mrf.mxu0
  %v2145 = vadd.f32 0.0, %v2144
  %2146 = vmatmul.f32.gmra.mxu0 %v2056
  %v2147 = vpop.f32.mrf.mxu0
  %v2148 = vadd.f32 0.0, %v2147
  %2149 = vmatmul.f32.gmra.mxu0 %v2059
  %v2150 = vpop.f32.mrf.mxu0
  %v2151 = vadd.f32 0.0, %v2150
  %2152 = vmatmul.f32.gmra.mxu0 %v2062
  %v2153 = vpop.f32.mrf.mxu0
  %v2154 = vadd.f32 0.0, %v2153
  %2155 = vmatmul.f32.gmra.mxu0 %v2065
  %v2156 = vpop.f32.mrf.mxu0
  %v2157 = vadd.f32 0.0, %v2156
  %2158 = vmatmul.f32.gmra.mxu0 %v2068
  %v2159 = vpop.f32.mrf.mxu0
  %v2160 = vadd.f32 0.0, %v2159
  %2161 = vmatmul.f32.gmra.mxu0 %v2071
  %v2162 = vpop.f32.mrf.mxu0
  %v2163 = vadd.f32 0.0, %v2162
  %2164 = vmatmul.f32.gmra.mxu0 %v2074
  %v2165 = vpop.f32.mrf.mxu0
  %v2166 = vadd.f32 0.0, %v2165
  %2167 = vmatmul.f32.gmra.mxu0 %v2077
  %v2168 = vpop.f32.mrf.mxu0
  %v2169 = vadd.f32 0.0, %v2168
  %2170 = vmatmul.f32.gmra.mxu0 %v2080
  %v2171 = vpop.f32.mrf.mxu0
  %v2172 = vadd.f32 0.0, %v2171
  %2173 = vmatmul.f32.gmra.mxu0 %v2083
  %v2174 = vpop.f32.mrf.mxu0
  %v2175 = vadd.f32 0.0, %v2174
  %2176 = vmatmul.f32.gmra.mxu0 %v2086
  %v2177 = vpop.f32.mrf.mxu0
  %v2178 = vadd.f32 0.0, %v2177
  %2179 = vmatmul.f32.gmra.mxu0 %v2089
  %v2180 = vpop.f32.mrf.mxu0
  %v2181 = vadd.f32 0.0, %v2180
  %2182 = vmatmul.f32.gmra.mxu0 %v2092
  %v2183 = vpop.f32.mrf.mxu0
  %v2184 = vadd.f32 0.0, %v2183
  %2185 = vmatmul.f32.gmra.mxu0 %v2095
  %v2186 = vpop.f32.mrf.mxu0
  %v2187 = vadd.f32 0.0, %v2186
  %2188 = vmatmul.f32.gmra.mxu0 %v2098
  %v2189 = vpop.f32.mrf.mxu0
  %v2190 = vadd.f32 0.0, %v2189
  %2191 = vmatmul.f32.gmra.mxu0 %v2101
  %v2192 = vpop.f32.mrf.mxu0
  %v2193 = vadd.f32 0.0, %v2192
  %2194 = vmatmul.f32.gmra.mxu0 %v2104
  %v2195 = vpop.f32.mrf.mxu0
  %v2196 = vadd.f32 0.0, %v2195
  %2197 = vmatmul.f32.gmra.mxu0 %v2107
  %v2198 = vpop.f32.mrf.mxu0
  %v2199 = vadd.f32 0.0, %v2198
  %2200 = vmatmul.f32.gmra.mxu0 %v2110
  %v2201 = vpop.f32.mrf.mxu0
  %v2202 = vadd.f32 0.0, %v2201
  %2203 = vmatmul.f32.gmra.mxu0 %v2113
  %v2204 = vpop.f32.mrf.mxu0
  %v2205 = vadd.f32 0.0, %v2204
  %2206 = vmatmul.f32.gmra.mxu0 %v2116
  %v2207 = vpop.f32.mrf.mxu0
  %v2208 = vadd.f32 0.0, %v2207
  %2209 = vmatmul.f32.gmra.mxu0 %v2119
  %v2210 = vpop.f32.mrf.mxu0
  %v2211 = vadd.f32 0.0, %v2210
  %2212 = vmatmul.f32.gmra.mxu0 %v2122
  %v2213 = vpop.f32.mrf.mxu0
  %v2214 = vadd.f32 0.0, %v2213
  %2215 = vmatmul.f32.gmra.mxu0 %v2125
  %v2216 = vpop.f32.mrf.mxu0
  %v2217 = vadd.f32 0.0, %v2216
  %2218 = vdwg.mxu0
  %v2219 = vadd.f32 %v1997, %v2145
  %v2220 = vadd.f32 %v1998, %v2148
  %v2221 = vadd.f32 %v1999, %v2151
  %v2222 = vadd.f32 %v2000, %v2154
  %v2223 = vadd.f32 %v2001, %v2157
  %v2224 = vadd.f32 %v2002, %v2160
  %v2225 = vadd.f32 %v2003, %v2163
  %v2226 = vadd.f32 %v2004, %v2166
  %v2227 = vadd.f32 %v2005, %v2169
  %v2228 = vadd.f32 %v2006, %v2172
  %v2229 = vadd.f32 %v2007, %v2175
  %v2230 = vadd.f32 %v2008, %v2178
  %v2231 = vadd.f32 %v2009, %v2181
  %v2232 = vadd.f32 %v2010, %v2184
  %v2233 = vadd.f32 %v2011, %v2187
  %v2234 = vadd.f32 %v2012, %v2190
  %v2235 = vadd.f32 %v2013, %v2193
  %v2236 = vadd.f32 %v2014, %v2196
  %v2237 = vadd.f32 %v2015, %v2199
  %v2238 = vadd.f32 %v2016, %v2202
  %v2239 = vadd.f32 %v2017, %v2205
  %v2240 = vadd.f32 %v2018, %v2208
  %v2241 = vadd.f32 %v2019, %v2211
  %v2242 = vadd.f32 %v2020, %v2214
  %v2243 = vadd.f32 %v2021, %v2217
  %v2244 = vld [vmem:[%s4] sm:$0x1]
  %v2246 = vperm.slane %v2244, 0
  %v2248 = vadd.f32 %v2219, %v2246
  %v2249 = vadd.f32 %v2220, %v2246
  %v2250 = vadd.f32 %v2221, %v2246
  %v2251 = vadd.f32 %v2222, %v2246
  %v2252 = vadd.f32 %v2223, %v2246
  %v2253 = vadd.f32 %v2224, %v2246
  %v2254 = vadd.f32 %v2225, %v2246
  %v2255 = vadd.f32 %v2226, %v2246
  %v2256 = vadd.f32 %v2227, %v2246
  %v2257 = vadd.f32 %v2228, %v2246
  %v2258 = vadd.f32 %v2229, %v2246
  %v2259 = vadd.f32 %v2230, %v2246
  %v2260 = vadd.f32 %v2231, %v2246
  %v2261 = vadd.f32 %v2232, %v2246
  %v2262 = vadd.f32 %v2233, %v2246
  %v2263 = vadd.f32 %v2234, %v2246
  %v2264 = vadd.f32 %v2235, %v2246
  %v2265 = vadd.f32 %v2236, %v2246
  %v2266 = vadd.f32 %v2237, %v2246
  %v2267 = vadd.f32 %v2238, %v2246
  %v2268 = vadd.f32 %v2239, %v2246
  %v2269 = vadd.f32 %v2240, %v2246
  %v2270 = vadd.f32 %v2241, %v2246
  %v2271 = vadd.f32 %v2242, %v2246
  %v2272 = vadd.f32 %v2243, %v2246
  %v2273 = vmax.f32 %v2248, 0.0
  %v2274 = vmax.f32 %v2249, 0.0
  %v2275 = vmax.f32 %v2250, 0.0
  %v2276 = vmax.f32 %v2251, 0.0
  %v2277 = vmax.f32 %v2252, 0.0
  %v2278 = vmax.f32 %v2253, 0.0
  %v2279 = vmax.f32 %v2254, 0.0
  %v2280 = vmax.f32 %v2255, 0.0
  %v2281 = vmax.f32 %v2256, 0.0
  %v2282 = vmax.f32 %v2257, 0.0
  %v2283 = vmax.f32 %v2258, 0.0
  %v2284 = vmax.f32 %v2259, 0.0
  %v2285 = vmax.f32 %v2260, 0.0
  %v2286 = vmax.f32 %v2261, 0.0
  %v2287 = vmax.f32 %v2262, 0.0
  %v2288 = vmax.f32 %v2263, 0.0
  %v2289 = vmax.f32 %v2264, 0.0
  %v2290 = vmax.f32 %v2265, 0.0
  %v2291 = vmax.f32 %v2266, 0.0
  %v2292 = vmax.f32 %v2267, 0.0
  %v2293 = vmax.f32 %v2268, 0.0
  %v2294 = vmax.f32 %v2269, 0.0
  %v2295 = vmax.f32 %v2270, 0.0
  %v2296 = vmax.f32 %v2271, 0.0
  %v2297 = vmax.f32 %v2272, 0.0
  %2298 = vst.msk [vmem:[#allocation3] sm:$0xff] %vm32, %v2273
  %2299 = vst.msk [vmem:[#allocation3 + $0x8] sm:$0xff] %vm32, %v2274
  %2300 = vst.msk [vmem:[#allocation3 + $0x10] sm:$0xff] %vm32, %v2275
  %2301 = vst.msk [vmem:[#allocation3 + $0x18] sm:$0xff] %vm32, %v2276
  %2302 = vst.msk [vmem:[#allocation3 + $0x20] sm:$0xff] %vm32, %v2277
  %2303 = vst.msk [vmem:[#allocation3 + $0x28] sm:$0xff] %vm32, %v2278
  %2304 = vst.msk [vmem:[#allocation3 + $0x30] sm:$0xff] %vm32, %v2279
  %2305 = vst.msk [vmem:[#allocation3 + $0x38] sm:$0xff] %vm32, %v2280
  %2306 = vst.msk [vmem:[#allocation3 + $0x40] sm:$0xff] %vm32, %v2281
  %2307 = vst.msk [vmem:[#allocation3 + $0x48] sm:$0xff] %vm32, %v2282
  %2308 = vst.msk [vmem:[#allocation3 + $0x50] sm:$0xff] %vm32, %v2283
  %2309 = vst.msk [vmem:[#allocation3 + $0x58] sm:$0xff] %vm32, %v2284
  %2310 = vst.msk [vmem:[#allocation3 + $0x60] sm:$0xff] %vm32, %v2285
  %2311 = vst.msk [vmem:[#allocation3 + $0x68] sm:$0xff] %vm32, %v2286
  %2312 = vst.msk [vmem:[#allocation3 + $0x70] sm:$0xff] %vm32, %v2287
  %2313 = vst.msk [vmem:[#allocation3 + $0x78] sm:$0xff] %vm32, %v2288
  %2314 = vst.msk [vmem:[#allocation3 + $0x80] sm:$0xff] %vm32, %v2289
  %2315 = vst.msk [vmem:[#allocation3 + $0x88] sm:$0xff] %vm32, %v2290
  %2316 = vst.msk [vmem:[#allocation3 + $0x90] sm:$0xff] %vm32, %v2291
  %2317 = vst.msk [vmem:[#allocation3 + $0x98] sm:$0xff] %vm32, %v2292
  %2318 = vst.msk [vmem:[#allocation3 + $0xa0] sm:$0xff] %vm32, %v2293
  %2319 = vst.msk [vmem:[#allocation3 + $0xa8] sm:$0xff] %vm32, %v2294
  %2320 = vst.msk [vmem:[#allocation3 + $0xb0] sm:$0xff] %vm32, %v2295
  %2321 = vst.msk [vmem:[#allocation3 + $0xb8] sm:$0xff] %vm32, %v2296
  %2322 = vst.msk [vmem:[#allocation3 + $0xc0] sm:$0xff] %vm32, %v2297
  %v2323 = vld [vmem:[#allocation3] sm:$0xff]
  %v2324 = vld [vmem:[#allocation3 + $0x8] sm:$0xff]
  %v2325 = vld [vmem:[#allocation3 + $0x10] sm:$0xff]
  %v2326 = vld [vmem:[#allocation3 + $0x18] sm:$0xff]
  %v2327 = vld [vmem:[#allocation3 + $0x20] sm:$0xff]
  %v2328 = vld [vmem:[#allocation3 + $0x28] sm:$0xff]
  %v2329 = vld [vmem:[#allocation3 + $0x30] sm:$0xff]
  %v2330 = vld [vmem:[#allocation3 + $0x38] sm:$0xff]
  %v2331 = vld [vmem:[#allocation3 + $0x40] sm:$0xff]
  %v2332 = vld [vmem:[#allocation3 + $0x48] sm:$0xff]
  %v2333 = vld [vmem:[#allocation3 + $0x50] sm:$0xff]
  %v2334 = vld [vmem:[#allocation3 + $0x58] sm:$0xff]
  %v2335 = vld [vmem:[#allocation3 + $0x60] sm:$0xff]
  %v2336 = vld [vmem:[#allocation3 + $0x68] sm:$0xff]
  %v2337 = vld [vmem:[#allocation3 + $0x70] sm:$0xff]
  %v2338 = vld [vmem:[#allocation3 + $0x78] sm:$0xff]
  %v2339 = vld [vmem:[#allocation3 + $0x80] sm:$0xff]
  %v2340 = vld [vmem:[#allocation3 + $0x88] sm:$0xff]
  %v2341 = vld [vmem:[#allocation3 + $0x90] sm:$0xff]
  %v2342 = vld [vmem:[#allocation3 + $0x98] sm:$0xff]
  %v2343 = vld [vmem:[#allocation3 + $0xa0] sm:$0xff]
  %v2344 = vld [vmem:[#allocation3 + $0xa8] sm:$0xff]
  %v2345 = vld [vmem:[#allocation3 + $0xb0] sm:$0xff]
  %v2346 = vld [vmem:[#allocation3 + $0xb8] sm:$0xff]
  %v2347 = vld [vmem:[#allocation3 + $0xc0] sm:$0xff]
  %v2348 = vld [vmem:[%s5] sm:$0xff]
  %v2349 = vld [vmem:[%s5 + $0x8] sm:$0xff]
  %v2350 = vld [vmem:[%s5 + $0x10] sm:$0xff]
  %v2351 = vld [vmem:[%s5 + $0x18] sm:$0xff]
  %v2352 = vld [vmem:[#allocation3 + $0x1] sm:$0xff]
  %v2353 = vld [vmem:[#allocation3 + $0x9] sm:$0xff]
  %v2354 = vld [vmem:[#allocation3 + $0x11] sm:$0xff]
  %v2355 = vld [vmem:[#allocation3 + $0x19] sm:$0xff]
  %v2356 = vld [vmem:[#allocation3 + $0x21] sm:$0xff]
  %v2357 = vld [vmem:[#allocation3 + $0x29] sm:$0xff]
  %v2358 = vld [vmem:[#allocation3 + $0x31] sm:$0xff]
  %v2359 = vld [vmem:[#allocation3 + $0x39] sm:$0xff]
  %v2360 = vld [vmem:[#allocation3 + $0x41] sm:$0xff]
  %v2361 = vld [vmem:[#allocation3 + $0x49] sm:$0xff]
  %v2362 = vld [vmem:[#allocation3 + $0x51] sm:$0xff]
  %v2363 = vld [vmem:[#allocation3 + $0x59] sm:$0xff]
  %v2364 = vld [vmem:[#allocation3 + $0x61] sm:$0xff]
  %v2365 = vld [vmem:[#allocation3 + $0x69] sm:$0xff]
  %v2366 = vld [vmem:[#allocation3 + $0x71] sm:$0xff]
  %v2367 = vld [vmem:[#allocation3 + $0x79] sm:$0xff]
  %v2368 = vld [vmem:[#allocation3 + $0x81] sm:$0xff]
  %v2369 = vld [vmem:[#allocation3 + $0x89] sm:$0xff]
  %v2370 = vld [vmem:[#allocation3 + $0x91] sm:$0xff]
  %v2371 = vld [vmem:[#allocation3 + $0x99] sm:$0xff]
  %v2372 = vld [vmem:[#allocation3 + $0xa1] sm:$0xff]
  %v2373 = vld [vmem:[#allocation3 + $0xa9] sm:$0xff]
  %v2374 = vld [vmem:[#allocation3 + $0xb1] sm:$0xff]
  %v2375 = vld [vmem:[#allocation3 + $0xb9] sm:$0xff]
  %v2376 = vld [vmem:[#allocation3 + $0xc1] sm:$0xff]
  %s2377 = scalar_lea.vmem %s5, 32
  %v2378 = vld [vmem:[%s2377] sm:$0xff]
  %v2379 = vld [vmem:[%s2377 + $0x8] sm:$0xff]
  %v2380 = vld [vmem:[%s2377 + $0x10] sm:$0xff]
  %v2381 = vld [vmem:[%s2377 + $0x18] sm:$0xff]
  %v2383 = vsel %vm32, %v2352, 0
  %v2386 = vsel %vm32, %v2353, 0
  %v2389 = vsel %vm32, %v2354, 0
  %v2392 = vsel %vm32, %v2355, 0
  %v2395 = vsel %vm32, %v2356, 0
  %v2398 = vsel %vm32, %v2357, 0
  %v2401 = vsel %vm32, %v2358, 0
  %v2404 = vsel %vm32, %v2359, 0
  %v2407 = vsel %vm32, %v2360, 0
  %v2410 = vsel %vm32, %v2361, 0
  %v2413 = vsel %vm32, %v2362, 0
  %v2416 = vsel %vm32, %v2363, 0
  %v2419 = vsel %vm32, %v2364, 0
  %v2422 = vsel %vm32, %v2365, 0
  %v2425 = vsel %vm32, %v2366, 0
  %v2428 = vsel %vm32, %v2367, 0
  %v2431 = vsel %vm32, %v2368, 0
  %v2434 = vsel %vm32, %v2369, 0
  %v2437 = vsel %vm32, %v2370, 0
  %v2440 = vsel %vm32, %v2371, 0
  %v2443 = vsel %vm32, %v2372, 0
  %v2446 = vsel %vm32, %v2373, 0
  %v2449 = vsel %vm32, %v2374, 0
  %v2452 = vsel %vm32, %v2375, 0
  %v2455 = vsel %vm32, %v2376, 0
  %2457 = vmatpush.msra.mxu0 0.0
  %2458 = vmatpush.msra.mxu0 0.0
  %2459 = vmatpush.msra.mxu0 0.0
  %2460 = vmatpush.msra.mxu0 0.0
  %2461 = vmatpush.msra.mxu0 0.0
  %2462 = vmatpush.msra.mxu0 0.0
  %2463 = vmatpush.msra.mxu0 0.0
  %2464 = vmatpush.msra.mxu0 0.0
  %2465 = vmatpush.msra.mxu0 0.0
  %2466 = vmatpush.msra.mxu0 0.0
  %2467 = vmatpush.msra.mxu0 0.0
  %2468 = vmatpush.msra.mxu0 0.0
  %2469 = vmatpush.msra.mxu0 %v2381
  %2470 = vmatpush.msra.mxu0 %v2380
  %2471 = vmatpush.msra.mxu0 %v2379
  %2472 = vmatpush.msra.mxu0 %v2378
  %2473 = vmatmul.f32.gmra.mxu0 %v2383
  %v2474 = vpop.f32.mrf.mxu0
  %v2475 = vadd.f32 0.0, %v2474
  %2476 = vmatmul.f32.gmra.mxu0 %v2386
  %v2477 = vpop.f32.mrf.mxu0
  %v2478 = vadd.f32 0.0, %v2477
  %2479 = vmatmul.f32.gmra.mxu0 %v2389
  %v2480 = vpop.f32.mrf.mxu0
  %v2481 = vadd.f32 0.0, %v2480
  %2482 = vmatmul.f32.gmra.mxu0 %v2392
  %v2483 = vpop.f32.mrf.mxu0
  %v2484 = vadd.f32 0.0, %v2483
  %2485 = vmatmul.f32.gmra.mxu0 %v2395
  %v2486 = vpop.f32.mrf.mxu0
  %v2487 = vadd.f32 0.0, %v2486
  %2488 = vmatmul.f32.gmra.mxu0 %v2398
  %v2489 = vpop.f32.mrf.mxu0
  %v2490 = vadd.f32 0.0, %v2489
  %2491 = vmatmul.f32.gmra.mxu0 %v2401
  %v2492 = vpop.f32.mrf.mxu0
  %v2493 = vadd.f32 0.0, %v2492
  %2494 = vmatmul.f32.gmra.mxu0 %v2404
  %v2495 = vpop.f32.mrf.mxu0
  %v2496 = vadd.f32 0.0, %v2495
  %2497 = vmatmul.f32.gmra.mxu0 %v2407
  %v2498 = vpop.f32.mrf.mxu0
  %v2499 = vadd.f32 0.0, %v2498
  %2500 = vmatmul.f32.gmra.mxu0 %v2410
  %v2501 = vpop.f32.mrf.mxu0
  %v2502 = vadd.f32 0.0, %v2501
  %2503 = vmatmul.f32.gmra.mxu0 %v2413
  %v2504 = vpop.f32.mrf.mxu0
  %v2505 = vadd.f32 0.0, %v2504
  %2506 = vmatmul.f32.gmra.mxu0 %v2416
  %v2507 = vpop.f32.mrf.mxu0
  %v2508 = vadd.f32 0.0, %v2507
  %2509 = vmatmul.f32.gmra.mxu0 %v2419
  %v2510 = vpop.f32.mrf.mxu0
  %v2511 = vadd.f32 0.0, %v2510
  %2512 = vmatmul.f32.gmra.mxu0 %v2422
  %v2513 = vpop.f32.mrf.mxu0
  %v2514 = vadd.f32 0.0, %v2513
  %2515 = vmatmul.f32.gmra.mxu0 %v2425
  %v2516 = vpop.f32.mrf.mxu0
  %v2517 = vadd.f32 0.0, %v2516
  %2518 = vmatmul.f32.gmra.mxu0 %v2428
  %v2519 = vpop.f32.mrf.mxu0
  %v2520 = vadd.f32 0.0, %v2519
  %2521 = vmatmul.f32.gmra.mxu0 %v2431
  %v2522 = vpop.f32.mrf.mxu0
  %v2523 = vadd.f32 0.0, %v2522
  %2524 = vmatmul.f32.gmra.mxu0 %v2434
  %v2525 = vpop.f32.mrf.mxu0
  %v2526 = vadd.f32 0.0, %v2525
  %2527 = vmatmul.f32.gmra.mxu0 %v2437
  %v2528 = vpop.f32.mrf.mxu0
  %v2529 = vadd.f32 0.0, %v2528
  %2530 = vmatmul.f32.gmra.mxu0 %v2440
  %v2531 = vpop.f32.mrf.mxu0
  %v2532 = vadd.f32 0.0, %v2531
  %2533 = vmatmul.f32.gmra.mxu0 %v2443
  %v2534 = vpop.f32.mrf.mxu0
  %v2535 = vadd.f32 0.0, %v2534
  %2536 = vmatmul.f32.gmra.mxu0 %v2446
  %v2537 = vpop.f32.mrf.mxu0
  %v2538 = vadd.f32 0.0, %v2537
  %2539 = vmatmul.f32.gmra.mxu0 %v2449
  %v2540 = vpop.f32.mrf.mxu0
  %v2541 = vadd.f32 0.0, %v2540
  %2542 = vmatmul.f32.gmra.mxu0 %v2452
  %v2543 = vpop.f32.mrf.mxu0
  %v2544 = vadd.f32 0.0, %v2543
  %2545 = vmatmul.f32.gmra.mxu0 %v2455
  %v2546 = vpop.f32.mrf.mxu0
  %v2547 = vadd.f32 0.0, %v2546
  %2548 = vdwg.mxu0
  %v2550 = vsel %vm32, %v2323, 0
  %v2553 = vsel %vm32, %v2324, 0
  %v2556 = vsel %vm32, %v2325, 0
  %v2559 = vsel %vm32, %v2326, 0
  %v2562 = vsel %vm32, %v2327, 0
  %v2565 = vsel %vm32, %v2328, 0
  %v2568 = vsel %vm32, %v2329, 0
  %v2571 = vsel %vm32, %v2330, 0
  %v2574 = vsel %vm32, %v2331, 0
  %v2577 = vsel %vm32, %v2332, 0
  %v2580 = vsel %vm32, %v2333, 0
  %v2583 = vsel %vm32, %v2334, 0
  %v2586 = vsel %vm32, %v2335, 0
  %v2589 = vsel %vm32, %v2336, 0
  %v2592 = vsel %vm32, %v2337, 0
  %v2595 = vsel %vm32, %v2338, 0
  %v2598 = vsel %vm32, %v2339, 0
  %v2601 = vsel %vm32, %v2340, 0
  %v2604 = vsel %vm32, %v2341, 0
  %v2607 = vsel %vm32, %v2342, 0
  %v2610 = vsel %vm32, %v2343, 0
  %v2613 = vsel %vm32, %v2344, 0
  %v2616 = vsel %vm32, %v2345, 0
  %v2619 = vsel %vm32, %v2346, 0
  %v2622 = vsel %vm32, %v2347, 0
  %2624 = vmatpush.msra.mxu0 0.0
  %2625 = vmatpush.msra.mxu0 0.0
  %2626 = vmatpush.msra.mxu0 0.0
  %2627 = vmatpush.msra.mxu0 0.0
  %2628 = vmatpush.msra.mxu0 0.0
  %2629 = vmatpush.msra.mxu0 0.0
  %2630 = vmatpush.msra.mxu0 0.0
  %2631 = vmatpush.msra.mxu0 0.0
  %2632 = vmatpush.msra.mxu0 0.0
  %2633 = vmatpush.msra.mxu0 0.0
  %2634 = vmatpush.msra.mxu0 0.0
  %2635 = vmatpush.msra.mxu0 0.0
  %2636 = vmatpush.msra.mxu0 %v2351
  %2637 = vmatpush.msra.mxu0 %v2350
  %2638 = vmatpush.msra.mxu0 %v2349
  %2639 = vmatpush.msra.mxu0 %v2348
  %2640 = vmatmul.f32.gmra.mxu0 %v2550
  %v2641 = vpop.f32.mrf.mxu0
  %v2642 = vadd.f32 %v2475, %v2641
  %2643 = vmatmul.f32.gmra.mxu0 %v2553
  %v2644 = vpop.f32.mrf.mxu0
  %v2645 = vadd.f32 %v2478, %v2644
  %2646 = vmatmul.f32.gmra.mxu0 %v2556
  %v2647 = vpop.f32.mrf.mxu0
  %v2648 = vadd.f32 %v2481, %v2647
  %2649 = vmatmul.f32.gmra.mxu0 %v2559
  %v2650 = vpop.f32.mrf.mxu0
  %v2651 = vadd.f32 %v2484, %v2650
  %2652 = vmatmul.f32.gmra.mxu0 %v2562
  %v2653 = vpop.f32.mrf.mxu0
  %v2654 = vadd.f32 %v2487, %v2653
  %2655 = vmatmul.f32.gmra.mxu0 %v2565
  %v2656 = vpop.f32.mrf.mxu0
  %v2657 = vadd.f32 %v2490, %v2656
  %2658 = vmatmul.f32.gmra.mxu0 %v2568
  %v2659 = vpop.f32.mrf.mxu0
  %v2660 = vadd.f32 %v2493, %v2659
  %2661 = vmatmul.f32.gmra.mxu0 %v2571
  %v2662 = vpop.f32.mrf.mxu0
  %v2663 = vadd.f32 %v2496, %v2662
  %2664 = vmatmul.f32.gmra.mxu0 %v2574
  %v2665 = vpop.f32.mrf.mxu0
  %v2666 = vadd.f32 %v2499, %v2665
  %2667 = vmatmul.f32.gmra.mxu0 %v2577
  %v2668 = vpop.f32.mrf.mxu0
  %v2669 = vadd.f32 %v2502, %v2668
  %2670 = vmatmul.f32.gmra.mxu0 %v2580
  %v2671 = vpop.f32.mrf.mxu0
  %v2672 = vadd.f32 %v2505, %v2671
  %2673 = vmatmul.f32.gmra.mxu0 %v2583
  %v2674 = vpop.f32.mrf.mxu0
  %v2675 = vadd.f32 %v2508, %v2674
  %2676 = vmatmul.f32.gmra.mxu0 %v2586
  %v2677 = vpop.f32.mrf.mxu0
  %v2678 = vadd.f32 %v2511, %v2677
  %2679 = vmatmul.f32.gmra.mxu0 %v2589
  %v2680 = vpop.f32.mrf.mxu0
  %v2681 = vadd.f32 %v2514, %v2680
  %2682 = vmatmul.f32.gmra.mxu0 %v2592
  %v2683 = vpop.f32.mrf.mxu0
  %v2684 = vadd.f32 %v2517, %v2683
  %2685 = vmatmul.f32.gmra.mxu0 %v2595
  %v2686 = vpop.f32.mrf.mxu0
  %v2687 = vadd.f32 %v2520, %v2686
  %2688 = vmatmul.f32.gmra.mxu0 %v2598
  %v2689 = vpop.f32.mrf.mxu0
  %v2690 = vadd.f32 %v2523, %v2689
  %2691 = vmatmul.f32.gmra.mxu0 %v2601
  %v2692 = vpop.f32.mrf.mxu0
  %v2693 = vadd.f32 %v2526, %v2692
  %2694 = vmatmul.f32.gmra.mxu0 %v2604
  %v2695 = vpop.f32.mrf.mxu0
  %v2696 = vadd.f32 %v2529, %v2695
  %2697 = vmatmul.f32.gmra.mxu0 %v2607
  %v2698 = vpop.f32.mrf.mxu0
  %v2699 = vadd.f32 %v2532, %v2698
  %2700 = vmatmul.f32.gmra.mxu0 %v2610
  %v2701 = vpop.f32.mrf.mxu0
  %v2702 = vadd.f32 %v2535, %v2701
  %2703 = vmatmul.f32.gmra.mxu0 %v2613
  %v2704 = vpop.f32.mrf.mxu0
  %v2705 = vadd.f32 %v2538, %v2704
  %2706 = vmatmul.f32.gmra.mxu0 %v2616
  %v2707 = vpop.f32.mrf.mxu0
  %v2708 = vadd.f32 %v2541, %v2707
  %2709 = vmatmul.f32.gmra.mxu0 %v2619
  %v2710 = vpop.f32.mrf.mxu0
  %v2711 = vadd.f32 %v2544, %v2710
  %2712 = vmatmul.f32.gmra.mxu0 %v2622
  %v2713 = vpop.f32.mrf.mxu0
  %v2714 = vadd.f32 %v2547, %v2713
  %2715 = vdwg.mxu0
  %v2716 = vld [vmem:[#allocation3 + $0x2] sm:$0xff]
  %v2717 = vld [vmem:[#allocation3 + $0xa] sm:$0xff]
  %v2718 = vld [vmem:[#allocation3 + $0x12] sm:$0xff]
  %v2719 = vld [vmem:[#allocation3 + $0x1a] sm:$0xff]
  %v2720 = vld [vmem:[#allocation3 + $0x22] sm:$0xff]
  %v2721 = vld [vmem:[#allocation3 + $0x2a] sm:$0xff]
  %v2722 = vld [vmem:[#allocation3 + $0x32] sm:$0xff]
  %v2723 = vld [vmem:[#allocation3 + $0x3a] sm:$0xff]
  %v2724 = vld [vmem:[#allocation3 + $0x42] sm:$0xff]
  %v2725 = vld [vmem:[#allocation3 + $0x4a] sm:$0xff]
  %v2726 = vld [vmem:[#allocation3 + $0x52] sm:$0xff]
  %v2727 = vld [vmem:[#allocation3 + $0x5a] sm:$0xff]
  %v2728 = vld [vmem:[#allocation3 + $0x62] sm:$0xff]
  %v2729 = vld [vmem:[#allocation3 + $0x6a] sm:$0xff]
  %v2730 = vld [vmem:[#allocation3 + $0x72] sm:$0xff]
  %v2731 = vld [vmem:[#allocation3 + $0x7a] sm:$0xff]
  %v2732 = vld [vmem:[#allocation3 + $0x82] sm:$0xff]
  %v2733 = vld [vmem:[#allocation3 + $0x8a] sm:$0xff]
  %v2734 = vld [vmem:[#allocation3 + $0x92] sm:$0xff]
  %v2735 = vld [vmem:[#allocation3 + $0x9a] sm:$0xff]
  %v2736 = vld [vmem:[#allocation3 + $0xa2] sm:$0xff]
  %v2737 = vld [vmem:[#allocation3 + $0xaa] sm:$0xff]
  %v2738 = vld [vmem:[#allocation3 + $0xb2] sm:$0xff]
  %v2739 = vld [vmem:[#allocation3 + $0xba] sm:$0xff]
  %v2740 = vld [vmem:[#allocation3 + $0xc2] sm:$0xff]
  %s2741 = scalar_lea.vmem %s5, 64
  %v2742 = vld [vmem:[%s2741] sm:$0xff]
  %v2743 = vld [vmem:[%s2741 + $0x8] sm:$0xff]
  %v2744 = vld [vmem:[%s2741 + $0x10] sm:$0xff]
  %v2745 = vld [vmem:[%s2741 + $0x18] sm:$0xff]
  %v2747 = vsel %vm32, %v2716, 0
  %v2750 = vsel %vm32, %v2717, 0
  %v2753 = vsel %vm32, %v2718, 0
  %v2756 = vsel %vm32, %v2719, 0
  %v2759 = vsel %vm32, %v2720, 0
  %v2762 = vsel %vm32, %v2721, 0
  %v2765 = vsel %vm32, %v2722, 0
  %v2768 = vsel %vm32, %v2723, 0
  %v2771 = vsel %vm32, %v2724, 0
  %v2774 = vsel %vm32, %v2725, 0
  %v2777 = vsel %vm32, %v2726, 0
  %v2780 = vsel %vm32, %v2727, 0
  %v2783 = vsel %vm32, %v2728, 0
  %v2786 = vsel %vm32, %v2729, 0
  %v2789 = vsel %vm32, %v2730, 0
  %v2792 = vsel %vm32, %v2731, 0
  %v2795 = vsel %vm32, %v2732, 0
  %v2798 = vsel %vm32, %v2733, 0
  %v2801 = vsel %vm32, %v2734, 0
  %v2804 = vsel %vm32, %v2735, 0
  %v2807 = vsel %vm32, %v2736, 0
  %v2810 = vsel %vm32, %v2737, 0
  %v2813 = vsel %vm32, %v2738, 0
  %v2816 = vsel %vm32, %v2739, 0
  %v2819 = vsel %vm32, %v2740, 0
  %2821 = vmatpush.msra.mxu0 0.0
  %2822 = vmatpush.msra.mxu0 0.0
  %2823 = vmatpush.msra.mxu0 0.0
  %2824 = vmatpush.msra.mxu0 0.0
  %2825 = vmatpush.msra.mxu0 0.0
  %2826 = vmatpush.msra.mxu0 0.0
  %2827 = vmatpush.msra.mxu0 0.0
  %2828 = vmatpush.msra.mxu0 0.0
  %2829 = vmatpush.msra.mxu0 0.0
  %2830 = vmatpush.msra.mxu0 0.0
  %2831 = vmatpush.msra.mxu0 0.0
  %2832 = vmatpush.msra.mxu0 0.0
  %2833 = vmatpush.msra.mxu0 %v2745
  %2834 = vmatpush.msra.mxu0 %v2744
  %2835 = vmatpush.msra.mxu0 %v2743
  %2836 = vmatpush.msra.mxu0 %v2742
  %2837 = vmatmul.f32.gmra.mxu0 %v2747
  %v2838 = vpop.f32.mrf.mxu0
  %v2839 = vadd.f32 0.0, %v2838
  %2840 = vmatmul.f32.gmra.mxu0 %v2750
  %v2841 = vpop.f32.mrf.mxu0
  %v2842 = vadd.f32 0.0, %v2841
  %2843 = vmatmul.f32.gmra.mxu0 %v2753
  %v2844 = vpop.f32.mrf.mxu0
  %v2845 = vadd.f32 0.0, %v2844
  %2846 = vmatmul.f32.gmra.mxu0 %v2756
  %v2847 = vpop.f32.mrf.mxu0
  %v2848 = vadd.f32 0.0, %v2847
  %2849 = vmatmul.f32.gmra.mxu0 %v2759
  %v2850 = vpop.f32.mrf.mxu0
  %v2851 = vadd.f32 0.0, %v2850
  %2852 = vmatmul.f32.gmra.mxu0 %v2762
  %v2853 = vpop.f32.mrf.mxu0
  %v2854 = vadd.f32 0.0, %v2853
  %2855 = vmatmul.f32.gmra.mxu0 %v2765
  %v2856 = vpop.f32.mrf.mxu0
  %v2857 = vadd.f32 0.0, %v2856
  %2858 = vmatmul.f32.gmra.mxu0 %v2768
  %v2859 = vpop.f32.mrf.mxu0
  %v2860 = vadd.f32 0.0, %v2859
  %2861 = vmatmul.f32.gmra.mxu0 %v2771
  %v2862 = vpop.f32.mrf.mxu0
  %v2863 = vadd.f32 0.0, %v2862
  %2864 = vmatmul.f32.gmra.mxu0 %v2774
  %v2865 = vpop.f32.mrf.mxu0
  %v2866 = vadd.f32 0.0, %v2865
  %2867 = vmatmul.f32.gmra.mxu0 %v2777
  %v2868 = vpop.f32.mrf.mxu0
  %v2869 = vadd.f32 0.0, %v2868
  %2870 = vmatmul.f32.gmra.mxu0 %v2780
  %v2871 = vpop.f32.mrf.mxu0
  %v2872 = vadd.f32 0.0, %v2871
  %2873 = vmatmul.f32.gmra.mxu0 %v2783
  %v2874 = vpop.f32.mrf.mxu0
  %v2875 = vadd.f32 0.0, %v2874
  %2876 = vmatmul.f32.gmra.mxu0 %v2786
  %v2877 = vpop.f32.mrf.mxu0
  %v2878 = vadd.f32 0.0, %v2877
  %2879 = vmatmul.f32.gmra.mxu0 %v2789
  %v2880 = vpop.f32.mrf.mxu0
  %v2881 = vadd.f32 0.0, %v2880
  %2882 = vmatmul.f32.gmra.mxu0 %v2792
  %v2883 = vpop.f32.mrf.mxu0
  %v2884 = vadd.f32 0.0, %v2883
  %2885 = vmatmul.f32.gmra.mxu0 %v2795
  %v2886 = vpop.f32.mrf.mxu0
  %v2887 = vadd.f32 0.0, %v2886
  %2888 = vmatmul.f32.gmra.mxu0 %v2798
  %v2889 = vpop.f32.mrf.mxu0
  %v2890 = vadd.f32 0.0, %v2889
  %2891 = vmatmul.f32.gmra.mxu0 %v2801
  %v2892 = vpop.f32.mrf.mxu0
  %v2893 = vadd.f32 0.0, %v2892
  %2894 = vmatmul.f32.gmra.mxu0 %v2804
  %v2895 = vpop.f32.mrf.mxu0
  %v2896 = vadd.f32 0.0, %v2895
  %2897 = vmatmul.f32.gmra.mxu0 %v2807
  %v2898 = vpop.f32.mrf.mxu0
  %v2899 = vadd.f32 0.0, %v2898
  %2900 = vmatmul.f32.gmra.mxu0 %v2810
  %v2901 = vpop.f32.mrf.mxu0
  %v2902 = vadd.f32 0.0, %v2901
  %2903 = vmatmul.f32.gmra.mxu0 %v2813
  %v2904 = vpop.f32.mrf.mxu0
  %v2905 = vadd.f32 0.0, %v2904
  %2906 = vmatmul.f32.gmra.mxu0 %v2816
  %v2907 = vpop.f32.mrf.mxu0
  %v2908 = vadd.f32 0.0, %v2907
  %2909 = vmatmul.f32.gmra.mxu0 %v2819
  %v2910 = vpop.f32.mrf.mxu0
  %v2911 = vadd.f32 0.0, %v2910
  %2912 = vdwg.mxu0
  %v2913 = vadd.f32 %v2642, %v2839
  %v2914 = vadd.f32 %v2645, %v2842
  %v2915 = vadd.f32 %v2648, %v2845
  %v2916 = vadd.f32 %v2651, %v2848
  %v2917 = vadd.f32 %v2654, %v2851
  %v2918 = vadd.f32 %v2657, %v2854
  %v2919 = vadd.f32 %v2660, %v2857
  %v2920 = vadd.f32 %v2663, %v2860
  %v2921 = vadd.f32 %v2666, %v2863
  %v2922 = vadd.f32 %v2669, %v2866
  %v2923 = vadd.f32 %v2672, %v2869
  %v2924 = vadd.f32 %v2675, %v2872
  %v2925 = vadd.f32 %v2678, %v2875
  %v2926 = vadd.f32 %v2681, %v2878
  %v2927 = vadd.f32 %v2684, %v2881
  %v2928 = vadd.f32 %v2687, %v2884
  %v2929 = vadd.f32 %v2690, %v2887
  %v2930 = vadd.f32 %v2693, %v2890
  %v2931 = vadd.f32 %v2696, %v2893
  %v2932 = vadd.f32 %v2699, %v2896
  %v2933 = vadd.f32 %v2702, %v2899
  %v2934 = vadd.f32 %v2705, %v2902
  %v2935 = vadd.f32 %v2708, %v2905
  %v2936 = vadd.f32 %v2711, %v2908
  %v2937 = vadd.f32 %v2714, %v2911
  %v2938 = vld [vmem:[#allocation3 + $0xa] sm:$0xff]
  %v2939 = vld [vmem:[#allocation3 + $0x12] sm:$0xff]
  %v2940 = vld [vmem:[#allocation3 + $0x1a] sm:$0xff]
  %v2941 = vld [vmem:[#allocation3 + $0x22] sm:$0xff]
  %v2942 = vld [vmem:[#allocation3 + $0x2a] sm:$0xff]
  %v2943 = vld [vmem:[#allocation3 + $0x32] sm:$0xff]
  %v2944 = vld [vmem:[#allocation3 + $0x3a] sm:$0xff]
  %v2945 = vld [vmem:[#allocation3 + $0x42] sm:$0xff]
  %v2946 = vld [vmem:[#allocation3 + $0x4a] sm:$0xff]
  %v2947 = vld [vmem:[#allocation3 + $0x52] sm:$0xff]
  %v2948 = vld [vmem:[#allocation3 + $0x5a] sm:$0xff]
  %v2949 = vld [vmem:[#allocation3 + $0x62] sm:$0xff]
  %v2950 = vld [vmem:[#allocation3 + $0x6a] sm:$0xff]
  %v2951 = vld [vmem:[#allocation3 + $0x72] sm:$0xff]
  %v2952 = vld [vmem:[#allocation3 + $0x7a] sm:$0xff]
  %v2953 = vld [vmem:[#allocation3 + $0x82] sm:$0xff]
  %v2954 = vld [vmem:[#allocation3 + $0x8a] sm:$0xff]
  %v2955 = vld [vmem:[#allocation3 + $0x92] sm:$0xff]
  %v2956 = vld [vmem:[#allocation3 + $0x9a] sm:$0xff]
  %v2957 = vld [vmem:[#allocation3 + $0xa2] sm:$0xff]
  %v2958 = vld [vmem:[#allocation3 + $0xaa] sm:$0xff]
  %v2959 = vld [vmem:[#allocation3 + $0xb2] sm:$0xff]
  %v2960 = vld [vmem:[#allocation3 + $0xba] sm:$0xff]
  %v2961 = vld [vmem:[#allocation3 + $0xc2] sm:$0xff]
  %v2962 = vld [vmem:[#allocation3 + $0xca] sm:$0xff]
  %s2963 = scalar_lea.vmem %s5, 96
  %v2964 = vld [vmem:[%s2963] sm:$0xff]
  %v2965 = vld [vmem:[%s2963 + $0x8] sm:$0xff]
  %v2966 = vld [vmem:[%s2963 + $0x10] sm:$0xff]
  %v2967 = vld [vmem:[%s2963 + $0x18] sm:$0xff]
  %v2969 = vsel %vm32, %v2938, 0
  %v2972 = vsel %vm32, %v2939, 0
  %v2975 = vsel %vm32, %v2940, 0
  %v2978 = vsel %vm32, %v2941, 0
  %v2981 = vsel %vm32, %v2942, 0
  %v2984 = vsel %vm32, %v2943, 0
  %v2987 = vsel %vm32, %v2944, 0
  %v2990 = vsel %vm32, %v2945, 0
  %v2993 = vsel %vm32, %v2946, 0
  %v2996 = vsel %vm32, %v2947, 0
  %v2999 = vsel %vm32, %v2948, 0
  %v3002 = vsel %vm32, %v2949, 0
  %v3005 = vsel %vm32, %v2950, 0
  %v3008 = vsel %vm32, %v2951, 0
  %v3011 = vsel %vm32, %v2952, 0
  %v3014 = vsel %vm32, %v2953, 0
  %v3017 = vsel %vm32, %v2954, 0
  %v3020 = vsel %vm32, %v2955, 0
  %v3023 = vsel %vm32, %v2956, 0
  %v3026 = vsel %vm32, %v2957, 0
  %v3029 = vsel %vm32, %v2958, 0
  %v3032 = vsel %vm32, %v2959, 0
  %v3035 = vsel %vm32, %v2960, 0
  %v3038 = vsel %vm32, %v2961, 0
  %v3041 = vsel %vm32, %v2962, 0
  %3043 = vmatpush.msra.mxu0 0.0
  %3044 = vmatpush.msra.mxu0 0.0
  %3045 = vmatpush.msra.mxu0 0.0
  %3046 = vmatpush.msra.mxu0 0.0
  %3047 = vmatpush.msra.mxu0 0.0
  %3048 = vmatpush.msra.mxu0 0.0
  %3049 = vmatpush.msra.mxu0 0.0
  %3050 = vmatpush.msra.mxu0 0.0
  %3051 = vmatpush.msra.mxu0 0.0
  %3052 = vmatpush.msra.mxu0 0.0
  %3053 = vmatpush.msra.mxu0 0.0
  %3054 = vmatpush.msra.mxu0 0.0
  %3055 = vmatpush.msra.mxu0 %v2967
  %3056 = vmatpush.msra.mxu0 %v2966
  %3057 = vmatpush.msra.mxu0 %v2965
  %3058 = vmatpush.msra.mxu0 %v2964
  %3059 = vmatmul.f32.gmra.mxu0 %v2969
  %v3060 = vpop.f32.mrf.mxu0
  %v3061 = vadd.f32 0.0, %v3060
  %3062 = vmatmul.f32.gmra.mxu0 %v2972
  %v3063 = vpop.f32.mrf.mxu0
  %v3064 = vadd.f32 0.0, %v3063
  %3065 = vmatmul.f32.gmra.mxu0 %v2975
  %v3066 = vpop.f32.mrf.mxu0
  %v3067 = vadd.f32 0.0, %v3066
  %3068 = vmatmul.f32.gmra.mxu0 %v2978
  %v3069 = vpop.f32.mrf.mxu0
  %v3070 = vadd.f32 0.0, %v3069
  %3071 = vmatmul.f32.gmra.mxu0 %v2981
  %v3072 = vpop.f32.mrf.mxu0
  %v3073 = vadd.f32 0.0, %v3072
  %3074 = vmatmul.f32.gmra.mxu0 %v2984
  %v3075 = vpop.f32.mrf.mxu0
  %v3076 = vadd.f32 0.0, %v3075
  %3077 = vmatmul.f32.gmra.mxu0 %v2987
  %v3078 = vpop.f32.mrf.mxu0
  %v3079 = vadd.f32 0.0, %v3078
  %3080 = vmatmul.f32.gmra.mxu0 %v2990
  %v3081 = vpop.f32.mrf.mxu0
  %v3082 = vadd.f32 0.0, %v3081
  %3083 = vmatmul.f32.gmra.mxu0 %v2993
  %v3084 = vpop.f32.mrf.mxu0
  %v3085 = vadd.f32 0.0, %v3084
  %3086 = vmatmul.f32.gmra.mxu0 %v2996
  %v3087 = vpop.f32.mrf.mxu0
  %v3088 = vadd.f32 0.0, %v3087
  %3089 = vmatmul.f32.gmra.mxu0 %v2999
  %v3090 = vpop.f32.mrf.mxu0
  %v3091 = vadd.f32 0.0, %v3090
  %3092 = vmatmul.f32.gmra.mxu0 %v3002
  %v3093 = vpop.f32.mrf.mxu0
  %v3094 = vadd.f32 0.0, %v3093
  %3095 = vmatmul.f32.gmra.mxu0 %v3005
  %v3096 = vpop.f32.mrf.mxu0
  %v3097 = vadd.f32 0.0, %v3096
  %3098 = vmatmul.f32.gmra.mxu0 %v3008
  %v3099 = vpop.f32.mrf.mxu0
  %v3100 = vadd.f32 0.0, %v3099
  %3101 = vmatmul.f32.gmra.mxu0 %v3011
  %v3102 = vpop.f32.mrf.mxu0
  %v3103 = vadd.f32 0.0, %v3102
  %3104 = vmatmul.f32.gmra.mxu0 %v3014
  %v3105 = vpop.f32.mrf.mxu0
  %v3106 = vadd.f32 0.0, %v3105
  %3107 = vmatmul.f32.gmra.mxu0 %v3017
  %v3108 = vpop.f32.mrf.mxu0
  %v3109 = vadd.f32 0.0, %v3108
  %3110 = vmatmul.f32.gmra.mxu0 %v3020
  %v3111 = vpop.f32.mrf.mxu0
  %v3112 = vadd.f32 0.0, %v3111
  %3113 = vmatmul.f32.gmra.mxu0 %v3023
  %v3114 = vpop.f32.mrf.mxu0
  %v3115 = vadd.f32 0.0, %v3114
  %3116 = vmatmul.f32.gmra.mxu0 %v3026
  %v3117 = vpop.f32.mrf.mxu0
  %v3118 = vadd.f32 0.0, %v3117
  %3119 = vmatmul.f32.gmra.mxu0 %v3029
  %v3120 = vpop.f32.mrf.mxu0
  %v3121 = vadd.f32 0.0, %v3120
  %3122 = vmatmul.f32.gmra.mxu0 %v3032
  %v3123 = vpop.f32.mrf.mxu0
  %v3124 = vadd.f32 0.0, %v3123
  %3125 = vmatmul.f32.gmra.mxu0 %v3035
  %v3126 = vpop.f32.mrf.mxu0
  %v3127 = vadd.f32 0.0, %v3126
  %3128 = vmatmul.f32.gmra.mxu0 %v3038
  %v3129 = vpop.f32.mrf.mxu0
  %v3130 = vadd.f32 0.0, %v3129
  %3131 = vmatmul.f32.gmra.mxu0 %v3041
  %v3132 = vpop.f32.mrf.mxu0
  %v3133 = vadd.f32 0.0, %v3132
  %3134 = vdwg.mxu0
  %v3135 = vadd.f32 %v2913, %v3061
  %v3136 = vadd.f32 %v2914, %v3064
  %v3137 = vadd.f32 %v2915, %v3067
  %v3138 = vadd.f32 %v2916, %v3070
  %v3139 = vadd.f32 %v2917, %v3073
  %v3140 = vadd.f32 %v2918, %v3076
  %v3141 = vadd.f32 %v2919, %v3079
  %v3142 = vadd.f32 %v2920, %v3082
  %v3143 = vadd.f32 %v2921, %v3085
  %v3144 = vadd.f32 %v2922, %v3088
  %v3145 = vadd.f32 %v2923, %v3091
  %v3146 = vadd.f32 %v2924, %v3094
  %v3147 = vadd.f32 %v2925, %v3097
  %v3148 = vadd.f32 %v2926, %v3100
  %v3149 = vadd.f32 %v2927, %v3103
  %v3150 = vadd.f32 %v2928, %v3106
  %v3151 = vadd.f32 %v2929, %v3109
  %v3152 = vadd.f32 %v2930, %v3112
  %v3153 = vadd.f32 %v2931, %v3115
  %v3154 = vadd.f32 %v2932, %v3118
  %v3155 = vadd.f32 %v2933, %v3121
  %v3156 = vadd.f32 %v2934, %v3124
  %v3157 = vadd.f32 %v2935, %v3127
  %v3158 = vadd.f32 %v2936, %v3130
  %v3159 = vadd.f32 %v2937, %v3133
  %v3160 = vld [vmem:[#allocation3 + $0xb] sm:$0xff]
  %v3161 = vld [vmem:[#allocation3 + $0x13] sm:$0xff]
  %v3162 = vld [vmem:[#allocation3 + $0x1b] sm:$0xff]
  %v3163 = vld [vmem:[#allocation3 + $0x23] sm:$0xff]
  %v3164 = vld [vmem:[#allocation3 + $0x2b] sm:$0xff]
  %v3165 = vld [vmem:[#allocation3 + $0x33] sm:$0xff]
  %v3166 = vld [vmem:[#allocation3 + $0x3b] sm:$0xff]
  %v3167 = vld [vmem:[#allocation3 + $0x43] sm:$0xff]
  %v3168 = vld [vmem:[#allocation3 + $0x4b] sm:$0xff]
  %v3169 = vld [vmem:[#allocation3 + $0x53] sm:$0xff]
  %v3170 = vld [vmem:[#allocation3 + $0x5b] sm:$0xff]
  %v3171 = vld [vmem:[#allocation3 + $0x63] sm:$0xff]
  %v3172 = vld [vmem:[#allocation3 + $0x6b] sm:$0xff]
  %v3173 = vld [vmem:[#allocation3 + $0x73] sm:$0xff]
  %v3174 = vld [vmem:[#allocation3 + $0x7b] sm:$0xff]
  %v3175 = vld [vmem:[#allocation3 + $0x83] sm:$0xff]
  %v3176 = vld [vmem:[#allocation3 + $0x8b] sm:$0xff]
  %v3177 = vld [vmem:[#allocation3 + $0x93] sm:$0xff]
  %v3178 = vld [vmem:[#allocation3 + $0x9b] sm:$0xff]
  %v3179 = vld [vmem:[#allocation3 + $0xa3] sm:$0xff]
  %v3180 = vld [vmem:[#allocation3 + $0xab] sm:$0xff]
  %v3181 = vld [vmem:[#allocation3 + $0xb3] sm:$0xff]
  %v3182 = vld [vmem:[#allocation3 + $0xbb] sm:$0xff]
  %v3183 = vld [vmem:[#allocation3 + $0xc3] sm:$0xff]
  %v3184 = vld [vmem:[#allocation3 + $0xcb] sm:$0xff]
  %s3185 = scalar_lea.vmem %s5, 128
  %v3186 = vld [vmem:[%s3185] sm:$0xff]
  %v3187 = vld [vmem:[%s3185 + $0x8] sm:$0xff]
  %v3188 = vld [vmem:[%s3185 + $0x10] sm:$0xff]
  %v3189 = vld [vmem:[%s3185 + $0x18] sm:$0xff]
  %v3191 = vsel %vm32, %v3160, 0
  %v3194 = vsel %vm32, %v3161, 0
  %v3197 = vsel %vm32, %v3162, 0
  %v3200 = vsel %vm32, %v3163, 0
  %v3203 = vsel %vm32, %v3164, 0
  %v3206 = vsel %vm32, %v3165, 0
  %v3209 = vsel %vm32, %v3166, 0
  %v3212 = vsel %vm32, %v3167, 0
  %v3215 = vsel %vm32, %v3168, 0
  %v3218 = vsel %vm32, %v3169, 0
  %v3221 = vsel %vm32, %v3170, 0
  %v3224 = vsel %vm32, %v3171, 0
  %v3227 = vsel %vm32, %v3172, 0
  %v3230 = vsel %vm32, %v3173, 0
  %v3233 = vsel %vm32, %v3174, 0
  %v3236 = vsel %vm32, %v3175, 0
  %v3239 = vsel %vm32, %v3176, 0
  %v3242 = vsel %vm32, %v3177, 0
  %v3245 = vsel %vm32, %v3178, 0
  %v3248 = vsel %vm32, %v3179, 0
  %v3251 = vsel %vm32, %v3180, 0
  %v3254 = vsel %vm32, %v3181, 0
  %v3257 = vsel %vm32, %v3182, 0
  %v3260 = vsel %vm32, %v3183, 0
  %v3263 = vsel %vm32, %v3184, 0
  %3265 = vmatpush.msra.mxu0 0.0
  %3266 = vmatpush.msra.mxu0 0.0
  %3267 = vmatpush.msra.mxu0 0.0
  %3268 = vmatpush.msra.mxu0 0.0
  %3269 = vmatpush.msra.mxu0 0.0
  %3270 = vmatpush.msra.mxu0 0.0
  %3271 = vmatpush.msra.mxu0 0.0
  %3272 = vmatpush.msra.mxu0 0.0
  %3273 = vmatpush.msra.mxu0 0.0
  %3274 = vmatpush.msra.mxu0 0.0
  %3275 = vmatpush.msra.mxu0 0.0
  %3276 = vmatpush.msra.mxu0 0.0
  %3277 = vmatpush.msra.mxu0 %v3189
  %3278 = vmatpush.msra.mxu0 %v3188
  %3279 = vmatpush.msra.mxu0 %v3187
  %3280 = vmatpush.msra.mxu0 %v3186
  %3281 = vmatmul.f32.gmra.mxu0 %v3191
  %v3282 = vpop.f32.mrf.mxu0
  %v3283 = vadd.f32 0.0, %v3282
  %3284 = vmatmul.f32.gmra.mxu0 %v3194
  %v3285 = vpop.f32.mrf.mxu0
  %v3286 = vadd.f32 0.0, %v3285
  %3287 = vmatmul.f32.gmra.mxu0 %v3197
  %v3288 = vpop.f32.mrf.mxu0
  %v3289 = vadd.f32 0.0, %v3288
  %3290 = vmatmul.f32.gmra.mxu0 %v3200
  %v3291 = vpop.f32.mrf.mxu0
  %v3292 = vadd.f32 0.0, %v3291
  %3293 = vmatmul.f32.gmra.mxu0 %v3203
  %v3294 = vpop.f32.mrf.mxu0
  %v3295 = vadd.f32 0.0, %v3294
  %3296 = vmatmul.f32.gmra.mxu0 %v3206
  %v3297 = vpop.f32.mrf.mxu0
  %v3298 = vadd.f32 0.0, %v3297
  %3299 = vmatmul.f32.gmra.mxu0 %v3209
  %v3300 = vpop.f32.mrf.mxu0
  %v3301 = vadd.f32 0.0, %v3300
  %3302 = vmatmul.f32.gmra.mxu0 %v3212
  %v3303 = vpop.f32.mrf.mxu0
  %v3304 = vadd.f32 0.0, %v3303
  %3305 = vmatmul.f32.gmra.mxu0 %v3215
  %v3306 = vpop.f32.mrf.mxu0
  %v3307 = vadd.f32 0.0, %v3306
  %3308 = vmatmul.f32.gmra.mxu0 %v3218
  %v3309 = vpop.f32.mrf.mxu0
  %v3310 = vadd.f32 0.0, %v3309
  %3311 = vmatmul.f32.gmra.mxu0 %v3221
  %v3312 = vpop.f32.mrf.mxu0
  %v3313 = vadd.f32 0.0, %v3312
  %3314 = vmatmul.f32.gmra.mxu0 %v3224
  %v3315 = vpop.f32.mrf.mxu0
  %v3316 = vadd.f32 0.0, %v3315
  %3317 = vmatmul.f32.gmra.mxu0 %v3227
  %v3318 = vpop.f32.mrf.mxu0
  %v3319 = vadd.f32 0.0, %v3318
  %3320 = vmatmul.f32.gmra.mxu0 %v3230
  %v3321 = vpop.f32.mrf.mxu0
  %v3322 = vadd.f32 0.0, %v3321
  %3323 = vmatmul.f32.gmra.mxu0 %v3233
  %v3324 = vpop.f32.mrf.mxu0
  %v3325 = vadd.f32 0.0, %v3324
  %3326 = vmatmul.f32.gmra.mxu0 %v3236
  %v3327 = vpop.f32.mrf.mxu0
  %v3328 = vadd.f32 0.0, %v3327
  %3329 = vmatmul.f32.gmra.mxu0 %v3239
  %v3330 = vpop.f32.mrf.mxu0
  %v3331 = vadd.f32 0.0, %v3330
  %3332 = vmatmul.f32.gmra.mxu0 %v3242
  %v3333 = vpop.f32.mrf.mxu0
  %v3334 = vadd.f32 0.0, %v3333
  %3335 = vmatmul.f32.gmra.mxu0 %v3245
  %v3336 = vpop.f32.mrf.mxu0
  %v3337 = vadd.f32 0.0, %v3336
  %3338 = vmatmul.f32.gmra.mxu0 %v3248
  %v3339 = vpop.f32.mrf.mxu0
  %v3340 = vadd.f32 0.0, %v3339
  %3341 = vmatmul.f32.gmra.mxu0 %v3251
  %v3342 = vpop.f32.mrf.mxu0
  %v3343 = vadd.f32 0.0, %v3342
  %3344 = vmatmul.f32.gmra.mxu0 %v3254
  %v3345 = vpop.f32.mrf.mxu0
  %v3346 = vadd.f32 0.0, %v3345
  %3347 = vmatmul.f32.gmra.mxu0 %v3257
  %v3348 = vpop.f32.mrf.mxu0
  %v3349 = vadd.f32 0.0, %v3348
  %3350 = vmatmul.f32.gmra.mxu0 %v3260
  %v3351 = vpop.f32.mrf.mxu0
  %v3352 = vadd.f32 0.0, %v3351
  %3353 = vmatmul.f32.gmra.mxu0 %v3263
  %v3354 = vpop.f32.mrf.mxu0
  %v3355 = vadd.f32 0.0, %v3354
  %3356 = vdwg.mxu0
  %v3357 = vadd.f32 %v3135, %v3283
  %v3358 = vadd.f32 %v3136, %v3286
  %v3359 = vadd.f32 %v3137, %v3289
  %v3360 = vadd.f32 %v3138, %v3292
  %v3361 = vadd.f32 %v3139, %v3295
  %v3362 = vadd.f32 %v3140, %v3298
  %v3363 = vadd.f32 %v3141, %v3301
  %v3364 = vadd.f32 %v3142, %v3304
  %v3365 = vadd.f32 %v3143, %v3307
  %v3366 = vadd.f32 %v3144, %v3310
  %v3367 = vadd.f32 %v3145, %v3313
  %v3368 = vadd.f32 %v3146, %v3316
  %v3369 = vadd.f32 %v3147, %v3319
  %v3370 = vadd.f32 %v3148, %v3322
  %v3371 = vadd.f32 %v3149, %v3325
  %v3372 = vadd.f32 %v3150, %v3328
  %v3373 = vadd.f32 %v3151, %v3331
  %v3374 = vadd.f32 %v3152, %v3334
  %v3375 = vadd.f32 %v3153, %v3337
  %v3376 = vadd.f32 %v3154, %v3340
  %v3377 = vadd.f32 %v3155, %v3343
  %v3378 = vadd.f32 %v3156, %v3346
  %v3379 = vadd.f32 %v3157, %v3349
  %v3380 = vadd.f32 %v3158, %v3352
  %v3381 = vadd.f32 %v3159, %v3355
  %v3382 = vld [vmem:[#allocation3 + $0xc] sm:$0xff]
  %v3383 = vld [vmem:[#allocation3 + $0x14] sm:$0xff]
  %v3384 = vld [vmem:[#allocation3 + $0x1c] sm:$0xff]
  %v3385 = vld [vmem:[#allocation3 + $0x24] sm:$0xff]
  %v3386 = vld [vmem:[#allocation3 + $0x2c] sm:$0xff]
  %v3387 = vld [vmem:[#allocation3 + $0x34] sm:$0xff]
  %v3388 = vld [vmem:[#allocation3 + $0x3c] sm:$0xff]
  %v3389 = vld [vmem:[#allocation3 + $0x44] sm:$0xff]
  %v3390 = vld [vmem:[#allocation3 + $0x4c] sm:$0xff]
  %v3391 = vld [vmem:[#allocation3 + $0x54] sm:$0xff]
  %v3392 = vld [vmem:[#allocation3 + $0x5c] sm:$0xff]
  %v3393 = vld [vmem:[#allocation3 + $0x64] sm:$0xff]
  %v3394 = vld [vmem:[#allocation3 + $0x6c] sm:$0xff]
  %v3395 = vld [vmem:[#allocation3 + $0x74] sm:$0xff]
  %v3396 = vld [vmem:[#allocation3 + $0x7c] sm:$0xff]
  %v3397 = vld [vmem:[#allocation3 + $0x84] sm:$0xff]
  %v3398 = vld [vmem:[#allocation3 + $0x8c] sm:$0xff]
  %v3399 = vld [vmem:[#allocation3 + $0x94] sm:$0xff]
  %v3400 = vld [vmem:[#allocation3 + $0x9c] sm:$0xff]
  %v3401 = vld [vmem:[#allocation3 + $0xa4] sm:$0xff]
  %v3402 = vld [vmem:[#allocation3 + $0xac] sm:$0xff]
  %v3403 = vld [vmem:[#allocation3 + $0xb4] sm:$0xff]
  %v3404 = vld [vmem:[#allocation3 + $0xbc] sm:$0xff]
  %v3405 = vld [vmem:[#allocation3 + $0xc4] sm:$0xff]
  %v3406 = vld [vmem:[#allocation3 + $0xcc] sm:$0xff]
  %s3407 = scalar_lea.vmem %s5, 160
  %v3408 = vld [vmem:[%s3407] sm:$0xff]
  %v3409 = vld [vmem:[%s3407 + $0x8] sm:$0xff]
  %v3410 = vld [vmem:[%s3407 + $0x10] sm:$0xff]
  %v3411 = vld [vmem:[%s3407 + $0x18] sm:$0xff]
  %v3413 = vsel %vm32, %v3382, 0
  %v3416 = vsel %vm32, %v3383, 0
  %v3419 = vsel %vm32, %v3384, 0
  %v3422 = vsel %vm32, %v3385, 0
  %v3425 = vsel %vm32, %v3386, 0
  %v3428 = vsel %vm32, %v3387, 0
  %v3431 = vsel %vm32, %v3388, 0
  %v3434 = vsel %vm32, %v3389, 0
  %v3437 = vsel %vm32, %v3390, 0
  %v3440 = vsel %vm32, %v3391, 0
  %v3443 = vsel %vm32, %v3392, 0
  %v3446 = vsel %vm32, %v3393, 0
  %v3449 = vsel %vm32, %v3394, 0
  %v3452 = vsel %vm32, %v3395, 0
  %v3455 = vsel %vm32, %v3396, 0
  %v3458 = vsel %vm32, %v3397, 0
  %v3461 = vsel %vm32, %v3398, 0
  %v3464 = vsel %vm32, %v3399, 0
  %v3467 = vsel %vm32, %v3400, 0
  %v3470 = vsel %vm32, %v3401, 0
  %v3473 = vsel %vm32, %v3402, 0
  %v3476 = vsel %vm32, %v3403, 0
  %v3479 = vsel %vm32, %v3404, 0
  %v3482 = vsel %vm32, %v3405, 0
  %v3485 = vsel %vm32, %v3406, 0
  %3487 = vmatpush.msra.mxu0 0.0
  %3488 = vmatpush.msra.mxu0 0.0
  %3489 = vmatpush.msra.mxu0 0.0
  %3490 = vmatpush.msra.mxu0 0.0
  %3491 = vmatpush.msra.mxu0 0.0
  %3492 = vmatpush.msra.mxu0 0.0
  %3493 = vmatpush.msra.mxu0 0.0
  %3494 = vmatpush.msra.mxu0 0.0
  %3495 = vmatpush.msra.mxu0 0.0
  %3496 = vmatpush.msra.mxu0 0.0
  %3497 = vmatpush.msra.mxu0 0.0
  %3498 = vmatpush.msra.mxu0 0.0
  %3499 = vmatpush.msra.mxu0 %v3411
  %3500 = vmatpush.msra.mxu0 %v3410
  %3501 = vmatpush.msra.mxu0 %v3409
  %3502 = vmatpush.msra.mxu0 %v3408
  %3503 = vmatmul.f32.gmra.mxu0 %v3413
  %v3504 = vpop.f32.mrf.mxu0
  %v3505 = vadd.f32 0.0, %v3504
  %3506 = vmatmul.f32.gmra.mxu0 %v3416
  %v3507 = vpop.f32.mrf.mxu0
  %v3508 = vadd.f32 0.0, %v3507
  %3509 = vmatmul.f32.gmra.mxu0 %v3419
  %v3510 = vpop.f32.mrf.mxu0
  %v3511 = vadd.f32 0.0, %v3510
  %3512 = vmatmul.f32.gmra.mxu0 %v3422
  %v3513 = vpop.f32.mrf.mxu0
  %v3514 = vadd.f32 0.0, %v3513
  %3515 = vmatmul.f32.gmra.mxu0 %v3425
  %v3516 = vpop.f32.mrf.mxu0
  %v3517 = vadd.f32 0.0, %v3516
  %3518 = vmatmul.f32.gmra.mxu0 %v3428
  %v3519 = vpop.f32.mrf.mxu0
  %v3520 = vadd.f32 0.0, %v3519
  %3521 = vmatmul.f32.gmra.mxu0 %v3431
  %v3522 = vpop.f32.mrf.mxu0
  %v3523 = vadd.f32 0.0, %v3522
  %3524 = vmatmul.f32.gmra.mxu0 %v3434
  %v3525 = vpop.f32.mrf.mxu0
  %v3526 = vadd.f32 0.0, %v3525
  %3527 = vmatmul.f32.gmra.mxu0 %v3437
  %v3528 = vpop.f32.mrf.mxu0
  %v3529 = vadd.f32 0.0, %v3528
  %3530 = vmatmul.f32.gmra.mxu0 %v3440
  %v3531 = vpop.f32.mrf.mxu0
  %v3532 = vadd.f32 0.0, %v3531
  %3533 = vmatmul.f32.gmra.mxu0 %v3443
  %v3534 = vpop.f32.mrf.mxu0
  %v3535 = vadd.f32 0.0, %v3534
  %3536 = vmatmul.f32.gmra.mxu0 %v3446
  %v3537 = vpop.f32.mrf.mxu0
  %v3538 = vadd.f32 0.0, %v3537
  %3539 = vmatmul.f32.gmra.mxu0 %v3449
  %v3540 = vpop.f32.mrf.mxu0
  %v3541 = vadd.f32 0.0, %v3540
  %3542 = vmatmul.f32.gmra.mxu0 %v3452
  %v3543 = vpop.f32.mrf.mxu0
  %v3544 = vadd.f32 0.0, %v3543
  %3545 = vmatmul.f32.gmra.mxu0 %v3455
  %v3546 = vpop.f32.mrf.mxu0
  %v3547 = vadd.f32 0.0, %v3546
  %3548 = vmatmul.f32.gmra.mxu0 %v3458
  %v3549 = vpop.f32.mrf.mxu0
  %v3550 = vadd.f32 0.0, %v3549
  %3551 = vmatmul.f32.gmra.mxu0 %v3461
  %v3552 = vpop.f32.mrf.mxu0
  %v3553 = vadd.f32 0.0, %v3552
  %3554 = vmatmul.f32.gmra.mxu0 %v3464
  %v3555 = vpop.f32.mrf.mxu0
  %v3556 = vadd.f32 0.0, %v3555
  %3557 = vmatmul.f32.gmra.mxu0 %v3467
  %v3558 = vpop.f32.mrf.mxu0
  %v3559 = vadd.f32 0.0, %v3558
  %3560 = vmatmul.f32.gmra.mxu0 %v3470
  %v3561 = vpop.f32.mrf.mxu0
  %v3562 = vadd.f32 0.0, %v3561
  %3563 = vmatmul.f32.gmra.mxu0 %v3473
  %v3564 = vpop.f32.mrf.mxu0
  %v3565 = vadd.f32 0.0, %v3564
  %3566 = vmatmul.f32.gmra.mxu0 %v3476
  %v3567 = vpop.f32.mrf.mxu0
  %v3568 = vadd.f32 0.0, %v3567
  %3569 = vmatmul.f32.gmra.mxu0 %v3479
  %v3570 = vpop.f32.mrf.mxu0
  %v3571 = vadd.f32 0.0, %v3570
  %3572 = vmatmul.f32.gmra.mxu0 %v3482
  %v3573 = vpop.f32.mrf.mxu0
  %v3574 = vadd.f32 0.0, %v3573
  %3575 = vmatmul.f32.gmra.mxu0 %v3485
  %v3576 = vpop.f32.mrf.mxu0
  %v3577 = vadd.f32 0.0, %v3576
  %3578 = vdwg.mxu0
  %v3579 = vadd.f32 %v3357, %v3505
  %v3580 = vadd.f32 %v3358, %v3508
  %v3581 = vadd.f32 %v3359, %v3511
  %v3582 = vadd.f32 %v3360, %v3514
  %v3583 = vadd.f32 %v3361, %v3517
  %v3584 = vadd.f32 %v3362, %v3520
  %v3585 = vadd.f32 %v3363, %v3523
  %v3586 = vadd.f32 %v3364, %v3526
  %v3587 = vadd.f32 %v3365, %v3529
  %v3588 = vadd.f32 %v3366, %v3532
  %v3589 = vadd.f32 %v3367, %v3535
  %v3590 = vadd.f32 %v3368, %v3538
  %v3591 = vadd.f32 %v3369, %v3541
  %v3592 = vadd.f32 %v3370, %v3544
  %v3593 = vadd.f32 %v3371, %v3547
  %v3594 = vadd.f32 %v3372, %v3550
  %v3595 = vadd.f32 %v3373, %v3553
  %v3596 = vadd.f32 %v3374, %v3556
  %v3597 = vadd.f32 %v3375, %v3559
  %v3598 = vadd.f32 %v3376, %v3562
  %v3599 = vadd.f32 %v3377, %v3565
  %v3600 = vadd.f32 %v3378, %v3568
  %v3601 = vadd.f32 %v3379, %v3571
  %v3602 = vadd.f32 %v3380, %v3574
  %v3603 = vadd.f32 %v3381, %v3577
  %v3604 = vld [vmem:[#allocation3 + $0x14] sm:$0xff]
  %v3605 = vld [vmem:[#allocation3 + $0x1c] sm:$0xff]
  %v3606 = vld [vmem:[#allocation3 + $0x24] sm:$0xff]
  %v3607 = vld [vmem:[#allocation3 + $0x2c] sm:$0xff]
  %v3608 = vld [vmem:[#allocation3 + $0x34] sm:$0xff]
  %v3609 = vld [vmem:[#allocation3 + $0x3c] sm:$0xff]
  %v3610 = vld [vmem:[#allocation3 + $0x44] sm:$0xff]
  %v3611 = vld [vmem:[#allocation3 + $0x4c] sm:$0xff]
  %v3612 = vld [vmem:[#allocation3 + $0x54] sm:$0xff]
  %v3613 = vld [vmem:[#allocation3 + $0x5c] sm:$0xff]
  %v3614 = vld [vmem:[#allocation3 + $0x64] sm:$0xff]
  %v3615 = vld [vmem:[#allocation3 + $0x6c] sm:$0xff]
  %v3616 = vld [vmem:[#allocation3 + $0x74] sm:$0xff]
  %v3617 = vld [vmem:[#allocation3 + $0x7c] sm:$0xff]
  %v3618 = vld [vmem:[#allocation3 + $0x84] sm:$0xff]
  %v3619 = vld [vmem:[#allocation3 + $0x8c] sm:$0xff]
  %v3620 = vld [vmem:[#allocation3 + $0x94] sm:$0xff]
  %v3621 = vld [vmem:[#allocation3 + $0x9c] sm:$0xff]
  %v3622 = vld [vmem:[#allocation3 + $0xa4] sm:$0xff]
  %v3623 = vld [vmem:[#allocation3 + $0xac] sm:$0xff]
  %v3624 = vld [vmem:[#allocation3 + $0xb4] sm:$0xff]
  %v3625 = vld [vmem:[#allocation3 + $0xbc] sm:$0xff]
  %v3626 = vld [vmem:[#allocation3 + $0xc4] sm:$0xff]
  %v3627 = vld [vmem:[#allocation3 + $0xcc] sm:$0xff]
  %v3628 = vld [vmem:[#allocation3 + $0xd4] sm:$0xff]
  %s3629 = scalar_lea.vmem %s5, 192
  %v3630 = vld [vmem:[%s3629] sm:$0xff]
  %v3631 = vld [vmem:[%s3629 + $0x8] sm:$0xff]
  %v3632 = vld [vmem:[%s3629 + $0x10] sm:$0xff]
  %v3633 = vld [vmem:[%s3629 + $0x18] sm:$0xff]
  %v3635 = vsel %vm32, %v3604, 0
  %v3638 = vsel %vm32, %v3605, 0
  %v3641 = vsel %vm32, %v3606, 0
  %v3644 = vsel %vm32, %v3607, 0
  %v3647 = vsel %vm32, %v3608, 0
  %v3650 = vsel %vm32, %v3609, 0
  %v3653 = vsel %vm32, %v3610, 0
  %v3656 = vsel %vm32, %v3611, 0
  %v3659 = vsel %vm32, %v3612, 0
  %v3662 = vsel %vm32, %v3613, 0
  %v3665 = vsel %vm32, %v3614, 0
  %v3668 = vsel %vm32, %v3615, 0
  %v3671 = vsel %vm32, %v3616, 0
  %v3674 = vsel %vm32, %v3617, 0
  %v3677 = vsel %vm32, %v3618, 0
  %v3680 = vsel %vm32, %v3619, 0
  %v3683 = vsel %vm32, %v3620, 0
  %v3686 = vsel %vm32, %v3621, 0
  %v3689 = vsel %vm32, %v3622, 0
  %v3692 = vsel %vm32, %v3623, 0
  %v3695 = vsel %vm32, %v3624, 0
  %v3698 = vsel %vm32, %v3625, 0
  %v3701 = vsel %vm32, %v3626, 0
  %v3704 = vsel %vm32, %v3627, 0
  %v3707 = vsel %vm32, %v3628, 0
  %3709 = vmatpush.msra.mxu0 0.0
  %3710 = vmatpush.msra.mxu0 0.0
  %3711 = vmatpush.msra.mxu0 0.0
  %3712 = vmatpush.msra.mxu0 0.0
  %3713 = vmatpush.msra.mxu0 0.0
  %3714 = vmatpush.msra.mxu0 0.0
  %3715 = vmatpush.msra.mxu0 0.0
  %3716 = vmatpush.msra.mxu0 0.0
  %3717 = vmatpush.msra.mxu0 0.0
  %3718 = vmatpush.msra.mxu0 0.0
  %3719 = vmatpush.msra.mxu0 0.0
  %3720 = vmatpush.msra.mxu0 0.0
  %3721 = vmatpush.msra.mxu0 %v3633
  %3722 = vmatpush.msra.mxu0 %v3632
  %3723 = vmatpush.msra.mxu0 %v3631
  %3724 = vmatpush.msra.mxu0 %v3630
  %3725 = vmatmul.f32.gmra.mxu0 %v3635
  %v3726 = vpop.f32.mrf.mxu0
  %v3727 = vadd.f32 0.0, %v3726
  %3728 = vmatmul.f32.gmra.mxu0 %v3638
  %v3729 = vpop.f32.mrf.mxu0
  %v3730 = vadd.f32 0.0, %v3729
  %3731 = vmatmul.f32.gmra.mxu0 %v3641
  %v3732 = vpop.f32.mrf.mxu0
  %v3733 = vadd.f32 0.0, %v3732
  %3734 = vmatmul.f32.gmra.mxu0 %v3644
  %v3735 = vpop.f32.mrf.mxu0
  %v3736 = vadd.f32 0.0, %v3735
  %3737 = vmatmul.f32.gmra.mxu0 %v3647
  %v3738 = vpop.f32.mrf.mxu0
  %v3739 = vadd.f32 0.0, %v3738
  %3740 = vmatmul.f32.gmra.mxu0 %v3650
  %v3741 = vpop.f32.mrf.mxu0
  %v3742 = vadd.f32 0.0, %v3741
  %3743 = vmatmul.f32.gmra.mxu0 %v3653
  %v3744 = vpop.f32.mrf.mxu0
  %v3745 = vadd.f32 0.0, %v3744
  %3746 = vmatmul.f32.gmra.mxu0 %v3656
  %v3747 = vpop.f32.mrf.mxu0
  %v3748 = vadd.f32 0.0, %v3747
  %3749 = vmatmul.f32.gmra.mxu0 %v3659
  %v3750 = vpop.f32.mrf.mxu0
  %v3751 = vadd.f32 0.0, %v3750
  %3752 = vmatmul.f32.gmra.mxu0 %v3662
  %v3753 = vpop.f32.mrf.mxu0
  %v3754 = vadd.f32 0.0, %v3753
  %3755 = vmatmul.f32.gmra.mxu0 %v3665
  %v3756 = vpop.f32.mrf.mxu0
  %v3757 = vadd.f32 0.0, %v3756
  %3758 = vmatmul.f32.gmra.mxu0 %v3668
  %v3759 = vpop.f32.mrf.mxu0
  %v3760 = vadd.f32 0.0, %v3759
  %3761 = vmatmul.f32.gmra.mxu0 %v3671
  %v3762 = vpop.f32.mrf.mxu0
  %v3763 = vadd.f32 0.0, %v3762
  %3764 = vmatmul.f32.gmra.mxu0 %v3674
  %v3765 = vpop.f32.mrf.mxu0
  %v3766 = vadd.f32 0.0, %v3765
  %3767 = vmatmul.f32.gmra.mxu0 %v3677
  %v3768 = vpop.f32.mrf.mxu0
  %v3769 = vadd.f32 0.0, %v3768
  %3770 = vmatmul.f32.gmra.mxu0 %v3680
  %v3771 = vpop.f32.mrf.mxu0
  %v3772 = vadd.f32 0.0, %v3771
  %3773 = vmatmul.f32.gmra.mxu0 %v3683
  %v3774 = vpop.f32.mrf.mxu0
  %v3775 = vadd.f32 0.0, %v3774
  %3776 = vmatmul.f32.gmra.mxu0 %v3686
  %v3777 = vpop.f32.mrf.mxu0
  %v3778 = vadd.f32 0.0, %v3777
  %3779 = vmatmul.f32.gmra.mxu0 %v3689
  %v3780 = vpop.f32.mrf.mxu0
  %v3781 = vadd.f32 0.0, %v3780
  %3782 = vmatmul.f32.gmra.mxu0 %v3692
  %v3783 = vpop.f32.mrf.mxu0
  %v3784 = vadd.f32 0.0, %v3783
  %3785 = vmatmul.f32.gmra.mxu0 %v3695
  %v3786 = vpop.f32.mrf.mxu0
  %v3787 = vadd.f32 0.0, %v3786
  %3788 = vmatmul.f32.gmra.mxu0 %v3698
  %v3789 = vpop.f32.mrf.mxu0
  %v3790 = vadd.f32 0.0, %v3789
  %3791 = vmatmul.f32.gmra.mxu0 %v3701
  %v3792 = vpop.f32.mrf.mxu0
  %v3793 = vadd.f32 0.0, %v3792
  %3794 = vmatmul.f32.gmra.mxu0 %v3704
  %v3795 = vpop.f32.mrf.mxu0
  %v3796 = vadd.f32 0.0, %v3795
  %3797 = vmatmul.f32.gmra.mxu0 %v3707
  %v3798 = vpop.f32.mrf.mxu0
  %v3799 = vadd.f32 0.0, %v3798
  %3800 = vdwg.mxu0
  %v3801 = vadd.f32 %v3579, %v3727
  %v3802 = vadd.f32 %v3580, %v3730
  %v3803 = vadd.f32 %v3581, %v3733
  %v3804 = vadd.f32 %v3582, %v3736
  %v3805 = vadd.f32 %v3583, %v3739
  %v3806 = vadd.f32 %v3584, %v3742
  %v3807 = vadd.f32 %v3585, %v3745
  %v3808 = vadd.f32 %v3586, %v3748
  %v3809 = vadd.f32 %v3587, %v3751
  %v3810 = vadd.f32 %v3588, %v3754
  %v3811 = vadd.f32 %v3589, %v3757
  %v3812 = vadd.f32 %v3590, %v3760
  %v3813 = vadd.f32 %v3591, %v3763
  %v3814 = vadd.f32 %v3592, %v3766
  %v3815 = vadd.f32 %v3593, %v3769
  %v3816 = vadd.f32 %v3594, %v3772
  %v3817 = vadd.f32 %v3595, %v3775
  %v3818 = vadd.f32 %v3596, %v3778
  %v3819 = vadd.f32 %v3597, %v3781
  %v3820 = vadd.f32 %v3598, %v3784
  %v3821 = vadd.f32 %v3599, %v3787
  %v3822 = vadd.f32 %v3600, %v3790
  %v3823 = vadd.f32 %v3601, %v3793
  %v3824 = vadd.f32 %v3602, %v3796
  %v3825 = vadd.f32 %v3603, %v3799
  %v3826 = vld [vmem:[#allocation3 + $0x15] sm:$0xff]
  %v3827 = vld [vmem:[#allocation3 + $0x1d] sm:$0xff]
  %v3828 = vld [vmem:[#allocation3 + $0x25] sm:$0xff]
  %v3829 = vld [vmem:[#allocation3 + $0x2d] sm:$0xff]
  %v3830 = vld [vmem:[#allocation3 + $0x35] sm:$0xff]
  %v3831 = vld [vmem:[#allocation3 + $0x3d] sm:$0xff]
  %v3832 = vld [vmem:[#allocation3 + $0x45] sm:$0xff]
  %v3833 = vld [vmem:[#allocation3 + $0x4d] sm:$0xff]
  %v3834 = vld [vmem:[#allocation3 + $0x55] sm:$0xff]
  %v3835 = vld [vmem:[#allocation3 + $0x5d] sm:$0xff]
  %v3836 = vld [vmem:[#allocation3 + $0x65] sm:$0xff]
  %v3837 = vld [vmem:[#allocation3 + $0x6d] sm:$0xff]
  %v3838 = vld [vmem:[#allocation3 + $0x75] sm:$0xff]
  %v3839 = vld [vmem:[#allocation3 + $0x7d] sm:$0xff]
  %v3840 = vld [vmem:[#allocation3 + $0x85] sm:$0xff]
  %v3841 = vld [vmem:[#allocation3 + $0x8d] sm:$0xff]
  %v3842 = vld [vmem:[#allocation3 + $0x95] sm:$0xff]
  %v3843 = vld [vmem:[#allocation3 + $0x9d] sm:$0xff]
  %v3844 = vld [vmem:[#allocation3 + $0xa5] sm:$0xff]
  %v3845 = vld [vmem:[#allocation3 + $0xad] sm:$0xff]
  %v3846 = vld [vmem:[#allocation3 + $0xb5] sm:$0xff]
  %v3847 = vld [vmem:[#allocation3 + $0xbd] sm:$0xff]
  %v3848 = vld [vmem:[#allocation3 + $0xc5] sm:$0xff]
  %v3849 = vld [vmem:[#allocation3 + $0xcd] sm:$0xff]
  %v3850 = vld [vmem:[#allocation3 + $0xd5] sm:$0xff]
  %s3851 = scalar_lea.vmem %s5, 224
  %v3852 = vld [vmem:[%s3851] sm:$0xff]
  %v3853 = vld [vmem:[%s3851 + $0x8] sm:$0xff]
  %v3854 = vld [vmem:[%s3851 + $0x10] sm:$0xff]
  %v3855 = vld [vmem:[%s3851 + $0x18] sm:$0xff]
  %v3857 = vsel %vm32, %v3826, 0
  %v3860 = vsel %vm32, %v3827, 0
  %v3863 = vsel %vm32, %v3828, 0
  %v3866 = vsel %vm32, %v3829, 0
  %v3869 = vsel %vm32, %v3830, 0
  %v3872 = vsel %vm32, %v3831, 0
  %v3875 = vsel %vm32, %v3832, 0
  %v3878 = vsel %vm32, %v3833, 0
  %v3881 = vsel %vm32, %v3834, 0
  %v3884 = vsel %vm32, %v3835, 0
  %v3887 = vsel %vm32, %v3836, 0
  %v3890 = vsel %vm32, %v3837, 0
  %v3893 = vsel %vm32, %v3838, 0
  %v3896 = vsel %vm32, %v3839, 0
  %v3899 = vsel %vm32, %v3840, 0
  %v3902 = vsel %vm32, %v3841, 0
  %v3905 = vsel %vm32, %v3842, 0
  %v3908 = vsel %vm32, %v3843, 0
  %v3911 = vsel %vm32, %v3844, 0
  %v3914 = vsel %vm32, %v3845, 0
  %v3917 = vsel %vm32, %v3846, 0
  %v3920 = vsel %vm32, %v3847, 0
  %v3923 = vsel %vm32, %v3848, 0
  %v3926 = vsel %vm32, %v3849, 0
  %v3929 = vsel %vm32, %v3850, 0
  %3931 = vmatpush.msra.mxu0 0.0
  %3932 = vmatpush.msra.mxu0 0.0
  %3933 = vmatpush.msra.mxu0 0.0
  %3934 = vmatpush.msra.mxu0 0.0
  %3935 = vmatpush.msra.mxu0 0.0
  %3936 = vmatpush.msra.mxu0 0.0
  %3937 = vmatpush.msra.mxu0 0.0
  %3938 = vmatpush.msra.mxu0 0.0
  %3939 = vmatpush.msra.mxu0 0.0
  %3940 = vmatpush.msra.mxu0 0.0
  %3941 = vmatpush.msra.mxu0 0.0
  %3942 = vmatpush.msra.mxu0 0.0
  %3943 = vmatpush.msra.mxu0 %v3855
  %3944 = vmatpush.msra.mxu0 %v3854
  %3945 = vmatpush.msra.mxu0 %v3853
  %3946 = vmatpush.msra.mxu0 %v3852
  %3947 = vmatmul.f32.gmra.mxu0 %v3857
  %v3948 = vpop.f32.mrf.mxu0
  %v3949 = vadd.f32 0.0, %v3948
  %3950 = vmatmul.f32.gmra.mxu0 %v3860
  %v3951 = vpop.f32.mrf.mxu0
  %v3952 = vadd.f32 0.0, %v3951
  %3953 = vmatmul.f32.gmra.mxu0 %v3863
  %v3954 = vpop.f32.mrf.mxu0
  %v3955 = vadd.f32 0.0, %v3954
  %3956 = vmatmul.f32.gmra.mxu0 %v3866
  %v3957 = vpop.f32.mrf.mxu0
  %v3958 = vadd.f32 0.0, %v3957
  %3959 = vmatmul.f32.gmra.mxu0 %v3869
  %v3960 = vpop.f32.mrf.mxu0
  %v3961 = vadd.f32 0.0, %v3960
  %3962 = vmatmul.f32.gmra.mxu0 %v3872
  %v3963 = vpop.f32.mrf.mxu0
  %v3964 = vadd.f32 0.0, %v3963
  %3965 = vmatmul.f32.gmra.mxu0 %v3875
  %v3966 = vpop.f32.mrf.mxu0
  %v3967 = vadd.f32 0.0, %v3966
  %3968 = vmatmul.f32.gmra.mxu0 %v3878
  %v3969 = vpop.f32.mrf.mxu0
  %v3970 = vadd.f32 0.0, %v3969
  %3971 = vmatmul.f32.gmra.mxu0 %v3881
  %v3972 = vpop.f32.mrf.mxu0
  %v3973 = vadd.f32 0.0, %v3972
  %3974 = vmatmul.f32.gmra.mxu0 %v3884
  %v3975 = vpop.f32.mrf.mxu0
  %v3976 = vadd.f32 0.0, %v3975
  %3977 = vmatmul.f32.gmra.mxu0 %v3887
  %v3978 = vpop.f32.mrf.mxu0
  %v3979 = vadd.f32 0.0, %v3978
  %3980 = vmatmul.f32.gmra.mxu0 %v3890
  %v3981 = vpop.f32.mrf.mxu0
  %v3982 = vadd.f32 0.0, %v3981
  %3983 = vmatmul.f32.gmra.mxu0 %v3893
  %v3984 = vpop.f32.mrf.mxu0
  %v3985 = vadd.f32 0.0, %v3984
  %3986 = vmatmul.f32.gmra.mxu0 %v3896
  %v3987 = vpop.f32.mrf.mxu0
  %v3988 = vadd.f32 0.0, %v3987
  %3989 = vmatmul.f32.gmra.mxu0 %v3899
  %v3990 = vpop.f32.mrf.mxu0
  %v3991 = vadd.f32 0.0, %v3990
  %3992 = vmatmul.f32.gmra.mxu0 %v3902
  %v3993 = vpop.f32.mrf.mxu0
  %v3994 = vadd.f32 0.0, %v3993
  %3995 = vmatmul.f32.gmra.mxu0 %v3905
  %v3996 = vpop.f32.mrf.mxu0
  %v3997 = vadd.f32 0.0, %v3996
  %3998 = vmatmul.f32.gmra.mxu0 %v3908
  %v3999 = vpop.f32.mrf.mxu0
  %v4000 = vadd.f32 0.0, %v3999
  %4001 = vmatmul.f32.gmra.mxu0 %v3911
  %v4002 = vpop.f32.mrf.mxu0
  %v4003 = vadd.f32 0.0, %v4002
  %4004 = vmatmul.f32.gmra.mxu0 %v3914
  %v4005 = vpop.f32.mrf.mxu0
  %v4006 = vadd.f32 0.0, %v4005
  %4007 = vmatmul.f32.gmra.mxu0 %v3917
  %v4008 = vpop.f32.mrf.mxu0
  %v4009 = vadd.f32 0.0, %v4008
  %4010 = vmatmul.f32.gmra.mxu0 %v3920
  %v4011 = vpop.f32.mrf.mxu0
  %v4012 = vadd.f32 0.0, %v4011
  %4013 = vmatmul.f32.gmra.mxu0 %v3923
  %v4014 = vpop.f32.mrf.mxu0
  %v4015 = vadd.f32 0.0, %v4014
  %4016 = vmatmul.f32.gmra.mxu0 %v3926
  %v4017 = vpop.f32.mrf.mxu0
  %v4018 = vadd.f32 0.0, %v4017
  %4019 = vmatmul.f32.gmra.mxu0 %v3929
  %v4020 = vpop.f32.mrf.mxu0
  %v4021 = vadd.f32 0.0, %v4020
  %4022 = vdwg.mxu0
  %v4023 = vadd.f32 %v3801, %v3949
  %v4024 = vadd.f32 %v3802, %v3952
  %v4025 = vadd.f32 %v3803, %v3955
  %v4026 = vadd.f32 %v3804, %v3958
  %v4027 = vadd.f32 %v3805, %v3961
  %v4028 = vadd.f32 %v3806, %v3964
  %v4029 = vadd.f32 %v3807, %v3967
  %v4030 = vadd.f32 %v3808, %v3970
  %v4031 = vadd.f32 %v3809, %v3973
  %v4032 = vadd.f32 %v3810, %v3976
  %v4033 = vadd.f32 %v3811, %v3979
  %v4034 = vadd.f32 %v3812, %v3982
  %v4035 = vadd.f32 %v3813, %v3985
  %v4036 = vadd.f32 %v3814, %v3988
  %v4037 = vadd.f32 %v3815, %v3991
  %v4038 = vadd.f32 %v3816, %v3994
  %v4039 = vadd.f32 %v3817, %v3997
  %v4040 = vadd.f32 %v3818, %v4000
  %v4041 = vadd.f32 %v3819, %v4003
  %v4042 = vadd.f32 %v3820, %v4006
  %v4043 = vadd.f32 %v3821, %v4009
  %v4044 = vadd.f32 %v3822, %v4012
  %v4045 = vadd.f32 %v3823, %v4015
  %v4046 = vadd.f32 %v3824, %v4018
  %v4047 = vadd.f32 %v3825, %v4021
  %v4048 = vld [vmem:[#allocation3 + $0x16] sm:$0xff]
  %v4049 = vld [vmem:[#allocation3 + $0x1e] sm:$0xff]
  %v4050 = vld [vmem:[#allocation3 + $0x26] sm:$0xff]
  %v4051 = vld [vmem:[#allocation3 + $0x2e] sm:$0xff]
  %v4052 = vld [vmem:[#allocation3 + $0x36] sm:$0xff]
  %v4053 = vld [vmem:[#allocation3 + $0x3e] sm:$0xff]
  %v4054 = vld [vmem:[#allocation3 + $0x46] sm:$0xff]
  %v4055 = vld [vmem:[#allocation3 + $0x4e] sm:$0xff]
  %v4056 = vld [vmem:[#allocation3 + $0x56] sm:$0xff]
  %v4057 = vld [vmem:[#allocation3 + $0x5e] sm:$0xff]
  %v4058 = vld [vmem:[#allocation3 + $0x66] sm:$0xff]
  %v4059 = vld [vmem:[#allocation3 + $0x6e] sm:$0xff]
  %v4060 = vld [vmem:[#allocation3 + $0x76] sm:$0xff]
  %v4061 = vld [vmem:[#allocation3 + $0x7e] sm:$0xff]
  %v4062 = vld [vmem:[#allocation3 + $0x86] sm:$0xff]
  %v4063 = vld [vmem:[#allocation3 + $0x8e] sm:$0xff]
  %v4064 = vld [vmem:[#allocation3 + $0x96] sm:$0xff]
  %v4065 = vld [vmem:[#allocation3 + $0x9e] sm:$0xff]
  %v4066 = vld [vmem:[#allocation3 + $0xa6] sm:$0xff]
  %v4067 = vld [vmem:[#allocation3 + $0xae] sm:$0xff]
  %v4068 = vld [vmem:[#allocation3 + $0xb6] sm:$0xff]
  %v4069 = vld [vmem:[#allocation3 + $0xbe] sm:$0xff]
  %v4070 = vld [vmem:[#allocation3 + $0xc6] sm:$0xff]
  %v4071 = vld [vmem:[#allocation3 + $0xce] sm:$0xff]
  %v4072 = vld [vmem:[#allocation3 + $0xd6] sm:$0xff]
  %s4073 = scalar_lea.vmem %s5, 256
  %v4074 = vld [vmem:[%s4073] sm:$0xff]
  %v4075 = vld [vmem:[%s4073 + $0x8] sm:$0xff]
  %v4076 = vld [vmem:[%s4073 + $0x10] sm:$0xff]
  %v4077 = vld [vmem:[%s4073 + $0x18] sm:$0xff]
  %v4079 = vsel %vm32, %v4048, 0
  %v4082 = vsel %vm32, %v4049, 0
  %v4085 = vsel %vm32, %v4050, 0
  %v4088 = vsel %vm32, %v4051, 0
  %v4091 = vsel %vm32, %v4052, 0
  %v4094 = vsel %vm32, %v4053, 0
  %v4097 = vsel %vm32, %v4054, 0
  %v4100 = vsel %vm32, %v4055, 0
  %v4103 = vsel %vm32, %v4056, 0
  %v4106 = vsel %vm32, %v4057, 0
  %v4109 = vsel %vm32, %v4058, 0
  %v4112 = vsel %vm32, %v4059, 0
  %v4115 = vsel %vm32, %v4060, 0
  %v4118 = vsel %vm32, %v4061, 0
  %v4121 = vsel %vm32, %v4062, 0
  %v4124 = vsel %vm32, %v4063, 0
  %v4127 = vsel %vm32, %v4064, 0
  %v4130 = vsel %vm32, %v4065, 0
  %v4133 = vsel %vm32, %v4066, 0
  %v4136 = vsel %vm32, %v4067, 0
  %v4139 = vsel %vm32, %v4068, 0
  %v4142 = vsel %vm32, %v4069, 0
  %v4145 = vsel %vm32, %v4070, 0
  %v4148 = vsel %vm32, %v4071, 0
  %v4151 = vsel %vm32, %v4072, 0
  %4153 = vmatpush.msra.mxu0 0.0
  %4154 = vmatpush.msra.mxu0 0.0
  %4155 = vmatpush.msra.mxu0 0.0
  %4156 = vmatpush.msra.mxu0 0.0
  %4157 = vmatpush.msra.mxu0 0.0
  %4158 = vmatpush.msra.mxu0 0.0
  %4159 = vmatpush.msra.mxu0 0.0
  %4160 = vmatpush.msra.mxu0 0.0
  %4161 = vmatpush.msra.mxu0 0.0
  %4162 = vmatpush.msra.mxu0 0.0
  %4163 = vmatpush.msra.mxu0 0.0
  %4164 = vmatpush.msra.mxu0 0.0
  %4165 = vmatpush.msra.mxu0 %v4077
  %4166 = vmatpush.msra.mxu0 %v4076
  %4167 = vmatpush.msra.mxu0 %v4075
  %4168 = vmatpush.msra.mxu0 %v4074
  %4169 = vmatmul.f32.gmra.mxu0 %v4079
  %v4170 = vpop.f32.mrf.mxu0
  %v4171 = vadd.f32 0.0, %v4170
  %4172 = vmatmul.f32.gmra.mxu0 %v4082
  %v4173 = vpop.f32.mrf.mxu0
  %v4174 = vadd.f32 0.0, %v4173
  %4175 = vmatmul.f32.gmra.mxu0 %v4085
  %v4176 = vpop.f32.mrf.mxu0
  %v4177 = vadd.f32 0.0, %v4176
  %4178 = vmatmul.f32.gmra.mxu0 %v4088
  %v4179 = vpop.f32.mrf.mxu0
  %v4180 = vadd.f32 0.0, %v4179
  %4181 = vmatmul.f32.gmra.mxu0 %v4091
  %v4182 = vpop.f32.mrf.mxu0
  %v4183 = vadd.f32 0.0, %v4182
  %4184 = vmatmul.f32.gmra.mxu0 %v4094
  %v4185 = vpop.f32.mrf.mxu0
  %v4186 = vadd.f32 0.0, %v4185
  %4187 = vmatmul.f32.gmra.mxu0 %v4097
  %v4188 = vpop.f32.mrf.mxu0
  %v4189 = vadd.f32 0.0, %v4188
  %4190 = vmatmul.f32.gmra.mxu0 %v4100
  %v4191 = vpop.f32.mrf.mxu0
  %v4192 = vadd.f32 0.0, %v4191
  %4193 = vmatmul.f32.gmra.mxu0 %v4103
  %v4194 = vpop.f32.mrf.mxu0
  %v4195 = vadd.f32 0.0, %v4194
  %4196 = vmatmul.f32.gmra.mxu0 %v4106
  %v4197 = vpop.f32.mrf.mxu0
  %v4198 = vadd.f32 0.0, %v4197
  %4199 = vmatmul.f32.gmra.mxu0 %v4109
  %v4200 = vpop.f32.mrf.mxu0
  %v4201 = vadd.f32 0.0, %v4200
  %4202 = vmatmul.f32.gmra.mxu0 %v4112
  %v4203 = vpop.f32.mrf.mxu0
  %v4204 = vadd.f32 0.0, %v4203
  %4205 = vmatmul.f32.gmra.mxu0 %v4115
  %v4206 = vpop.f32.mrf.mxu0
  %v4207 = vadd.f32 0.0, %v4206
  %4208 = vmatmul.f32.gmra.mxu0 %v4118
  %v4209 = vpop.f32.mrf.mxu0
  %v4210 = vadd.f32 0.0, %v4209
  %4211 = vmatmul.f32.gmra.mxu0 %v4121
  %v4212 = vpop.f32.mrf.mxu0
  %v4213 = vadd.f32 0.0, %v4212
  %4214 = vmatmul.f32.gmra.mxu0 %v4124
  %v4215 = vpop.f32.mrf.mxu0
  %v4216 = vadd.f32 0.0, %v4215
  %4217 = vmatmul.f32.gmra.mxu0 %v4127
  %v4218 = vpop.f32.mrf.mxu0
  %v4219 = vadd.f32 0.0, %v4218
  %4220 = vmatmul.f32.gmra.mxu0 %v4130
  %v4221 = vpop.f32.mrf.mxu0
  %v4222 = vadd.f32 0.0, %v4221
  %4223 = vmatmul.f32.gmra.mxu0 %v4133
  %v4224 = vpop.f32.mrf.mxu0
  %v4225 = vadd.f32 0.0, %v4224
  %4226 = vmatmul.f32.gmra.mxu0 %v4136
  %v4227 = vpop.f32.mrf.mxu0
  %v4228 = vadd.f32 0.0, %v4227
  %4229 = vmatmul.f32.gmra.mxu0 %v4139
  %v4230 = vpop.f32.mrf.mxu0
  %v4231 = vadd.f32 0.0, %v4230
  %4232 = vmatmul.f32.gmra.mxu0 %v4142
  %v4233 = vpop.f32.mrf.mxu0
  %v4234 = vadd.f32 0.0, %v4233
  %4235 = vmatmul.f32.gmra.mxu0 %v4145
  %v4236 = vpop.f32.mrf.mxu0
  %v4237 = vadd.f32 0.0, %v4236
  %4238 = vmatmul.f32.gmra.mxu0 %v4148
  %v4239 = vpop.f32.mrf.mxu0
  %v4240 = vadd.f32 0.0, %v4239
  %4241 = vmatmul.f32.gmra.mxu0 %v4151
  %v4242 = vpop.f32.mrf.mxu0
  %v4243 = vadd.f32 0.0, %v4242
  %4244 = vdwg.mxu0
  %v4245 = vadd.f32 %v4023, %v4171
  %v4246 = vadd.f32 %v4024, %v4174
  %v4247 = vadd.f32 %v4025, %v4177
  %v4248 = vadd.f32 %v4026, %v4180
  %v4249 = vadd.f32 %v4027, %v4183
  %v4250 = vadd.f32 %v4028, %v4186
  %v4251 = vadd.f32 %v4029, %v4189
  %v4252 = vadd.f32 %v4030, %v4192
  %v4253 = vadd.f32 %v4031, %v4195
  %v4254 = vadd.f32 %v4032, %v4198
  %v4255 = vadd.f32 %v4033, %v4201
  %v4256 = vadd.f32 %v4034, %v4204
  %v4257 = vadd.f32 %v4035, %v4207
  %v4258 = vadd.f32 %v4036, %v4210
  %v4259 = vadd.f32 %v4037, %v4213
  %v4260 = vadd.f32 %v4038, %v4216
  %v4261 = vadd.f32 %v4039, %v4219
  %v4262 = vadd.f32 %v4040, %v4222
  %v4263 = vadd.f32 %v4041, %v4225
  %v4264 = vadd.f32 %v4042, %v4228
  %v4265 = vadd.f32 %v4043, %v4231
  %v4266 = vadd.f32 %v4044, %v4234
  %v4267 = vadd.f32 %v4045, %v4237
  %v4268 = vadd.f32 %v4046, %v4240
  %v4269 = vadd.f32 %v4047, %v4243
  %v4270 = vld [vmem:[%s6] sm:$0x1]
  %v4272 = vperm.slane %v4270, 0
  %v4274 = vadd.f32 %v4245, %v4272
  %v4275 = vadd.f32 %v4246, %v4272
  %v4276 = vadd.f32 %v4247, %v4272
  %v4277 = vadd.f32 %v4248, %v4272
  %v4278 = vadd.f32 %v4249, %v4272
  %v4279 = vadd.f32 %v4250, %v4272
  %v4280 = vadd.f32 %v4251, %v4272
  %v4281 = vadd.f32 %v4252, %v4272
  %v4282 = vadd.f32 %v4253, %v4272
  %v4283 = vadd.f32 %v4254, %v4272
  %v4284 = vadd.f32 %v4255, %v4272
  %v4285 = vadd.f32 %v4256, %v4272
  %v4286 = vadd.f32 %v4257, %v4272
  %v4287 = vadd.f32 %v4258, %v4272
  %v4288 = vadd.f32 %v4259, %v4272
  %v4289 = vadd.f32 %v4260, %v4272
  %v4290 = vadd.f32 %v4261, %v4272
  %v4291 = vadd.f32 %v4262, %v4272
  %v4292 = vadd.f32 %v4263, %v4272
  %v4293 = vadd.f32 %v4264, %v4272
  %v4294 = vadd.f32 %v4265, %v4272
  %v4295 = vadd.f32 %v4266, %v4272
  %v4296 = vadd.f32 %v4267, %v4272
  %v4297 = vadd.f32 %v4268, %v4272
  %v4298 = vadd.f32 %v4269, %v4272
  %v4299 = vmax.f32 %v4274, 0.0
  %v4300 = vmax.f32 %v4275, 0.0
  %v4301 = vmax.f32 %v4276, 0.0
  %v4302 = vmax.f32 %v4277, 0.0
  %v4303 = vmax.f32 %v4278, 0.0
  %v4304 = vmax.f32 %v4279, 0.0
  %v4305 = vmax.f32 %v4280, 0.0
  %v4306 = vmax.f32 %v4281, 0.0
  %v4307 = vmax.f32 %v4282, 0.0
  %v4308 = vmax.f32 %v4283, 0.0
  %v4309 = vmax.f32 %v4284, 0.0
  %v4310 = vmax.f32 %v4285, 0.0
  %v4311 = vmax.f32 %v4286, 0.0
  %v4312 = vmax.f32 %v4287, 0.0
  %v4313 = vmax.f32 %v4288, 0.0
  %v4314 = vmax.f32 %v4289, 0.0
  %v4315 = vmax.f32 %v4290, 0.0
  %v4316 = vmax.f32 %v4291, 0.0
  %v4317 = vmax.f32 %v4292, 0.0
  %v4318 = vmax.f32 %v4293, 0.0
  %v4319 = vmax.f32 %v4294, 0.0
  %v4320 = vmax.f32 %v4295, 0.0
  %v4321 = vmax.f32 %v4296, 0.0
  %v4322 = vmax.f32 %v4297, 0.0
  %v4323 = vmax.f32 %v4298, 0.0
  %4324 = vst.msk [vmem:[#allocation4] sm:$0xff] %vm32, %v4299
  %4325 = vst.msk [vmem:[#allocation4 + $0x8] sm:$0xff] %vm32, %v4300
  %4326 = vst.msk [vmem:[#allocation4 + $0x10] sm:$0xff] %vm32, %v4301
  %4327 = vst.msk [vmem:[#allocation4 + $0x18] sm:$0xff] %vm32, %v4302
  %4328 = vst.msk [vmem:[#allocation4 + $0x20] sm:$0xff] %vm32, %v4303
  %4329 = vst.msk [vmem:[#allocation4 + $0x28] sm:$0xff] %vm32, %v4304
  %4330 = vst.msk [vmem:[#allocation4 + $0x30] sm:$0xff] %vm32, %v4305
  %4331 = vst.msk [vmem:[#allocation4 + $0x38] sm:$0xff] %vm32, %v4306
  %4332 = vst.msk [vmem:[#allocation4 + $0x40] sm:$0xff] %vm32, %v4307
  %4333 = vst.msk [vmem:[#allocation4 + $0x48] sm:$0xff] %vm32, %v4308
  %4334 = vst.msk [vmem:[#allocation4 + $0x50] sm:$0xff] %vm32, %v4309
  %4335 = vst.msk [vmem:[#allocation4 + $0x58] sm:$0xff] %vm32, %v4310
  %4336 = vst.msk [vmem:[#allocation4 + $0x60] sm:$0xff] %vm32, %v4311
  %4337 = vst.msk [vmem:[#allocation4 + $0x68] sm:$0xff] %vm32, %v4312
  %4338 = vst.msk [vmem:[#allocation4 + $0x70] sm:$0xff] %vm32, %v4313
  %4339 = vst.msk [vmem:[#allocation4 + $0x78] sm:$0xff] %vm32, %v4314
  %4340 = vst.msk [vmem:[#allocation4 + $0x80] sm:$0xff] %vm32, %v4315
  %4341 = vst.msk [vmem:[#allocation4 + $0x88] sm:$0xff] %vm32, %v4316
  %4342 = vst.msk [vmem:[#allocation4 + $0x90] sm:$0xff] %vm32, %v4317
  %4343 = vst.msk [vmem:[#allocation4 + $0x98] sm:$0xff] %vm32, %v4318
  %4344 = vst.msk [vmem:[#allocation4 + $0xa0] sm:$0xff] %vm32, %v4319
  %4345 = vst.msk [vmem:[#allocation4 + $0xa8] sm:$0xff] %vm32, %v4320
  %4346 = vst.msk [vmem:[#allocation4 + $0xb0] sm:$0xff] %vm32, %v4321
  %4347 = vst.msk [vmem:[#allocation4 + $0xb8] sm:$0xff] %vm32, %v4322
  %4348 = vst.msk [vmem:[#allocation4 + $0xc0] sm:$0xff] %vm32, %v4323
  %v4349 = vld [vmem:[#allocation4] sm:$0xff]
  %v4350 = vld [vmem:[#allocation4 + $0x8] sm:$0xff]
  %v4351 = vld [vmem:[#allocation4 + $0x10] sm:$0xff]
  %v4352 = vld [vmem:[#allocation4 + $0x18] sm:$0xff]
  %v4353 = vld [vmem:[#allocation4 + $0x20] sm:$0xff]
  %v4354 = vld [vmem:[#allocation4 + $0x28] sm:$0xff]
  %v4355 = vld [vmem:[#allocation4 + $0x30] sm:$0xff]
  %v4356 = vld [vmem:[#allocation4 + $0x38] sm:$0xff]
  %v4357 = vld [vmem:[#allocation4 + $0x40] sm:$0xff]
  %v4358 = vld [vmem:[#allocation4 + $0x48] sm:$0xff]
  %v4359 = vld [vmem:[#allocation4 + $0x50] sm:$0xff]
  %v4360 = vld [vmem:[#allocation4 + $0x58] sm:$0xff]
  %v4361 = vld [vmem:[#allocation4 + $0x60] sm:$0xff]
  %v4362 = vld [vmem:[#allocation4 + $0x68] sm:$0xff]
  %v4363 = vld [vmem:[#allocation4 + $0x70] sm:$0xff]
  %v4364 = vld [vmem:[#allocation4 + $0x78] sm:$0xff]
  %v4365 = vld [vmem:[#allocation4 + $0x80] sm:$0xff]
  %v4366 = vld [vmem:[#allocation4 + $0x88] sm:$0xff]
  %v4367 = vld [vmem:[#allocation4 + $0x90] sm:$0xff]
  %v4368 = vld [vmem:[#allocation4 + $0x98] sm:$0xff]
  %v4369 = vld [vmem:[#allocation4 + $0xa0] sm:$0xff]
  %v4370 = vld [vmem:[#allocation4 + $0xa8] sm:$0xff]
  %v4371 = vld [vmem:[#allocation4 + $0xb0] sm:$0xff]
  %v4372 = vld [vmem:[#allocation4 + $0xb8] sm:$0xff]
  %v4373 = vld [vmem:[#allocation4 + $0xc0] sm:$0xff]
  %v4374 = vld [vmem:[%s7] sm:$0xff]
  %v4375 = vld [vmem:[%s7 + $0x8] sm:$0xff]
  %v4376 = vld [vmem:[%s7 + $0x10] sm:$0xff]
  %v4377 = vld [vmem:[%s7 + $0x18] sm:$0xff]
  %v4378 = vld [vmem:[#allocation4 + $0x1] sm:$0xff]
  %v4379 = vld [vmem:[#allocation4 + $0x9] sm:$0xff]
  %v4380 = vld [vmem:[#allocation4 + $0x11] sm:$0xff]
  %v4381 = vld [vmem:[#allocation4 + $0x19] sm:$0xff]
  %v4382 = vld [vmem:[#allocation4 + $0x21] sm:$0xff]
  %v4383 = vld [vmem:[#allocation4 + $0x29] sm:$0xff]
  %v4384 = vld [vmem:[#allocation4 + $0x31] sm:$0xff]
  %v4385 = vld [vmem:[#allocation4 + $0x39] sm:$0xff]
  %v4386 = vld [vmem:[#allocation4 + $0x41] sm:$0xff]
  %v4387 = vld [vmem:[#allocation4 + $0x49] sm:$0xff]
  %v4388 = vld [vmem:[#allocation4 + $0x51] sm:$0xff]
  %v4389 = vld [vmem:[#allocation4 + $0x59] sm:$0xff]
  %v4390 = vld [vmem:[#allocation4 + $0x61] sm:$0xff]
  %v4391 = vld [vmem:[#allocation4 + $0x69] sm:$0xff]
  %v4392 = vld [vmem:[#allocation4 + $0x71] sm:$0xff]
  %v4393 = vld [vmem:[#allocation4 + $0x79] sm:$0xff]
  %v4394 = vld [vmem:[#allocation4 + $0x81] sm:$0xff]
  %v4395 = vld [vmem:[#allocation4 + $0x89] sm:$0xff]
  %v4396 = vld [vmem:[#allocation4 + $0x91] sm:$0xff]
  %v4397 = vld [vmem:[#allocation4 + $0x99] sm:$0xff]
  %v4398 = vld [vmem:[#allocation4 + $0xa1] sm:$0xff]
  %v4399 = vld [vmem:[#allocation4 + $0xa9] sm:$0xff]
  %v4400 = vld [vmem:[#allocation4 + $0xb1] sm:$0xff]
  %v4401 = vld [vmem:[#allocation4 + $0xb9] sm:$0xff]
  %v4402 = vld [vmem:[#allocation4 + $0xc1] sm:$0xff]
  %s4403 = scalar_lea.vmem %s7, 32
  %v4404 = vld [vmem:[%s4403] sm:$0xff]
  %v4405 = vld [vmem:[%s4403 + $0x8] sm:$0xff]
  %v4406 = vld [vmem:[%s4403 + $0x10] sm:$0xff]
  %v4407 = vld [vmem:[%s4403 + $0x18] sm:$0xff]
  %v4409 = vsel %vm32, %v4378, 0
  %v4412 = vsel %vm32, %v4379, 0
  %v4415 = vsel %vm32, %v4380, 0
  %v4418 = vsel %vm32, %v4381, 0
  %v4421 = vsel %vm32, %v4382, 0
  %v4424 = vsel %vm32, %v4383, 0
  %v4427 = vsel %vm32, %v4384, 0
  %v4430 = vsel %vm32, %v4385, 0
  %v4433 = vsel %vm32, %v4386, 0
  %v4436 = vsel %vm32, %v4387, 0
  %v4439 = vsel %vm32, %v4388, 0
  %v4442 = vsel %vm32, %v4389, 0
  %v4445 = vsel %vm32, %v4390, 0
  %v4448 = vsel %vm32, %v4391, 0
  %v4451 = vsel %vm32, %v4392, 0
  %v4454 = vsel %vm32, %v4393, 0
  %v4457 = vsel %vm32, %v4394, 0
  %v4460 = vsel %vm32, %v4395, 0
  %v4463 = vsel %vm32, %v4396, 0
  %v4466 = vsel %vm32, %v4397, 0
  %v4469 = vsel %vm32, %v4398, 0
  %v4472 = vsel %vm32, %v4399, 0
  %v4475 = vsel %vm32, %v4400, 0
  %v4478 = vsel %vm32, %v4401, 0
  %v4481 = vsel %vm32, %v4402, 0
  %4483 = vmatpush.msra.mxu0 0.0
  %4484 = vmatpush.msra.mxu0 0.0
  %4485 = vmatpush.msra.mxu0 0.0
  %4486 = vmatpush.msra.mxu0 0.0
  %4487 = vmatpush.msra.mxu0 0.0
  %4488 = vmatpush.msra.mxu0 0.0
  %4489 = vmatpush.msra.mxu0 0.0
  %4490 = vmatpush.msra.mxu0 0.0
  %4491 = vmatpush.msra.mxu0 0.0
  %4492 = vmatpush.msra.mxu0 0.0
  %4493 = vmatpush.msra.mxu0 0.0
  %4494 = vmatpush.msra.mxu0 0.0
  %4495 = vmatpush.msra.mxu0 %v4407
  %4496 = vmatpush.msra.mxu0 %v4406
  %4497 = vmatpush.msra.mxu0 %v4405
  %4498 = vmatpush.msra.mxu0 %v4404
  %4499 = vmatmul.f32.gmra.mxu0 %v4409
  %v4500 = vpop.f32.mrf.mxu0
  %v4501 = vadd.f32 0.0, %v4500
  %4502 = vmatmul.f32.gmra.mxu0 %v4412
  %v4503 = vpop.f32.mrf.mxu0
  %v4504 = vadd.f32 0.0, %v4503
  %4505 = vmatmul.f32.gmra.mxu0 %v4415
  %v4506 = vpop.f32.mrf.mxu0
  %v4507 = vadd.f32 0.0, %v4506
  %4508 = vmatmul.f32.gmra.mxu0 %v4418
  %v4509 = vpop.f32.mrf.mxu0
  %v4510 = vadd.f32 0.0, %v4509
  %4511 = vmatmul.f32.gmra.mxu0 %v4421
  %v4512 = vpop.f32.mrf.mxu0
  %v4513 = vadd.f32 0.0, %v4512
  %4514 = vmatmul.f32.gmra.mxu0 %v4424
  %v4515 = vpop.f32.mrf.mxu0
  %v4516 = vadd.f32 0.0, %v4515
  %4517 = vmatmul.f32.gmra.mxu0 %v4427
  %v4518 = vpop.f32.mrf.mxu0
  %v4519 = vadd.f32 0.0, %v4518
  %4520 = vmatmul.f32.gmra.mxu0 %v4430
  %v4521 = vpop.f32.mrf.mxu0
  %v4522 = vadd.f32 0.0, %v4521
  %4523 = vmatmul.f32.gmra.mxu0 %v4433
  %v4524 = vpop.f32.mrf.mxu0
  %v4525 = vadd.f32 0.0, %v4524
  %4526 = vmatmul.f32.gmra.mxu0 %v4436
  %v4527 = vpop.f32.mrf.mxu0
  %v4528 = vadd.f32 0.0, %v4527
  %4529 = vmatmul.f32.gmra.mxu0 %v4439
  %v4530 = vpop.f32.mrf.mxu0
  %v4531 = vadd.f32 0.0, %v4530
  %4532 = vmatmul.f32.gmra.mxu0 %v4442
  %v4533 = vpop.f32.mrf.mxu0
  %v4534 = vadd.f32 0.0, %v4533
  %4535 = vmatmul.f32.gmra.mxu0 %v4445
  %v4536 = vpop.f32.mrf.mxu0
  %v4537 = vadd.f32 0.0, %v4536
  %4538 = vmatmul.f32.gmra.mxu0 %v4448
  %v4539 = vpop.f32.mrf.mxu0
  %v4540 = vadd.f32 0.0, %v4539
  %4541 = vmatmul.f32.gmra.mxu0 %v4451
  %v4542 = vpop.f32.mrf.mxu0
  %v4543 = vadd.f32 0.0, %v4542
  %4544 = vmatmul.f32.gmra.mxu0 %v4454
  %v4545 = vpop.f32.mrf.mxu0
  %v4546 = vadd.f32 0.0, %v4545
  %4547 = vmatmul.f32.gmra.mxu0 %v4457
  %v4548 = vpop.f32.mrf.mxu0
  %v4549 = vadd.f32 0.0, %v4548
  %4550 = vmatmul.f32.gmra.mxu0 %v4460
  %v4551 = vpop.f32.mrf.mxu0
  %v4552 = vadd.f32 0.0, %v4551
  %4553 = vmatmul.f32.gmra.mxu0 %v4463
  %v4554 = vpop.f32.mrf.mxu0
  %v4555 = vadd.f32 0.0, %v4554
  %4556 = vmatmul.f32.gmra.mxu0 %v4466
  %v4557 = vpop.f32.mrf.mxu0
  %v4558 = vadd.f32 0.0, %v4557
  %4559 = vmatmul.f32.gmra.mxu0 %v4469
  %v4560 = vpop.f32.mrf.mxu0
  %v4561 = vadd.f32 0.0, %v4560
  %4562 = vmatmul.f32.gmra.mxu0 %v4472
  %v4563 = vpop.f32.mrf.mxu0
  %v4564 = vadd.f32 0.0, %v4563
  %4565 = vmatmul.f32.gmra.mxu0 %v4475
  %v4566 = vpop.f32.mrf.mxu0
  %v4567 = vadd.f32 0.0, %v4566
  %4568 = vmatmul.f32.gmra.mxu0 %v4478
  %v4569 = vpop.f32.mrf.mxu0
  %v4570 = vadd.f32 0.0, %v4569
  %4571 = vmatmul.f32.gmra.mxu0 %v4481
  %v4572 = vpop.f32.mrf.mxu0
  %v4573 = vadd.f32 0.0, %v4572
  %4574 = vdwg.mxu0
  %v4576 = vsel %vm32, %v4349, 0
  %v4579 = vsel %vm32, %v4350, 0
  %v4582 = vsel %vm32, %v4351, 0
  %v4585 = vsel %vm32, %v4352, 0
  %v4588 = vsel %vm32, %v4353, 0
  %v4591 = vsel %vm32, %v4354, 0
  %v4594 = vsel %vm32, %v4355, 0
  %v4597 = vsel %vm32, %v4356, 0
  %v4600 = vsel %vm32, %v4357, 0
  %v4603 = vsel %vm32, %v4358, 0
  %v4606 = vsel %vm32, %v4359, 0
  %v4609 = vsel %vm32, %v4360, 0
  %v4612 = vsel %vm32, %v4361, 0
  %v4615 = vsel %vm32, %v4362, 0
  %v4618 = vsel %vm32, %v4363, 0
  %v4621 = vsel %vm32, %v4364, 0
  %v4624 = vsel %vm32, %v4365, 0
  %v4627 = vsel %vm32, %v4366, 0
  %v4630 = vsel %vm32, %v4367, 0
  %v4633 = vsel %vm32, %v4368, 0
  %v4636 = vsel %vm32, %v4369, 0
  %v4639 = vsel %vm32, %v4370, 0
  %v4642 = vsel %vm32, %v4371, 0
  %v4645 = vsel %vm32, %v4372, 0
  %v4648 = vsel %vm32, %v4373, 0
  %4650 = vmatpush.msra.mxu0 0.0
  %4651 = vmatpush.msra.mxu0 0.0
  %4652 = vmatpush.msra.mxu0 0.0
  %4653 = vmatpush.msra.mxu0 0.0
  %4654 = vmatpush.msra.mxu0 0.0
  %4655 = vmatpush.msra.mxu0 0.0
  %4656 = vmatpush.msra.mxu0 0.0
  %4657 = vmatpush.msra.mxu0 0.0
  %4658 = vmatpush.msra.mxu0 0.0
  %4659 = vmatpush.msra.mxu0 0.0
  %4660 = vmatpush.msra.mxu0 0.0
  %4661 = vmatpush.msra.mxu0 0.0
  %4662 = vmatpush.msra.mxu0 %v4377
  %4663 = vmatpush.msra.mxu0 %v4376
  %4664 = vmatpush.msra.mxu0 %v4375
  %4665 = vmatpush.msra.mxu0 %v4374
  %4666 = vmatmul.f32.gmra.mxu0 %v4576
  %v4667 = vpop.f32.mrf.mxu0
  %v4668 = vadd.f32 %v4501, %v4667
  %4669 = vmatmul.f32.gmra.mxu0 %v4579
  %v4670 = vpop.f32.mrf.mxu0
  %v4671 = vadd.f32 %v4504, %v4670
  %4672 = vmatmul.f32.gmra.mxu0 %v4582
  %v4673 = vpop.f32.mrf.mxu0
  %v4674 = vadd.f32 %v4507, %v4673
  %4675 = vmatmul.f32.gmra.mxu0 %v4585
  %v4676 = vpop.f32.mrf.mxu0
  %v4677 = vadd.f32 %v4510, %v4676
  %4678 = vmatmul.f32.gmra.mxu0 %v4588
  %v4679 = vpop.f32.mrf.mxu0
  %v4680 = vadd.f32 %v4513, %v4679
  %4681 = vmatmul.f32.gmra.mxu0 %v4591
  %v4682 = vpop.f32.mrf.mxu0
  %v4683 = vadd.f32 %v4516, %v4682
  %4684 = vmatmul.f32.gmra.mxu0 %v4594
  %v4685 = vpop.f32.mrf.mxu0
  %v4686 = vadd.f32 %v4519, %v4685
  %4687 = vmatmul.f32.gmra.mxu0 %v4597
  %v4688 = vpop.f32.mrf.mxu0
  %v4689 = vadd.f32 %v4522, %v4688
  %4690 = vmatmul.f32.gmra.mxu0 %v4600
  %v4691 = vpop.f32.mrf.mxu0
  %v4692 = vadd.f32 %v4525, %v4691
  %4693 = vmatmul.f32.gmra.mxu0 %v4603
  %v4694 = vpop.f32.mrf.mxu0
  %v4695 = vadd.f32 %v4528, %v4694
  %4696 = vmatmul.f32.gmra.mxu0 %v4606
  %v4697 = vpop.f32.mrf.mxu0
  %v4698 = vadd.f32 %v4531, %v4697
  %4699 = vmatmul.f32.gmra.mxu0 %v4609
  %v4700 = vpop.f32.mrf.mxu0
  %v4701 = vadd.f32 %v4534, %v4700
  %4702 = vmatmul.f32.gmra.mxu0 %v4612
  %v4703 = vpop.f32.mrf.mxu0
  %v4704 = vadd.f32 %v4537, %v4703
  %4705 = vmatmul.f32.gmra.mxu0 %v4615
  %v4706 = vpop.f32.mrf.mxu0
  %v4707 = vadd.f32 %v4540, %v4706
  %4708 = vmatmul.f32.gmra.mxu0 %v4618
  %v4709 = vpop.f32.mrf.mxu0
  %v4710 = vadd.f32 %v4543, %v4709
  %4711 = vmatmul.f32.gmra.mxu0 %v4621
  %v4712 = vpop.f32.mrf.mxu0
  %v4713 = vadd.f32 %v4546, %v4712
  %4714 = vmatmul.f32.gmra.mxu0 %v4624
  %v4715 = vpop.f32.mrf.mxu0
  %v4716 = vadd.f32 %v4549, %v4715
  %4717 = vmatmul.f32.gmra.mxu0 %v4627
  %v4718 = vpop.f32.mrf.mxu0
  %v4719 = vadd.f32 %v4552, %v4718
  %4720 = vmatmul.f32.gmra.mxu0 %v4630
  %v4721 = vpop.f32.mrf.mxu0
  %v4722 = vadd.f32 %v4555, %v4721
  %4723 = vmatmul.f32.gmra.mxu0 %v4633
  %v4724 = vpop.f32.mrf.mxu0
  %v4725 = vadd.f32 %v4558, %v4724
  %4726 = vmatmul.f32.gmra.mxu0 %v4636
  %v4727 = vpop.f32.mrf.mxu0
  %v4728 = vadd.f32 %v4561, %v4727
  %4729 = vmatmul.f32.gmra.mxu0 %v4639
  %v4730 = vpop.f32.mrf.mxu0
  %v4731 = vadd.f32 %v4564, %v4730
  %4732 = vmatmul.f32.gmra.mxu0 %v4642
  %v4733 = vpop.f32.mrf.mxu0
  %v4734 = vadd.f32 %v4567, %v4733
  %4735 = vmatmul.f32.gmra.mxu0 %v4645
  %v4736 = vpop.f32.mrf.mxu0
  %v4737 = vadd.f32 %v4570, %v4736
  %4738 = vmatmul.f32.gmra.mxu0 %v4648
  %v4739 = vpop.f32.mrf.mxu0
  %v4740 = vadd.f32 %v4573, %v4739
  %4741 = vdwg.mxu0
  %v4742 = vld [vmem:[#allocation4 + $0x2] sm:$0xff]
  %v4743 = vld [vmem:[#allocation4 + $0xa] sm:$0xff]
  %v4744 = vld [vmem:[#allocation4 + $0x12] sm:$0xff]
  %v4745 = vld [vmem:[#allocation4 + $0x1a] sm:$0xff]
  %v4746 = vld [vmem:[#allocation4 + $0x22] sm:$0xff]
  %v4747 = vld [vmem:[#allocation4 + $0x2a] sm:$0xff]
  %v4748 = vld [vmem:[#allocation4 + $0x32] sm:$0xff]
  %v4749 = vld [vmem:[#allocation4 + $0x3a] sm:$0xff]
  %v4750 = vld [vmem:[#allocation4 + $0x42] sm:$0xff]
  %v4751 = vld [vmem:[#allocation4 + $0x4a] sm:$0xff]
  %v4752 = vld [vmem:[#allocation4 + $0x52] sm:$0xff]
  %v4753 = vld [vmem:[#allocation4 + $0x5a] sm:$0xff]
  %v4754 = vld [vmem:[#allocation4 + $0x62] sm:$0xff]
  %v4755 = vld [vmem:[#allocation4 + $0x6a] sm:$0xff]
  %v4756 = vld [vmem:[#allocation4 + $0x72] sm:$0xff]
  %v4757 = vld [vmem:[#allocation4 + $0x7a] sm:$0xff]
  %v4758 = vld [vmem:[#allocation4 + $0x82] sm:$0xff]
  %v4759 = vld [vmem:[#allocation4 + $0x8a] sm:$0xff]
  %v4760 = vld [vmem:[#allocation4 + $0x92] sm:$0xff]
  %v4761 = vld [vmem:[#allocation4 + $0x9a] sm:$0xff]
  %v4762 = vld [vmem:[#allocation4 + $0xa2] sm:$0xff]
  %v4763 = vld [vmem:[#allocation4 + $0xaa] sm:$0xff]
  %v4764 = vld [vmem:[#allocation4 + $0xb2] sm:$0xff]
  %v4765 = vld [vmem:[#allocation4 + $0xba] sm:$0xff]
  %v4766 = vld [vmem:[#allocation4 + $0xc2] sm:$0xff]
  %s4767 = scalar_lea.vmem %s7, 64
  %v4768 = vld [vmem:[%s4767] sm:$0xff]
  %v4769 = vld [vmem:[%s4767 + $0x8] sm:$0xff]
  %v4770 = vld [vmem:[%s4767 + $0x10] sm:$0xff]
  %v4771 = vld [vmem:[%s4767 + $0x18] sm:$0xff]
  %v4773 = vsel %vm32, %v4742, 0
  %v4776 = vsel %vm32, %v4743, 0
  %v4779 = vsel %vm32, %v4744, 0
  %v4782 = vsel %vm32, %v4745, 0
  %v4785 = vsel %vm32, %v4746, 0
  %v4788 = vsel %vm32, %v4747, 0
  %v4791 = vsel %vm32, %v4748, 0
  %v4794 = vsel %vm32, %v4749, 0
  %v4797 = vsel %vm32, %v4750, 0
  %v4800 = vsel %vm32, %v4751, 0
  %v4803 = vsel %vm32, %v4752, 0
  %v4806 = vsel %vm32, %v4753, 0
  %v4809 = vsel %vm32, %v4754, 0
  %v4812 = vsel %vm32, %v4755, 0
  %v4815 = vsel %vm32, %v4756, 0
  %v4818 = vsel %vm32, %v4757, 0
  %v4821 = vsel %vm32, %v4758, 0
  %v4824 = vsel %vm32, %v4759, 0
  %v4827 = vsel %vm32, %v4760, 0
  %v4830 = vsel %vm32, %v4761, 0
  %v4833 = vsel %vm32, %v4762, 0
  %v4836 = vsel %vm32, %v4763, 0
  %v4839 = vsel %vm32, %v4764, 0
  %v4842 = vsel %vm32, %v4765, 0
  %v4845 = vsel %vm32, %v4766, 0
  %4847 = vmatpush.msra.mxu0 0.0
  %4848 = vmatpush.msra.mxu0 0.0
  %4849 = vmatpush.msra.mxu0 0.0
  %4850 = vmatpush.msra.mxu0 0.0
  %4851 = vmatpush.msra.mxu0 0.0
  %4852 = vmatpush.msra.mxu0 0.0
  %4853 = vmatpush.msra.mxu0 0.0
  %4854 = vmatpush.msra.mxu0 0.0
  %4855 = vmatpush.msra.mxu0 0.0
  %4856 = vmatpush.msra.mxu0 0.0
  %4857 = vmatpush.msra.mxu0 0.0
  %4858 = vmatpush.msra.mxu0 0.0
  %4859 = vmatpush.msra.mxu0 %v4771
  %4860 = vmatpush.msra.mxu0 %v4770
  %4861 = vmatpush.msra.mxu0 %v4769
  %4862 = vmatpush.msra.mxu0 %v4768
  %4863 = vmatmul.f32.gmra.mxu0 %v4773
  %v4864 = vpop.f32.mrf.mxu0
  %v4865 = vadd.f32 0.0, %v4864
  %4866 = vmatmul.f32.gmra.mxu0 %v4776
  %v4867 = vpop.f32.mrf.mxu0
  %v4868 = vadd.f32 0.0, %v4867
  %4869 = vmatmul.f32.gmra.mxu0 %v4779
  %v4870 = vpop.f32.mrf.mxu0
  %v4871 = vadd.f32 0.0, %v4870
  %4872 = vmatmul.f32.gmra.mxu0 %v4782
  %v4873 = vpop.f32.mrf.mxu0
  %v4874 = vadd.f32 0.0, %v4873
  %4875 = vmatmul.f32.gmra.mxu0 %v4785
  %v4876 = vpop.f32.mrf.mxu0
  %v4877 = vadd.f32 0.0, %v4876
  %4878 = vmatmul.f32.gmra.mxu0 %v4788
  %v4879 = vpop.f32.mrf.mxu0
  %v4880 = vadd.f32 0.0, %v4879
  %4881 = vmatmul.f32.gmra.mxu0 %v4791
  %v4882 = vpop.f32.mrf.mxu0
  %v4883 = vadd.f32 0.0, %v4882
  %4884 = vmatmul.f32.gmra.mxu0 %v4794
  %v4885 = vpop.f32.mrf.mxu0
  %v4886 = vadd.f32 0.0, %v4885
  %4887 = vmatmul.f32.gmra.mxu0 %v4797
  %v4888 = vpop.f32.mrf.mxu0
  %v4889 = vadd.f32 0.0, %v4888
  %4890 = vmatmul.f32.gmra.mxu0 %v4800
  %v4891 = vpop.f32.mrf.mxu0
  %v4892 = vadd.f32 0.0, %v4891
  %4893 = vmatmul.f32.gmra.mxu0 %v4803
  %v4894 = vpop.f32.mrf.mxu0
  %v4895 = vadd.f32 0.0, %v4894
  %4896 = vmatmul.f32.gmra.mxu0 %v4806
  %v4897 = vpop.f32.mrf.mxu0
  %v4898 = vadd.f32 0.0, %v4897
  %4899 = vmatmul.f32.gmra.mxu0 %v4809
  %v4900 = vpop.f32.mrf.mxu0
  %v4901 = vadd.f32 0.0, %v4900
  %4902 = vmatmul.f32.gmra.mxu0 %v4812
  %v4903 = vpop.f32.mrf.mxu0
  %v4904 = vadd.f32 0.0, %v4903
  %4905 = vmatmul.f32.gmra.mxu0 %v4815
  %v4906 = vpop.f32.mrf.mxu0
  %v4907 = vadd.f32 0.0, %v4906
  %4908 = vmatmul.f32.gmra.mxu0 %v4818
  %v4909 = vpop.f32.mrf.mxu0
  %v4910 = vadd.f32 0.0, %v4909
  %4911 = vmatmul.f32.gmra.mxu0 %v4821
  %v4912 = vpop.f32.mrf.mxu0
  %v4913 = vadd.f32 0.0, %v4912
  %4914 = vmatmul.f32.gmra.mxu0 %v4824
  %v4915 = vpop.f32.mrf.mxu0
  %v4916 = vadd.f32 0.0, %v4915
  %4917 = vmatmul.f32.gmra.mxu0 %v4827
  %v4918 = vpop.f32.mrf.mxu0
  %v4919 = vadd.f32 0.0, %v4918
  %4920 = vmatmul.f32.gmra.mxu0 %v4830
  %v4921 = vpop.f32.mrf.mxu0
  %v4922 = vadd.f32 0.0, %v4921
  %4923 = vmatmul.f32.gmra.mxu0 %v4833
  %v4924 = vpop.f32.mrf.mxu0
  %v4925 = vadd.f32 0.0, %v4924
  %4926 = vmatmul.f32.gmra.mxu0 %v4836
  %v4927 = vpop.f32.mrf.mxu0
  %v4928 = vadd.f32 0.0, %v4927
  %4929 = vmatmul.f32.gmra.mxu0 %v4839
  %v4930 = vpop.f32.mrf.mxu0
  %v4931 = vadd.f32 0.0, %v4930
  %4932 = vmatmul.f32.gmra.mxu0 %v4842
  %v4933 = vpop.f32.mrf.mxu0
  %v4934 = vadd.f32 0.0, %v4933
  %4935 = vmatmul.f32.gmra.mxu0 %v4845
  %v4936 = vpop.f32.mrf.mxu0
  %v4937 = vadd.f32 0.0, %v4936
  %4938 = vdwg.mxu0
  %v4939 = vadd.f32 %v4668, %v4865
  %v4940 = vadd.f32 %v4671, %v4868
  %v4941 = vadd.f32 %v4674, %v4871
  %v4942 = vadd.f32 %v4677, %v4874
  %v4943 = vadd.f32 %v4680, %v4877
  %v4944 = vadd.f32 %v4683, %v4880
  %v4945 = vadd.f32 %v4686, %v4883
  %v4946 = vadd.f32 %v4689, %v4886
  %v4947 = vadd.f32 %v4692, %v4889
  %v4948 = vadd.f32 %v4695, %v4892
  %v4949 = vadd.f32 %v4698, %v4895
  %v4950 = vadd.f32 %v4701, %v4898
  %v4951 = vadd.f32 %v4704, %v4901
  %v4952 = vadd.f32 %v4707, %v4904
  %v4953 = vadd.f32 %v4710, %v4907
  %v4954 = vadd.f32 %v4713, %v4910
  %v4955 = vadd.f32 %v4716, %v4913
  %v4956 = vadd.f32 %v4719, %v4916
  %v4957 = vadd.f32 %v4722, %v4919
  %v4958 = vadd.f32 %v4725, %v4922
  %v4959 = vadd.f32 %v4728, %v4925
  %v4960 = vadd.f32 %v4731, %v4928
  %v4961 = vadd.f32 %v4734, %v4931
  %v4962 = vadd.f32 %v4737, %v4934
  %v4963 = vadd.f32 %v4740, %v4937
  %v4964 = vld [vmem:[#allocation4 + $0xa] sm:$0xff]
  %v4965 = vld [vmem:[#allocation4 + $0x12] sm:$0xff]
  %v4966 = vld [vmem:[#allocation4 + $0x1a] sm:$0xff]
  %v4967 = vld [vmem:[#allocation4 + $0x22] sm:$0xff]
  %v4968 = vld [vmem:[#allocation4 + $0x2a] sm:$0xff]
  %v4969 = vld [vmem:[#allocation4 + $0x32] sm:$0xff]
  %v4970 = vld [vmem:[#allocation4 + $0x3a] sm:$0xff]
  %v4971 = vld [vmem:[#allocation4 + $0x42] sm:$0xff]
  %v4972 = vld [vmem:[#allocation4 + $0x4a] sm:$0xff]
  %v4973 = vld [vmem:[#allocation4 + $0x52] sm:$0xff]
  %v4974 = vld [vmem:[#allocation4 + $0x5a] sm:$0xff]
  %v4975 = vld [vmem:[#allocation4 + $0x62] sm:$0xff]
  %v4976 = vld [vmem:[#allocation4 + $0x6a] sm:$0xff]
  %v4977 = vld [vmem:[#allocation4 + $0x72] sm:$0xff]
  %v4978 = vld [vmem:[#allocation4 + $0x7a] sm:$0xff]
  %v4979 = vld [vmem:[#allocation4 + $0x82] sm:$0xff]
  %v4980 = vld [vmem:[#allocation4 + $0x8a] sm:$0xff]
  %v4981 = vld [vmem:[#allocation4 + $0x92] sm:$0xff]
  %v4982 = vld [vmem:[#allocation4 + $0x9a] sm:$0xff]
  %v4983 = vld [vmem:[#allocation4 + $0xa2] sm:$0xff]
  %v4984 = vld [vmem:[#allocation4 + $0xaa] sm:$0xff]
  %v4985 = vld [vmem:[#allocation4 + $0xb2] sm:$0xff]
  %v4986 = vld [vmem:[#allocation4 + $0xba] sm:$0xff]
  %v4987 = vld [vmem:[#allocation4 + $0xc2] sm:$0xff]
  %v4988 = vld [vmem:[#allocation4 + $0xca] sm:$0xff]
  %s4989 = scalar_lea.vmem %s7, 96
  %v4990 = vld [vmem:[%s4989] sm:$0xff]
  %v4991 = vld [vmem:[%s4989 + $0x8] sm:$0xff]
  %v4992 = vld [vmem:[%s4989 + $0x10] sm:$0xff]
  %v4993 = vld [vmem:[%s4989 + $0x18] sm:$0xff]
  %v4995 = vsel %vm32, %v4964, 0
  %v4998 = vsel %vm32, %v4965, 0
  %v5001 = vsel %vm32, %v4966, 0
  %v5004 = vsel %vm32, %v4967, 0
  %v5007 = vsel %vm32, %v4968, 0
  %v5010 = vsel %vm32, %v4969, 0
  %v5013 = vsel %vm32, %v4970, 0
  %v5016 = vsel %vm32, %v4971, 0
  %v5019 = vsel %vm32, %v4972, 0
  %v5022 = vsel %vm32, %v4973, 0
  %v5025 = vsel %vm32, %v4974, 0
  %v5028 = vsel %vm32, %v4975, 0
  %v5031 = vsel %vm32, %v4976, 0
  %v5034 = vsel %vm32, %v4977, 0
  %v5037 = vsel %vm32, %v4978, 0
  %v5040 = vsel %vm32, %v4979, 0
  %v5043 = vsel %vm32, %v4980, 0
  %v5046 = vsel %vm32, %v4981, 0
  %v5049 = vsel %vm32, %v4982, 0
  %v5052 = vsel %vm32, %v4983, 0
  %v5055 = vsel %vm32, %v4984, 0
  %v5058 = vsel %vm32, %v4985, 0
  %v5061 = vsel %vm32, %v4986, 0
  %v5064 = vsel %vm32, %v4987, 0
  %v5067 = vsel %vm32, %v4988, 0
  %5069 = vmatpush.msra.mxu0 0.0
  %5070 = vmatpush.msra.mxu0 0.0
  %5071 = vmatpush.msra.mxu0 0.0
  %5072 = vmatpush.msra.mxu0 0.0
  %5073 = vmatpush.msra.mxu0 0.0
  %5074 = vmatpush.msra.mxu0 0.0
  %5075 = vmatpush.msra.mxu0 0.0
  %5076 = vmatpush.msra.mxu0 0.0
  %5077 = vmatpush.msra.mxu0 0.0
  %5078 = vmatpush.msra.mxu0 0.0
  %5079 = vmatpush.msra.mxu0 0.0
  %5080 = vmatpush.msra.mxu0 0.0
  %5081 = vmatpush.msra.mxu0 %v4993
  %5082 = vmatpush.msra.mxu0 %v4992
  %5083 = vmatpush.msra.mxu0 %v4991
  %5084 = vmatpush.msra.mxu0 %v4990
  %5085 = vmatmul.f32.gmra.mxu0 %v4995
  %v5086 = vpop.f32.mrf.mxu0
  %v5087 = vadd.f32 0.0, %v5086
  %5088 = vmatmul.f32.gmra.mxu0 %v4998
  %v5089 = vpop.f32.mrf.mxu0
  %v5090 = vadd.f32 0.0, %v5089
  %5091 = vmatmul.f32.gmra.mxu0 %v5001
  %v5092 = vpop.f32.mrf.mxu0
  %v5093 = vadd.f32 0.0, %v5092
  %5094 = vmatmul.f32.gmra.mxu0 %v5004
  %v5095 = vpop.f32.mrf.mxu0
  %v5096 = vadd.f32 0.0, %v5095
  %5097 = vmatmul.f32.gmra.mxu0 %v5007
  %v5098 = vpop.f32.mrf.mxu0
  %v5099 = vadd.f32 0.0, %v5098
  %5100 = vmatmul.f32.gmra.mxu0 %v5010
  %v5101 = vpop.f32.mrf.mxu0
  %v5102 = vadd.f32 0.0, %v5101
  %5103 = vmatmul.f32.gmra.mxu0 %v5013
  %v5104 = vpop.f32.mrf.mxu0
  %v5105 = vadd.f32 0.0, %v5104
  %5106 = vmatmul.f32.gmra.mxu0 %v5016
  %v5107 = vpop.f32.mrf.mxu0
  %v5108 = vadd.f32 0.0, %v5107
  %5109 = vmatmul.f32.gmra.mxu0 %v5019
  %v5110 = vpop.f32.mrf.mxu0
  %v5111 = vadd.f32 0.0, %v5110
  %5112 = vmatmul.f32.gmra.mxu0 %v5022
  %v5113 = vpop.f32.mrf.mxu0
  %v5114 = vadd.f32 0.0, %v5113
  %5115 = vmatmul.f32.gmra.mxu0 %v5025
  %v5116 = vpop.f32.mrf.mxu0
  %v5117 = vadd.f32 0.0, %v5116
  %5118 = vmatmul.f32.gmra.mxu0 %v5028
  %v5119 = vpop.f32.mrf.mxu0
  %v5120 = vadd.f32 0.0, %v5119
  %5121 = vmatmul.f32.gmra.mxu0 %v5031
  %v5122 = vpop.f32.mrf.mxu0
  %v5123 = vadd.f32 0.0, %v5122
  %5124 = vmatmul.f32.gmra.mxu0 %v5034
  %v5125 = vpop.f32.mrf.mxu0
  %v5126 = vadd.f32 0.0, %v5125
  %5127 = vmatmul.f32.gmra.mxu0 %v5037
  %v5128 = vpop.f32.mrf.mxu0
  %v5129 = vadd.f32 0.0, %v5128
  %5130 = vmatmul.f32.gmra.mxu0 %v5040
  %v5131 = vpop.f32.mrf.mxu0
  %v5132 = vadd.f32 0.0, %v5131
  %5133 = vmatmul.f32.gmra.mxu0 %v5043
  %v5134 = vpop.f32.mrf.mxu0
  %v5135 = vadd.f32 0.0, %v5134
  %5136 = vmatmul.f32.gmra.mxu0 %v5046
  %v5137 = vpop.f32.mrf.mxu0
  %v5138 = vadd.f32 0.0, %v5137
  %5139 = vmatmul.f32.gmra.mxu0 %v5049
  %v5140 = vpop.f32.mrf.mxu0
  %v5141 = vadd.f32 0.0, %v5140
  %5142 = vmatmul.f32.gmra.mxu0 %v5052
  %v5143 = vpop.f32.mrf.mxu0
  %v5144 = vadd.f32 0.0, %v5143
  %5145 = vmatmul.f32.gmra.mxu0 %v5055
  %v5146 = vpop.f32.mrf.mxu0
  %v5147 = vadd.f32 0.0, %v5146
  %5148 = vmatmul.f32.gmra.mxu0 %v5058
  %v5149 = vpop.f32.mrf.mxu0
  %v5150 = vadd.f32 0.0, %v5149
  %5151 = vmatmul.f32.gmra.mxu0 %v5061
  %v5152 = vpop.f32.mrf.mxu0
  %v5153 = vadd.f32 0.0, %v5152
  %5154 = vmatmul.f32.gmra.mxu0 %v5064
  %v5155 = vpop.f32.mrf.mxu0
  %v5156 = vadd.f32 0.0, %v5155
  %5157 = vmatmul.f32.gmra.mxu0 %v5067
  %v5158 = vpop.f32.mrf.mxu0
  %v5159 = vadd.f32 0.0, %v5158
  %5160 = vdwg.mxu0
  %v5161 = vadd.f32 %v4939, %v5087
  %v5162 = vadd.f32 %v4940, %v5090
  %v5163 = vadd.f32 %v4941, %v5093
  %v5164 = vadd.f32 %v4942, %v5096
  %v5165 = vadd.f32 %v4943, %v5099
  %v5166 = vadd.f32 %v4944, %v5102
  %v5167 = vadd.f32 %v4945, %v5105
  %v5168 = vadd.f32 %v4946, %v5108
  %v5169 = vadd.f32 %v4947, %v5111
  %v5170 = vadd.f32 %v4948, %v5114
  %v5171 = vadd.f32 %v4949, %v5117
  %v5172 = vadd.f32 %v4950, %v5120
  %v5173 = vadd.f32 %v4951, %v5123
  %v5174 = vadd.f32 %v4952, %v5126
  %v5175 = vadd.f32 %v4953, %v5129
  %v5176 = vadd.f32 %v4954, %v5132
  %v5177 = vadd.f32 %v4955, %v5135
  %v5178 = vadd.f32 %v4956, %v5138
  %v5179 = vadd.f32 %v4957, %v5141
  %v5180 = vadd.f32 %v4958, %v5144
  %v5181 = vadd.f32 %v4959, %v5147
  %v5182 = vadd.f32 %v4960, %v5150
  %v5183 = vadd.f32 %v4961, %v5153
  %v5184 = vadd.f32 %v4962, %v5156
  %v5185 = vadd.f32 %v4963, %v5159
  %v5186 = vld [vmem:[#allocation4 + $0xb] sm:$0xff]
  %v5187 = vld [vmem:[#allocation4 + $0x13] sm:$0xff]
  %v5188 = vld [vmem:[#allocation4 + $0x1b] sm:$0xff]
  %v5189 = vld [vmem:[#allocation4 + $0x23] sm:$0xff]
  %v5190 = vld [vmem:[#allocation4 + $0x2b] sm:$0xff]
  %v5191 = vld [vmem:[#allocation4 + $0x33] sm:$0xff]
  %v5192 = vld [vmem:[#allocation4 + $0x3b] sm:$0xff]
  %v5193 = vld [vmem:[#allocation4 + $0x43] sm:$0xff]
  %v5194 = vld [vmem:[#allocation4 + $0x4b] sm:$0xff]
  %v5195 = vld [vmem:[#allocation4 + $0x53] sm:$0xff]
  %v5196 = vld [vmem:[#allocation4 + $0x5b] sm:$0xff]
  %v5197 = vld [vmem:[#allocation4 + $0x63] sm:$0xff]
  %v5198 = vld [vmem:[#allocation4 + $0x6b] sm:$0xff]
  %v5199 = vld [vmem:[#allocation4 + $0x73] sm:$0xff]
  %v5200 = vld [vmem:[#allocation4 + $0x7b] sm:$0xff]
  %v5201 = vld [vmem:[#allocation4 + $0x83] sm:$0xff]
  %v5202 = vld [vmem:[#allocation4 + $0x8b] sm:$0xff]
  %v5203 = vld [vmem:[#allocation4 + $0x93] sm:$0xff]
  %v5204 = vld [vmem:[#allocation4 + $0x9b] sm:$0xff]
  %v5205 = vld [vmem:[#allocation4 + $0xa3] sm:$0xff]
  %v5206 = vld [vmem:[#allocation4 + $0xab] sm:$0xff]
  %v5207 = vld [vmem:[#allocation4 + $0xb3] sm:$0xff]
  %v5208 = vld [vmem:[#allocation4 + $0xbb] sm:$0xff]
  %v5209 = vld [vmem:[#allocation4 + $0xc3] sm:$0xff]
  %v5210 = vld [vmem:[#allocation4 + $0xcb] sm:$0xff]
  %s5211 = scalar_lea.vmem %s7, 128
  %v5212 = vld [vmem:[%s5211] sm:$0xff]
  %v5213 = vld [vmem:[%s5211 + $0x8] sm:$0xff]
  %v5214 = vld [vmem:[%s5211 + $0x10] sm:$0xff]
  %v5215 = vld [vmem:[%s5211 + $0x18] sm:$0xff]
  %v5217 = vsel %vm32, %v5186, 0
  %v5220 = vsel %vm32, %v5187, 0
  %v5223 = vsel %vm32, %v5188, 0
  %v5226 = vsel %vm32, %v5189, 0
  %v5229 = vsel %vm32, %v5190, 0
  %v5232 = vsel %vm32, %v5191, 0
  %v5235 = vsel %vm32, %v5192, 0
  %v5238 = vsel %vm32, %v5193, 0
  %v5241 = vsel %vm32, %v5194, 0
  %v5244 = vsel %vm32, %v5195, 0
  %v5247 = vsel %vm32, %v5196, 0
  %v5250 = vsel %vm32, %v5197, 0
  %v5253 = vsel %vm32, %v5198, 0
  %v5256 = vsel %vm32, %v5199, 0
  %v5259 = vsel %vm32, %v5200, 0
  %v5262 = vsel %vm32, %v5201, 0
  %v5265 = vsel %vm32, %v5202, 0
  %v5268 = vsel %vm32, %v5203, 0
  %v5271 = vsel %vm32, %v5204, 0
  %v5274 = vsel %vm32, %v5205, 0
  %v5277 = vsel %vm32, %v5206, 0
  %v5280 = vsel %vm32, %v5207, 0
  %v5283 = vsel %vm32, %v5208, 0
  %v5286 = vsel %vm32, %v5209, 0
  %v5289 = vsel %vm32, %v5210, 0
  %5291 = vmatpush.msra.mxu0 0.0
  %5292 = vmatpush.msra.mxu0 0.0
  %5293 = vmatpush.msra.mxu0 0.0
  %5294 = vmatpush.msra.mxu0 0.0
  %5295 = vmatpush.msra.mxu0 0.0
  %5296 = vmatpush.msra.mxu0 0.0
  %5297 = vmatpush.msra.mxu0 0.0
  %5298 = vmatpush.msra.mxu0 0.0
  %5299 = vmatpush.msra.mxu0 0.0
  %5300 = vmatpush.msra.mxu0 0.0
  %5301 = vmatpush.msra.mxu0 0.0
  %5302 = vmatpush.msra.mxu0 0.0
  %5303 = vmatpush.msra.mxu0 %v5215
  %5304 = vmatpush.msra.mxu0 %v5214
  %5305 = vmatpush.msra.mxu0 %v5213
  %5306 = vmatpush.msra.mxu0 %v5212
  %5307 = vmatmul.f32.gmra.mxu0 %v5217
  %v5308 = vpop.f32.mrf.mxu0
  %v5309 = vadd.f32 0.0, %v5308
  %5310 = vmatmul.f32.gmra.mxu0 %v5220
  %v5311 = vpop.f32.mrf.mxu0
  %v5312 = vadd.f32 0.0, %v5311
  %5313 = vmatmul.f32.gmra.mxu0 %v5223
  %v5314 = vpop.f32.mrf.mxu0
  %v5315 = vadd.f32 0.0, %v5314
  %5316 = vmatmul.f32.gmra.mxu0 %v5226
  %v5317 = vpop.f32.mrf.mxu0
  %v5318 = vadd.f32 0.0, %v5317
  %5319 = vmatmul.f32.gmra.mxu0 %v5229
  %v5320 = vpop.f32.mrf.mxu0
  %v5321 = vadd.f32 0.0, %v5320
  %5322 = vmatmul.f32.gmra.mxu0 %v5232
  %v5323 = vpop.f32.mrf.mxu0
  %v5324 = vadd.f32 0.0, %v5323
  %5325 = vmatmul.f32.gmra.mxu0 %v5235
  %v5326 = vpop.f32.mrf.mxu0
  %v5327 = vadd.f32 0.0, %v5326
  %5328 = vmatmul.f32.gmra.mxu0 %v5238
  %v5329 = vpop.f32.mrf.mxu0
  %v5330 = vadd.f32 0.0, %v5329
  %5331 = vmatmul.f32.gmra.mxu0 %v5241
  %v5332 = vpop.f32.mrf.mxu0
  %v5333 = vadd.f32 0.0, %v5332
  %5334 = vmatmul.f32.gmra.mxu0 %v5244
  %v5335 = vpop.f32.mrf.mxu0
  %v5336 = vadd.f32 0.0, %v5335
  %5337 = vmatmul.f32.gmra.mxu0 %v5247
  %v5338 = vpop.f32.mrf.mxu0
  %v5339 = vadd.f32 0.0, %v5338
  %5340 = vmatmul.f32.gmra.mxu0 %v5250
  %v5341 = vpop.f32.mrf.mxu0
  %v5342 = vadd.f32 0.0, %v5341
  %5343 = vmatmul.f32.gmra.mxu0 %v5253
  %v5344 = vpop.f32.mrf.mxu0
  %v5345 = vadd.f32 0.0, %v5344
  %5346 = vmatmul.f32.gmra.mxu0 %v5256
  %v5347 = vpop.f32.mrf.mxu0
  %v5348 = vadd.f32 0.0, %v5347
  %5349 = vmatmul.f32.gmra.mxu0 %v5259
  %v5350 = vpop.f32.mrf.mxu0
  %v5351 = vadd.f32 0.0, %v5350
  %5352 = vmatmul.f32.gmra.mxu0 %v5262
  %v5353 = vpop.f32.mrf.mxu0
  %v5354 = vadd.f32 0.0, %v5353
  %5355 = vmatmul.f32.gmra.mxu0 %v5265
  %v5356 = vpop.f32.mrf.mxu0
  %v5357 = vadd.f32 0.0, %v5356
  %5358 = vmatmul.f32.gmra.mxu0 %v5268
  %v5359 = vpop.f32.mrf.mxu0
  %v5360 = vadd.f32 0.0, %v5359
  %5361 = vmatmul.f32.gmra.mxu0 %v5271
  %v5362 = vpop.f32.mrf.mxu0
  %v5363 = vadd.f32 0.0, %v5362
  %5364 = vmatmul.f32.gmra.mxu0 %v5274
  %v5365 = vpop.f32.mrf.mxu0
  %v5366 = vadd.f32 0.0, %v5365
  %5367 = vmatmul.f32.gmra.mxu0 %v5277
  %v5368 = vpop.f32.mrf.mxu0
  %v5369 = vadd.f32 0.0, %v5368
  %5370 = vmatmul.f32.gmra.mxu0 %v5280
  %v5371 = vpop.f32.mrf.mxu0
  %v5372 = vadd.f32 0.0, %v5371
  %5373 = vmatmul.f32.gmra.mxu0 %v5283
  %v5374 = vpop.f32.mrf.mxu0
  %v5375 = vadd.f32 0.0, %v5374
  %5376 = vmatmul.f32.gmra.mxu0 %v5286
  %v5377 = vpop.f32.mrf.mxu0
  %v5378 = vadd.f32 0.0, %v5377
  %5379 = vmatmul.f32.gmra.mxu0 %v5289
  %v5380 = vpop.f32.mrf.mxu0
  %v5381 = vadd.f32 0.0, %v5380
  %5382 = vdwg.mxu0
  %v5383 = vadd.f32 %v5161, %v5309
  %v5384 = vadd.f32 %v5162, %v5312
  %v5385 = vadd.f32 %v5163, %v5315
  %v5386 = vadd.f32 %v5164, %v5318
  %v5387 = vadd.f32 %v5165, %v5321
  %v5388 = vadd.f32 %v5166, %v5324
  %v5389 = vadd.f32 %v5167, %v5327
  %v5390 = vadd.f32 %v5168, %v5330
  %v5391 = vadd.f32 %v5169, %v5333
  %v5392 = vadd.f32 %v5170, %v5336
  %v5393 = vadd.f32 %v5171, %v5339
  %v5394 = vadd.f32 %v5172, %v5342
  %v5395 = vadd.f32 %v5173, %v5345
  %v5396 = vadd.f32 %v5174, %v5348
  %v5397 = vadd.f32 %v5175, %v5351
  %v5398 = vadd.f32 %v5176, %v5354
  %v5399 = vadd.f32 %v5177, %v5357
  %v5400 = vadd.f32 %v5178, %v5360
  %v5401 = vadd.f32 %v5179, %v5363
  %v5402 = vadd.f32 %v5180, %v5366
  %v5403 = vadd.f32 %v5181, %v5369
  %v5404 = vadd.f32 %v5182, %v5372
  %v5405 = vadd.f32 %v5183, %v5375
  %v5406 = vadd.f32 %v5184, %v5378
  %v5407 = vadd.f32 %v5185, %v5381
  %v5408 = vld [vmem:[#allocation4 + $0xc] sm:$0xff]
  %v5409 = vld [vmem:[#allocation4 + $0x14] sm:$0xff]
  %v5410 = vld [vmem:[#allocation4 + $0x1c] sm:$0xff]
  %v5411 = vld [vmem:[#allocation4 + $0x24] sm:$0xff]
  %v5412 = vld [vmem:[#allocation4 + $0x2c] sm:$0xff]
  %v5413 = vld [vmem:[#allocation4 + $0x34] sm:$0xff]
  %v5414 = vld [vmem:[#allocation4 + $0x3c] sm:$0xff]
  %v5415 = vld [vmem:[#allocation4 + $0x44] sm:$0xff]
  %v5416 = vld [vmem:[#allocation4 + $0x4c] sm:$0xff]
  %v5417 = vld [vmem:[#allocation4 + $0x54] sm:$0xff]
  %v5418 = vld [vmem:[#allocation4 + $0x5c] sm:$0xff]
  %v5419 = vld [vmem:[#allocation4 + $0x64] sm:$0xff]
  %v5420 = vld [vmem:[#allocation4 + $0x6c] sm:$0xff]
  %v5421 = vld [vmem:[#allocation4 + $0x74] sm:$0xff]
  %v5422 = vld [vmem:[#allocation4 + $0x7c] sm:$0xff]
  %v5423 = vld [vmem:[#allocation4 + $0x84] sm:$0xff]
  %v5424 = vld [vmem:[#allocation4 + $0x8c] sm:$0xff]
  %v5425 = vld [vmem:[#allocation4 + $0x94] sm:$0xff]
  %v5426 = vld [vmem:[#allocation4 + $0x9c] sm:$0xff]
  %v5427 = vld [vmem:[#allocation4 + $0xa4] sm:$0xff]
  %v5428 = vld [vmem:[#allocation4 + $0xac] sm:$0xff]
  %v5429 = vld [vmem:[#allocation4 + $0xb4] sm:$0xff]
  %v5430 = vld [vmem:[#allocation4 + $0xbc] sm:$0xff]
  %v5431 = vld [vmem:[#allocation4 + $0xc4] sm:$0xff]
  %v5432 = vld [vmem:[#allocation4 + $0xcc] sm:$0xff]
  %s5433 = scalar_lea.vmem %s7, 160
  %v5434 = vld [vmem:[%s5433] sm:$0xff]
  %v5435 = vld [vmem:[%s5433 + $0x8] sm:$0xff]
  %v5436 = vld [vmem:[%s5433 + $0x10] sm:$0xff]
  %v5437 = vld [vmem:[%s5433 + $0x18] sm:$0xff]
  %v5439 = vsel %vm32, %v5408, 0
  %v5442 = vsel %vm32, %v5409, 0
  %v5445 = vsel %vm32, %v5410, 0
  %v5448 = vsel %vm32, %v5411, 0
  %v5451 = vsel %vm32, %v5412, 0
  %v5454 = vsel %vm32, %v5413, 0
  %v5457 = vsel %vm32, %v5414, 0
  %v5460 = vsel %vm32, %v5415, 0
  %v5463 = vsel %vm32, %v5416, 0
  %v5466 = vsel %vm32, %v5417, 0
  %v5469 = vsel %vm32, %v5418, 0
  %v5472 = vsel %vm32, %v5419, 0
  %v5475 = vsel %vm32, %v5420, 0
  %v5478 = vsel %vm32, %v5421, 0
  %v5481 = vsel %vm32, %v5422, 0
  %v5484 = vsel %vm32, %v5423, 0
  %v5487 = vsel %vm32, %v5424, 0
  %v5490 = vsel %vm32, %v5425, 0
  %v5493 = vsel %vm32, %v5426, 0
  %v5496 = vsel %vm32, %v5427, 0
  %v5499 = vsel %vm32, %v5428, 0
  %v5502 = vsel %vm32, %v5429, 0
  %v5505 = vsel %vm32, %v5430, 0
  %v5508 = vsel %vm32, %v5431, 0
  %v5511 = vsel %vm32, %v5432, 0
  %5513 = vmatpush.msra.mxu0 0.0
  %5514 = vmatpush.msra.mxu0 0.0
  %5515 = vmatpush.msra.mxu0 0.0
  %5516 = vmatpush.msra.mxu0 0.0
  %5517 = vmatpush.msra.mxu0 0.0
  %5518 = vmatpush.msra.mxu0 0.0
  %5519 = vmatpush.msra.mxu0 0.0
  %5520 = vmatpush.msra.mxu0 0.0
  %5521 = vmatpush.msra.mxu0 0.0
  %5522 = vmatpush.msra.mxu0 0.0
  %5523 = vmatpush.msra.mxu0 0.0
  %5524 = vmatpush.msra.mxu0 0.0
  %5525 = vmatpush.msra.mxu0 %v5437
  %5526 = vmatpush.msra.mxu0 %v5436
  %5527 = vmatpush.msra.mxu0 %v5435
  %5528 = vmatpush.msra.mxu0 %v5434
  %5529 = vmatmul.f32.gmra.mxu0 %v5439
  %v5530 = vpop.f32.mrf.mxu0
  %v5531 = vadd.f32 0.0, %v5530
  %5532 = vmatmul.f32.gmra.mxu0 %v5442
  %v5533 = vpop.f32.mrf.mxu0
  %v5534 = vadd.f32 0.0, %v5533
  %5535 = vmatmul.f32.gmra.mxu0 %v5445
  %v5536 = vpop.f32.mrf.mxu0
  %v5537 = vadd.f32 0.0, %v5536
  %5538 = vmatmul.f32.gmra.mxu0 %v5448
  %v5539 = vpop.f32.mrf.mxu0
  %v5540 = vadd.f32 0.0, %v5539
  %5541 = vmatmul.f32.gmra.mxu0 %v5451
  %v5542 = vpop.f32.mrf.mxu0
  %v5543 = vadd.f32 0.0, %v5542
  %5544 = vmatmul.f32.gmra.mxu0 %v5454
  %v5545 = vpop.f32.mrf.mxu0
  %v5546 = vadd.f32 0.0, %v5545
  %5547 = vmatmul.f32.gmra.mxu0 %v5457
  %v5548 = vpop.f32.mrf.mxu0
  %v5549 = vadd.f32 0.0, %v5548
  %5550 = vmatmul.f32.gmra.mxu0 %v5460
  %v5551 = vpop.f32.mrf.mxu0
  %v5552 = vadd.f32 0.0, %v5551
  %5553 = vmatmul.f32.gmra.mxu0 %v5463
  %v5554 = vpop.f32.mrf.mxu0
  %v5555 = vadd.f32 0.0, %v5554
  %5556 = vmatmul.f32.gmra.mxu0 %v5466
  %v5557 = vpop.f32.mrf.mxu0
  %v5558 = vadd.f32 0.0, %v5557
  %5559 = vmatmul.f32.gmra.mxu0 %v5469
  %v5560 = vpop.f32.mrf.mxu0
  %v5561 = vadd.f32 0.0, %v5560
  %5562 = vmatmul.f32.gmra.mxu0 %v5472
  %v5563 = vpop.f32.mrf.mxu0
  %v5564 = vadd.f32 0.0, %v5563
  %5565 = vmatmul.f32.gmra.mxu0 %v5475
  %v5566 = vpop.f32.mrf.mxu0
  %v5567 = vadd.f32 0.0, %v5566
  %5568 = vmatmul.f32.gmra.mxu0 %v5478
  %v5569 = vpop.f32.mrf.mxu0
  %v5570 = vadd.f32 0.0, %v5569
  %5571 = vmatmul.f32.gmra.mxu0 %v5481
  %v5572 = vpop.f32.mrf.mxu0
  %v5573 = vadd.f32 0.0, %v5572
  %5574 = vmatmul.f32.gmra.mxu0 %v5484
  %v5575 = vpop.f32.mrf.mxu0
  %v5576 = vadd.f32 0.0, %v5575
  %5577 = vmatmul.f32.gmra.mxu0 %v5487
  %v5578 = vpop.f32.mrf.mxu0
  %v5579 = vadd.f32 0.0, %v5578
  %5580 = vmatmul.f32.gmra.mxu0 %v5490
  %v5581 = vpop.f32.mrf.mxu0
  %v5582 = vadd.f32 0.0, %v5581
  %5583 = vmatmul.f32.gmra.mxu0 %v5493
  %v5584 = vpop.f32.mrf.mxu0
  %v5585 = vadd.f32 0.0, %v5584
  %5586 = vmatmul.f32.gmra.mxu0 %v5496
  %v5587 = vpop.f32.mrf.mxu0
  %v5588 = vadd.f32 0.0, %v5587
  %5589 = vmatmul.f32.gmra.mxu0 %v5499
  %v5590 = vpop.f32.mrf.mxu0
  %v5591 = vadd.f32 0.0, %v5590
  %5592 = vmatmul.f32.gmra.mxu0 %v5502
  %v5593 = vpop.f32.mrf.mxu0
  %v5594 = vadd.f32 0.0, %v5593
  %5595 = vmatmul.f32.gmra.mxu0 %v5505
  %v5596 = vpop.f32.mrf.mxu0
  %v5597 = vadd.f32 0.0, %v5596
  %5598 = vmatmul.f32.gmra.mxu0 %v5508
  %v5599 = vpop.f32.mrf.mxu0
  %v5600 = vadd.f32 0.0, %v5599
  %5601 = vmatmul.f32.gmra.mxu0 %v5511
  %v5602 = vpop.f32.mrf.mxu0
  %v5603 = vadd.f32 0.0, %v5602
  %5604 = vdwg.mxu0
  %v5605 = vadd.f32 %v5383, %v5531
  %v5606 = vadd.f32 %v5384, %v5534
  %v5607 = vadd.f32 %v5385, %v5537
  %v5608 = vadd.f32 %v5386, %v5540
  %v5609 = vadd.f32 %v5387, %v5543
  %v5610 = vadd.f32 %v5388, %v5546
  %v5611 = vadd.f32 %v5389, %v5549
  %v5612 = vadd.f32 %v5390, %v5552
  %v5613 = vadd.f32 %v5391, %v5555
  %v5614 = vadd.f32 %v5392, %v5558
  %v5615 = vadd.f32 %v5393, %v5561
  %v5616 = vadd.f32 %v5394, %v5564
  %v5617 = vadd.f32 %v5395, %v5567
  %v5618 = vadd.f32 %v5396, %v5570
  %v5619 = vadd.f32 %v5397, %v5573
  %v5620 = vadd.f32 %v5398, %v5576
  %v5621 = vadd.f32 %v5399, %v5579
  %v5622 = vadd.f32 %v5400, %v5582
  %v5623 = vadd.f32 %v5401, %v5585
  %v5624 = vadd.f32 %v5402, %v5588
  %v5625 = vadd.f32 %v5403, %v5591
  %v5626 = vadd.f32 %v5404, %v5594
  %v5627 = vadd.f32 %v5405, %v5597
  %v5628 = vadd.f32 %v5406, %v5600
  %v5629 = vadd.f32 %v5407, %v5603
  %v5630 = vld [vmem:[#allocation4 + $0x14] sm:$0xff]
  %v5631 = vld [vmem:[#allocation4 + $0x1c] sm:$0xff]
  %v5632 = vld [vmem:[#allocation4 + $0x24] sm:$0xff]
  %v5633 = vld [vmem:[#allocation4 + $0x2c] sm:$0xff]
  %v5634 = vld [vmem:[#allocation4 + $0x34] sm:$0xff]
  %v5635 = vld [vmem:[#allocation4 + $0x3c] sm:$0xff]
  %v5636 = vld [vmem:[#allocation4 + $0x44] sm:$0xff]
  %v5637 = vld [vmem:[#allocation4 + $0x4c] sm:$0xff]
  %v5638 = vld [vmem:[#allocation4 + $0x54] sm:$0xff]
  %v5639 = vld [vmem:[#allocation4 + $0x5c] sm:$0xff]
  %v5640 = vld [vmem:[#allocation4 + $0x64] sm:$0xff]
  %v5641 = vld [vmem:[#allocation4 + $0x6c] sm:$0xff]
  %v5642 = vld [vmem:[#allocation4 + $0x74] sm:$0xff]
  %v5643 = vld [vmem:[#allocation4 + $0x7c] sm:$0xff]
  %v5644 = vld [vmem:[#allocation4 + $0x84] sm:$0xff]
  %v5645 = vld [vmem:[#allocation4 + $0x8c] sm:$0xff]
  %v5646 = vld [vmem:[#allocation4 + $0x94] sm:$0xff]
  %v5647 = vld [vmem:[#allocation4 + $0x9c] sm:$0xff]
  %v5648 = vld [vmem:[#allocation4 + $0xa4] sm:$0xff]
  %v5649 = vld [vmem:[#allocation4 + $0xac] sm:$0xff]
  %v5650 = vld [vmem:[#allocation4 + $0xb4] sm:$0xff]
  %v5651 = vld [vmem:[#allocation4 + $0xbc] sm:$0xff]
  %v5652 = vld [vmem:[#allocation4 + $0xc4] sm:$0xff]
  %v5653 = vld [vmem:[#allocation4 + $0xcc] sm:$0xff]
  %v5654 = vld [vmem:[#allocation4 + $0xd4] sm:$0xff]
  %s5655 = scalar_lea.vmem %s7, 192
  %v5656 = vld [vmem:[%s5655] sm:$0xff]
  %v5657 = vld [vmem:[%s5655 + $0x8] sm:$0xff]
  %v5658 = vld [vmem:[%s5655 + $0x10] sm:$0xff]
  %v5659 = vld [vmem:[%s5655 + $0x18] sm:$0xff]
  %v5661 = vsel %vm32, %v5630, 0
  %v5664 = vsel %vm32, %v5631, 0
  %v5667 = vsel %vm32, %v5632, 0
  %v5670 = vsel %vm32, %v5633, 0
  %v5673 = vsel %vm32, %v5634, 0
  %v5676 = vsel %vm32, %v5635, 0
  %v5679 = vsel %vm32, %v5636, 0
  %v5682 = vsel %vm32, %v5637, 0
  %v5685 = vsel %vm32, %v5638, 0
  %v5688 = vsel %vm32, %v5639, 0
  %v5691 = vsel %vm32, %v5640, 0
  %v5694 = vsel %vm32, %v5641, 0
  %v5697 = vsel %vm32, %v5642, 0
  %v5700 = vsel %vm32, %v5643, 0
  %v5703 = vsel %vm32, %v5644, 0
  %v5706 = vsel %vm32, %v5645, 0
  %v5709 = vsel %vm32, %v5646, 0
  %v5712 = vsel %vm32, %v5647, 0
  %v5715 = vsel %vm32, %v5648, 0
  %v5718 = vsel %vm32, %v5649, 0
  %v5721 = vsel %vm32, %v5650, 0
  %v5724 = vsel %vm32, %v5651, 0
  %v5727 = vsel %vm32, %v5652, 0
  %v5730 = vsel %vm32, %v5653, 0
  %v5733 = vsel %vm32, %v5654, 0
  %5735 = vmatpush.msra.mxu0 0.0
  %5736 = vmatpush.msra.mxu0 0.0
  %5737 = vmatpush.msra.mxu0 0.0
  %5738 = vmatpush.msra.mxu0 0.0
  %5739 = vmatpush.msra.mxu0 0.0
  %5740 = vmatpush.msra.mxu0 0.0
  %5741 = vmatpush.msra.mxu0 0.0
  %5742 = vmatpush.msra.mxu0 0.0
  %5743 = vmatpush.msra.mxu0 0.0
  %5744 = vmatpush.msra.mxu0 0.0
  %5745 = vmatpush.msra.mxu0 0.0
  %5746 = vmatpush.msra.mxu0 0.0
  %5747 = vmatpush.msra.mxu0 %v5659
  %5748 = vmatpush.msra.mxu0 %v5658
  %5749 = vmatpush.msra.mxu0 %v5657
  %5750 = vmatpush.msra.mxu0 %v5656
  %5751 = vmatmul.f32.gmra.mxu0 %v5661
  %v5752 = vpop.f32.mrf.mxu0
  %v5753 = vadd.f32 0.0, %v5752
  %5754 = vmatmul.f32.gmra.mxu0 %v5664
  %v5755 = vpop.f32.mrf.mxu0
  %v5756 = vadd.f32 0.0, %v5755
  %5757 = vmatmul.f32.gmra.mxu0 %v5667
  %v5758 = vpop.f32.mrf.mxu0
  %v5759 = vadd.f32 0.0, %v5758
  %5760 = vmatmul.f32.gmra.mxu0 %v5670
  %v5761 = vpop.f32.mrf.mxu0
  %v5762 = vadd.f32 0.0, %v5761
  %5763 = vmatmul.f32.gmra.mxu0 %v5673
  %v5764 = vpop.f32.mrf.mxu0
  %v5765 = vadd.f32 0.0, %v5764
  %5766 = vmatmul.f32.gmra.mxu0 %v5676
  %v5767 = vpop.f32.mrf.mxu0
  %v5768 = vadd.f32 0.0, %v5767
  %5769 = vmatmul.f32.gmra.mxu0 %v5679
  %v5770 = vpop.f32.mrf.mxu0
  %v5771 = vadd.f32 0.0, %v5770
  %5772 = vmatmul.f32.gmra.mxu0 %v5682
  %v5773 = vpop.f32.mrf.mxu0
  %v5774 = vadd.f32 0.0, %v5773
  %5775 = vmatmul.f32.gmra.mxu0 %v5685
  %v5776 = vpop.f32.mrf.mxu0
  %v5777 = vadd.f32 0.0, %v5776
  %5778 = vmatmul.f32.gmra.mxu0 %v5688
  %v5779 = vpop.f32.mrf.mxu0
  %v5780 = vadd.f32 0.0, %v5779
  %5781 = vmatmul.f32.gmra.mxu0 %v5691
  %v5782 = vpop.f32.mrf.mxu0
  %v5783 = vadd.f32 0.0, %v5782
  %5784 = vmatmul.f32.gmra.mxu0 %v5694
  %v5785 = vpop.f32.mrf.mxu0
  %v5786 = vadd.f32 0.0, %v5785
  %5787 = vmatmul.f32.gmra.mxu0 %v5697
  %v5788 = vpop.f32.mrf.mxu0
  %v5789 = vadd.f32 0.0, %v5788
  %5790 = vmatmul.f32.gmra.mxu0 %v5700
  %v5791 = vpop.f32.mrf.mxu0
  %v5792 = vadd.f32 0.0, %v5791
  %5793 = vmatmul.f32.gmra.mxu0 %v5703
  %v5794 = vpop.f32.mrf.mxu0
  %v5795 = vadd.f32 0.0, %v5794
  %5796 = vmatmul.f32.gmra.mxu0 %v5706
  %v5797 = vpop.f32.mrf.mxu0
  %v5798 = vadd.f32 0.0, %v5797
  %5799 = vmatmul.f32.gmra.mxu0 %v5709
  %v5800 = vpop.f32.mrf.mxu0
  %v5801 = vadd.f32 0.0, %v5800
  %5802 = vmatmul.f32.gmra.mxu0 %v5712
  %v5803 = vpop.f32.mrf.mxu0
  %v5804 = vadd.f32 0.0, %v5803
  %5805 = vmatmul.f32.gmra.mxu0 %v5715
  %v5806 = vpop.f32.mrf.mxu0
  %v5807 = vadd.f32 0.0, %v5806
  %5808 = vmatmul.f32.gmra.mxu0 %v5718
  %v5809 = vpop.f32.mrf.mxu0
  %v5810 = vadd.f32 0.0, %v5809
  %5811 = vmatmul.f32.gmra.mxu0 %v5721
  %v5812 = vpop.f32.mrf.mxu0
  %v5813 = vadd.f32 0.0, %v5812
  %5814 = vmatmul.f32.gmra.mxu0 %v5724
  %v5815 = vpop.f32.mrf.mxu0
  %v5816 = vadd.f32 0.0, %v5815
  %5817 = vmatmul.f32.gmra.mxu0 %v5727
  %v5818 = vpop.f32.mrf.mxu0
  %v5819 = vadd.f32 0.0, %v5818
  %5820 = vmatmul.f32.gmra.mxu0 %v5730
  %v5821 = vpop.f32.mrf.mxu0
  %v5822 = vadd.f32 0.0, %v5821
  %5823 = vmatmul.f32.gmra.mxu0 %v5733
  %v5824 = vpop.f32.mrf.mxu0
  %v5825 = vadd.f32 0.0, %v5824
  %5826 = vdwg.mxu0
  %v5827 = vadd.f32 %v5605, %v5753
  %v5828 = vadd.f32 %v5606, %v5756
  %v5829 = vadd.f32 %v5607, %v5759
  %v5830 = vadd.f32 %v5608, %v5762
  %v5831 = vadd.f32 %v5609, %v5765
  %v5832 = vadd.f32 %v5610, %v5768
  %v5833 = vadd.f32 %v5611, %v5771
  %v5834 = vadd.f32 %v5612, %v5774
  %v5835 = vadd.f32 %v5613, %v5777
  %v5836 = vadd.f32 %v5614, %v5780
  %v5837 = vadd.f32 %v5615, %v5783
  %v5838 = vadd.f32 %v5616, %v5786
  %v5839 = vadd.f32 %v5617, %v5789
  %v5840 = vadd.f32 %v5618, %v5792
  %v5841 = vadd.f32 %v5619, %v5795
  %v5842 = vadd.f32 %v5620, %v5798
  %v5843 = vadd.f32 %v5621, %v5801
  %v5844 = vadd.f32 %v5622, %v5804
  %v5845 = vadd.f32 %v5623, %v5807
  %v5846 = vadd.f32 %v5624, %v5810
  %v5847 = vadd.f32 %v5625, %v5813
  %v5848 = vadd.f32 %v5626, %v5816
  %v5849 = vadd.f32 %v5627, %v5819
  %v5850 = vadd.f32 %v5628, %v5822
  %v5851 = vadd.f32 %v5629, %v5825
  %v5852 = vld [vmem:[#allocation4 + $0x15] sm:$0xff]
  %v5853 = vld [vmem:[#allocation4 + $0x1d] sm:$0xff]
  %v5854 = vld [vmem:[#allocation4 + $0x25] sm:$0xff]
  %v5855 = vld [vmem:[#allocation4 + $0x2d] sm:$0xff]
  %v5856 = vld [vmem:[#allocation4 + $0x35] sm:$0xff]
  %v5857 = vld [vmem:[#allocation4 + $0x3d] sm:$0xff]
  %v5858 = vld [vmem:[#allocation4 + $0x45] sm:$0xff]
  %v5859 = vld [vmem:[#allocation4 + $0x4d] sm:$0xff]
  %v5860 = vld [vmem:[#allocation4 + $0x55] sm:$0xff]
  %v5861 = vld [vmem:[#allocation4 + $0x5d] sm:$0xff]
  %v5862 = vld [vmem:[#allocation4 + $0x65] sm:$0xff]
  %v5863 = vld [vmem:[#allocation4 + $0x6d] sm:$0xff]
  %v5864 = vld [vmem:[#allocation4 + $0x75] sm:$0xff]
  %v5865 = vld [vmem:[#allocation4 + $0x7d] sm:$0xff]
  %v5866 = vld [vmem:[#allocation4 + $0x85] sm:$0xff]
  %v5867 = vld [vmem:[#allocation4 + $0x8d] sm:$0xff]
  %v5868 = vld [vmem:[#allocation4 + $0x95] sm:$0xff]
  %v5869 = vld [vmem:[#allocation4 + $0x9d] sm:$0xff]
  %v5870 = vld [vmem:[#allocation4 + $0xa5] sm:$0xff]
  %v5871 = vld [vmem:[#allocation4 + $0xad] sm:$0xff]
  %v5872 = vld [vmem:[#allocation4 + $0xb5] sm:$0xff]
  %v5873 = vld [vmem:[#allocation4 + $0xbd] sm:$0xff]
  %v5874 = vld [vmem:[#allocation4 + $0xc5] sm:$0xff]
  %v5875 = vld [vmem:[#allocation4 + $0xcd] sm:$0xff]
  %v5876 = vld [vmem:[#allocation4 + $0xd5] sm:$0xff]
  %s5877 = scalar_lea.vmem %s7, 224
  %v5878 = vld [vmem:[%s5877] sm:$0xff]
  %v5879 = vld [vmem:[%s5877 + $0x8] sm:$0xff]
  %v5880 = vld [vmem:[%s5877 + $0x10] sm:$0xff]
  %v5881 = vld [vmem:[%s5877 + $0x18] sm:$0xff]
  %v5883 = vsel %vm32, %v5852, 0
  %v5886 = vsel %vm32, %v5853, 0
  %v5889 = vsel %vm32, %v5854, 0
  %v5892 = vsel %vm32, %v5855, 0
  %v5895 = vsel %vm32, %v5856, 0
  %v5898 = vsel %vm32, %v5857, 0
  %v5901 = vsel %vm32, %v5858, 0
  %v5904 = vsel %vm32, %v5859, 0
  %v5907 = vsel %vm32, %v5860, 0
  %v5910 = vsel %vm32, %v5861, 0
  %v5913 = vsel %vm32, %v5862, 0
  %v5916 = vsel %vm32, %v5863, 0
  %v5919 = vsel %vm32, %v5864, 0
  %v5922 = vsel %vm32, %v5865, 0
  %v5925 = vsel %vm32, %v5866, 0
  %v5928 = vsel %vm32, %v5867, 0
  %v5931 = vsel %vm32, %v5868, 0
  %v5934 = vsel %vm32, %v5869, 0
  %v5937 = vsel %vm32, %v5870, 0
  %v5940 = vsel %vm32, %v5871, 0
  %v5943 = vsel %vm32, %v5872, 0
  %v5946 = vsel %vm32, %v5873, 0
  %v5949 = vsel %vm32, %v5874, 0
  %v5952 = vsel %vm32, %v5875, 0
  %v5955 = vsel %vm32, %v5876, 0
  %5957 = vmatpush.msra.mxu0 0.0
  %5958 = vmatpush.msra.mxu0 0.0
  %5959 = vmatpush.msra.mxu0 0.0
  %5960 = vmatpush.msra.mxu0 0.0
  %5961 = vmatpush.msra.mxu0 0.0
  %5962 = vmatpush.msra.mxu0 0.0
  %5963 = vmatpush.msra.mxu0 0.0
  %5964 = vmatpush.msra.mxu0 0.0
  %5965 = vmatpush.msra.mxu0 0.0
  %5966 = vmatpush.msra.mxu0 0.0
  %5967 = vmatpush.msra.mxu0 0.0
  %5968 = vmatpush.msra.mxu0 0.0
  %5969 = vmatpush.msra.mxu0 %v5881
  %5970 = vmatpush.msra.mxu0 %v5880
  %5971 = vmatpush.msra.mxu0 %v5879
  %5972 = vmatpush.msra.mxu0 %v5878
  %5973 = vmatmul.f32.gmra.mxu0 %v5883
  %v5974 = vpop.f32.mrf.mxu0
  %v5975 = vadd.f32 0.0, %v5974
  %5976 = vmatmul.f32.gmra.mxu0 %v5886
  %v5977 = vpop.f32.mrf.mxu0
  %v5978 = vadd.f32 0.0, %v5977
  %5979 = vmatmul.f32.gmra.mxu0 %v5889
  %v5980 = vpop.f32.mrf.mxu0
  %v5981 = vadd.f32 0.0, %v5980
  %5982 = vmatmul.f32.gmra.mxu0 %v5892
  %v5983 = vpop.f32.mrf.mxu0
  %v5984 = vadd.f32 0.0, %v5983
  %5985 = vmatmul.f32.gmra.mxu0 %v5895
  %v5986 = vpop.f32.mrf.mxu0
  %v5987 = vadd.f32 0.0, %v5986
  %5988 = vmatmul.f32.gmra.mxu0 %v5898
  %v5989 = vpop.f32.mrf.mxu0
  %v5990 = vadd.f32 0.0, %v5989
  %5991 = vmatmul.f32.gmra.mxu0 %v5901
  %v5992 = vpop.f32.mrf.mxu0
  %v5993 = vadd.f32 0.0, %v5992
  %5994 = vmatmul.f32.gmra.mxu0 %v5904
  %v5995 = vpop.f32.mrf.mxu0
  %v5996 = vadd.f32 0.0, %v5995
  %5997 = vmatmul.f32.gmra.mxu0 %v5907
  %v5998 = vpop.f32.mrf.mxu0
  %v5999 = vadd.f32 0.0, %v5998
  %6000 = vmatmul.f32.gmra.mxu0 %v5910
  %v6001 = vpop.f32.mrf.mxu0
  %v6002 = vadd.f32 0.0, %v6001
  %6003 = vmatmul.f32.gmra.mxu0 %v5913
  %v6004 = vpop.f32.mrf.mxu0
  %v6005 = vadd.f32 0.0, %v6004
  %6006 = vmatmul.f32.gmra.mxu0 %v5916
  %v6007 = vpop.f32.mrf.mxu0
  %v6008 = vadd.f32 0.0, %v6007
  %6009 = vmatmul.f32.gmra.mxu0 %v5919
  %v6010 = vpop.f32.mrf.mxu0
  %v6011 = vadd.f32 0.0, %v6010
  %6012 = vmatmul.f32.gmra.mxu0 %v5922
  %v6013 = vpop.f32.mrf.mxu0
  %v6014 = vadd.f32 0.0, %v6013
  %6015 = vmatmul.f32.gmra.mxu0 %v5925
  %v6016 = vpop.f32.mrf.mxu0
  %v6017 = vadd.f32 0.0, %v6016
  %6018 = vmatmul.f32.gmra.mxu0 %v5928
  %v6019 = vpop.f32.mrf.mxu0
  %v6020 = vadd.f32 0.0, %v6019
  %6021 = vmatmul.f32.gmra.mxu0 %v5931
  %v6022 = vpop.f32.mrf.mxu0
  %v6023 = vadd.f32 0.0, %v6022
  %6024 = vmatmul.f32.gmra.mxu0 %v5934
  %v6025 = vpop.f32.mrf.mxu0
  %v6026 = vadd.f32 0.0, %v6025
  %6027 = vmatmul.f32.gmra.mxu0 %v5937
  %v6028 = vpop.f32.mrf.mxu0
  %v6029 = vadd.f32 0.0, %v6028
  %6030 = vmatmul.f32.gmra.mxu0 %v5940
  %v6031 = vpop.f32.mrf.mxu0
  %v6032 = vadd.f32 0.0, %v6031
  %6033 = vmatmul.f32.gmra.mxu0 %v5943
  %v6034 = vpop.f32.mrf.mxu0
  %v6035 = vadd.f32 0.0, %v6034
  %6036 = vmatmul.f32.gmra.mxu0 %v5946
  %v6037 = vpop.f32.mrf.mxu0
  %v6038 = vadd.f32 0.0, %v6037
  %6039 = vmatmul.f32.gmra.mxu0 %v5949
  %v6040 = vpop.f32.mrf.mxu0
  %v6041 = vadd.f32 0.0, %v6040
  %6042 = vmatmul.f32.gmra.mxu0 %v5952
  %v6043 = vpop.f32.mrf.mxu0
  %v6044 = vadd.f32 0.0, %v6043
  %6045 = vmatmul.f32.gmra.mxu0 %v5955
  %v6046 = vpop.f32.mrf.mxu0
  %v6047 = vadd.f32 0.0, %v6046
  %6048 = vdwg.mxu0
  %v6049 = vadd.f32 %v5827, %v5975
  %v6050 = vadd.f32 %v5828, %v5978
  %v6051 = vadd.f32 %v5829, %v5981
  %v6052 = vadd.f32 %v5830, %v5984
  %v6053 = vadd.f32 %v5831, %v5987
  %v6054 = vadd.f32 %v5832, %v5990
  %v6055 = vadd.f32 %v5833, %v5993
  %v6056 = vadd.f32 %v5834, %v5996
  %v6057 = vadd.f32 %v5835, %v5999
  %v6058 = vadd.f32 %v5836, %v6002
  %v6059 = vadd.f32 %v5837, %v6005
  %v6060 = vadd.f32 %v5838, %v6008
  %v6061 = vadd.f32 %v5839, %v6011
  %v6062 = vadd.f32 %v5840, %v6014
  %v6063 = vadd.f32 %v5841, %v6017
  %v6064 = vadd.f32 %v5842, %v6020
  %v6065 = vadd.f32 %v5843, %v6023
  %v6066 = vadd.f32 %v5844, %v6026
  %v6067 = vadd.f32 %v5845, %v6029
  %v6068 = vadd.f32 %v5846, %v6032
  %v6069 = vadd.f32 %v5847, %v6035
  %v6070 = vadd.f32 %v5848, %v6038
  %v6071 = vadd.f32 %v5849, %v6041
  %v6072 = vadd.f32 %v5850, %v6044
  %v6073 = vadd.f32 %v5851, %v6047
  %v6074 = vld [vmem:[#allocation4 + $0x16] sm:$0xff]
  %v6075 = vld [vmem:[#allocation4 + $0x1e] sm:$0xff]
  %v6076 = vld [vmem:[#allocation4 + $0x26] sm:$0xff]
  %v6077 = vld [vmem:[#allocation4 + $0x2e] sm:$0xff]
  %v6078 = vld [vmem:[#allocation4 + $0x36] sm:$0xff]
  %v6079 = vld [vmem:[#allocation4 + $0x3e] sm:$0xff]
  %v6080 = vld [vmem:[#allocation4 + $0x46] sm:$0xff]
  %v6081 = vld [vmem:[#allocation4 + $0x4e] sm:$0xff]
  %v6082 = vld [vmem:[#allocation4 + $0x56] sm:$0xff]
  %v6083 = vld [vmem:[#allocation4 + $0x5e] sm:$0xff]
  %v6084 = vld [vmem:[#allocation4 + $0x66] sm:$0xff]
  %v6085 = vld [vmem:[#allocation4 + $0x6e] sm:$0xff]
  %v6086 = vld [vmem:[#allocation4 + $0x76] sm:$0xff]
  %v6087 = vld [vmem:[#allocation4 + $0x7e] sm:$0xff]
  %v6088 = vld [vmem:[#allocation4 + $0x86] sm:$0xff]
  %v6089 = vld [vmem:[#allocation4 + $0x8e] sm:$0xff]
  %v6090 = vld [vmem:[#allocation4 + $0x96] sm:$0xff]
  %v6091 = vld [vmem:[#allocation4 + $0x9e] sm:$0xff]
  %v6092 = vld [vmem:[#allocation4 + $0xa6] sm:$0xff]
  %v6093 = vld [vmem:[#allocation4 + $0xae] sm:$0xff]
  %v6094 = vld [vmem:[#allocation4 + $0xb6] sm:$0xff]
  %v6095 = vld [vmem:[#allocation4 + $0xbe] sm:$0xff]
  %v6096 = vld [vmem:[#allocation4 + $0xc6] sm:$0xff]
  %v6097 = vld [vmem:[#allocation4 + $0xce] sm:$0xff]
  %v6098 = vld [vmem:[#allocation4 + $0xd6] sm:$0xff]
  %s6099 = scalar_lea.vmem %s7, 256
  %v6100 = vld [vmem:[%s6099] sm:$0xff]
  %v6101 = vld [vmem:[%s6099 + $0x8] sm:$0xff]
  %v6102 = vld [vmem:[%s6099 + $0x10] sm:$0xff]
  %v6103 = vld [vmem:[%s6099 + $0x18] sm:$0xff]
  %v6105 = vsel %vm32, %v6074, 0
  %v6108 = vsel %vm32, %v6075, 0
  %v6111 = vsel %vm32, %v6076, 0
  %v6114 = vsel %vm32, %v6077, 0
  %v6117 = vsel %vm32, %v6078, 0
  %v6120 = vsel %vm32, %v6079, 0
  %v6123 = vsel %vm32, %v6080, 0
  %v6126 = vsel %vm32, %v6081, 0
  %v6129 = vsel %vm32, %v6082, 0
  %v6132 = vsel %vm32, %v6083, 0
  %v6135 = vsel %vm32, %v6084, 0
  %v6138 = vsel %vm32, %v6085, 0
  %v6141 = vsel %vm32, %v6086, 0
  %v6144 = vsel %vm32, %v6087, 0
  %v6147 = vsel %vm32, %v6088, 0
  %v6150 = vsel %vm32, %v6089, 0
  %v6153 = vsel %vm32, %v6090, 0
  %v6156 = vsel %vm32, %v6091, 0
  %v6159 = vsel %vm32, %v6092, 0
  %v6162 = vsel %vm32, %v6093, 0
  %v6165 = vsel %vm32, %v6094, 0
  %v6168 = vsel %vm32, %v6095, 0
  %v6171 = vsel %vm32, %v6096, 0
  %v6174 = vsel %vm32, %v6097, 0
  %v6177 = vsel %vm32, %v6098, 0
  %6179 = vmatpush.msra.mxu0 0.0
  %6180 = vmatpush.msra.mxu0 0.0
  %6181 = vmatpush.msra.mxu0 0.0
  %6182 = vmatpush.msra.mxu0 0.0
  %6183 = vmatpush.msra.mxu0 0.0
  %6184 = vmatpush.msra.mxu0 0.0
  %6185 = vmatpush.msra.mxu0 0.0
  %6186 = vmatpush.msra.mxu0 0.0
  %6187 = vmatpush.msra.mxu0 0.0
  %6188 = vmatpush.msra.mxu0 0.0
  %6189 = vmatpush.msra.mxu0 0.0
  %6190 = vmatpush.msra.mxu0 0.0
  %6191 = vmatpush.msra.mxu0 %v6103
  %6192 = vmatpush.msra.mxu0 %v6102
  %6193 = vmatpush.msra.mxu0 %v6101
  %6194 = vmatpush.msra.mxu0 %v6100
  %6195 = vmatmul.f32.gmra.mxu0 %v6105
  %v6196 = vpop.f32.mrf.mxu0
  %v6197 = vadd.f32 0.0, %v6196
  %6198 = vmatmul.f32.gmra.mxu0 %v6108
  %v6199 = vpop.f32.mrf.mxu0
  %v6200 = vadd.f32 0.0, %v6199
  %6201 = vmatmul.f32.gmra.mxu0 %v6111
  %v6202 = vpop.f32.mrf.mxu0
  %v6203 = vadd.f32 0.0, %v6202
  %6204 = vmatmul.f32.gmra.mxu0 %v6114
  %v6205 = vpop.f32.mrf.mxu0
  %v6206 = vadd.f32 0.0, %v6205
  %6207 = vmatmul.f32.gmra.mxu0 %v6117
  %v6208 = vpop.f32.mrf.mxu0
  %v6209 = vadd.f32 0.0, %v6208
  %6210 = vmatmul.f32.gmra.mxu0 %v6120
  %v6211 = vpop.f32.mrf.mxu0
  %v6212 = vadd.f32 0.0, %v6211
  %6213 = vmatmul.f32.gmra.mxu0 %v6123
  %v6214 = vpop.f32.mrf.mxu0
  %v6215 = vadd.f32 0.0, %v6214
  %6216 = vmatmul.f32.gmra.mxu0 %v6126
  %v6217 = vpop.f32.mrf.mxu0
  %v6218 = vadd.f32 0.0, %v6217
  %6219 = vmatmul.f32.gmra.mxu0 %v6129
  %v6220 = vpop.f32.mrf.mxu0
  %v6221 = vadd.f32 0.0, %v6220
  %6222 = vmatmul.f32.gmra.mxu0 %v6132
  %v6223 = vpop.f32.mrf.mxu0
  %v6224 = vadd.f32 0.0, %v6223
  %6225 = vmatmul.f32.gmra.mxu0 %v6135
  %v6226 = vpop.f32.mrf.mxu0
  %v6227 = vadd.f32 0.0, %v6226
  %6228 = vmatmul.f32.gmra.mxu0 %v6138
  %v6229 = vpop.f32.mrf.mxu0
  %v6230 = vadd.f32 0.0, %v6229
  %6231 = vmatmul.f32.gmra.mxu0 %v6141
  %v6232 = vpop.f32.mrf.mxu0
  %v6233 = vadd.f32 0.0, %v6232
  %6234 = vmatmul.f32.gmra.mxu0 %v6144
  %v6235 = vpop.f32.mrf.mxu0
  %v6236 = vadd.f32 0.0, %v6235
  %6237 = vmatmul.f32.gmra.mxu0 %v6147
  %v6238 = vpop.f32.mrf.mxu0
  %v6239 = vadd.f32 0.0, %v6238
  %6240 = vmatmul.f32.gmra.mxu0 %v6150
  %v6241 = vpop.f32.mrf.mxu0
  %v6242 = vadd.f32 0.0, %v6241
  %6243 = vmatmul.f32.gmra.mxu0 %v6153
  %v6244 = vpop.f32.mrf.mxu0
  %v6245 = vadd.f32 0.0, %v6244
  %6246 = vmatmul.f32.gmra.mxu0 %v6156
  %v6247 = vpop.f32.mrf.mxu0
  %v6248 = vadd.f32 0.0, %v6247
  %6249 = vmatmul.f32.gmra.mxu0 %v6159
  %v6250 = vpop.f32.mrf.mxu0
  %v6251 = vadd.f32 0.0, %v6250
  %6252 = vmatmul.f32.gmra.mxu0 %v6162
  %v6253 = vpop.f32.mrf.mxu0
  %v6254 = vadd.f32 0.0, %v6253
  %6255 = vmatmul.f32.gmra.mxu0 %v6165
  %v6256 = vpop.f32.mrf.mxu0
  %v6257 = vadd.f32 0.0, %v6256
  %6258 = vmatmul.f32.gmra.mxu0 %v6168
  %v6259 = vpop.f32.mrf.mxu0
  %v6260 = vadd.f32 0.0, %v6259
  %6261 = vmatmul.f32.gmra.mxu0 %v6171
  %v6262 = vpop.f32.mrf.mxu0
  %v6263 = vadd.f32 0.0, %v6262
  %6264 = vmatmul.f32.gmra.mxu0 %v6174
  %v6265 = vpop.f32.mrf.mxu0
  %v6266 = vadd.f32 0.0, %v6265
  %6267 = vmatmul.f32.gmra.mxu0 %v6177
  %v6268 = vpop.f32.mrf.mxu0
  %v6269 = vadd.f32 0.0, %v6268
  %6270 = vdwg.mxu0
  %v6271 = vadd.f32 %v6049, %v6197
  %v6272 = vadd.f32 %v6050, %v6200
  %v6273 = vadd.f32 %v6051, %v6203
  %v6274 = vadd.f32 %v6052, %v6206
  %v6275 = vadd.f32 %v6053, %v6209
  %v6276 = vadd.f32 %v6054, %v6212
  %v6277 = vadd.f32 %v6055, %v6215
  %v6278 = vadd.f32 %v6056, %v6218
  %v6279 = vadd.f32 %v6057, %v6221
  %v6280 = vadd.f32 %v6058, %v6224
  %v6281 = vadd.f32 %v6059, %v6227
  %v6282 = vadd.f32 %v6060, %v6230
  %v6283 = vadd.f32 %v6061, %v6233
  %v6284 = vadd.f32 %v6062, %v6236
  %v6285 = vadd.f32 %v6063, %v6239
  %v6286 = vadd.f32 %v6064, %v6242
  %v6287 = vadd.f32 %v6065, %v6245
  %v6288 = vadd.f32 %v6066, %v6248
  %v6289 = vadd.f32 %v6067, %v6251
  %v6290 = vadd.f32 %v6068, %v6254
  %v6291 = vadd.f32 %v6069, %v6257
  %v6292 = vadd.f32 %v6070, %v6260
  %v6293 = vadd.f32 %v6071, %v6263
  %v6294 = vadd.f32 %v6072, %v6266
  %v6295 = vadd.f32 %v6073, %v6269
  %v6296 = vld [vmem:[%s8] sm:$0x1]
  %v6298 = vperm.slane %v6296, 0
  %v6300 = vadd.f32 %v6271, %v6298
  %v6301 = vadd.f32 %v6272, %v6298
  %v6302 = vadd.f32 %v6273, %v6298
  %v6303 = vadd.f32 %v6274, %v6298
  %v6304 = vadd.f32 %v6275, %v6298
  %v6305 = vadd.f32 %v6276, %v6298
  %v6306 = vadd.f32 %v6277, %v6298
  %v6307 = vadd.f32 %v6278, %v6298
  %v6308 = vadd.f32 %v6279, %v6298
  %v6309 = vadd.f32 %v6280, %v6298
  %v6310 = vadd.f32 %v6281, %v6298
  %v6311 = vadd.f32 %v6282, %v6298
  %v6312 = vadd.f32 %v6283, %v6298
  %v6313 = vadd.f32 %v6284, %v6298
  %v6314 = vadd.f32 %v6285, %v6298
  %v6315 = vadd.f32 %v6286, %v6298
  %v6316 = vadd.f32 %v6287, %v6298
  %v6317 = vadd.f32 %v6288, %v6298
  %v6318 = vadd.f32 %v6289, %v6298
  %v6319 = vadd.f32 %v6290, %v6298
  %v6320 = vadd.f32 %v6291, %v6298
  %v6321 = vadd.f32 %v6292, %v6298
  %v6322 = vadd.f32 %v6293, %v6298
  %v6323 = vadd.f32 %v6294, %v6298
  %v6324 = vadd.f32 %v6295, %v6298
  %v6325 = vmax.f32 %v6300, 0.0
  %v6326 = vmax.f32 %v6301, 0.0
  %v6327 = vmax.f32 %v6302, 0.0
  %v6328 = vmax.f32 %v6303, 0.0
  %v6329 = vmax.f32 %v6304, 0.0
  %v6330 = vmax.f32 %v6305, 0.0
  %v6331 = vmax.f32 %v6306, 0.0
  %v6332 = vmax.f32 %v6307, 0.0
  %v6333 = vmax.f32 %v6308, 0.0
  %v6334 = vmax.f32 %v6309, 0.0
  %v6335 = vmax.f32 %v6310, 0.0
  %v6336 = vmax.f32 %v6311, 0.0
  %v6337 = vmax.f32 %v6312, 0.0
  %v6338 = vmax.f32 %v6313, 0.0
  %v6339 = vmax.f32 %v6314, 0.0
  %v6340 = vmax.f32 %v6315, 0.0
  %v6341 = vmax.f32 %v6316, 0.0
  %v6342 = vmax.f32 %v6317, 0.0
  %v6343 = vmax.f32 %v6318, 0.0
  %v6344 = vmax.f32 %v6319, 0.0
  %v6345 = vmax.f32 %v6320, 0.0
  %v6346 = vmax.f32 %v6321, 0.0
  %v6347 = vmax.f32 %v6322, 0.0
  %v6348 = vmax.f32 %v6323, 0.0
  %v6349 = vmax.f32 %v6324, 0.0
  %6350 = vst.msk [vmem:[%s9] sm:$0xff] %vm32, %v6325
  %6351 = vst.msk [vmem:[%s9 + $0x8] sm:$0xff] %vm32, %v6326
  %6352 = vst.msk [vmem:[%s9 + $0x10] sm:$0xff] %vm32, %v6327
  %6353 = vst.msk [vmem:[%s9 + $0x18] sm:$0xff] %vm32, %v6328
  %6354 = vst.msk [vmem:[%s9 + $0x20] sm:$0xff] %vm32, %v6329
  %6355 = vst.msk [vmem:[%s9 + $0x28] sm:$0xff] %vm32, %v6330
  %6356 = vst.msk [vmem:[%s9 + $0x30] sm:$0xff] %vm32, %v6331
  %6357 = vst.msk [vmem:[%s9 + $0x38] sm:$0xff] %vm32, %v6332
  %6358 = vst.msk [vmem:[%s9 + $0x40] sm:$0xff] %vm32, %v6333
  %6359 = vst.msk [vmem:[%s9 + $0x48] sm:$0xff] %vm32, %v6334
  %6360 = vst.msk [vmem:[%s9 + $0x50] sm:$0xff] %vm32, %v6335
  %6361 = vst.msk [vmem:[%s9 + $0x58] sm:$0xff] %vm32, %v6336
  %6362 = vst.msk [vmem:[%s9 + $0x60] sm:$0xff] %vm32, %v6337
  %6363 = vst.msk [vmem:[%s9 + $0x68] sm:$0xff] %vm32, %v6338
  %6364 = vst.msk [vmem:[%s9 + $0x70] sm:$0xff] %vm32, %v6339
  %6365 = vst.msk [vmem:[%s9 + $0x78] sm:$0xff] %vm32, %v6340
  %6366 = vst.msk [vmem:[%s9 + $0x80] sm:$0xff] %vm32, %v6341
  %6367 = vst.msk [vmem:[%s9 + $0x88] sm:$0xff] %vm32, %v6342
  %6368 = vst.msk [vmem:[%s9 + $0x90] sm:$0xff] %vm32, %v6343
  %6369 = vst.msk [vmem:[%s9 + $0x98] sm:$0xff] %vm32, %v6344
  %6370 = vst.msk [vmem:[%s9 + $0xa0] sm:$0xff] %vm32, %v6345
  %6371 = vst.msk [vmem:[%s9 + $0xa8] sm:$0xff] %vm32, %v6346
  %6372 = vst.msk [vmem:[%s9 + $0xb0] sm:$0xff] %vm32, %v6347
  %6373 = vst.msk [vmem:[%s9 + $0xb8] sm:$0xff] %vm32, %v6348
  %6374 = vst.msk [vmem:[%s9 + $0xc0] sm:$0xff] %vm32, %v6349
  // Predicated region
  $region38: #{actor_forward.2} parent=0 // pred_check
    _
  $region39: #{actor_forward.2} parent=0 // pred_check_branch
    %6376 = sbr.rel (0) target = $region41
  $region40: #{actor_forward.2} parent=0 // pred_region
    _
  $region41: #{actor_forward.2} parent=0 // pred_fallthru
    _
  // Predicated region
  $region42: #{actor_forward.2} parent=0 // pred_check
    _
  $region43: #{actor_forward.2} parent=0 // pred_check_branch
    %6378 = sbr.rel (0) target = $region45
  $region44: #{actor_forward.2} parent=0 // pred_region
    _
  $region45: #{actor_forward.2} parent=0 // pred_fallthru
    _

</llo_original>
